<compile_context>
chip_gen: v7x
topology: tpu7x:2x2x1
jax: 0.10.0
libtpu: 0.0.40
codegen_flags: <defaults>
</compile_context>

<pallas_src>
import functools

import numpy as np
import jax
import jax.numpy as jnp
from jax.experimental import pallas as pl
from jax.experimental.pallas import tpu as pltpu

# ----------------------------- module constants -----------------------------
TEMP = 0.1
INV_TEMP = 1.0 / TEMP
BASE_TEMP = 1.0
IGNORE_LABEL = 255
NUM_CLASSES = 17
DIM = 64
K = 6
K_SPLIT = [0.95, 0.85, 0.75, 0.65, 0.55]
PIXEL_UPDATE_FREQ = 30
PIXEL_SIZE = PIXEL_UPDATE_FREQ * 5          # 150
MU = 0.99
N_VIEW = 100 // K                           # 16

C_TOTAL = NUM_CLASSES * K * PIXEL_SIZE      # 15300 point-queue negatives
TILE_C = 3072                               # queue tile (5 grid steps)
CP = ((C_TOTAL + TILE_C - 1) // TILE_C) * TILE_C   # 15360
M_PAD = 128                                 # cluster centers padded 102 -> 128 lanes

PAD_ANCHOR_LABEL = -3.0                     # sentinel label of padded anchor rows
PAD_QUEUE_LABEL = -2.0                      # sentinel label of padded queue columns
NEG_INF = -1e30


def _dot_nt(a, b):
    # (M, D) x (N, D) -> (M, N), contracting the feature axis on the MXU.
    return jax.lax.dot_general(a, b, (((1,), (1,)), ((), ())),
                               preferred_element_type=jnp.float32)


# ------------------------------ Pallas kernels ------------------------------
def _neg_rowsum_kernel(ya_ref, xa_ref, xc_ref, yc_ref, out_ref, m_sc, l_sc):
    """Per anchor row:  max_j s_ij  and  sum_j exp(s_ij - max_i) * [y_i != y_queue_j],
    with s = (X_anchor / T) @ X_queue.T, accumulated online over queue tiles.
    Matches torch's neg_logits (shifted by the queue scores' own row max)."""
    k = pl.program_id(1)

    @pl.when(k == 0)
    def _():
        m_sc[...] = jnp.full_like(m_sc, NEG_INF)
        l_sc[...] = jnp.zeros_like(l_sc)

    xa = (xa_ref[...] * INV_TEMP).astype(jnp.bfloat16)       # fold 1/T into (TN, 64)
    xc = xc_ref[...].astype(jnp.bfloat16)                     # (TILE_C, 64)
    s = _dot_nt(xa, xc)                                       # (TN, TILE_C) f32

    yc = yc_ref[...]                                          # (1, TILE_C)
    s = jnp.where(yc >= 0.0, s, NEG_INF)                      # kill padded queue cols

    m_old = m_sc[...]
    m_new = jnp.maximum(m_old, jnp.max(s, axis=1, keepdims=True))
    # fused negative mask * exp  (different label -> keep)
    p = jnp.where(ya_ref[...] != yc, jnp.exp(s - m_new), 0.0)
    l_sc[...] = l_sc[...] * jnp.exp(m_old - m_new) + jnp.sum(p, axis=1, keepdims=True)
    m_sc[...] = m_new

    @pl.when(k == pl.num_programs(1) - 1)
    def _():
        out_ref[...] = l_sc[...]


def _ppc_loss_kernel(xa_ref, xt_ref, ycol_ref, yrow_ref, neg_ref, out_ref,
                     tot_sc, cnt_sc):
    """Anchor-vs-teacher contrastive loss, tiled over anchor rows; the queue negative
    sums (neg_ref) come from _neg_rowsum_kernel.  Reproduces the PyTorch reference's
    denominator (its two terms use different max shifts — kept deliberately)."""
    i = pl.program_id(0)

    @pl.when(i == 0)
    def _():
        tot_sc[...] = jnp.zeros_like(tot_sc)
        cnt_sc[...] = jnp.zeros_like(cnt_sc)

    tn = xa_ref.shape[0]
    npt = xt_ref.shape[0]

    xa = (xa_ref[...] * INV_TEMP).astype(jnp.bfloat16)        # (TN, 64)
    xt = xt_ref[...].astype(jnp.bfloat16)                     # (Np, 64)
    s = _dot_nt(xa, xt)                                       # (TN, Np)

    ycol = ycol_ref[...]                                      # (TN, 1) this tile's labels
    yrow = yrow_ref[...]                                      # (1, Np) all anchor labels
    col_valid = yrow >= 0.0
    row_valid = ycol >= 0.0

    s = jnp.where(col_valid, s, NEG_INF)                      # exclude padded teacher cols
    logits = s - jnp.max(s, axis=1, keepdims=True)
    exp_logits = jnp.exp(logits)                              # padded cols -> 0

    same = ycol == yrow                                       # (TN, Np)
    # neg_logits_raw: exp(logits) over different-label columns (diag has equal labels).
    neg_raw = jnp.sum(jnp.where(same, 0.0, exp_logits), axis=1, keepdims=True)

    rows = jax.lax.broadcasted_iota(jnp.int32, (tn, npt), 0) + i * tn
    cols = jax.lax.broadcasted_iota(jnp.int32, (tn, npt), 1)
    pos = jnp.logical_and(jnp.logical_and(same, jnp.logical_and(col_valid, row_valid)),
                          rows != cols)                       # positives, self-pair removed

    log_prob = logits - jnp.log(exp_logits + neg_ref[...] + neg_raw)

    mask_sum = jnp.sum(jnp.where(pos, 1.0, 0.0), axis=1, keepdims=True)   # (TN, 1)
    num = jnp.sum(jnp.where(pos, log_prob, 0.0), axis=1, keepdims=True)
    sel = mask_sum > 0.0
    mean_pos = jnp.where(sel, num / jnp.where(sel, mask_sum, 1.0), 0.0)

    tot_sc[...] += jnp.sum(mean_pos, axis=0, keepdims=True)
    cnt_sc[...] += jnp.sum(jnp.where(sel, 1.0, 0.0), axis=0, keepdims=True)

    @pl.when(i == pl.num_programs(0) - 1)
    def _():
        # cnt == 0 -> NaN, same as torch .mean() over an empty index set.
        out_ref[...] = -(TEMP / BASE_TEMP) * tot_sc[...] / cnt_sc[...]


def _pcc_loss_kernel(xa_ref, y1_ref, y2_ref, c_ref, out_ref, tot_sc, *,
                     n_actual, m_actual):
    """Anchor-vs-cluster-center contrastive loss (covers pcc and pcc_top2; for plain pcc
    pass y2 == y1).  Centers are padded to 128 columns; padded columns are masked."""
    i = pl.program_id(0)

    @pl.when(i == 0)
    def _():
        tot_sc[...] = jnp.zeros_like(tot_sc)

    xa = (xa_ref[...] * INV_TEMP).astype(jnp.bfloat16)
    c = c_ref[...].astype(jnp.bfloat16)
    s = _dot_nt(xa, c)                                        # (TN, 128)

    col = jax.lax.broadcasted_iota(jnp.float32, s.shape, 1)
    col_valid = col < m_actual
    s = jnp.where(col_valid, s, NEG_INF)
    logits = s - jnp.max(s, axis=1, keepdims=True)
    exp_logits = jnp.exp(logits)                              # padded cols -> 0

    y1 = y1_ref[...]
    y2 = y2_ref[...]
    row_valid = y1 >= 0.0
    pos = jnp.logical_and(jnp.logical_or(y1 == col, y2 == col), col_valid)

    neg = jnp.sum(jnp.where(pos, 0.0, exp_logits), axis=1, keepdims=True)
    log_prob = logits - jnp.log(exp_logits + neg)

    mask_sum = jnp.sum(jnp.where(pos, 1.0, 0.0), axis=1, keepdims=True)
    num = jnp.sum(jnp.where(pos, log_prob, 0.0), axis=1, keepdims=True)
    mean_pos = jnp.where(row_valid, num / jnp.maximum(mask_sum, 1.0), 0.0)
    tot_sc[...] += jnp.sum(mean_pos, axis=0, keepdims=True)

    @pl.when(i == pl.num_programs(0) - 1)
    def _():
        out_ref[...] = -(TEMP / BASE_TEMP) * tot_sc[...] / n_actual


# ------------------------------ Pallas wrappers ------------------------------
def _pad_rows(n):
    """Pad anchor count to a multiple of 128; pick an anchor tile size that keeps the
    (TN, C)/(TN, Np) f32 intermediates comfortably inside the 32 MiB scoped VMEM
    (v7x has only 64 MiB physical)."""
    npad = max(128, ((n + 127) // 128) * 128)
    if npad > 2048 or npad % 256 != 0:
        tn = 128
    else:
        tn = 256
    return npad, tn


def neg_rowsum(x_a, y_a, x_c, y_c, tn):
    npad = x_a.shape[0]
    cp = x_c.shape[0]
    return pl.pallas_call(
        _neg_rowsum_kernel,
        out_shape=jax.ShapeDtypeStruct((npad, 1), jnp.float32),
        grid=(npad // tn, cp // TILE_C),
        in_specs=[pl.BlockSpec((tn, 1), lambda i, k: (i, 0)),
                  pl.BlockSpec((tn, DIM), lambda i, k: (i, 0)),
                  pl.BlockSpec((TILE_C, DIM), lambda i, k: (k, 0)),
                  pl.BlockSpec((1, TILE_C), lambda i, k: (0, k))],
        out_specs=pl.BlockSpec((tn, 1), lambda i, k: (i, 0)),
        scratch_shapes=[pltpu.VMEM((tn, 1), jnp.float32),
                        pltpu.VMEM((tn, 1), jnp.float32)],
        compiler_params=pltpu.CompilerParams(
            dimension_semantics=("parallel", "arbitrary")),
    )(y_a.reshape(npad, 1), x_a, x_c, y_c)


def ppc_contrastive_v1(X_anchor, y_anchor, t_anchor, X_contrast, y_contrast, tn):
    npad = X_anchor.shape[0]
    neg = neg_rowsum(X_anchor, y_anchor, X_contrast, y_contrast, tn)
    loss = pl.pallas_call(
        _ppc_loss_kernel,
        out_shape=jax.ShapeDtypeStruct((1, 1), jnp.float32),
        grid=(npad // tn,),
        in_specs=[pl.BlockSpec((tn, DIM), lambda i: (i, 0)),
                  pl.BlockSpec((npad, DIM), lambda i: (0, 0)),
                  pl.BlockSpec((tn, 1), lambda i: (i, 0)),
                  pl.BlockSpec((1, npad), lambda i: (0, 0)),
                  pl.BlockSpec((tn, 1), lambda i: (i, 0))],
        out_specs=pl.BlockSpec((1, 1), lambda i: (0, 0)),
        scratch_shapes=[pltpu.VMEM((1, 1), jnp.float32),
                        pltpu.VMEM((1, 1), jnp.float32)],
        compiler_params=pltpu.CompilerParams(dimension_semantics=("arbitrary",)),
    )(X_anchor, t_anchor, y_anchor.reshape(npad, 1), y_anchor.reshape(1, npad), neg)
    return loss[0, 0]


def pcc_contrastive(X_anchor, y1, y2, centers_padded, tn, n_actual):
    npad = X_anchor.shape[0]
    mpad = centers_padded.shape[0]
    kernel = functools.partial(_pcc_loss_kernel,
                               n_actual=float(n_actual),
                               m_actual=float(NUM_CLASSES * K))
    loss = pl.pallas_call(
        kernel,
        out_shape=jax.ShapeDtypeStruct((1, 1), jnp.float32),
        grid=(npad // tn,),
        in_specs=[pl.BlockSpec((tn, DIM), lambda i: (i, 0)),
                  pl.BlockSpec((tn, 1), lambda i: (i, 0)),
                  pl.BlockSpec((tn, 1), lambda i: (i, 0)),
                  pl.BlockSpec((mpad, DIM), lambda i: (0, 0))],
        out_specs=pl.BlockSpec((1, 1), lambda i: (0, 0)),
        scratch_shapes=[pltpu.VMEM((1, 1), jnp.float32)],
        compiler_params=pltpu.CompilerParams(dimension_semantics=("arbitrary",)),
    )(X_anchor, y1.reshape(npad, 1), y2.reshape(npad, 1), centers_padded)
    return loss[0, 0]


# ------------------------- host-side (dynamic-shape) glue -------------------------
def _l2norm_np(x, axis):
    return x / np.maximum(np.linalg.norm(x, axis=axis, keepdims=True), 1e-12)


def _pad_anchor_features(X, npad):
    n = X.shape[0]
    out = np.zeros((npad, DIM), np.float32)
    out[:n] = X
    return jnp.asarray(out)


def _pad_anchor_labels(y, npad):
    n = y.shape[0]
    out = np.full((npad,), PAD_ANCHOR_LABEL, np.float32)
    out[:n] = y
    return jnp.asarray(out)


def _assign_subclass_cur(X, y_hat, y, X_t, cur, rng):
    bs = X.shape[0]
    X_, y_, Xt_ = [], [], []
    for ii in range(bs):
        this_y_hat, this_x, this_cur, this_x_t = y_hat[ii], X[ii], cur[ii], X_t[ii]
        this_classes = [c for c in np.unique(this_y_hat) if c != IGNORE_LABEL]
        for cls_id in this_classes:
            class_indices = np.nonzero(this_y_hat == cls_id)[0]
            class_cur = this_cur[class_indices]
            c_ths = [1.0]
            for kk in range(K - 1):
                c_ths.append(float(np.quantile(class_cur, K_SPLIT[kk])))
            c_ths.append(0.0)
            for kk in range(K):
                sel = (class_cur <= c_ths[kk]) & (class_cur >= c_ths[kk + 1])
                cur_indices = class_indices[sel]
                num_indices = cur_indices.shape[0]
                num_sample = min(num_indices, N_VIEW)
                perm = rng.permutation(num_indices)
                indices = cur_indices[perm[:num_sample]]
                X_.append(this_x[indices])
                y_.append(this_y_hat[indices].astype(np.int64) * K + kk)
                Xt_.append(this_x_t[indices])
    if len(X_) == 0:
        return None, None, None
    return (np.concatenate(X_, 0).astype(np.float32),
            np.concatenate(y_, 0).astype(np.float32),
            np.concatenate(Xt_, 0).astype(np.float32))


def _assign_subclass_cur_top2(X, y_hat, y_hat2, cur, rng):
    bs = X.shape[0]
    X_, y_, y_2 = [], [], []
    for ii in range(bs):
        this_y_hat, this_x, this_cur, this_y_hat2 = y_hat[ii], X[ii], cur[ii], y_hat2[ii]
        this_classes = [c for c in np.unique(this_y_hat) if c != IGNORE_LABEL]
        for cls_id in this_classes:
            class_indices = np.nonzero(this_y_hat == cls_id)[0]
            class_cur = this_cur[class_indices]
            c_ths = [1.0]
            for kk in range(K - 1):
                c_ths.append(float(np.quantile(class_cur, K_SPLIT[kk])))
            c_ths.append(0.0)
            for kk in range(K):
                sel = (class_cur <= c_ths[kk]) & (class_cur >= c_ths[kk + 1])
                cur_indices = class_indices[sel]
                num_indices = cur_indices.shape[0]
                num_sample = min(num_indices, N_VIEW)
                perm = rng.permutation(num_indices)
                indices = cur_indices[perm[:num_sample]]
                X_.append(this_x[indices])
                y_.append(this_y_hat[indices].astype(np.int64) * K + kk)
                y_2.append(this_y_hat2[indices].astype(np.int64) * K + kk)
    if len(X_) == 0:
        return None, None, None
    return (np.concatenate(X_, 0).astype(np.float32),
            np.concatenate(y_, 0).astype(np.float32),
            np.concatenate(y_2, 0).astype(np.float32))


class ContrastState:
    """Deterministically initialized replacement for the module buffers.
    point_queue / cluster_center are kept device-resident (jnp) so the Pallas calls never
    re-upload them; the per-step updates are small device scatters."""

    def __init__(self, key):
        k1, k2 = jax.random.split(key)
        cc = jax.random.normal(k1, (NUM_CLASSES, K, DIM), dtype=jnp.float32)
        self.cluster_center = cc / jnp.maximum(
            jnp.linalg.norm(cc, axis=2, keepdims=True), 1e-12)
        self.new_cluster_center = self.cluster_center
        pq = jax.random.normal(k2, (NUM_CLASSES * K, PIXEL_SIZE, DIM), dtype=jnp.float32)
        self.point_queue = pq / jnp.maximum(
            jnp.linalg.norm(pq, axis=2, keepdims=True), 1e-12)
        self.point_queue_ptr = np.zeros(NUM_CLASSES * K, dtype=np.int64)
        # queue labels (with padded columns at -2), built once
        yc = np.repeat(np.arange(NUM_CLASSES * K, dtype=np.float32), PIXEL_SIZE)
        yc = np.pad(yc, (0, CP - yc.shape[0]), constant_values=PAD_QUEUE_LABEL)
        self.y_contrast = jnp.asarray(yc.reshape(1, CP))


def _queue_operations(state, feats, labels, rng):
    # reproduces torch's .view(dim, -1) memory reinterpret (row-major), not a transpose
    this_feat = feats.reshape(DIM, -1)
    this_label = labels.reshape(-1)
    rows_all, feats_all = [], []
    for lb in np.unique(this_label):
        lb = int(lb)
        idxs = np.nonzero(this_label == lb)[0]
        num_pixel = idxs.shape[0]
        perm = rng.permutation(num_pixel)
        cnt = min(num_pixel, PIXEL_UPDATE_FREQ)
        feat = _l2norm_np(this_feat[:, idxs[perm[:cnt]]].T, 1)
        ptr = int(state.point_queue_ptr[lb])
        if ptr + cnt > PIXEL_SIZE:
            rows = lb * PIXEL_SIZE + np.arange(PIXEL_SIZE - cnt, PIXEL_SIZE)
            state.point_queue_ptr[lb] = 0
        else:
            rows = lb * PIXEL_SIZE + np.arange(ptr, ptr + cnt)
            state.point_queue_ptr[lb] = (ptr + cnt) % PIXEL_SIZE
        rows_all.append(rows)
        feats_all.append(feat)
    if rows_all:
        rows_all = np.concatenate(rows_all).astype(np.int32)
        feats_all = np.concatenate(feats_all, 0).astype(np.float32)
        flat = state.point_queue.reshape(NUM_CLASSES * K * PIXEL_SIZE, DIM)
        flat = flat.at[jnp.asarray(rows_all)].set(jnp.asarray(feats_all))
        state.point_queue = flat.reshape(NUM_CLASSES * K, PIXEL_SIZE, DIM)


def _center_update(state, featt_, labels_):
    cls_ids = (labels_ // K).astype(np.int64)
    subcls_ids = (labels_ % K).astype(np.int64)
    present = set(np.unique(cls_ids).tolist())
    means = np.zeros((NUM_CLASSES, K, DIM), np.float32)      # scatter_mean semantics
    present_mask = np.zeros((NUM_CLASSES, 1, 1), bool)
    for cls_id in range(NUM_CLASSES):
        if cls_id in present:
            present_mask[cls_id] = True
            sel = cls_ids == cls_id
            cf, cs = featt_[sel], subcls_ids[sel]
            for kk in range(K):
                m = cs == kk
                if m.any():
                    means[cls_id, kk] = cf[m].mean(axis=0)
    new_cc = jnp.where(jnp.asarray(present_mask), jnp.asarray(means), state.cluster_center)
    state.new_cluster_center = new_cc
    cc = state.cluster_center * MU + new_cc * (1.0 - MU)
    state.cluster_center = cc / jnp.maximum(
        jnp.linalg.norm(cc, axis=2, keepdims=True), 1e-12)


def forward(state, feat_s, pred_s, label_s, feat_t, top2_mask, top2_label, cur, rng):
    feat_s = np.asarray(feat_s, np.float32)
    feat_t = np.asarray(feat_t, np.float32)
    label_s = np.asarray(label_s)
    pred_s = np.asarray(pred_s)
    cur = np.asarray(cur, np.float32)
    top2_mask = np.asarray(top2_mask, bool)
    top2_label = np.asarray(top2_label)

    bs = feat_s.shape[0]
    fs = _l2norm_np(np.transpose(feat_s, (0, 2, 1)), 2)       # (B, P, D)
    ft = _l2norm_np(np.transpose(feat_t, (0, 2, 1)), 2)

    feats_, labels_, featt_ = _assign_subclass_cur(fs, label_s, pred_s, ft, cur, rng)
    if feats_ is None:
        return jnp.float32(0.0), None, None, None

    n = feats_.shape[0]
    npad, tn = _pad_rows(n)
    Xa = _pad_anchor_features(feats_, npad)
    Xt = _pad_anchor_features(featt_, npad)
    ya = _pad_anchor_labels(labels_, npad)

    # device-resident negatives / centers (padded on device; tiny copies)
    X_contrast = jnp.pad(state.point_queue.reshape(C_TOTAL, DIM),
                         ((0, CP - C_TOTAL), (0, 0)))
    centers = jnp.pad(state.cluster_center.reshape(NUM_CLASSES * K, DIM),
                      ((0, M_PAD - NUM_CLASSES * K), (0, 0)))

    ppc_loss = ppc_contrastive_v1(Xa, ya, Xt, X_contrast, state.y_contrast, tn)
    pcc_loss = pcc_contrastive(Xa, ya, ya, centers, tn, n)
    loss = pcc_loss * 2.0 + ppc_loss

    label_2 = top2_label[:, 0, :].copy()
    label_2[~top2_mask] = IGNORE_LABEL
    label_3 = top2_label[:, 1, :].copy()
    label_3[~top2_mask] = IGNORE_LABEL
    # faithful to the original: full-batch labels paired with second-half features/cur
    feats_top2, labels_top2, labels_top3 = _assign_subclass_cur_top2(
        fs[bs // 2:], label_2, label_3, cur[bs // 2:], rng)
    if feats_top2 is not None:
        n2 = feats_top2.shape[0]
        npad2, tn2 = _pad_rows(n2)
        Xa2 = _pad_anchor_features(feats_top2, npad2)
        y2a = _pad_anchor_labels(labels_top2, npad2)
        y2b = _pad_anchor_labels(labels_top3, npad2)
        pcc_top2_loss = pcc_contrastive(Xa2, y2a, y2b, centers, tn2, n2)
    else:
        # TODO(synk): original PyTorch would crash here (None anchors); skip instead.
        pcc_top2_loss = jnp.float32(0.0)
    loss = loss + pcc_top2_loss * 2.0

    # ---- stateful updates (point queue + cluster centers), device-resident ----
    _queue_operations(state, featt_, labels_.astype(np.int64), rng)
    _center_update(state, featt_, labels_)

    return loss, pcc_loss, ppc_loss, pcc_top2_loss


# ------------------------------------ main ------------------------------------
if __name__ == "__main__":
    key = jax.random.PRNGKey(0)
    ks = jax.random.split(key, 9)
    bs, p_num = 2, 64

    feat_s = jax.random.normal(ks[0], (bs, DIM, p_num), jnp.float32)
    feat_t = jax.random.normal(ks[1], (bs, DIM, p_num), jnp.float32)
    label_s = jax.random.randint(ks[2], (bs, p_num), 0, NUM_CLASSES)
    ignore = jax.random.bernoulli(ks[3], 0.1, (bs, p_num))
    label_s = jnp.where(ignore, IGNORE_LABEL, label_s)
    pred_s = jax.random.randint(ks[4], (bs, p_num), 0, NUM_CLASSES)
    cur = jax.random.uniform(ks[5], (bs, p_num), jnp.float32)
    top2_mask = jax.random.bernoulli(ks[6], 0.8, (bs, p_num))
    top2_label = jax.random.randint(ks[7], (bs, 2, p_num), 0, NUM_CLASSES)

    state = ContrastState(ks[8])
    rng = np.random.default_rng(0)   # deterministic replacement for torch.randperm

    loss, pcc_loss, ppc_loss, pcc_top2_loss = forward(
        state, feat_s, pred_s, label_s, feat_t, top2_mask, top2_label, cur, rng)
    jax.block_until_ready(loss)
    jax.block_until_ready(state.point_queue)
    jax.block_until_ready(state.cluster_center)
    print("KERNEL_OK")
</pallas_src>

<mosaic_0001>
module attributes {stable_mosaic.version = 11 : i64} {
  func.func @_neg_rowsum_kernel(%arg0: i32, %arg1: i32, %arg2: memref<256x1xf32, #tpu.memory_space<vmem>>, %arg3: memref<256x64xf32, #tpu.memory_space<vmem>>, %arg4: memref<3072x64xf32, #tpu.memory_space<vmem>>, %arg5: memref<1x3072xf32, #tpu.memory_space<vmem>>, %arg6: memref<256x1xf32, #tpu.memory_space<vmem>>, %arg7: memref<256x1xf32, #tpu.memory_space<vmem>>, %arg8: memref<256x1xf32, #tpu.memory_space<vmem>>) attributes {dimension_semantics = [#tpu.dimension_semantics<parallel>, #tpu.dimension_semantics<arbitrary>], iteration_bounds = array<i64: 1, 5>, scalar_prefetch = 0 : i64, scratch_operands = 2 : i64, tpu.core_type = #tpu.core_type<tc>, window_params = [{transform_indices = @transform_0, window_bounds = array<i64: 256, 1>}, {transform_indices = @transform_1, window_bounds = array<i64: 256, 64>}, {transform_indices = @transform_2, window_bounds = array<i64: 3072, 64>}, {transform_indices = @transform_3, window_bounds = array<i64: 1, 3072>}, {transform_indices = @transform_4, window_bounds = array<i64: 256, 1>}]} {
    %c0_i32 = arith.constant 0 : i32
    %0 = arith.cmpi eq, %arg1, %c0_i32 : i32
    %1 = arith.extui %0 : i1 to i32
    %c0_i32_0 = arith.constant 0 : i32
    %2 = arith.cmpi ne, %1, %c0_i32_0 : i32
    scf.if %2 {
      %cst_23 = arith.constant -1.000000e+30 : f32
      %42 = vector.broadcast %cst_23 : f32 to vector<256x1xf32>
      %c0_24 = arith.constant 0 : index
      %c0_25 = arith.constant 0 : index
      %43 = vector.load %arg7[%c0_24, %c0_25] : memref<256x1xf32, #tpu.memory_space<vmem>>, vector<256x1xf32>
      tpu.vector_store %arg7[%c0_24, %c0_25], %42 {strides = array<i32>} : memref<256x1xf32, #tpu.memory_space<vmem>>, vector<256x1xf32>,
      %cst_26 = arith.constant 0.000000e+00 : f32
      %44 = vector.broadcast %cst_26 : f32 to vector<256x1xf32>
      %c0_27 = arith.constant 0 : index
      %c0_28 = arith.constant 0 : index
      %45 = vector.load %arg8[%c0_27, %c0_28] : memref<256x1xf32, #tpu.memory_space<vmem>>, vector<256x1xf32>
      tpu.vector_store %arg8[%c0_27, %c0_28], %44 {strides = array<i32>} : memref<256x1xf32, #tpu.memory_space<vmem>>, vector<256x1xf32>,
    } else {
    }
    %c0 = arith.constant 0 : index
    %c0_1 = arith.constant 0 : index
    %3 = vector.load %arg3[%c0, %c0_1] : memref<256x64xf32, #tpu.memory_space<vmem>>, vector<256x64xf32>
    %cst = arith.constant 1.000000e+01 : f32
    %4 = vector.broadcast %cst : f32 to vector<256x64xf32>
    %5 = arith.mulf %3, %4 : vector<256x64xf32>
    %6 = arith.truncf %5 : vector<256x64xf32> to vector<256x64xbf16>
    %c0_2 = arith.constant 0 : index
    %c0_3 = arith.constant 0 : index
    %7 = vector.load %arg4[%c0_2, %c0_3] : memref<3072x64xf32, #tpu.memory_space<vmem>>, vector<3072x64xf32>
    %8 = arith.truncf %7 : vector<3072x64xf32> to vector<3072x64xbf16>
    %cst_4 = arith.constant dense<0.000000e+00> : vector<256x3072xf32>
    %9 = tpu.matmul %6, %8, %cst_4 {dimension_numbers = #tpu.dot_dimension_numbers<[1], [1], [0], [0], [0, 0, 1, 0], [], []>} : vector<256x64xbf16>, vector<3072x64xbf16>, vector<256x3072xf32> -> vector<256x3072xf32>
    %c0_5 = arith.constant 0 : index
    %c0_6 = arith.constant 0 : index
    %10 = vector.load %arg5[%c0_5, %c0_6] : memref<1x3072xf32, #tpu.memory_space<vmem>>, vector<1x3072xf32>
    %cst_7 = arith.constant 0.000000e+00 : f32
    %11 = vector.broadcast %cst_7 : f32 to vector<1x3072xf32>
    %12 = arith.cmpf oge, %10, %11 : vector<1x3072xf32>
    %cst_8 = arith.constant -1.000000e+30 : f32
    %13 = vector.shape_cast %12 : vector<1x3072xi1> to vector<1x3072xi1>
    %14 = vector.broadcast %13 : vector<1x3072xi1> to vector<256x3072xi1>
    %15 = vector.broadcast %cst_8 : f32 to vector<256x3072xf32>
    %16 = arith.select %14, %9, %15 : vector<256x3072xi1>, vector<256x3072xf32>
    %c0_9 = arith.constant 0 : index
    %c0_10 = arith.constant 0 : index
    %17 = vector.load %arg7[%c0_9, %c0_10] : memref<256x1xf32, #tpu.memory_space<vmem>>, vector<256x1xf32>
    %cst_11 = arith.constant dense<0xFF800000> : vector<256xf32>
    %18 = vector.multi_reduction <maximumf>, %16, %cst_11 [1] : vector<256x3072xf32> to vector<256xf32>
    %19 = vector.shape_cast %18 : vector<256xf32> to vector<256x1xf32>
    %20 = arith.maximumf %17, %19 : vector<256x1xf32>
    %c0_12 = arith.constant 0 : index
    %c0_13 = arith.constant 0 : index
    %21 = vector.load %arg2[%c0_12, %c0_13] : memref<256x1xf32, #tpu.memory_space<vmem>>, vector<256x1xf32>
    %22 = vector.broadcast %21 : vector<256x1xf32> to vector<256x3072xf32>
    %23 = vector.broadcast %10 : vector<1x3072xf32> to vector<256x3072xf32>
    %24 = arith.cmpf one, %22, %23 : vector<256x3072xf32>
    %25 = vector.broadcast %20 : vector<256x1xf32> to vector<256x3072xf32>
    %26 = arith.subf %16, %25 : vector<256x3072xf32>
    %27 = math.exp %26 : vector<256x3072xf32>
    %cst_14 = arith.constant 0.000000e+00 : f32
    %28 = vector.broadcast %cst_14 : f32 to vector<256x3072xf32>
    %29 = arith.select %24, %27, %28 : vector<256x3072xi1>, vector<256x3072xf32>
    %c0_15 = arith.constant 0 : index
    %c0_16 = arith.constant 0 : index
    %30 = vector.load %arg8[%c0_15, %c0_16] : memref<256x1xf32, #tpu.memory_space<vmem>>, vector<256x1xf32>
    %31 = arith.subf %17, %20 : vector<256x1xf32>
    %32 = math.exp %31 : vector<256x1xf32>
    %33 = arith.mulf %30, %32 : vector<256x1xf32>
    %cst_17 = arith.constant dense<0.000000e+00> : vector<256xf32>
    %34 = vector.multi_reduction <add>, %29, %cst_17 [1] : vector<256x3072xf32> to vector<256xf32>
    %35 = vector.shape_cast %34 : vector<256xf32> to vector<256x1xf32>
    %36 = arith.addf %33, %35 : vector<256x1xf32>
    %c0_18 = arith.constant 0 : index
    %c0_19 = arith.constant 0 : index
    %37 = vector.load %arg8[%c0_18, %c0_19] : memref<256x1xf32, #tpu.memory_space<vmem>>, vector<256x1xf32>
    tpu.vector_store %arg8[%c0_18, %c0_19], %36 {strides = array<i32>} : memref<256x1xf32, #tpu.memory_space<vmem>>, vector<256x1xf32>,
    %c0_20 = arith.constant 0 : index
    %c0_21 = arith.constant 0 : index
    %38 = vector.load %arg7[%c0_20, %c0_21] : memref<256x1xf32, #tpu.memory_space<vmem>>, vector<256x1xf32>
    tpu.vector_store %arg7[%c0_20, %c0_21], %20 {strides = array<i32>} : memref<256x1xf32, #tpu.memory_space<vmem>>, vector<256x1xf32>,
    %c4_i32 = arith.constant 4 : i32
    %39 = arith.cmpi eq, %arg1, %c4_i32 : i32
    %40 = arith.extui %39 : i1 to i32
    %c0_i32_22 = arith.constant 0 : i32
    %41 = arith.cmpi ne, %40, %c0_i32_22 : i32
    scf.if %41 {
      %c0_23 = arith.constant 0 : index
      %c0_24 = arith.constant 0 : index
      %42 = vector.load %arg8[%c0_23, %c0_24] : memref<256x1xf32, #tpu.memory_space<vmem>>, vector<256x1xf32>
      %c0_25 = arith.constant 0 : index
      %c0_26 = arith.constant 0 : index
      %43 = vector.load %arg6[%c0_25, %c0_26] : memref<256x1xf32, #tpu.memory_space<vmem>>, vector<256x1xf32>
      tpu.vector_store %arg6[%c0_25, %c0_26], %42 {strides = array<i32>} : memref<256x1xf32, #tpu.memory_space<vmem>>, vector<256x1xf32>,
    } else {
    }
    return
  }
  func.func @transform_0(%arg0: i32, %arg1: i32) -> (i32, i32) {
    %c0_i32 = arith.constant 0 : i32
    %c0_i32_0 = arith.constant 0 : i32
    return %arg0, %c0_i32 : i32, i32
  }
  func.func @transform_1(%arg0: i32, %arg1: i32) -> (i32, i32) {
    %c0_i32 = arith.constant 0 : i32
    %c0_i32_0 = arith.constant 0 : i32
    return %arg0, %c0_i32 : i32, i32
  }
  func.func @transform_2(%arg0: i32, %arg1: i32) -> (i32, i32) {
    %c0_i32 = arith.constant 0 : i32
    %c0_i32_0 = arith.constant 0 : i32
    return %arg1, %c0_i32 : i32, i32
  }
  func.func @transform_3(%arg0: i32, %arg1: i32) -> (i32, i32) {
    %c0_i32 = arith.constant 0 : i32
    %c0_i32_0 = arith.constant 0 : i32
    return %c0_i32, %arg1 : i32, i32
  }
  func.func @transform_4(%arg0: i32, %arg1: i32) -> (i32, i32) {
    %c0_i32 = arith.constant 0 : i32
    %c0_i32_0 = arith.constant 0 : i32
    return %arg0, %c0_i32 : i32, i32
  }
}

</mosaic_0001>

<llo_original>
// kernel: tpu_custom_call.1
$region0: #{tpu_custom_call.1}
  #allocation0 [shape = 'u32[]', space=smem, size = 0x4, offset = 0x4, fixed_abs, tag = 'smem constant byte address 0x4 - core index']
  #allocation1 [shape = 'u32[144,128]{1,0:T(1,128)}', space=vmem, size = 0x12000, scoped, tag = 'internal scratch']
  #allocation2 [shape = 'f32[256,1]{1,0:T(8,128)}', space=vmem, size = 0x20000, scoped, tag = 'scratch operand']
  #allocation3 [shape = 'f32[256,1]{1,0:T(8,128)}', space=vmem, size = 0x20000, scoped, tag = 'scratch operand']
  %s0 = inlined_call_operand.vmem [shape: f32[256,1], index: 0, kind: input, shape index: {}]
  %s1 = inlined_call_operand.vmem [shape: f32[256,64], index: 1, kind: input, shape index: {}]
  %s2 = inlined_call_operand.vmem [shape: f32[15360,64], index: 2, kind: input, shape index: {}]
  %s3 = inlined_call_operand.vmem [shape: f32[1,15360], index: 3, kind: input, shape index: {}]
  %s4 = inlined_call_operand.vmem [shape: f32[256,1], index: 4, kind: output, shape index: {}]
  %s5 = sld [smem:[#allocation0]]
  $region57: #{tpu_custom_call.1} parent=0
    _
  %s7 = ssub.s32 1, %s5
  %s8 = scalar_select 0, %s7, %s5
  loop: start=0, step=1, limit=7
  $region2: #{tpu_custom_call.1} parent=0 // loop_pre_header
    _
  $region3: #{tpu_custom_call.1} parent=0 // loop_header
    %s10 = sphi 0, %s14
    %p11 = scmp.ge.s32.totalorder %s10, 7
    %s17 = sphi 0, %s29
    %s18 = sphi 0, %s25
    %s19 = sphi 0, %s17
    %s20 = sphi 0, %s18
    %s21 = sphi 0, %s19
    %s22 = sphi 0, %s20
    %s32 = sphi 0, %s34
    %s35 = sphi 0, %s32
    %s36 = sphi 0, %s35
    %s52 = sphi 0, %s36
    %s58 = sphi 0, %s60
    %s61 = sphi 0, %s58
    %s62 = sphi 0, %s61
    %s78 = sphi 0, %s62
    %s84 = sphi 0, %s86
    %s87 = sphi 0, %s84
    %s88 = sphi 0, %s87
    %s104 = sphi 0, %s88
    %s110 = sphi 0, %s112
    %s113 = sphi 0, %s110
    %s114 = sphi 0, %s113
    %s130 = sphi 0, %s114
    %s136 = sphi 0, %s138
    %s139 = sphi 0, %s136
    %s140 = sphi 0, %s139
    %s156 = sphi 0, %s140
  $region4: #{tpu_custom_call.1} parent=0 // loop_header_branch
    %13 = sbr.rel (%p11) target = $region8
  $region5: #{tpu_custom_call.1} parent=0 // loop_body
    %s15 = ssub.s32 %s10, 1
    %s16 = ssub.s32 %s10, 2
    %s23 = sadd.s32 1, %s18
    %p24 = scmp.ge.s32.totalorder %s23, 5
    %s25 = scalar_select %p24, 0, %s23
    %s26 = sadd.s32 1, %s17
    %s27 = scalar_select %p24, %s26, %s17
    %p28 = scmp.ge.s32.totalorder %s27, 1
    %s29 = scalar_select %p28, 0, %s27
    %s30 = ssub.s32 %s17, %s29
    %p31 = scmp.eq.s32.totalorder %s30, 0
    %s33 = sadd.s32 %s32, 1
    %s34 = scalar_select %p31, %s32, %s33
    %p37 = pneg %p31
    %p38 = scmp.eq.s32.totalorder %s10, 4
    %p39 = por %p37, %p38
    %p40 = scmp.ne.s32.totalorder %s32, %s35
    %p41 = scmp.eq.s32.totalorder %s10, 0
    %p42 = por %p40, %p41
    %p43 = scmp.ne.s32.totalorder %s32, %s35
    %p44 = scmp.eq.s32.totalorder %s15, 4
    %p45 = por %p43, %p44
    %p46 = scmp.ne.s32.totalorder %s35, %s36
    %p47 = scmp.eq.s32.totalorder %s15, 0
    %p48 = por %p46, %p47
    %p49 = scmp.ne.s32.totalorder %s35, %s36
    %p50 = scmp.eq.s32.totalorder %s16, 4
    %p51 = por %p49, %p50
    %p53 = scmp.ne.s32.totalorder %s36, %s52
    %p54 = scmp.eq.s32.totalorder %s16, 0
    %p55 = por %p53, %p54
    %s56 = ssub.s32 %s17, %s29
    %p57 = scmp.eq.s32.totalorder %s56, 0
    %s59 = sadd.s32 %s58, 1
    %s60 = scalar_select %p57, %s58, %s59
    %p63 = pneg %p57
    %p64 = scmp.eq.s32.totalorder %s10, 4
    %p65 = por %p63, %p64
    %p66 = scmp.ne.s32.totalorder %s58, %s61
    %p67 = scmp.eq.s32.totalorder %s10, 0
    %p68 = por %p66, %p67
    %p69 = scmp.ne.s32.totalorder %s58, %s61
    %p70 = scmp.eq.s32.totalorder %s15, 4
    %p71 = por %p69, %p70
    %p72 = scmp.ne.s32.totalorder %s61, %s62
    %p73 = scmp.eq.s32.totalorder %s15, 0
    %p74 = por %p72, %p73
    %p75 = scmp.ne.s32.totalorder %s61, %s62
    %p76 = scmp.eq.s32.totalorder %s16, 4
    %p77 = por %p75, %p76
    %p79 = scmp.ne.s32.totalorder %s62, %s78
    %p80 = scmp.eq.s32.totalorder %s16, 0
    %p81 = por %p79, %p80
    %s82 = ssub.s32 %s18, %s25
    %p83 = scmp.eq.s32.totalorder %s82, 0
    %s85 = sadd.s32 %s84, 1
    %s86 = scalar_select %p83, %s84, %s85
    %p89 = pneg %p83
    %p90 = scmp.eq.s32.totalorder %s10, 4
    %p91 = por %p89, %p90
    %p92 = scmp.ne.s32.totalorder %s84, %s87
    %p93 = scmp.eq.s32.totalorder %s10, 0
    %p94 = por %p92, %p93
    %p95 = scmp.ne.s32.totalorder %s84, %s87
    %p96 = scmp.eq.s32.totalorder %s15, 4
    %p97 = por %p95, %p96
    %p98 = scmp.ne.s32.totalorder %s87, %s88
    %p99 = scmp.eq.s32.totalorder %s15, 0
    %p100 = por %p98, %p99
    %p101 = scmp.ne.s32.totalorder %s87, %s88
    %p102 = scmp.eq.s32.totalorder %s16, 4
    %p103 = por %p101, %p102
    %p105 = scmp.ne.s32.totalorder %s88, %s104
    %p106 = scmp.eq.s32.totalorder %s16, 0
    %p107 = por %p105, %p106
    %s108 = ssub.s32 %s18, %s25
    %p109 = scmp.eq.s32.totalorder %s108, 0
    %s111 = sadd.s32 %s110, 1
    %s112 = scalar_select %p109, %s110, %s111
    %p115 = pneg %p109
    %p116 = scmp.eq.s32.totalorder %s10, 4
    %p117 = por %p115, %p116
    %p118 = scmp.ne.s32.totalorder %s110, %s113
    %p119 = scmp.eq.s32.totalorder %s10, 0
    %p120 = por %p118, %p119
    %p121 = scmp.ne.s32.totalorder %s110, %s113
    %p122 = scmp.eq.s32.totalorder %s15, 4
    %p123 = por %p121, %p122
    %p124 = scmp.ne.s32.totalorder %s113, %s114
    %p125 = scmp.eq.s32.totalorder %s15, 0
    %p126 = por %p124, %p125
    %p127 = scmp.ne.s32.totalorder %s113, %s114
    %p128 = scmp.eq.s32.totalorder %s16, 4
    %p129 = por %p127, %p128
    %p131 = scmp.ne.s32.totalorder %s114, %s130
    %p132 = scmp.eq.s32.totalorder %s16, 0
    %p133 = por %p131, %p132
    %s134 = ssub.s32 %s17, %s29
    %p135 = scmp.eq.s32.totalorder %s134, 0
    %s137 = sadd.s32 %s136, 1
    %s138 = scalar_select %p135, %s136, %s137
    %p141 = pneg %p135
    %p142 = scmp.eq.s32.totalorder %s10, 4
    %p143 = por %p141, %p142
    %p144 = scmp.ne.s32.totalorder %s136, %s139
    %p145 = scmp.eq.s32.totalorder %s10, 0
    %p146 = por %p144, %p145
    %p147 = scmp.ne.s32.totalorder %s136, %s139
    %p148 = scmp.eq.s32.totalorder %s15, 4
    %p149 = por %p147, %p148
    %p150 = scmp.ne.s32.totalorder %s139, %s140
    %p151 = scmp.eq.s32.totalorder %s15, 0
    %p152 = por %p150, %p151
    %p153 = scmp.ne.s32.totalorder %s139, %s140
    %p154 = scmp.eq.s32.totalorder %s16, 4
    %p155 = por %p153, %p154
    %p157 = scmp.ne.s32.totalorder %s140, %s156
    %p158 = scmp.eq.s32.totalorder %s16, 0
    %p159 = por %p157, %p158
    %p160 = scmp.le.s32.totalorder 1, %s10
    %p161 = scmp.lt.s32.totalorder %s10, 6
    %p162 = pnand %p160, %p161
    %p163 = pneg %p162
    // Predicated region
    $region9: #{tpu_custom_call.1} parent=5 // pred_check
      _
    $region10: #{tpu_custom_call.1} parent=5 // pred_check_branch
      %165 = sbr.rel (%p162) target = $region12
    $region11: #{tpu_custom_call.1} parent=5 // pred_region
      %s166 = ssub.s32 %s10, 1
      // Predicated region
      $region13: #{tpu_custom_call.1} parent=11 // pred_check
        %p167 = pneg %p48
      $region14: #{tpu_custom_call.1} parent=11 // pred_check_branch
        %169 = sbr.rel (%p167) target = $region16
      $region15: #{tpu_custom_call.1} parent=11 // pred_region
        %s170 = smul.u32 32, %s19
        %p171 = scmp.lt.s32.totalorder %s170, 31
        %s172 = scalar_select %p171, %s170, 31
        %s173 = smul.addr %s172, 8
        %s174 = scalar_lea.vmem %s0, %s173
        %s175 = smul.u32 32, %s19
      $region16: #{tpu_custom_call.1} parent=11 // pred_fallthru
        _
      // Predicated region
      $region17: #{tpu_custom_call.1} parent=11 // pred_check
        %p176 = pneg %p74
      $region18: #{tpu_custom_call.1} parent=11 // pred_check_branch
        %178 = sbr.rel (%p176) target = $region20
      $region19: #{tpu_custom_call.1} parent=11 // pred_region
        %s179 = smul.u32 32, %s19
        %p180 = scmp.lt.s32.totalorder %s179, 31
        %s181 = scalar_select %p180, %s179, 31
        %s182 = smul.addr %s181, 8
        %s183 = scalar_lea.vmem %s1, %s182
        %s184 = smul.u32 32, %s19
      $region20: #{tpu_custom_call.1} parent=11 // pred_fallthru
        _
    $region12: #{tpu_custom_call.1} parent=5 // pred_fallthru
      _
    %p185 = scmp.lt.s32.totalorder %s10, 5
    // Predicated region
    $region21: #{tpu_custom_call.1} parent=5 // pred_check
      %p186 = pneg %p185
    $region22: #{tpu_custom_call.1} parent=5 // pred_check_branch
      %188 = sbr.rel (%p186) target = $region24
    $region23: #{tpu_custom_call.1} parent=5 // pred_region
      // Predicated region
      $region25: #{tpu_custom_call.1} parent=23 // pred_check
        %p189 = pneg %p94
      $region26: #{tpu_custom_call.1} parent=23 // pred_check_branch
        %191 = sbr.rel (%p189) target = $region28
      $region27: #{tpu_custom_call.1} parent=23 // pred_region
        %s192 = smul.u32 384, %s18
        %p193 = scmp.lt.s32.totalorder %s192, 1919
        %s194 = scalar_select %p193, %s192, 1919
        %s195 = smul.addr %s194, 8
        %s196 = scalar_lea.vmem %s2, %s195
        %s197 = smul.u32 384, %s18
      $region28: #{tpu_custom_call.1} parent=23 // pred_fallthru
        _
      // Predicated region
      $region29: #{tpu_custom_call.1} parent=23 // pred_check
        %p198 = pneg %p120
      $region30: #{tpu_custom_call.1} parent=23 // pred_check_branch
        %200 = sbr.rel (%p198) target = $region32
      $region31: #{tpu_custom_call.1} parent=23 // pred_region
        %s201 = smul.u32 24, %s18
        %p202 = scmp.lt.s32.totalorder %s201, 119
        %s203 = scalar_select %p202, %s201, 119
        %s204 = scalar_lea.vmem %s3, %s203
        %s205 = smul.u32 24, %s18
      $region32: #{tpu_custom_call.1} parent=23 // pred_fallthru
        _
    $region24: #{tpu_custom_call.1} parent=5 // pred_fallthru
      _
    %p206 = scmp.le.s32.totalorder 1, %s10
    %p207 = scmp.lt.s32.totalorder %s10, 6
    %p208 = pnand %p206, %p207
    %p209 = pneg %p208
    // Predicated region
    $region33: #{tpu_custom_call.1} parent=5 // pred_check
      _
    $region34: #{tpu_custom_call.1} parent=5 // pred_check_branch
      %211 = sbr.rel (%p208) target = $region36
    $region35: #{tpu_custom_call.1} parent=5 // pred_region
      %s212 = ssub.s32 %s10, 1
      %s213 = smul.u32 32, %s19
      %p214 = scmp.lt.s32.totalorder %s213, 31
      %s215 = scalar_select %p214, %s213, 31
      %s216 = smul.addr %s215, 8
      %s217 = scalar_lea.vmem %s0, %s216
      %p218 = pneg %p48
      %p219 = pneg %p45
      %s220 = smul.u32 32, %s19
      %p221 = scmp.lt.s32.totalorder %s220, 31
      %s222 = scalar_select %p221, %s220, 31
      %s223 = smul.addr %s222, 8
      %s224 = scalar_lea.vmem %s1, %s223
      %p225 = pneg %p74
      %p226 = pneg %p71
      %s227 = smul.u32 384, %s20
      %p228 = scmp.lt.s32.totalorder %s227, 1919
      %s229 = scalar_select %p228, %s227, 1919
      %s230 = smul.addr %s229, 8
      %s231 = scalar_lea.vmem %s2, %s230
      %p232 = pneg %p100
      %p233 = pneg %p97
      %s234 = smul.u32 24, %s20
      %p235 = scmp.lt.s32.totalorder %s234, 119
      %s236 = scalar_select %p235, %s234, 119
      %s237 = scalar_lea.vmem %s3, %s236
      %p238 = pneg %p126
      %p239 = pneg %p123
      %p240 = pneg %p152
      %p241 = pneg %p149
      %s242 = smul.u32 32, %s19
      %p243 = scmp.lt.s32.totalorder %s242, 31
      %s244 = scalar_select %p243, %s242, 31
      %s245 = smul.addr %s244, 8
      %s246 = scalar_lea.vmem %s4, %s245
      %s247 = smul.u32 32, %s19
      %p248 = scmp.lt.s32.totalorder %s247, 31
      %s249 = scalar_select %p248, %s247, 31
      %s250 = smul.addr %s249, 8
      %s251 = scalar_lea.vmem %s0, %s250
      %s252 = smul.u32 32, %s19
      %s253 = smul.u32 32, %s19
      %p254 = scmp.lt.s32.totalorder %s253, 31
      %s255 = scalar_select %p254, %s253, 31
      %s256 = smul.addr %s255, 8
      %s257 = scalar_lea.vmem %s1, %s256
      %s258 = smul.u32 32, %s19
      %s259 = smul.u32 384, %s20
      %p260 = scmp.lt.s32.totalorder %s259, 1919
      %s261 = scalar_select %p260, %s259, 1919
      %s262 = smul.addr %s261, 8
      %s263 = scalar_lea.vmem %s2, %s262
      %s264 = smul.u32 384, %s20
      %s265 = smul.u32 24, %s20
      %p266 = scmp.lt.s32.totalorder %s265, 119
      %s267 = scalar_select %p266, %s265, 119
      %s268 = scalar_lea.vmem %s3, %s267
      %s269 = smul.u32 24, %s20
      %s270 = smul.u32 32, %s19
      %p271 = scmp.lt.s32.totalorder %s270, 31
      %s272 = scalar_select %p271, %s270, 31
      %s273 = smul.addr %s272, 8
      %s274 = scalar_lea.vmem %s4, %s273
      %s275 = smul.u32 32, %s19
      %p277 = scmp.eq.s32.totalorder %s20, 0
      // Predicated region
      $region37: #{tpu_custom_call.1} parent=35 // pred_check
        %p278 = pneg %p277
      $region38: #{tpu_custom_call.1} parent=35 // pred_check_branch
        %280 = sbr.rel (%p278) target = $region40
      $region39: #{tpu_custom_call.1} parent=35 // pred_region
        %vm281 = vcmask 7168
        %282 = vst.msk [vmem:[#allocation2] sm:$0xff] %vm281, -1e+30
        %283 = vst.msk [vmem:[#allocation2 + $0x8] sm:$0xff] %vm281, -1e+30
        %284 = vst.msk [vmem:[#allocation2 + $0x10] sm:$0xff] %vm281, -1e+30
        %285 = vst.msk [vmem:[#allocation2 + $0x18] sm:$0xff] %vm281, -1e+30
        %286 = vst.msk [vmem:[#allocation2 + $0x20] sm:$0xff] %vm281, -1e+30
        %287 = vst.msk [vmem:[#allocation2 + $0x28] sm:$0xff] %vm281, -1e+30
        %288 = vst.msk [vmem:[#allocation2 + $0x30] sm:$0xff] %vm281, -1e+30
        %289 = vst.msk [vmem:[#allocation2 + $0x38] sm:$0xff] %vm281, -1e+30
        %290 = vst.msk [vmem:[#allocation2 + $0x40] sm:$0xff] %vm281, -1e+30
        %291 = vst.msk [vmem:[#allocation2 + $0x48] sm:$0xff] %vm281, -1e+30
        %292 = vst.msk [vmem:[#allocation2 + $0x50] sm:$0xff] %vm281, -1e+30
        %293 = vst.msk [vmem:[#allocation2 + $0x58] sm:$0xff] %vm281, -1e+30
        %294 = vst.msk [vmem:[#allocation2 + $0x60] sm:$0xff] %vm281, -1e+30
        %295 = vst.msk [vmem:[#allocation2 + $0x68] sm:$0xff] %vm281, -1e+30
        %296 = vst.msk [vmem:[#allocation2 + $0x70] sm:$0xff] %vm281, -1e+30
        %297 = vst.msk [vmem:[#allocation2 + $0x78] sm:$0xff] %vm281, -1e+30
        %298 = vst.msk [vmem:[#allocation2 + $0x80] sm:$0xff] %vm281, -1e+30
        %299 = vst.msk [vmem:[#allocation2 + $0x88] sm:$0xff] %vm281, -1e+30
        %300 = vst.msk [vmem:[#allocation2 + $0x90] sm:$0xff] %vm281, -1e+30
        %301 = vst.msk [vmem:[#allocation2 + $0x98] sm:$0xff] %vm281, -1e+30
        %302 = vst.msk [vmem:[#allocation2 + $0xa0] sm:$0xff] %vm281, -1e+30
        %303 = vst.msk [vmem:[#allocation2 + $0xa8] sm:$0xff] %vm281, -1e+30
        %304 = vst.msk [vmem:[#allocation2 + $0xb0] sm:$0xff] %vm281, -1e+30
        %305 = vst.msk [vmem:[#allocation2 + $0xb8] sm:$0xff] %vm281, -1e+30
        %306 = vst.msk [vmem:[#allocation2 + $0xc0] sm:$0xff] %vm281, -1e+30
        %307 = vst.msk [vmem:[#allocation2 + $0xc8] sm:$0xff] %vm281, -1e+30
        %308 = vst.msk [vmem:[#allocation2 + $0xd0] sm:$0xff] %vm281, -1e+30
        %309 = vst.msk [vmem:[#allocation2 + $0xd8] sm:$0xff] %vm281, -1e+30
        %310 = vst.msk [vmem:[#allocation2 + $0xe0] sm:$0xff] %vm281, -1e+30
        %311 = vst.msk [vmem:[#allocation2 + $0xe8] sm:$0xff] %vm281, -1e+30
        %312 = vst.msk [vmem:[#allocation2 + $0xf0] sm:$0xff] %vm281, -1e+30
        %313 = vst.msk [vmem:[#allocation2 + $0xf8] sm:$0xff] %vm281, -1e+30
        %314 = vst.msk [vmem:[#allocation3] sm:$0xff] %vm281, 0.0
        %315 = vst.msk [vmem:[#allocation3 + $0x8] sm:$0xff] %vm281, 0.0
        %316 = vst.msk [vmem:[#allocation3 + $0x10] sm:$0xff] %vm281, 0.0
        %317 = vst.msk [vmem:[#allocation3 + $0x18] sm:$0xff] %vm281, 0.0
        %318 = vst.msk [vmem:[#allocation3 + $0x20] sm:$0xff] %vm281, 0.0
        %319 = vst.msk [vmem:[#allocation3 + $0x28] sm:$0xff] %vm281, 0.0
        %320 = vst.msk [vmem:[#allocation3 + $0x30] sm:$0xff] %vm281, 0.0
        %321 = vst.msk [vmem:[#allocation3 + $0x38] sm:$0xff] %vm281, 0.0
        %322 = vst.msk [vmem:[#allocation3 + $0x40] sm:$0xff] %vm281, 0.0
        %323 = vst.msk [vmem:[#allocation3 + $0x48] sm:$0xff] %vm281, 0.0
        %324 = vst.msk [vmem:[#allocation3 + $0x50] sm:$0xff] %vm281, 0.0
        %325 = vst.msk [vmem:[#allocation3 + $0x58] sm:$0xff] %vm281, 0.0
        %326 = vst.msk [vmem:[#allocation3 + $0x60] sm:$0xff] %vm281, 0.0
        %327 = vst.msk [vmem:[#allocation3 + $0x68] sm:$0xff] %vm281, 0.0
        %328 = vst.msk [vmem:[#allocation3 + $0x70] sm:$0xff] %vm281, 0.0
        %329 = vst.msk [vmem:[#allocation3 + $0x78] sm:$0xff] %vm281, 0.0
        %330 = vst.msk [vmem:[#allocation3 + $0x80] sm:$0xff] %vm281, 0.0
        %331 = vst.msk [vmem:[#allocation3 + $0x88] sm:$0xff] %vm281, 0.0
        %332 = vst.msk [vmem:[#allocation3 + $0x90] sm:$0xff] %vm281, 0.0
        %333 = vst.msk [vmem:[#allocation3 + $0x98] sm:$0xff] %vm281, 0.0
        %334 = vst.msk [vmem:[#allocation3 + $0xa0] sm:$0xff] %vm281, 0.0
        %335 = vst.msk [vmem:[#allocation3 + $0xa8] sm:$0xff] %vm281, 0.0
        %336 = vst.msk [vmem:[#allocation3 + $0xb0] sm:$0xff] %vm281, 0.0
        %337 = vst.msk [vmem:[#allocation3 + $0xb8] sm:$0xff] %vm281, 0.0
        %338 = vst.msk [vmem:[#allocation3 + $0xc0] sm:$0xff] %vm281, 0.0
        %339 = vst.msk [vmem:[#allocation3 + $0xc8] sm:$0xff] %vm281, 0.0
        %340 = vst.msk [vmem:[#allocation3 + $0xd0] sm:$0xff] %vm281, 0.0
        %341 = vst.msk [vmem:[#allocation3 + $0xd8] sm:$0xff] %vm281, 0.0
        %342 = vst.msk [vmem:[#allocation3 + $0xe0] sm:$0xff] %vm281, 0.0
        %343 = vst.msk [vmem:[#allocation3 + $0xe8] sm:$0xff] %vm281, 0.0
        %344 = vst.msk [vmem:[#allocation3 + $0xf0] sm:$0xff] %vm281, 0.0
        %345 = vst.msk [vmem:[#allocation3 + $0xf8] sm:$0xff] %vm281, 0.0
      $region40: #{tpu_custom_call.1} parent=35 // pred_fallthru
        _
      %v346 = vld [vmem:[%s257] sm:$0xff]
      %v347 = vld [vmem:[%s257 + $0x8] sm:$0xff]
      %v348 = vld [vmem:[%s257 + $0x10] sm:$0xff]
      %v349 = vld [vmem:[%s257 + $0x18] sm:$0xff]
      %v350 = vld [vmem:[%s257 + $0x20] sm:$0xff]
      %v351 = vld [vmem:[%s257 + $0x28] sm:$0xff]
      %v352 = vld [vmem:[%s257 + $0x30] sm:$0xff]
      %v353 = vld [vmem:[%s257 + $0x38] sm:$0xff]
      %v354 = vld [vmem:[%s257 + $0x40] sm:$0xff]
      %v355 = vld [vmem:[%s257 + $0x48] sm:$0xff]
      %v356 = vld [vmem:[%s257 + $0x50] sm:$0xff]
      %v357 = vld [vmem:[%s257 + $0x58] sm:$0xff]
      %v358 = vld [vmem:[%s257 + $0x60] sm:$0xff]
      %v359 = vld [vmem:[%s257 + $0x68] sm:$0xff]
      %v360 = vld [vmem:[%s257 + $0x70] sm:$0xff]
      %v361 = vld [vmem:[%s257 + $0x78] sm:$0xff]
      %v362 = vld [vmem:[%s257 + $0x80] sm:$0xff]
      %v363 = vld [vmem:[%s257 + $0x88] sm:$0xff]
      %v364 = vld [vmem:[%s257 + $0x90] sm:$0xff]
      %v365 = vld [vmem:[%s257 + $0x98] sm:$0xff]
      %v366 = vld [vmem:[%s257 + $0xa0] sm:$0xff]
      %v367 = vld [vmem:[%s257 + $0xa8] sm:$0xff]
      %v368 = vld [vmem:[%s257 + $0xb0] sm:$0xff]
      %v369 = vld [vmem:[%s257 + $0xb8] sm:$0xff]
      %v370 = vld [vmem:[%s257 + $0xc0] sm:$0xff]
      %v371 = vld [vmem:[%s257 + $0xc8] sm:$0xff]
      %v372 = vld [vmem:[%s257 + $0xd0] sm:$0xff]
      %v373 = vld [vmem:[%s257 + $0xd8] sm:$0xff]
      %v374 = vld [vmem:[%s257 + $0xe0] sm:$0xff]
      %v375 = vld [vmem:[%s257 + $0xe8] sm:$0xff]
      %v376 = vld [vmem:[%s257 + $0xf0] sm:$0xff]
      %v377 = vld [vmem:[%s257 + $0xf8] sm:$0xff]
      %v378 = vmul.f32 %v346, 10.0
      %v379 = vmul.f32 %v347, 10.0
      %v380 = vmul.f32 %v348, 10.0
      %v381 = vmul.f32 %v349, 10.0
      %v382 = vmul.f32 %v350, 10.0
      %v383 = vmul.f32 %v351, 10.0
      %v384 = vmul.f32 %v352, 10.0
      %v385 = vmul.f32 %v353, 10.0
      %v386 = vmul.f32 %v354, 10.0
      %v387 = vmul.f32 %v355, 10.0
      %v388 = vmul.f32 %v356, 10.0
      %v389 = vmul.f32 %v357, 10.0
      %v390 = vmul.f32 %v358, 10.0
      %v391 = vmul.f32 %v359, 10.0
      %v392 = vmul.f32 %v360, 10.0
      %v393 = vmul.f32 %v361, 10.0
      %v394 = vmul.f32 %v362, 10.0
      %v395 = vmul.f32 %v363, 10.0
      %v396 = vmul.f32 %v364, 10.0
      %v397 = vmul.f32 %v365, 10.0
      %v398 = vmul.f32 %v366, 10.0
      %v399 = vmul.f32 %v367, 10.0
      %v400 = vmul.f32 %v368, 10.0
      %v401 = vmul.f32 %v369, 10.0
      %v402 = vmul.f32 %v370, 10.0
      %v403 = vmul.f32 %v371, 10.0
      %v404 = vmul.f32 %v372, 10.0
      %v405 = vmul.f32 %v373, 10.0
      %v406 = vmul.f32 %v374, 10.0
      %v407 = vmul.f32 %v375, 10.0
      %v408 = vmul.f32 %v376, 10.0
      %v409 = vmul.f32 %v377, 10.0
      %v410 = vpack.c.bf16 %v379, %v378
      %v411 = vpack.c.bf16 %v381, %v380
      %v412 = vpack.c.bf16 %v383, %v382
      %v413 = vpack.c.bf16 %v385, %v384
      %v414 = vpack.c.bf16 %v387, %v386
      %v415 = vpack.c.bf16 %v389, %v388
      %v416 = vpack.c.bf16 %v391, %v390
      %v417 = vpack.c.bf16 %v393, %v392
      %v418 = vpack.c.bf16 %v395, %v394
      %v419 = vpack.c.bf16 %v397, %v396
      %v420 = vpack.c.bf16 %v399, %v398
      %v421 = vpack.c.bf16 %v401, %v400
      %v422 = vpack.c.bf16 %v403, %v402
      %v423 = vpack.c.bf16 %v405, %v404
      %v424 = vpack.c.bf16 %v407, %v406
      %v425 = vpack.c.bf16 %v409, %v408
      %v426 = vld [vmem:[%s263] sm:$0xff]
      %v427 = vld [vmem:[%s263 + $0x8] sm:$0xff]
      %v428 = vld [vmem:[%s263 + $0x10] sm:$0xff]
      %v429 = vld [vmem:[%s263 + $0x18] sm:$0xff]
      %v430 = vld [vmem:[%s263 + $0x20] sm:$0xff]
      %v431 = vld [vmem:[%s263 + $0x28] sm:$0xff]
      %v432 = vld [vmem:[%s263 + $0x30] sm:$0xff]
      %v433 = vld [vmem:[%s263 + $0x38] sm:$0xff]
      %v434 = vld [vmem:[%s263 + $0x40] sm:$0xff]
      %v435 = vld [vmem:[%s263 + $0x48] sm:$0xff]
      %v436 = vld [vmem:[%s263 + $0x50] sm:$0xff]
      %v437 = vld [vmem:[%s263 + $0x58] sm:$0xff]
      %v438 = vld [vmem:[%s263 + $0x60] sm:$0xff]
      %v439 = vld [vmem:[%s263 + $0x68] sm:$0xff]
      %v440 = vld [vmem:[%s263 + $0x70] sm:$0xff]
      %v441 = vld [vmem:[%s263 + $0x78] sm:$0xff]
      %v442 = vld [vmem:[%s263 + $0x80] sm:$0xff]
      %v443 = vld [vmem:[%s263 + $0x88] sm:$0xff]
      %v444 = vld [vmem:[%s263 + $0x90] sm:$0xff]
      %v445 = vld [vmem:[%s263 + $0x98] sm:$0xff]
      %v446 = vld [vmem:[%s263 + $0xa0] sm:$0xff]
      %v447 = vld [vmem:[%s263 + $0xa8] sm:$0xff]
      %v448 = vld [vmem:[%s263 + $0xb0] sm:$0xff]
      %v449 = vld [vmem:[%s263 + $0xb8] sm:$0xff]
      %v450 = vld [vmem:[%s263 + $0xc0] sm:$0xff]
      %v451 = vld [vmem:[%s263 + $0xc8] sm:$0xff]
      %v452 = vld [vmem:[%s263 + $0xd0] sm:$0xff]
      %v453 = vld [vmem:[%s263 + $0xd8] sm:$0xff]
      %v454 = vld [vmem:[%s263 + $0xe0] sm:$0xff]
      %v455 = vld [vmem:[%s263 + $0xe8] sm:$0xff]
      %v456 = vld [vmem:[%s263 + $0xf0] sm:$0xff]
      %v457 = vld [vmem:[%s263 + $0xf8] sm:$0xff]
      %v458 = vld [vmem:[%s263 + $0x100] sm:$0xff]
      %v459 = vld [vmem:[%s263 + $0x108] sm:$0xff]
      %v460 = vld [vmem:[%s263 + $0x110] sm:$0xff]
      %v461 = vld [vmem:[%s263 + $0x118] sm:$0xff]
      %v462 = vld [vmem:[%s263 + $0x120] sm:$0xff]
      %v463 = vld [vmem:[%s263 + $0x128] sm:$0xff]
      %v464 = vld [vmem:[%s263 + $0x130] sm:$0xff]
      %v465 = vld [vmem:[%s263 + $0x138] sm:$0xff]
      %v466 = vld [vmem:[%s263 + $0x140] sm:$0xff]
      %v467 = vld [vmem:[%s263 + $0x148] sm:$0xff]
      %v468 = vld [vmem:[%s263 + $0x150] sm:$0xff]
      %v469 = vld [vmem:[%s263 + $0x158] sm:$0xff]
      %v470 = vld [vmem:[%s263 + $0x160] sm:$0xff]
      %v471 = vld [vmem:[%s263 + $0x168] sm:$0xff]
      %v472 = vld [vmem:[%s263 + $0x170] sm:$0xff]
      %v473 = vld [vmem:[%s263 + $0x178] sm:$0xff]
      %v474 = vld [vmem:[%s263 + $0x180] sm:$0xff]
      %v475 = vld [vmem:[%s263 + $0x188] sm:$0xff]
      %v476 = vld [vmem:[%s263 + $0x190] sm:$0xff]
      %v477 = vld [vmem:[%s263 + $0x198] sm:$0xff]
      %v478 = vld [vmem:[%s263 + $0x1a0] sm:$0xff]
      %v479 = vld [vmem:[%s263 + $0x1a8] sm:$0xff]
      %v480 = vld [vmem:[%s263 + $0x1b0] sm:$0xff]
      %v481 = vld [vmem:[%s263 + $0x1b8] sm:$0xff]
      %v482 = vld [vmem:[%s263 + $0x1c0] sm:$0xff]
      %v483 = vld [vmem:[%s263 + $0x1c8] sm:$0xff]
      %v484 = vld [vmem:[%s263 + $0x1d0] sm:$0xff]
      %v485 = vld [vmem:[%s263 + $0x1d8] sm:$0xff]
      %v486 = vld [vmem:[%s263 + $0x1e0] sm:$0xff]
      %v487 = vld [vmem:[%s263 + $0x1e8] sm:$0xff]
      %v488 = vld [vmem:[%s263 + $0x1f0] sm:$0xff]
      %v489 = vld [vmem:[%s263 + $0x1f8] sm:$0xff]
      %v490 = vld [vmem:[%s263 + $0x200] sm:$0xff]
      %v491 = vld [vmem:[%s263 + $0x208] sm:$0xff]
      %v492 = vld [vmem:[%s263 + $0x210] sm:$0xff]
      %v493 = vld [vmem:[%s263 + $0x218] sm:$0xff]
      %v494 = vld [vmem:[%s263 + $0x220] sm:$0xff]
      %v495 = vld [vmem:[%s263 + $0x228] sm:$0xff]
      %v496 = vld [vmem:[%s263 + $0x230] sm:$0xff]
      %v497 = vld [vmem:[%s263 + $0x238] sm:$0xff]
      %v498 = vld [vmem:[%s263 + $0x240] sm:$0xff]
      %v499 = vld [vmem:[%s263 + $0x248] sm:$0xff]
      %v500 = vld [vmem:[%s263 + $0x250] sm:$0xff]
      %v501 = vld [vmem:[%s263 + $0x258] sm:$0xff]
      %v502 = vld [vmem:[%s263 + $0x260] sm:$0xff]
      %v503 = vld [vmem:[%s263 + $0x268] sm:$0xff]
      %v504 = vld [vmem:[%s263 + $0x270] sm:$0xff]
      %v505 = vld [vmem:[%s263 + $0x278] sm:$0xff]
      %v506 = vld [vmem:[%s263 + $0x280] sm:$0xff]
      %v507 = vld [vmem:[%s263 + $0x288] sm:$0xff]
      %v508 = vld [vmem:[%s263 + $0x290] sm:$0xff]
      %v509 = vld [vmem:[%s263 + $0x298] sm:$0xff]
      %v510 = vld [vmem:[%s263 + $0x2a0] sm:$0xff]
      %v511 = vld [vmem:[%s263 + $0x2a8] sm:$0xff]
      %v512 = vld [vmem:[%s263 + $0x2b0] sm:$0xff]
      %v513 = vld [vmem:[%s263 + $0x2b8] sm:$0xff]
      %v514 = vld [vmem:[%s263 + $0x2c0] sm:$0xff]
      %v515 = vld [vmem:[%s263 + $0x2c8] sm:$0xff]
      %v516 = vld [vmem:[%s263 + $0x2d0] sm:$0xff]
      %v517 = vld [vmem:[%s263 + $0x2d8] sm:$0xff]
      %v518 = vld [vmem:[%s263 + $0x2e0] sm:$0xff]
      %v519 = vld [vmem:[%s263 + $0x2e8] sm:$0xff]
      %v520 = vld [vmem:[%s263 + $0x2f0] sm:$0xff]
      %v521 = vld [vmem:[%s263 + $0x2f8] sm:$0xff]
      %v522 = vld [vmem:[%s263 + $0x300] sm:$0xff]
      %v523 = vld [vmem:[%s263 + $0x308] sm:$0xff]
      %v524 = vld [vmem:[%s263 + $0x310] sm:$0xff]
      %v525 = vld [vmem:[%s263 + $0x318] sm:$0xff]
      %v526 = vld [vmem:[%s263 + $0x320] sm:$0xff]
      %v527 = vld [vmem:[%s263 + $0x328] sm:$0xff]
      %v528 = vld [vmem:[%s263 + $0x330] sm:$0xff]
      %v529 = vld [vmem:[%s263 + $0x338] sm:$0xff]
      %v530 = vld [vmem:[%s263 + $0x340] sm:$0xff]
      %v531 = vld [vmem:[%s263 + $0x348] sm:$0xff]
      %v532 = vld [vmem:[%s263 + $0x350] sm:$0xff]
      %v533 = vld [vmem:[%s263 + $0x358] sm:$0xff]
      %v534 = vld [vmem:[%s263 + $0x360] sm:$0xff]
      %v535 = vld [vmem:[%s263 + $0x368] sm:$0xff]
      %v536 = vld [vmem:[%s263 + $0x370] sm:$0xff]
      %v537 = vld [vmem:[%s263 + $0x378] sm:$0xff]
      %v538 = vld [vmem:[%s263 + $0x380] sm:$0xff]
      %v539 = vld [vmem:[%s263 + $0x388] sm:$0xff]
      %v540 = vld [vmem:[%s263 + $0x390] sm:$0xff]
      %v541 = vld [vmem:[%s263 + $0x398] sm:$0xff]
      %v542 = vld [vmem:[%s263 + $0x3a0] sm:$0xff]
      %v543 = vld [vmem:[%s263 + $0x3a8] sm:$0xff]
      %v544 = vld [vmem:[%s263 + $0x3b0] sm:$0xff]
      %v545 = vld [vmem:[%s263 + $0x3b8] sm:$0xff]
      %v546 = vld [vmem:[%s263 + $0x3c0] sm:$0xff]
      %v547 = vld [vmem:[%s263 + $0x3c8] sm:$0xff]
      %v548 = vld [vmem:[%s263 + $0x3d0] sm:$0xff]
      %v549 = vld [vmem:[%s263 + $0x3d8] sm:$0xff]
      %v550 = vld [vmem:[%s263 + $0x3e0] sm:$0xff]
      %v551 = vld [vmem:[%s263 + $0x3e8] sm:$0xff]
      %v552 = vld [vmem:[%s263 + $0x3f0] sm:$0xff]
      %v553 = vld [vmem:[%s263 + $0x3f8] sm:$0xff]
      %v554 = vld [vmem:[%s263 + $0x400] sm:$0xff]
      %v555 = vld [vmem:[%s263 + $0x408] sm:$0xff]
      %v556 = vld [vmem:[%s263 + $0x410] sm:$0xff]
      %v557 = vld [vmem:[%s263 + $0x418] sm:$0xff]
      %v558 = vld [vmem:[%s263 + $0x420] sm:$0xff]
      %v559 = vld [vmem:[%s263 + $0x428] sm:$0xff]
      %v560 = vld [vmem:[%s263 + $0x430] sm:$0xff]
      %v561 = vld [vmem:[%s263 + $0x438] sm:$0xff]
      %v562 = vld [vmem:[%s263 + $0x440] sm:$0xff]
      %v563 = vld [vmem:[%s263 + $0x448] sm:$0xff]
      %v564 = vld [vmem:[%s263 + $0x450] sm:$0xff]
      %v565 = vld [vmem:[%s263 + $0x458] sm:$0xff]
      %v566 = vld [vmem:[%s263 + $0x460] sm:$0xff]
      %v567 = vld [vmem:[%s263 + $0x468] sm:$0xff]
      %v568 = vld [vmem:[%s263 + $0x470] sm:$0xff]
      %v569 = vld [vmem:[%s263 + $0x478] sm:$0xff]
      %v570 = vld [vmem:[%s263 + $0x480] sm:$0xff]
      %v571 = vld [vmem:[%s263 + $0x488] sm:$0xff]
      %v572 = vld [vmem:[%s263 + $0x490] sm:$0xff]
      %v573 = vld [vmem:[%s263 + $0x498] sm:$0xff]
      %v574 = vld [vmem:[%s263 + $0x4a0] sm:$0xff]
      %v575 = vld [vmem:[%s263 + $0x4a8] sm:$0xff]
      %v576 = vld [vmem:[%s263 + $0x4b0] sm:$0xff]
      %v577 = vld [vmem:[%s263 + $0x4b8] sm:$0xff]
      %v578 = vld [vmem:[%s263 + $0x4c0] sm:$0xff]
      %v579 = vld [vmem:[%s263 + $0x4c8] sm:$0xff]
      %v580 = vld [vmem:[%s263 + $0x4d0] sm:$0xff]
      %v581 = vld [vmem:[%s263 + $0x4d8] sm:$0xff]
      %v582 = vld [vmem:[%s263 + $0x4e0] sm:$0xff]
      %v583 = vld [vmem:[%s263 + $0x4e8] sm:$0xff]
      %v584 = vld [vmem:[%s263 + $0x4f0] sm:$0xff]
      %v585 = vld [vmem:[%s263 + $0x4f8] sm:$0xff]
      %v586 = vld [vmem:[%s263 + $0x500] sm:$0xff]
      %v587 = vld [vmem:[%s263 + $0x508] sm:$0xff]
      %v588 = vld [vmem:[%s263 + $0x510] sm:$0xff]
      %v589 = vld [vmem:[%s263 + $0x518] sm:$0xff]
      %v590 = vld [vmem:[%s263 + $0x520] sm:$0xff]
      %v591 = vld [vmem:[%s263 + $0x528] sm:$0xff]
      %v592 = vld [vmem:[%s263 + $0x530] sm:$0xff]
      %v593 = vld [vmem:[%s263 + $0x538] sm:$0xff]
      %v594 = vld [vmem:[%s263 + $0x540] sm:$0xff]
      %v595 = vld [vmem:[%s263 + $0x548] sm:$0xff]
      %v596 = vld [vmem:[%s263 + $0x550] sm:$0xff]
      %v597 = vld [vmem:[%s263 + $0x558] sm:$0xff]
      %v598 = vld [vmem:[%s263 + $0x560] sm:$0xff]
      %v599 = vld [vmem:[%s263 + $0x568] sm:$0xff]
      %v600 = vld [vmem:[%s263 + $0x570] sm:$0xff]
      %v601 = vld [vmem:[%s263 + $0x578] sm:$0xff]
      %v602 = vld [vmem:[%s263 + $0x580] sm:$0xff]
      %v603 = vld [vmem:[%s263 + $0x588] sm:$0xff]
      %v604 = vld [vmem:[%s263 + $0x590] sm:$0xff]
      %v605 = vld [vmem:[%s263 + $0x598] sm:$0xff]
      %v606 = vld [vmem:[%s263 + $0x5a0] sm:$0xff]
      %v607 = vld [vmem:[%s263 + $0x5a8] sm:$0xff]
      %v608 = vld [vmem:[%s263 + $0x5b0] sm:$0xff]
      %v609 = vld [vmem:[%s263 + $0x5b8] sm:$0xff]
      %v610 = vld [vmem:[%s263 + $0x5c0] sm:$0xff]
      %v611 = vld [vmem:[%s263 + $0x5c8] sm:$0xff]
      %v612 = vld [vmem:[%s263 + $0x5d0] sm:$0xff]
      %v613 = vld [vmem:[%s263 + $0x5d8] sm:$0xff]
      %v614 = vld [vmem:[%s263 + $0x5e0] sm:$0xff]
      %v615 = vld [vmem:[%s263 + $0x5e8] sm:$0xff]
      %v616 = vld [vmem:[%s263 + $0x5f0] sm:$0xff]
      %v617 = vld [vmem:[%s263 + $0x5f8] sm:$0xff]
      %v618 = vld [vmem:[%s263 + $0x600] sm:$0xff]
      %v619 = vld [vmem:[%s263 + $0x608] sm:$0xff]
      %v620 = vld [vmem:[%s263 + $0x610] sm:$0xff]
      %v621 = vld [vmem:[%s263 + $0x618] sm:$0xff]
      %v622 = vld [vmem:[%s263 + $0x620] sm:$0xff]
      %v623 = vld [vmem:[%s263 + $0x628] sm:$0xff]
      %v624 = vld [vmem:[%s263 + $0x630] sm:$0xff]
      %v625 = vld [vmem:[%s263 + $0x638] sm:$0xff]
      %v626 = vld [vmem:[%s263 + $0x640] sm:$0xff]
      %v627 = vld [vmem:[%s263 + $0x648] sm:$0xff]
      %v628 = vld [vmem:[%s263 + $0x650] sm:$0xff]
      %v629 = vld [vmem:[%s263 + $0x658] sm:$0xff]
      %v630 = vld [vmem:[%s263 + $0x660] sm:$0xff]
      %v631 = vld [vmem:[%s263 + $0x668] sm:$0xff]
      %v632 = vld [vmem:[%s263 + $0x670] sm:$0xff]
      %v633 = vld [vmem:[%s263 + $0x678] sm:$0xff]
      %v634 = vld [vmem:[%s263 + $0x680] sm:$0xff]
      %v635 = vld [vmem:[%s263 + $0x688] sm:$0xff]
      %v636 = vld [vmem:[%s263 + $0x690] sm:$0xff]
      %v637 = vld [vmem:[%s263 + $0x698] sm:$0xff]
      %v638 = vld [vmem:[%s263 + $0x6a0] sm:$0xff]
      %v639 = vld [vmem:[%s263 + $0x6a8] sm:$0xff]
      %v640 = vld [vmem:[%s263 + $0x6b0] sm:$0xff]
      %v641 = vld [vmem:[%s263 + $0x6b8] sm:$0xff]
      %v642 = vld [vmem:[%s263 + $0x6c0] sm:$0xff]
      %v643 = vld [vmem:[%s263 + $0x6c8] sm:$0xff]
      %v644 = vld [vmem:[%s263 + $0x6d0] sm:$0xff]
      %v645 = vld [vmem:[%s263 + $0x6d8] sm:$0xff]
      %v646 = vld [vmem:[%s263 + $0x6e0] sm:$0xff]
      %v647 = vld [vmem:[%s263 + $0x6e8] sm:$0xff]
      %v648 = vld [vmem:[%s263 + $0x6f0] sm:$0xff]
      %v649 = vld [vmem:[%s263 + $0x6f8] sm:$0xff]
      %v650 = vld [vmem:[%s263 + $0x700] sm:$0xff]
      %v651 = vld [vmem:[%s263 + $0x708] sm:$0xff]
      %v652 = vld [vmem:[%s263 + $0x710] sm:$0xff]
      %v653 = vld [vmem:[%s263 + $0x718] sm:$0xff]
      %v654 = vld [vmem:[%s263 + $0x720] sm:$0xff]
      %v655 = vld [vmem:[%s263 + $0x728] sm:$0xff]
      %v656 = vld [vmem:[%s263 + $0x730] sm:$0xff]
      %v657 = vld [vmem:[%s263 + $0x738] sm:$0xff]
      %v658 = vld [vmem:[%s263 + $0x740] sm:$0xff]
      %v659 = vld [vmem:[%s263 + $0x748] sm:$0xff]
      %v660 = vld [vmem:[%s263 + $0x750] sm:$0xff]
      %v661 = vld [vmem:[%s263 + $0x758] sm:$0xff]
      %v662 = vld [vmem:[%s263 + $0x760] sm:$0xff]
      %v663 = vld [vmem:[%s263 + $0x768] sm:$0xff]
      %v664 = vld [vmem:[%s263 + $0x770] sm:$0xff]
      %v665 = vld [vmem:[%s263 + $0x778] sm:$0xff]
      %v666 = vld [vmem:[%s263 + $0x780] sm:$0xff]
      %v667 = vld [vmem:[%s263 + $0x788] sm:$0xff]
      %v668 = vld [vmem:[%s263 + $0x790] sm:$0xff]
      %v669 = vld [vmem:[%s263 + $0x798] sm:$0xff]
      %v670 = vld [vmem:[%s263 + $0x7a0] sm:$0xff]
      %v671 = vld [vmem:[%s263 + $0x7a8] sm:$0xff]
      %v672 = vld [vmem:[%s263 + $0x7b0] sm:$0xff]
      %v673 = vld [vmem:[%s263 + $0x7b8] sm:$0xff]
      %v674 = vld [vmem:[%s263 + $0x7c0] sm:$0xff]
      %v675 = vld [vmem:[%s263 + $0x7c8] sm:$0xff]
      %v676 = vld [vmem:[%s263 + $0x7d0] sm:$0xff]
      %v677 = vld [vmem:[%s263 + $0x7d8] sm:$0xff]
      %v678 = vld [vmem:[%s263 + $0x7e0] sm:$0xff]
      %v679 = vld [vmem:[%s263 + $0x7e8] sm:$0xff]
      %v680 = vld [vmem:[%s263 + $0x7f0] sm:$0xff]
      %v681 = vld [vmem:[%s263 + $0x7f8] sm:$0xff]
      %v682 = vld [vmem:[%s263 + $0x800] sm:$0xff]
      %v683 = vld [vmem:[%s263 + $0x808] sm:$0xff]
      %v684 = vld [vmem:[%s263 + $0x810] sm:$0xff]
      %v685 = vld [vmem:[%s263 + $0x818] sm:$0xff]
      %v686 = vld [vmem:[%s263 + $0x820] sm:$0xff]
      %v687 = vld [vmem:[%s263 + $0x828] sm:$0xff]
      %v688 = vld [vmem:[%s263 + $0x830] sm:$0xff]
      %v689 = vld [vmem:[%s263 + $0x838] sm:$0xff]
      %v690 = vld [vmem:[%s263 + $0x840] sm:$0xff]
      %v691 = vld [vmem:[%s263 + $0x848] sm:$0xff]
      %v692 = vld [vmem:[%s263 + $0x850] sm:$0xff]
      %v693 = vld [vmem:[%s263 + $0x858] sm:$0xff]
      %v694 = vld [vmem:[%s263 + $0x860] sm:$0xff]
      %v695 = vld [vmem:[%s263 + $0x868] sm:$0xff]
      %v696 = vld [vmem:[%s263 + $0x870] sm:$0xff]
      %v697 = vld [vmem:[%s263 + $0x878] sm:$0xff]
      %v698 = vld [vmem:[%s263 + $0x880] sm:$0xff]
      %v699 = vld [vmem:[%s263 + $0x888] sm:$0xff]
      %v700 = vld [vmem:[%s263 + $0x890] sm:$0xff]
      %v701 = vld [vmem:[%s263 + $0x898] sm:$0xff]
      %v702 = vld [vmem:[%s263 + $0x8a0] sm:$0xff]
      %v703 = vld [vmem:[%s263 + $0x8a8] sm:$0xff]
      %v704 = vld [vmem:[%s263 + $0x8b0] sm:$0xff]
      %v705 = vld [vmem:[%s263 + $0x8b8] sm:$0xff]
      %v706 = vld [vmem:[%s263 + $0x8c0] sm:$0xff]
      %v707 = vld [vmem:[%s263 + $0x8c8] sm:$0xff]
      %v708 = vld [vmem:[%s263 + $0x8d0] sm:$0xff]
      %v709 = vld [vmem:[%s263 + $0x8d8] sm:$0xff]
      %v710 = vld [vmem:[%s263 + $0x8e0] sm:$0xff]
      %v711 = vld [vmem:[%s263 + $0x8e8] sm:$0xff]
      %v712 = vld [vmem:[%s263 + $0x8f0] sm:$0xff]
      %v713 = vld [vmem:[%s263 + $0x8f8] sm:$0xff]
      %v714 = vld [vmem:[%s263 + $0x900] sm:$0xff]
      %v715 = vld [vmem:[%s263 + $0x908] sm:$0xff]
      %v716 = vld [vmem:[%s263 + $0x910] sm:$0xff]
      %v717 = vld [vmem:[%s263 + $0x918] sm:$0xff]
      %v718 = vld [vmem:[%s263 + $0x920] sm:$0xff]
      %v719 = vld [vmem:[%s263 + $0x928] sm:$0xff]
      %v720 = vld [vmem:[%s263 + $0x930] sm:$0xff]
      %v721 = vld [vmem:[%s263 + $0x938] sm:$0xff]
      %v722 = vld [vmem:[%s263 + $0x940] sm:$0xff]
      %v723 = vld [vmem:[%s263 + $0x948] sm:$0xff]
      %v724 = vld [vmem:[%s263 + $0x950] sm:$0xff]
      %v725 = vld [vmem:[%s263 + $0x958] sm:$0xff]
      %v726 = vld [vmem:[%s263 + $0x960] sm:$0xff]
      %v727 = vld [vmem:[%s263 + $0x968] sm:$0xff]
      %v728 = vld [vmem:[%s263 + $0x970] sm:$0xff]
      %v729 = vld [vmem:[%s263 + $0x978] sm:$0xff]
      %v730 = vld [vmem:[%s263 + $0x980] sm:$0xff]
      %v731 = vld [vmem:[%s263 + $0x988] sm:$0xff]
      %v732 = vld [vmem:[%s263 + $0x990] sm:$0xff]
      %v733 = vld [vmem:[%s263 + $0x998] sm:$0xff]
      %v734 = vld [vmem:[%s263 + $0x9a0] sm:$0xff]
      %v735 = vld [vmem:[%s263 + $0x9a8] sm:$0xff]
      %v736 = vld [vmem:[%s263 + $0x9b0] sm:$0xff]
      %v737 = vld [vmem:[%s263 + $0x9b8] sm:$0xff]
      %v738 = vld [vmem:[%s263 + $0x9c0] sm:$0xff]
      %v739 = vld [vmem:[%s263 + $0x9c8] sm:$0xff]
      %v740 = vld [vmem:[%s263 + $0x9d0] sm:$0xff]
      %v741 = vld [vmem:[%s263 + $0x9d8] sm:$0xff]
      %v742 = vld [vmem:[%s263 + $0x9e0] sm:$0xff]
      %v743 = vld [vmem:[%s263 + $0x9e8] sm:$0xff]
      %v744 = vld [vmem:[%s263 + $0x9f0] sm:$0xff]
      %v745 = vld [vmem:[%s263 + $0x9f8] sm:$0xff]
      %v746 = vld [vmem:[%s263 + $0xa00] sm:$0xff]
      %v747 = vld [vmem:[%s263 + $0xa08] sm:$0xff]
      %v748 = vld [vmem:[%s263 + $0xa10] sm:$0xff]
      %v749 = vld [vmem:[%s263 + $0xa18] sm:$0xff]
      %v750 = vld [vmem:[%s263 + $0xa20] sm:$0xff]
      %v751 = vld [vmem:[%s263 + $0xa28] sm:$0xff]
      %v752 = vld [vmem:[%s263 + $0xa30] sm:$0xff]
      %v753 = vld [vmem:[%s263 + $0xa38] sm:$0xff]
      %v754 = vld [vmem:[%s263 + $0xa40] sm:$0xff]
      %v755 = vld [vmem:[%s263 + $0xa48] sm:$0xff]
      %v756 = vld [vmem:[%s263 + $0xa50] sm:$0xff]
      %v757 = vld [vmem:[%s263 + $0xa58] sm:$0xff]
      %v758 = vld [vmem:[%s263 + $0xa60] sm:$0xff]
      %v759 = vld [vmem:[%s263 + $0xa68] sm:$0xff]
      %v760 = vld [vmem:[%s263 + $0xa70] sm:$0xff]
      %v761 = vld [vmem:[%s263 + $0xa78] sm:$0xff]
      %v762 = vld [vmem:[%s263 + $0xa80] sm:$0xff]
      %v763 = vld [vmem:[%s263 + $0xa88] sm:$0xff]
      %v764 = vld [vmem:[%s263 + $0xa90] sm:$0xff]
      %v765 = vld [vmem:[%s263 + $0xa98] sm:$0xff]
      %v766 = vld [vmem:[%s263 + $0xaa0] sm:$0xff]
      %v767 = vld [vmem:[%s263 + $0xaa8] sm:$0xff]
      %v768 = vld [vmem:[%s263 + $0xab0] sm:$0xff]
      %v769 = vld [vmem:[%s263 + $0xab8] sm:$0xff]
      %v770 = vld [vmem:[%s263 + $0xac0] sm:$0xff]
      %v771 = vld [vmem:[%s263 + $0xac8] sm:$0xff]
      %v772 = vld [vmem:[%s263 + $0xad0] sm:$0xff]
      %v773 = vld [vmem:[%s263 + $0xad8] sm:$0xff]
      %v774 = vld [vmem:[%s263 + $0xae0] sm:$0xff]
      %v775 = vld [vmem:[%s263 + $0xae8] sm:$0xff]
      %v776 = vld [vmem:[%s263 + $0xaf0] sm:$0xff]
      %v777 = vld [vmem:[%s263 + $0xaf8] sm:$0xff]
      %v778 = vld [vmem:[%s263 + $0xb00] sm:$0xff]
      %v779 = vld [vmem:[%s263 + $0xb08] sm:$0xff]
      %v780 = vld [vmem:[%s263 + $0xb10] sm:$0xff]
      %v781 = vld [vmem:[%s263 + $0xb18] sm:$0xff]
      %v782 = vld [vmem:[%s263 + $0xb20] sm:$0xff]
      %v783 = vld [vmem:[%s263 + $0xb28] sm:$0xff]
      %v784 = vld [vmem:[%s263 + $0xb30] sm:$0xff]
      %v785 = vld [vmem:[%s263 + $0xb38] sm:$0xff]
      %v786 = vld [vmem:[%s263 + $0xb40] sm:$0xff]
      %v787 = vld [vmem:[%s263 + $0xb48] sm:$0xff]
      %v788 = vld [vmem:[%s263 + $0xb50] sm:$0xff]
      %v789 = vld [vmem:[%s263 + $0xb58] sm:$0xff]
      %v790 = vld [vmem:[%s263 + $0xb60] sm:$0xff]
      %v791 = vld [vmem:[%s263 + $0xb68] sm:$0xff]
      %v792 = vld [vmem:[%s263 + $0xb70] sm:$0xff]
      %v793 = vld [vmem:[%s263 + $0xb78] sm:$0xff]
      %v794 = vld [vmem:[%s263 + $0xb80] sm:$0xff]
      %v795 = vld [vmem:[%s263 + $0xb88] sm:$0xff]
      %v796 = vld [vmem:[%s263 + $0xb90] sm:$0xff]
      %v797 = vld [vmem:[%s263 + $0xb98] sm:$0xff]
      %v798 = vld [vmem:[%s263 + $0xba0] sm:$0xff]
      %v799 = vld [vmem:[%s263 + $0xba8] sm:$0xff]
      %v800 = vld [vmem:[%s263 + $0xbb0] sm:$0xff]
      %v801 = vld [vmem:[%s263 + $0xbb8] sm:$0xff]
      %v802 = vld [vmem:[%s263 + $0xbc0] sm:$0xff]
      %v803 = vld [vmem:[%s263 + $0xbc8] sm:$0xff]
      %v804 = vld [vmem:[%s263 + $0xbd0] sm:$0xff]
      %v805 = vld [vmem:[%s263 + $0xbd8] sm:$0xff]
      %v806 = vld [vmem:[%s263 + $0xbe0] sm:$0xff]
      %v807 = vld [vmem:[%s263 + $0xbe8] sm:$0xff]
      %v808 = vld [vmem:[%s263 + $0xbf0] sm:$0xff]
      %v809 = vld [vmem:[%s263 + $0xbf8] sm:$0xff]
      %v810 = vpack.c.bf16 %v427, %v426
      %v811 = vpack.c.bf16 %v429, %v428
      %v812 = vpack.c.bf16 %v431, %v430
      %v813 = vpack.c.bf16 %v433, %v432
      %v814 = vpack.c.bf16 %v435, %v434
      %v815 = vpack.c.bf16 %v437, %v436
      %v816 = vpack.c.bf16 %v439, %v438
      %v817 = vpack.c.bf16 %v441, %v440
      %v818 = vpack.c.bf16 %v443, %v442
      %v819 = vpack.c.bf16 %v445, %v444
      %v820 = vpack.c.bf16 %v447, %v446
      %v821 = vpack.c.bf16 %v449, %v448
      %v822 = vpack.c.bf16 %v451, %v450
      %v823 = vpack.c.bf16 %v453, %v452
      %v824 = vpack.c.bf16 %v455, %v454
      %v825 = vpack.c.bf16 %v457, %v456
      %v826 = vpack.c.bf16 %v459, %v458
      %v827 = vpack.c.bf16 %v461, %v460
      %v828 = vpack.c.bf16 %v463, %v462
      %v829 = vpack.c.bf16 %v465, %v464
      %v830 = vpack.c.bf16 %v467, %v466
      %v831 = vpack.c.bf16 %v469, %v468
      %v832 = vpack.c.bf16 %v471, %v470
      %v833 = vpack.c.bf16 %v473, %v472
      %v834 = vpack.c.bf16 %v475, %v474
      %v835 = vpack.c.bf16 %v477, %v476
      %v836 = vpack.c.bf16 %v479, %v478
      %v837 = vpack.c.bf16 %v481, %v480
      %v838 = vpack.c.bf16 %v483, %v482
      %v839 = vpack.c.bf16 %v485, %v484
      %v840 = vpack.c.bf16 %v487, %v486
      %v841 = vpack.c.bf16 %v489, %v488
      %v842 = vpack.c.bf16 %v491, %v490
      %v843 = vpack.c.bf16 %v493, %v492
      %v844 = vpack.c.bf16 %v495, %v494
      %v845 = vpack.c.bf16 %v497, %v496
      %v846 = vpack.c.bf16 %v499, %v498
      %v847 = vpack.c.bf16 %v501, %v500
      %v848 = vpack.c.bf16 %v503, %v502
      %v849 = vpack.c.bf16 %v505, %v504
      %v850 = vpack.c.bf16 %v507, %v506
      %v851 = vpack.c.bf16 %v509, %v508
      %v852 = vpack.c.bf16 %v511, %v510
      %v853 = vpack.c.bf16 %v513, %v512
      %v854 = vpack.c.bf16 %v515, %v514
      %v855 = vpack.c.bf16 %v517, %v516
      %v856 = vpack.c.bf16 %v519, %v518
      %v857 = vpack.c.bf16 %v521, %v520
      %v858 = vpack.c.bf16 %v523, %v522
      %v859 = vpack.c.bf16 %v525, %v524
      %v860 = vpack.c.bf16 %v527, %v526
      %v861 = vpack.c.bf16 %v529, %v528
      %v862 = vpack.c.bf16 %v531, %v530
      %v863 = vpack.c.bf16 %v533, %v532
      %v864 = vpack.c.bf16 %v535, %v534
      %v865 = vpack.c.bf16 %v537, %v536
      %v866 = vpack.c.bf16 %v539, %v538
      %v867 = vpack.c.bf16 %v541, %v540
      %v868 = vpack.c.bf16 %v543, %v542
      %v869 = vpack.c.bf16 %v545, %v544
      %v870 = vpack.c.bf16 %v547, %v546
      %v871 = vpack.c.bf16 %v549, %v548
      %v872 = vpack.c.bf16 %v551, %v550
      %v873 = vpack.c.bf16 %v553, %v552
      %v874 = vpack.c.bf16 %v555, %v554
      %v875 = vpack.c.bf16 %v557, %v556
      %v876 = vpack.c.bf16 %v559, %v558
      %v877 = vpack.c.bf16 %v561, %v560
      %v878 = vpack.c.bf16 %v563, %v562
      %v879 = vpack.c.bf16 %v565, %v564
      %v880 = vpack.c.bf16 %v567, %v566
      %v881 = vpack.c.bf16 %v569, %v568
      %v882 = vpack.c.bf16 %v571, %v570
      %v883 = vpack.c.bf16 %v573, %v572
      %v884 = vpack.c.bf16 %v575, %v574
      %v885 = vpack.c.bf16 %v577, %v576
      %v886 = vpack.c.bf16 %v579, %v578
      %v887 = vpack.c.bf16 %v581, %v580
      %v888 = vpack.c.bf16 %v583, %v582
      %v889 = vpack.c.bf16 %v585, %v584
      %v890 = vpack.c.bf16 %v587, %v586
      %v891 = vpack.c.bf16 %v589, %v588
      %v892 = vpack.c.bf16 %v591, %v590
      %v893 = vpack.c.bf16 %v593, %v592
      %v894 = vpack.c.bf16 %v595, %v594
      %v895 = vpack.c.bf16 %v597, %v596
      %v896 = vpack.c.bf16 %v599, %v598
      %v897 = vpack.c.bf16 %v601, %v600
      %v898 = vpack.c.bf16 %v603, %v602
      %v899 = vpack.c.bf16 %v605, %v604
      %v900 = vpack.c.bf16 %v607, %v606
      %v901 = vpack.c.bf16 %v609, %v608
      %v902 = vpack.c.bf16 %v611, %v610
      %v903 = vpack.c.bf16 %v613, %v612
      %v904 = vpack.c.bf16 %v615, %v614
      %v905 = vpack.c.bf16 %v617, %v616
      %v906 = vpack.c.bf16 %v619, %v618
      %v907 = vpack.c.bf16 %v621, %v620
      %v908 = vpack.c.bf16 %v623, %v622
      %v909 = vpack.c.bf16 %v625, %v624
      %v910 = vpack.c.bf16 %v627, %v626
      %v911 = vpack.c.bf16 %v629, %v628
      %v912 = vpack.c.bf16 %v631, %v630
      %v913 = vpack.c.bf16 %v633, %v632
      %v914 = vpack.c.bf16 %v635, %v634
      %v915 = vpack.c.bf16 %v637, %v636
      %v916 = vpack.c.bf16 %v639, %v638
      %v917 = vpack.c.bf16 %v641, %v640
      %v918 = vpack.c.bf16 %v643, %v642
      %v919 = vpack.c.bf16 %v645, %v644
      %v920 = vpack.c.bf16 %v647, %v646
      %v921 = vpack.c.bf16 %v649, %v648
      %v922 = vpack.c.bf16 %v651, %v650
      %v923 = vpack.c.bf16 %v653, %v652
      %v924 = vpack.c.bf16 %v655, %v654
      %v925 = vpack.c.bf16 %v657, %v656
      %v926 = vpack.c.bf16 %v659, %v658
      %v927 = vpack.c.bf16 %v661, %v660
      %v928 = vpack.c.bf16 %v663, %v662
      %v929 = vpack.c.bf16 %v665, %v664
      %v930 = vpack.c.bf16 %v667, %v666
      %v931 = vpack.c.bf16 %v669, %v668
      %v932 = vpack.c.bf16 %v671, %v670
      %v933 = vpack.c.bf16 %v673, %v672
      %v934 = vpack.c.bf16 %v675, %v674
      %v935 = vpack.c.bf16 %v677, %v676
      %v936 = vpack.c.bf16 %v679, %v678
      %v937 = vpack.c.bf16 %v681, %v680
      %v938 = vpack.c.bf16 %v683, %v682
      %v939 = vpack.c.bf16 %v685, %v684
      %v940 = vpack.c.bf16 %v687, %v686
      %v941 = vpack.c.bf16 %v689, %v688
      %v942 = vpack.c.bf16 %v691, %v690
      %v943 = vpack.c.bf16 %v693, %v692
      %v944 = vpack.c.bf16 %v695, %v694
      %v945 = vpack.c.bf16 %v697, %v696
      %v946 = vpack.c.bf16 %v699, %v698
      %v947 = vpack.c.bf16 %v701, %v700
      %v948 = vpack.c.bf16 %v703, %v702
      %v949 = vpack.c.bf16 %v705, %v704
      %v950 = vpack.c.bf16 %v707, %v706
      %v951 = vpack.c.bf16 %v709, %v708
      %v952 = vpack.c.bf16 %v711, %v710
      %v953 = vpack.c.bf16 %v713, %v712
      %v954 = vpack.c.bf16 %v715, %v714
      %v955 = vpack.c.bf16 %v717, %v716
      %v956 = vpack.c.bf16 %v719, %v718
      %v957 = vpack.c.bf16 %v721, %v720
      %v958 = vpack.c.bf16 %v723, %v722
      %v959 = vpack.c.bf16 %v725, %v724
      %v960 = vpack.c.bf16 %v727, %v726
      %v961 = vpack.c.bf16 %v729, %v728
      %v962 = vpack.c.bf16 %v731, %v730
      %v963 = vpack.c.bf16 %v733, %v732
      %v964 = vpack.c.bf16 %v735, %v734
      %v965 = vpack.c.bf16 %v737, %v736
      %v966 = vpack.c.bf16 %v739, %v738
      %v967 = vpack.c.bf16 %v741, %v740
      %v968 = vpack.c.bf16 %v743, %v742
      %v969 = vpack.c.bf16 %v745, %v744
      %v970 = vpack.c.bf16 %v747, %v746
      %v971 = vpack.c.bf16 %v749, %v748
      %v972 = vpack.c.bf16 %v751, %v750
      %v973 = vpack.c.bf16 %v753, %v752
      %v974 = vpack.c.bf16 %v755, %v754
      %v975 = vpack.c.bf16 %v757, %v756
      %v976 = vpack.c.bf16 %v759, %v758
      %v977 = vpack.c.bf16 %v761, %v760
      %v978 = vpack.c.bf16 %v763, %v762
      %v979 = vpack.c.bf16 %v765, %v764
      %v980 = vpack.c.bf16 %v767, %v766
      %v981 = vpack.c.bf16 %v769, %v768
      %v982 = vpack.c.bf16 %v771, %v770
      %v983 = vpack.c.bf16 %v773, %v772
      %v984 = vpack.c.bf16 %v775, %v774
      %v985 = vpack.c.bf16 %v777, %v776
      %v986 = vpack.c.bf16 %v779, %v778
      %v987 = vpack.c.bf16 %v781, %v780
      %v988 = vpack.c.bf16 %v783, %v782
      %v989 = vpack.c.bf16 %v785, %v784
      %v990 = vpack.c.bf16 %v787, %v786
      %v991 = vpack.c.bf16 %v789, %v788
      %v992 = vpack.c.bf16 %v791, %v790
      %v993 = vpack.c.bf16 %v793, %v792
      %v994 = vpack.c.bf16 %v795, %v794
      %v995 = vpack.c.bf16 %v797, %v796
      %v996 = vpack.c.bf16 %v799, %v798
      %v997 = vpack.c.bf16 %v801, %v800
      %v998 = vpack.c.bf16 %v803, %v802
      %v999 = vpack.c.bf16 %v805, %v804
      %v1000 = vpack.c.bf16 %v807, %v806
      %v1001 = vpack.c.bf16 %v809, %v808
      %vm1002 = vcmask 523264
      %v1004 = vsel %vm1002, %v410, 0
      %v1007 = vsel %vm1002, %v411, 0
      %v1010 = vsel %vm1002, %v412, 0
      %v1013 = vsel %vm1002, %v413, 0
      %v1016 = vsel %vm1002, %v414, 0
      %v1019 = vsel %vm1002, %v415, 0
      %v1022 = vsel %vm1002, %v416, 0
      %v1025 = vsel %vm1002, %v417, 0
      %v1028 = vsel %vm1002, %v418, 0
      %v1031 = vsel %vm1002, %v419, 0
      %v1034 = vsel %vm1002, %v420, 0
      %v1037 = vsel %vm1002, %v421, 0
      %v1040 = vsel %vm1002, %v422, 0
      %v1043 = vsel %vm1002, %v423, 0
      %v1046 = vsel %vm1002, %v424, 0
      %v1049 = vsel %vm1002, %v425, 0
      %v1052 = vsel %vm1002, %v810, 0
      %v1055 = vsel %vm1002, %v811, 0
      %v1058 = vsel %vm1002, %v812, 0
      %v1061 = vsel %vm1002, %v813, 0
      %v1064 = vsel %vm1002, %v814, 0
      %v1067 = vsel %vm1002, %v815, 0
      %v1070 = vsel %vm1002, %v816, 0
      %v1073 = vsel %vm1002, %v817, 0
      %v1076 = vsel %vm1002, %v818, 0
      %v1079 = vsel %vm1002, %v819, 0
      %v1082 = vsel %vm1002, %v820, 0
      %v1085 = vsel %vm1002, %v821, 0
      %v1088 = vsel %vm1002, %v822, 0
      %v1091 = vsel %vm1002, %v823, 0
      %v1094 = vsel %vm1002, %v824, 0
      %v1097 = vsel %vm1002, %v825, 0
      %v1100 = vsel %vm1002, %v826, 0
      %v1103 = vsel %vm1002, %v827, 0
      %v1106 = vsel %vm1002, %v828, 0
      %v1109 = vsel %vm1002, %v829, 0
      %v1112 = vsel %vm1002, %v830, 0
      %v1115 = vsel %vm1002, %v831, 0
      %v1118 = vsel %vm1002, %v832, 0
      %v1121 = vsel %vm1002, %v833, 0
      %v1124 = vsel %vm1002, %v834, 0
      %v1127 = vsel %vm1002, %v835, 0
      %v1130 = vsel %vm1002, %v836, 0
      %v1133 = vsel %vm1002, %v837, 0
      %v1136 = vsel %vm1002, %v838, 0
      %v1139 = vsel %vm1002, %v839, 0
      %v1142 = vsel %vm1002, %v840, 0
      %v1145 = vsel %vm1002, %v841, 0
      %v1148 = vsel %vm1002, %v842, 0
      %v1151 = vsel %vm1002, %v843, 0
      %v1154 = vsel %vm1002, %v844, 0
      %v1157 = vsel %vm1002, %v845, 0
      %v1160 = vsel %vm1002, %v846, 0
      %v1163 = vsel %vm1002, %v847, 0
      %v1166 = vsel %vm1002, %v848, 0
      %v1169 = vsel %vm1002, %v849, 0
      %v1172 = vsel %vm1002, %v850, 0
      %v1175 = vsel %vm1002, %v851, 0
      %v1178 = vsel %vm1002, %v852, 0
      %v1181 = vsel %vm1002, %v853, 0
      %v1184 = vsel %vm1002, %v854, 0
      %v1187 = vsel %vm1002, %v855, 0
      %v1190 = vsel %vm1002, %v856, 0
      %v1193 = vsel %vm1002, %v857, 0
      %v1196 = vsel %vm1002, %v858, 0
      %v1199 = vsel %vm1002, %v859, 0
      %v1202 = vsel %vm1002, %v860, 0
      %v1205 = vsel %vm1002, %v861, 0
      %v1208 = vsel %vm1002, %v862, 0
      %v1211 = vsel %vm1002, %v863, 0
      %v1214 = vsel %vm1002, %v864, 0
      %v1217 = vsel %vm1002, %v865, 0
      %v1220 = vsel %vm1002, %v866, 0
      %v1223 = vsel %vm1002, %v867, 0
      %v1226 = vsel %vm1002, %v868, 0
      %v1229 = vsel %vm1002, %v869, 0
      %v1232 = vsel %vm1002, %v870, 0
      %v1235 = vsel %vm1002, %v871, 0
      %v1238 = vsel %vm1002, %v872, 0
      %v1241 = vsel %vm1002, %v873, 0
      %v1244 = vsel %vm1002, %v874, 0
      %v1247 = vsel %vm1002, %v875, 0
      %v1250 = vsel %vm1002, %v876, 0
      %v1253 = vsel %vm1002, %v877, 0
      %v1256 = vsel %vm1002, %v878, 0
      %v1259 = vsel %vm1002, %v879, 0
      %v1262 = vsel %vm1002, %v880, 0
      %v1265 = vsel %vm1002, %v881, 0
      %v1268 = vsel %vm1002, %v882, 0
      %v1271 = vsel %vm1002, %v883, 0
      %v1274 = vsel %vm1002, %v884, 0
      %v1277 = vsel %vm1002, %v885, 0
      %v1280 = vsel %vm1002, %v886, 0
      %v1283 = vsel %vm1002, %v887, 0
      %v1286 = vsel %vm1002, %v888, 0
      %v1289 = vsel %vm1002, %v889, 0
      %v1292 = vsel %vm1002, %v890, 0
      %v1295 = vsel %vm1002, %v891, 0
      %v1298 = vsel %vm1002, %v892, 0
      %v1301 = vsel %vm1002, %v893, 0
      %v1304 = vsel %vm1002, %v894, 0
      %v1307 = vsel %vm1002, %v895, 0
      %v1310 = vsel %vm1002, %v896, 0
      %v1313 = vsel %vm1002, %v897, 0
      %v1316 = vsel %vm1002, %v898, 0
      %v1319 = vsel %vm1002, %v899, 0
      %v1322 = vsel %vm1002, %v900, 0
      %v1325 = vsel %vm1002, %v901, 0
      %v1328 = vsel %vm1002, %v902, 0
      %v1331 = vsel %vm1002, %v903, 0
      %v1334 = vsel %vm1002, %v904, 0
      %v1337 = vsel %vm1002, %v905, 0
      %v1340 = vsel %vm1002, %v906, 0
      %v1343 = vsel %vm1002, %v907, 0
      %v1346 = vsel %vm1002, %v908, 0
      %v1349 = vsel %vm1002, %v909, 0
      %v1352 = vsel %vm1002, %v910, 0
      %v1355 = vsel %vm1002, %v911, 0
      %v1358 = vsel %vm1002, %v912, 0
      %v1361 = vsel %vm1002, %v913, 0
      %v1364 = vsel %vm1002, %v914, 0
      %v1367 = vsel %vm1002, %v915, 0
      %v1370 = vsel %vm1002, %v916, 0
      %v1373 = vsel %vm1002, %v917, 0
      %v1376 = vsel %vm1002, %v918, 0
      %v1379 = vsel %vm1002, %v919, 0
      %v1382 = vsel %vm1002, %v920, 0
      %v1385 = vsel %vm1002, %v921, 0
      %v1388 = vsel %vm1002, %v922, 0
      %v1391 = vsel %vm1002, %v923, 0
      %v1394 = vsel %vm1002, %v924, 0
      %v1397 = vsel %vm1002, %v925, 0
      %v1400 = vsel %vm1002, %v926, 0
      %v1403 = vsel %vm1002, %v927, 0
      %v1406 = vsel %vm1002, %v928, 0
      %v1409 = vsel %vm1002, %v929, 0
      %v1412 = vsel %vm1002, %v930, 0
      %v1415 = vsel %vm1002, %v931, 0
      %v1418 = vsel %vm1002, %v932, 0
      %v1421 = vsel %vm1002, %v933, 0
      %v1424 = vsel %vm1002, %v934, 0
      %v1427 = vsel %vm1002, %v935, 0
      %v1430 = vsel %vm1002, %v936, 0
      %v1433 = vsel %vm1002, %v937, 0
      %v1436 = vsel %vm1002, %v938, 0
      %v1439 = vsel %vm1002, %v939, 0
      %v1442 = vsel %vm1002, %v940, 0
      %v1445 = vsel %vm1002, %v941, 0
      %v1448 = vsel %vm1002, %v942, 0
      %v1451 = vsel %vm1002, %v943, 0
      %v1454 = vsel %vm1002, %v944, 0
      %v1457 = vsel %vm1002, %v945, 0
      %v1460 = vsel %vm1002, %v946, 0
      %v1463 = vsel %vm1002, %v947, 0
      %v1466 = vsel %vm1002, %v948, 0
      %v1469 = vsel %vm1002, %v949, 0
      %v1472 = vsel %vm1002, %v950, 0
      %v1475 = vsel %vm1002, %v951, 0
      %v1478 = vsel %vm1002, %v952, 0
      %v1481 = vsel %vm1002, %v953, 0
      %v1484 = vsel %vm1002, %v954, 0
      %v1487 = vsel %vm1002, %v955, 0
      %v1490 = vsel %vm1002, %v956, 0
      %v1493 = vsel %vm1002, %v957, 0
      %v1496 = vsel %vm1002, %v958, 0
      %v1499 = vsel %vm1002, %v959, 0
      %v1502 = vsel %vm1002, %v960, 0
      %v1505 = vsel %vm1002, %v961, 0
      %v1508 = vsel %vm1002, %v962, 0
      %v1511 = vsel %vm1002, %v963, 0
      %v1514 = vsel %vm1002, %v964, 0
      %v1517 = vsel %vm1002, %v965, 0
      %v1520 = vsel %vm1002, %v966, 0
      %v1523 = vsel %vm1002, %v967, 0
      %v1526 = vsel %vm1002, %v968, 0
      %v1529 = vsel %vm1002, %v969, 0
      %v1532 = vsel %vm1002, %v970, 0
      %v1535 = vsel %vm1002, %v971, 0
      %v1538 = vsel %vm1002, %v972, 0
      %v1541 = vsel %vm1002, %v973, 0
      %v1544 = vsel %vm1002, %v974, 0
      %v1547 = vsel %vm1002, %v975, 0
      %v1550 = vsel %vm1002, %v976, 0
      %v1553 = vsel %vm1002, %v977, 0
      %v1556 = vsel %vm1002, %v978, 0
      %v1559 = vsel %vm1002, %v979, 0
      %v1562 = vsel %vm1002, %v980, 0
      %v1565 = vsel %vm1002, %v981, 0
      %v1568 = vsel %vm1002, %v982, 0
      %v1571 = vsel %vm1002, %v983, 0
      %v1574 = vsel %vm1002, %v984, 0
      %v1577 = vsel %vm1002, %v985, 0
      %v1580 = vsel %vm1002, %v986, 0
      %v1583 = vsel %vm1002, %v987, 0
      %v1586 = vsel %vm1002, %v988, 0
      %v1589 = vsel %vm1002, %v989, 0
      %v1592 = vsel %vm1002, %v990, 0
      %v1595 = vsel %vm1002, %v991, 0
      %v1598 = vsel %vm1002, %v992, 0
      %v1601 = vsel %vm1002, %v993, 0
      %v1604 = vsel %vm1002, %v994, 0
      %v1607 = vsel %vm1002, %v995, 0
      %v1610 = vsel %vm1002, %v996, 0
      %v1613 = vsel %vm1002, %v997, 0
      %v1616 = vsel %vm1002, %v998, 0
      %v1619 = vsel %vm1002, %v999, 0
      %v1622 = vsel %vm1002, %v1000, 0
      %v1625 = vsel %vm1002, %v1001, 0
      %1627 = vmatprep.subr.bf16.mxu0 0
      %1628 = vmatpush1.bf16.xpose.msra.mxu0 %v1052
      %1629 = vmatprep.subr.bf16.mxu0 0
      %1630 = vmatpush1.bf16.xpose.msra.mxu0 %v1055
      %1631 = vmatprep.subr.bf16.mxu0 0
      %1632 = vmatpush1.bf16.xpose.msra.mxu0 %v1058
      %1633 = vmatprep.subr.bf16.mxu0 0
      %1634 = vmatpush1.bf16.xpose.msra.mxu0 %v1061
      %1635 = vmatprep.subr.bf16.mxu0 0
      %1636 = vmatpush1.bf16.xpose.msra.mxu0 %v1064
      %1637 = vmatprep.subr.bf16.mxu0 0
      %1638 = vmatpush1.bf16.xpose.msra.mxu0 %v1067
      %1639 = vmatprep.subr.bf16.mxu0 0
      %1640 = vmatpush1.bf16.xpose.msra.mxu0 %v1070
      %1641 = vmatprep.subr.bf16.mxu0 0
      %1642 = vmatpush1.bf16.xpose.msra.mxu0 %v1073
      %1643 = vmatprep.subr.bf16.mxu0 0
      %1644 = vmatpush1.bf16.xpose.msra.mxu0 %v1076
      %1645 = vmatprep.subr.bf16.mxu0 0
      %1646 = vmatpush1.bf16.xpose.msra.mxu0 %v1079
      %1647 = vmatprep.subr.bf16.mxu0 0
      %1648 = vmatpush1.bf16.xpose.msra.mxu0 %v1082
      %1649 = vmatprep.subr.bf16.mxu0 0
      %1650 = vmatpush1.bf16.xpose.msra.mxu0 %v1085
      %1651 = vmatprep.subr.bf16.mxu0 0
      %1652 = vmatpush1.bf16.xpose.msra.mxu0 %v1088
      %1653 = vmatprep.subr.bf16.mxu0 0
      %1654 = vmatpush1.bf16.xpose.msra.mxu0 %v1091
      %1655 = vmatprep.subr.bf16.mxu0 0
      %1656 = vmatpush1.bf16.xpose.msra.mxu0 %v1094
      %1657 = vmatprep.subr.bf16.mxu0 0
      %1658 = vmatpush1.bf16.xpose.msra.mxu0 %v1097
      %1659 = vmatprep.mubr.bf16.mxu0 0
      %1660 = vmatmul.mubr.bf16.gmra.mrb[0].mxu0 %v1004
      %v1661 = vpop.f32.mrb[0].mxu0
      %v1662 = vadd.f32 0.0, %v1661
      %v1663 = vpop.f32.mrb[0].mxu0
      %v1664 = vadd.f32 0.0, %v1663
      %v1665 = vpop.f32.mrb[0].mxu0
      %v1666 = vadd.f32 0.0, %v1665
      %v1667 = vpop.f32.mrb[0].mxu0
      %v1668 = vadd.f32 0.0, %v1667
      %1669 = vmatprep.mubr.bf16.mxu0 0
      %1670 = vmatmul.mubr.bf16.gmra.mrb[0].mxu0 %v1007
      %v1671 = vpop.f32.mrb[0].mxu0
      %v1672 = vadd.f32 0.0, %v1671
      %v1673 = vpop.f32.mrb[0].mxu0
      %v1674 = vadd.f32 0.0, %v1673
      %v1675 = vpop.f32.mrb[0].mxu0
      %v1676 = vadd.f32 0.0, %v1675
      %v1677 = vpop.f32.mrb[0].mxu0
      %v1678 = vadd.f32 0.0, %v1677
      %1679 = vmatprep.mubr.bf16.mxu0 0
      %1680 = vmatmul.mubr.bf16.gmra.mrb[0].mxu0 %v1010
      %v1681 = vpop.f32.mrb[0].mxu0
      %v1682 = vadd.f32 0.0, %v1681
      %v1683 = vpop.f32.mrb[0].mxu0
      %v1684 = vadd.f32 0.0, %v1683
      %v1685 = vpop.f32.mrb[0].mxu0
      %v1686 = vadd.f32 0.0, %v1685
      %v1687 = vpop.f32.mrb[0].mxu0
      %v1688 = vadd.f32 0.0, %v1687
      %1689 = vmatprep.mubr.bf16.mxu0 0
      %1690 = vmatmul.mubr.bf16.gmra.mrb[0].mxu0 %v1013
      %v1691 = vpop.f32.mrb[0].mxu0
      %v1692 = vadd.f32 0.0, %v1691
      %v1693 = vpop.f32.mrb[0].mxu0
      %v1694 = vadd.f32 0.0, %v1693
      %v1695 = vpop.f32.mrb[0].mxu0
      %v1696 = vadd.f32 0.0, %v1695
      %v1697 = vpop.f32.mrb[0].mxu0
      %v1698 = vadd.f32 0.0, %v1697
      %1699 = vmatprep.mubr.bf16.mxu0 0
      %1700 = vmatmul.mubr.bf16.gmra.mrb[0].mxu0 %v1016
      %v1701 = vpop.f32.mrb[0].mxu0
      %v1702 = vadd.f32 0.0, %v1701
      %v1703 = vpop.f32.mrb[0].mxu0
      %v1704 = vadd.f32 0.0, %v1703
      %v1705 = vpop.f32.mrb[0].mxu0
      %v1706 = vadd.f32 0.0, %v1705
      %v1707 = vpop.f32.mrb[0].mxu0
      %v1708 = vadd.f32 0.0, %v1707
      %1709 = vmatprep.mubr.bf16.mxu0 0
      %1710 = vmatmul.mubr.bf16.gmra.mrb[0].mxu0 %v1019
      %v1711 = vpop.f32.mrb[0].mxu0
      %v1712 = vadd.f32 0.0, %v1711
      %v1713 = vpop.f32.mrb[0].mxu0
      %v1714 = vadd.f32 0.0, %v1713
      %v1715 = vpop.f32.mrb[0].mxu0
      %v1716 = vadd.f32 0.0, %v1715
      %v1717 = vpop.f32.mrb[0].mxu0
      %v1718 = vadd.f32 0.0, %v1717
      %1719 = vmatprep.mubr.bf16.mxu0 0
      %1720 = vmatmul.mubr.bf16.gmra.mrb[0].mxu0 %v1022
      %v1721 = vpop.f32.mrb[0].mxu0
      %v1722 = vadd.f32 0.0, %v1721
      %v1723 = vpop.f32.mrb[0].mxu0
      %v1724 = vadd.f32 0.0, %v1723
      %v1725 = vpop.f32.mrb[0].mxu0
      %v1726 = vadd.f32 0.0, %v1725
      %v1727 = vpop.f32.mrb[0].mxu0
      %v1728 = vadd.f32 0.0, %v1727
      %1729 = vmatprep.mubr.bf16.mxu0 0
      %1730 = vmatmul.mubr.bf16.gmra.mrb[0].mxu0 %v1025
      %v1731 = vpop.f32.mrb[0].mxu0
      %v1732 = vadd.f32 0.0, %v1731
      %v1733 = vpop.f32.mrb[0].mxu0
      %v1734 = vadd.f32 0.0, %v1733
      %v1735 = vpop.f32.mrb[0].mxu0
      %v1736 = vadd.f32 0.0, %v1735
      %v1737 = vpop.f32.mrb[0].mxu0
      %v1738 = vadd.f32 0.0, %v1737
      %1739 = vmatprep.mubr.bf16.mxu0 0
      %1740 = vmatmul.mubr.bf16.gmra.mrb[0].mxu0 %v1028
      %v1741 = vpop.f32.mrb[0].mxu0
      %v1742 = vadd.f32 0.0, %v1741
      %v1743 = vpop.f32.mrb[0].mxu0
      %v1744 = vadd.f32 0.0, %v1743
      %v1745 = vpop.f32.mrb[0].mxu0
      %v1746 = vadd.f32 0.0, %v1745
      %v1747 = vpop.f32.mrb[0].mxu0
      %v1748 = vadd.f32 0.0, %v1747
      %1749 = vmatprep.mubr.bf16.mxu0 0
      %1750 = vmatmul.mubr.bf16.gmra.mrb[0].mxu0 %v1031
      %v1751 = vpop.f32.mrb[0].mxu0
      %v1752 = vadd.f32 0.0, %v1751
      %v1753 = vpop.f32.mrb[0].mxu0
      %v1754 = vadd.f32 0.0, %v1753
      %v1755 = vpop.f32.mrb[0].mxu0
      %v1756 = vadd.f32 0.0, %v1755
      %v1757 = vpop.f32.mrb[0].mxu0
      %v1758 = vadd.f32 0.0, %v1757
      %1759 = vmatprep.mubr.bf16.mxu0 0
      %1760 = vmatmul.mubr.bf16.gmra.mrb[0].mxu0 %v1034
      %v1761 = vpop.f32.mrb[0].mxu0
      %v1762 = vadd.f32 0.0, %v1761
      %v1763 = vpop.f32.mrb[0].mxu0
      %v1764 = vadd.f32 0.0, %v1763
      %v1765 = vpop.f32.mrb[0].mxu0
      %v1766 = vadd.f32 0.0, %v1765
      %v1767 = vpop.f32.mrb[0].mxu0
      %v1768 = vadd.f32 0.0, %v1767
      %1769 = vmatprep.mubr.bf16.mxu0 0
      %1770 = vmatmul.mubr.bf16.gmra.mrb[0].mxu0 %v1037
      %v1771 = vpop.f32.mrb[0].mxu0
      %v1772 = vadd.f32 0.0, %v1771
      %v1773 = vpop.f32.mrb[0].mxu0
      %v1774 = vadd.f32 0.0, %v1773
      %v1775 = vpop.f32.mrb[0].mxu0
      %v1776 = vadd.f32 0.0, %v1775
      %v1777 = vpop.f32.mrb[0].mxu0
      %v1778 = vadd.f32 0.0, %v1777
      %1779 = vmatprep.mubr.bf16.mxu0 0
      %1780 = vmatmul.mubr.bf16.gmra.mrb[0].mxu0 %v1040
      %v1781 = vpop.f32.mrb[0].mxu0
      %v1782 = vadd.f32 0.0, %v1781
      %v1783 = vpop.f32.mrb[0].mxu0
      %v1784 = vadd.f32 0.0, %v1783
      %v1785 = vpop.f32.mrb[0].mxu0
      %v1786 = vadd.f32 0.0, %v1785
      %v1787 = vpop.f32.mrb[0].mxu0
      %v1788 = vadd.f32 0.0, %v1787
      %1789 = vmatprep.mubr.bf16.mxu0 0
      %1790 = vmatmul.mubr.bf16.gmra.mrb[0].mxu0 %v1043
      %v1791 = vpop.f32.mrb[0].mxu0
      %v1792 = vadd.f32 0.0, %v1791
      %v1793 = vpop.f32.mrb[0].mxu0
      %v1794 = vadd.f32 0.0, %v1793
      %v1795 = vpop.f32.mrb[0].mxu0
      %v1796 = vadd.f32 0.0, %v1795
      %v1797 = vpop.f32.mrb[0].mxu0
      %v1798 = vadd.f32 0.0, %v1797
      %1799 = vmatprep.mubr.bf16.mxu0 0
      %1800 = vmatmul.mubr.bf16.gmra.mrb[0].mxu0 %v1046
      %v1801 = vpop.f32.mrb[0].mxu0
      %v1802 = vadd.f32 0.0, %v1801
      %v1803 = vpop.f32.mrb[0].mxu0
      %v1804 = vadd.f32 0.0, %v1803
      %v1805 = vpop.f32.mrb[0].mxu0
      %v1806 = vadd.f32 0.0, %v1805
      %v1807 = vpop.f32.mrb[0].mxu0
      %v1808 = vadd.f32 0.0, %v1807
      %1809 = vmatprep.mubr.bf16.mxu0 0
      %1810 = vmatmul.mubr.bf16.gmra.mrb[0].mxu0 %v1049
      %v1811 = vpop.f32.mrb[0].mxu0
      %v1812 = vadd.f32 0.0, %v1811
      %v1813 = vpop.f32.mrb[0].mxu0
      %v1814 = vadd.f32 0.0, %v1813
      %v1815 = vpop.f32.mrb[0].mxu0
      %v1816 = vadd.f32 0.0, %v1815
      %v1817 = vpop.f32.mrb[0].mxu0
      %v1818 = vadd.f32 0.0, %v1817
      %1819 = vdwg.mxu0
      %1820 = vmatprep.subr.bf16.mxu0 0
      %1821 = vmatpush1.bf16.xpose.msra.mxu0 %v1100
      %1822 = vmatprep.subr.bf16.mxu0 0
      %1823 = vmatpush1.bf16.xpose.msra.mxu0 %v1103
      %1824 = vmatprep.subr.bf16.mxu0 0
      %1825 = vmatpush1.bf16.xpose.msra.mxu0 %v1106
      %1826 = vmatprep.subr.bf16.mxu0 0
      %1827 = vmatpush1.bf16.xpose.msra.mxu0 %v1109
      %1828 = vmatprep.subr.bf16.mxu0 0
      %1829 = vmatpush1.bf16.xpose.msra.mxu0 %v1112
      %1830 = vmatprep.subr.bf16.mxu0 0
      %1831 = vmatpush1.bf16.xpose.msra.mxu0 %v1115
      %1832 = vmatprep.subr.bf16.mxu0 0
      %1833 = vmatpush1.bf16.xpose.msra.mxu0 %v1118
      %1834 = vmatprep.subr.bf16.mxu0 0
      %1835 = vmatpush1.bf16.xpose.msra.mxu0 %v1121
      %1836 = vmatprep.subr.bf16.mxu0 0
      %1837 = vmatpush1.bf16.xpose.msra.mxu0 %v1124
      %1838 = vmatprep.subr.bf16.mxu0 0
      %1839 = vmatpush1.bf16.xpose.msra.mxu0 %v1127
      %1840 = vmatprep.subr.bf16.mxu0 0
      %1841 = vmatpush1.bf16.xpose.msra.mxu0 %v1130
      %1842 = vmatprep.subr.bf16.mxu0 0
      %1843 = vmatpush1.bf16.xpose.msra.mxu0 %v1133
      %1844 = vmatprep.subr.bf16.mxu0 0
      %1845 = vmatpush1.bf16.xpose.msra.mxu0 %v1136
      %1846 = vmatprep.subr.bf16.mxu0 0
      %1847 = vmatpush1.bf16.xpose.msra.mxu0 %v1139
      %1848 = vmatprep.subr.bf16.mxu0 0
      %1849 = vmatpush1.bf16.xpose.msra.mxu0 %v1142
      %1850 = vmatprep.subr.bf16.mxu0 0
      %1851 = vmatpush1.bf16.xpose.msra.mxu0 %v1145
      %1852 = vmatprep.mubr.bf16.mxu0 0
      %1853 = vmatmul.mubr.bf16.gmra.mrb[0].mxu0 %v1004
      %v1854 = vpop.f32.mrb[0].mxu0
      %v1855 = vadd.f32 0.0, %v1854
      %v1856 = vpop.f32.mrb[0].mxu0
      %v1857 = vadd.f32 0.0, %v1856
      %v1858 = vpop.f32.mrb[0].mxu0
      %v1859 = vadd.f32 0.0, %v1858
      %v1860 = vpop.f32.mrb[0].mxu0
      %v1861 = vadd.f32 0.0, %v1860
      %1862 = vmatprep.mubr.bf16.mxu0 0
      %1863 = vmatmul.mubr.bf16.gmra.mrb[0].mxu0 %v1007
      %v1864 = vpop.f32.mrb[0].mxu0
      %v1865 = vadd.f32 0.0, %v1864
      %v1866 = vpop.f32.mrb[0].mxu0
      %v1867 = vadd.f32 0.0, %v1866
      %v1868 = vpop.f32.mrb[0].mxu0
      %v1869 = vadd.f32 0.0, %v1868
      %v1870 = vpop.f32.mrb[0].mxu0
      %v1871 = vadd.f32 0.0, %v1870
      %1872 = vmatprep.mubr.bf16.mxu0 0
      %1873 = vmatmul.mubr.bf16.gmra.mrb[0].mxu0 %v1010
      %v1874 = vpop.f32.mrb[0].mxu0
      %v1875 = vadd.f32 0.0, %v1874
      %v1876 = vpop.f32.mrb[0].mxu0
      %v1877 = vadd.f32 0.0, %v1876
      %v1878 = vpop.f32.mrb[0].mxu0
      %v1879 = vadd.f32 0.0, %v1878
      %v1880 = vpop.f32.mrb[0].mxu0
      %v1881 = vadd.f32 0.0, %v1880
      %1882 = vmatprep.mubr.bf16.mxu0 0
      %1883 = vmatmul.mubr.bf16.gmra.mrb[0].mxu0 %v1013
      %v1884 = vpop.f32.mrb[0].mxu0
      %v1885 = vadd.f32 0.0, %v1884
      %v1886 = vpop.f32.mrb[0].mxu0
      %v1887 = vadd.f32 0.0, %v1886
      %v1888 = vpop.f32.mrb[0].mxu0
      %v1889 = vadd.f32 0.0, %v1888
      %v1890 = vpop.f32.mrb[0].mxu0
      %v1891 = vadd.f32 0.0, %v1890
      %1892 = vmatprep.mubr.bf16.mxu0 0
      %1893 = vmatmul.mubr.bf16.gmra.mrb[0].mxu0 %v1016
      %v1894 = vpop.f32.mrb[0].mxu0
      %v1895 = vadd.f32 0.0, %v1894
      %v1896 = vpop.f32.mrb[0].mxu0
      %v1897 = vadd.f32 0.0, %v1896
      %v1898 = vpop.f32.mrb[0].mxu0
      %v1899 = vadd.f32 0.0, %v1898
      %v1900 = vpop.f32.mrb[0].mxu0
      %v1901 = vadd.f32 0.0, %v1900
      %1902 = vmatprep.mubr.bf16.mxu0 0
      %1903 = vmatmul.mubr.bf16.gmra.mrb[0].mxu0 %v1019
      %v1904 = vpop.f32.mrb[0].mxu0
      %v1905 = vadd.f32 0.0, %v1904
      %v1906 = vpop.f32.mrb[0].mxu0
      %v1907 = vadd.f32 0.0, %v1906
      %v1908 = vpop.f32.mrb[0].mxu0
      %v1909 = vadd.f32 0.0, %v1908
      %v1910 = vpop.f32.mrb[0].mxu0
      %v1911 = vadd.f32 0.0, %v1910
      %1912 = vmatprep.mubr.bf16.mxu0 0
      %1913 = vmatmul.mubr.bf16.gmra.mrb[0].mxu0 %v1022
      %v1914 = vpop.f32.mrb[0].mxu0
      %v1915 = vadd.f32 0.0, %v1914
      %v1916 = vpop.f32.mrb[0].mxu0
      %v1917 = vadd.f32 0.0, %v1916
      %v1918 = vpop.f32.mrb[0].mxu0
      %v1919 = vadd.f32 0.0, %v1918
      %v1920 = vpop.f32.mrb[0].mxu0
      %v1921 = vadd.f32 0.0, %v1920
      %1922 = vmatprep.mubr.bf16.mxu0 0
      %1923 = vmatmul.mubr.bf16.gmra.mrb[0].mxu0 %v1025
      %v1924 = vpop.f32.mrb[0].mxu0
      %v1925 = vadd.f32 0.0, %v1924
      %v1926 = vpop.f32.mrb[0].mxu0
      %v1927 = vadd.f32 0.0, %v1926
      %v1928 = vpop.f32.mrb[0].mxu0
      %v1929 = vadd.f32 0.0, %v1928
      %v1930 = vpop.f32.mrb[0].mxu0
      %v1931 = vadd.f32 0.0, %v1930
      %1932 = vmatprep.mubr.bf16.mxu0 0
      %1933 = vmatmul.mubr.bf16.gmra.mrb[0].mxu0 %v1028
      %v1934 = vpop.f32.mrb[0].mxu0
      %v1935 = vadd.f32 0.0, %v1934
      %v1936 = vpop.f32.mrb[0].mxu0
      %v1937 = vadd.f32 0.0, %v1936
      %v1938 = vpop.f32.mrb[0].mxu0
      %v1939 = vadd.f32 0.0, %v1938
      %v1940 = vpop.f32.mrb[0].mxu0
      %v1941 = vadd.f32 0.0, %v1940
      %1942 = vmatprep.mubr.bf16.mxu0 0
      %1943 = vmatmul.mubr.bf16.gmra.mrb[0].mxu0 %v1031
      %v1944 = vpop.f32.mrb[0].mxu0
      %v1945 = vadd.f32 0.0, %v1944
      %v1946 = vpop.f32.mrb[0].mxu0
      %v1947 = vadd.f32 0.0, %v1946
      %v1948 = vpop.f32.mrb[0].mxu0
      %v1949 = vadd.f32 0.0, %v1948
      %v1950 = vpop.f32.mrb[0].mxu0
      %v1951 = vadd.f32 0.0, %v1950
      %1952 = vmatprep.mubr.bf16.mxu0 0
      %1953 = vmatmul.mubr.bf16.gmra.mrb[0].mxu0 %v1034
      %v1954 = vpop.f32.mrb[0].mxu0
      %v1955 = vadd.f32 0.0, %v1954
      %v1956 = vpop.f32.mrb[0].mxu0
      %v1957 = vadd.f32 0.0, %v1956
      %v1958 = vpop.f32.mrb[0].mxu0
      %v1959 = vadd.f32 0.0, %v1958
      %v1960 = vpop.f32.mrb[0].mxu0
      %v1961 = vadd.f32 0.0, %v1960
      %1962 = vmatprep.mubr.bf16.mxu0 0
      %1963 = vmatmul.mubr.bf16.gmra.mrb[0].mxu0 %v1037
      %v1964 = vpop.f32.mrb[0].mxu0
      %v1965 = vadd.f32 0.0, %v1964
      %v1966 = vpop.f32.mrb[0].mxu0
      %v1967 = vadd.f32 0.0, %v1966
      %v1968 = vpop.f32.mrb[0].mxu0
      %v1969 = vadd.f32 0.0, %v1968
      %v1970 = vpop.f32.mrb[0].mxu0
      %v1971 = vadd.f32 0.0, %v1970
      %1972 = vmatprep.mubr.bf16.mxu0 0
      %1973 = vmatmul.mubr.bf16.gmra.mrb[0].mxu0 %v1040
      %v1974 = vpop.f32.mrb[0].mxu0
      %v1975 = vadd.f32 0.0, %v1974
      %v1976 = vpop.f32.mrb[0].mxu0
      %v1977 = vadd.f32 0.0, %v1976
      %v1978 = vpop.f32.mrb[0].mxu0
      %v1979 = vadd.f32 0.0, %v1978
      %v1980 = vpop.f32.mrb[0].mxu0
      %v1981 = vadd.f32 0.0, %v1980
      %1982 = vmatprep.mubr.bf16.mxu0 0
      %1983 = vmatmul.mubr.bf16.gmra.mrb[0].mxu0 %v1043
      %v1984 = vpop.f32.mrb[0].mxu0
      %v1985 = vadd.f32 0.0, %v1984
      %v1986 = vpop.f32.mrb[0].mxu0
      %v1987 = vadd.f32 0.0, %v1986
      %v1988 = vpop.f32.mrb[0].mxu0
      %v1989 = vadd.f32 0.0, %v1988
      %v1990 = vpop.f32.mrb[0].mxu0
      %v1991 = vadd.f32 0.0, %v1990
      %1992 = vmatprep.mubr.bf16.mxu0 0
      %1993 = vmatmul.mubr.bf16.gmra.mrb[0].mxu0 %v1046
      %v1994 = vpop.f32.mrb[0].mxu0
      %v1995 = vadd.f32 0.0, %v1994
      %v1996 = vpop.f32.mrb[0].mxu0
      %v1997 = vadd.f32 0.0, %v1996
      %v1998 = vpop.f32.mrb[0].mxu0
      %v1999 = vadd.f32 0.0, %v1998
      %v2000 = vpop.f32.mrb[0].mxu0
      %v2001 = vadd.f32 0.0, %v2000
      %2002 = vmatprep.mubr.bf16.mxu0 0
      %2003 = vmatmul.mubr.bf16.gmra.mrb[0].mxu0 %v1049
      %v2004 = vpop.f32.mrb[0].mxu0
      %v2005 = vadd.f32 0.0, %v2004
      %v2006 = vpop.f32.mrb[0].mxu0
      %v2007 = vadd.f32 0.0, %v2006
      %v2008 = vpop.f32.mrb[0].mxu0
      %v2009 = vadd.f32 0.0, %v2008
      %v2010 = vpop.f32.mrb[0].mxu0
      %v2011 = vadd.f32 0.0, %v2010
      %2012 = vdwg.mxu0
      %2013 = vmatprep.subr.bf16.mxu0 0
      %2014 = vmatpush1.bf16.xpose.msra.mxu0 %v1148
      %2015 = vmatprep.subr.bf16.mxu0 0
      %2016 = vmatpush1.bf16.xpose.msra.mxu0 %v1151
      %2017 = vmatprep.subr.bf16.mxu0 0
      %2018 = vmatpush1.bf16.xpose.msra.mxu0 %v1154
      %2019 = vmatprep.subr.bf16.mxu0 0
      %2020 = vmatpush1.bf16.xpose.msra.mxu0 %v1157
      %2021 = vmatprep.subr.bf16.mxu0 0
      %2022 = vmatpush1.bf16.xpose.msra.mxu0 %v1160
      %2023 = vmatprep.subr.bf16.mxu0 0
      %2024 = vmatpush1.bf16.xpose.msra.mxu0 %v1163
      %2025 = vmatprep.subr.bf16.mxu0 0
      %2026 = vmatpush1.bf16.xpose.msra.mxu0 %v1166
      %2027 = vmatprep.subr.bf16.mxu0 0
      %2028 = vmatpush1.bf16.xpose.msra.mxu0 %v1169
      %2029 = vmatprep.subr.bf16.mxu0 0
      %2030 = vmatpush1.bf16.xpose.msra.mxu0 %v1172
      %2031 = vmatprep.subr.bf16.mxu0 0
      %2032 = vmatpush1.bf16.xpose.msra.mxu0 %v1175
      %2033 = vmatprep.subr.bf16.mxu0 0
      %2034 = vmatpush1.bf16.xpose.msra.mxu0 %v1178
      %2035 = vmatprep.subr.bf16.mxu0 0
      %2036 = vmatpush1.bf16.xpose.msra.mxu0 %v1181
      %2037 = vmatprep.subr.bf16.mxu0 0
      %2038 = vmatpush1.bf16.xpose.msra.mxu0 %v1184
      %2039 = vmatprep.subr.bf16.mxu0 0
      %2040 = vmatpush1.bf16.xpose.msra.mxu0 %v1187
      %2041 = vmatprep.subr.bf16.mxu0 0
      %2042 = vmatpush1.bf16.xpose.msra.mxu0 %v1190
      %2043 = vmatprep.subr.bf16.mxu0 0
      %2044 = vmatpush1.bf16.xpose.msra.mxu0 %v1193
      %2045 = vmatprep.mubr.bf16.mxu0 0
      %2046 = vmatmul.mubr.bf16.gmra.mrb[0].mxu0 %v1004
      %v2047 = vpop.f32.mrb[0].mxu0
      %v2048 = vadd.f32 0.0, %v2047
      %v2049 = vpop.f32.mrb[0].mxu0
      %v2050 = vadd.f32 0.0, %v2049
      %v2051 = vpop.f32.mrb[0].mxu0
      %v2052 = vadd.f32 0.0, %v2051
      %v2053 = vpop.f32.mrb[0].mxu0
      %v2054 = vadd.f32 0.0, %v2053
      %2055 = vmatprep.mubr.bf16.mxu0 0
      %2056 = vmatmul.mubr.bf16.gmra.mrb[0].mxu0 %v1007
      %v2057 = vpop.f32.mrb[0].mxu0
      %v2058 = vadd.f32 0.0, %v2057
      %v2059 = vpop.f32.mrb[0].mxu0
      %v2060 = vadd.f32 0.0, %v2059
      %v2061 = vpop.f32.mrb[0].mxu0
      %v2062 = vadd.f32 0.0, %v2061
      %v2063 = vpop.f32.mrb[0].mxu0
      %v2064 = vadd.f32 0.0, %v2063
      %2065 = vmatprep.mubr.bf16.mxu0 0
      %2066 = vmatmul.mubr.bf16.gmra.mrb[0].mxu0 %v1010
      %v2067 = vpop.f32.mrb[0].mxu0
      %v2068 = vadd.f32 0.0, %v2067
      %v2069 = vpop.f32.mrb[0].mxu0
      %v2070 = vadd.f32 0.0, %v2069
      %v2071 = vpop.f32.mrb[0].mxu0
      %v2072 = vadd.f32 0.0, %v2071
      %v2073 = vpop.f32.mrb[0].mxu0
      %v2074 = vadd.f32 0.0, %v2073
      %2075 = vmatprep.mubr.bf16.mxu0 0
      %2076 = vmatmul.mubr.bf16.gmra.mrb[0].mxu0 %v1013
      %v2077 = vpop.f32.mrb[0].mxu0
      %v2078 = vadd.f32 0.0, %v2077
      %v2079 = vpop.f32.mrb[0].mxu0
      %v2080 = vadd.f32 0.0, %v2079
      %v2081 = vpop.f32.mrb[0].mxu0
      %v2082 = vadd.f32 0.0, %v2081
      %v2083 = vpop.f32.mrb[0].mxu0
      %v2084 = vadd.f32 0.0, %v2083
      %2085 = vmatprep.mubr.bf16.mxu0 0
      %2086 = vmatmul.mubr.bf16.gmra.mrb[0].mxu0 %v1016
      %v2087 = vpop.f32.mrb[0].mxu0
      %v2088 = vadd.f32 0.0, %v2087
      %v2089 = vpop.f32.mrb[0].mxu0
      %v2090 = vadd.f32 0.0, %v2089
      %v2091 = vpop.f32.mrb[0].mxu0
      %v2092 = vadd.f32 0.0, %v2091
      %v2093 = vpop.f32.mrb[0].mxu0
      %v2094 = vadd.f32 0.0, %v2093
      %2095 = vmatprep.mubr.bf16.mxu0 0
      %2096 = vmatmul.mubr.bf16.gmra.mrb[0].mxu0 %v1019
      %v2097 = vpop.f32.mrb[0].mxu0
      %v2098 = vadd.f32 0.0, %v2097
      %v2099 = vpop.f32.mrb[0].mxu0
      %v2100 = vadd.f32 0.0, %v2099
      %v2101 = vpop.f32.mrb[0].mxu0
      %v2102 = vadd.f32 0.0, %v2101
      %v2103 = vpop.f32.mrb[0].mxu0
      %v2104 = vadd.f32 0.0, %v2103
      %2105 = vmatprep.mubr.bf16.mxu0 0
      %2106 = vmatmul.mubr.bf16.gmra.mrb[0].mxu0 %v1022
      %v2107 = vpop.f32.mrb[0].mxu0
      %v2108 = vadd.f32 0.0, %v2107
      %v2109 = vpop.f32.mrb[0].mxu0
      %v2110 = vadd.f32 0.0, %v2109
      %v2111 = vpop.f32.mrb[0].mxu0
      %v2112 = vadd.f32 0.0, %v2111
      %v2113 = vpop.f32.mrb[0].mxu0
      %v2114 = vadd.f32 0.0, %v2113
      %2115 = vmatprep.mubr.bf16.mxu0 0
      %2116 = vmatmul.mubr.bf16.gmra.mrb[0].mxu0 %v1025
      %v2117 = vpop.f32.mrb[0].mxu0
      %v2118 = vadd.f32 0.0, %v2117
      %v2119 = vpop.f32.mrb[0].mxu0
      %v2120 = vadd.f32 0.0, %v2119
      %v2121 = vpop.f32.mrb[0].mxu0
      %v2122 = vadd.f32 0.0, %v2121
      %v2123 = vpop.f32.mrb[0].mxu0
      %v2124 = vadd.f32 0.0, %v2123
      %2125 = vmatprep.mubr.bf16.mxu0 0
      %2126 = vmatmul.mubr.bf16.gmra.mrb[0].mxu0 %v1028
      %v2127 = vpop.f32.mrb[0].mxu0
      %v2128 = vadd.f32 0.0, %v2127
      %v2129 = vpop.f32.mrb[0].mxu0
      %v2130 = vadd.f32 0.0, %v2129
      %v2131 = vpop.f32.mrb[0].mxu0
      %v2132 = vadd.f32 0.0, %v2131
      %v2133 = vpop.f32.mrb[0].mxu0
      %v2134 = vadd.f32 0.0, %v2133
      %2135 = vmatprep.mubr.bf16.mxu0 0
      %2136 = vmatmul.mubr.bf16.gmra.mrb[0].mxu0 %v1031
      %v2137 = vpop.f32.mrb[0].mxu0
      %v2138 = vadd.f32 0.0, %v2137
      %v2139 = vpop.f32.mrb[0].mxu0
      %v2140 = vadd.f32 0.0, %v2139
      %v2141 = vpop.f32.mrb[0].mxu0
      %v2142 = vadd.f32 0.0, %v2141
      %v2143 = vpop.f32.mrb[0].mxu0
      %v2144 = vadd.f32 0.0, %v2143
      %2145 = vmatprep.mubr.bf16.mxu0 0
      %2146 = vmatmul.mubr.bf16.gmra.mrb[0].mxu0 %v1034
      %v2147 = vpop.f32.mrb[0].mxu0
      %v2148 = vadd.f32 0.0, %v2147
      %v2149 = vpop.f32.mrb[0].mxu0
      %v2150 = vadd.f32 0.0, %v2149
      %v2151 = vpop.f32.mrb[0].mxu0
      %v2152 = vadd.f32 0.0, %v2151
      %v2153 = vpop.f32.mrb[0].mxu0
      %v2154 = vadd.f32 0.0, %v2153
      %2155 = vmatprep.mubr.bf16.mxu0 0
      %2156 = vmatmul.mubr.bf16.gmra.mrb[0].mxu0 %v1037
      %v2157 = vpop.f32.mrb[0].mxu0
      %v2158 = vadd.f32 0.0, %v2157
      %v2159 = vpop.f32.mrb[0].mxu0
      %v2160 = vadd.f32 0.0, %v2159
      %v2161 = vpop.f32.mrb[0].mxu0
      %v2162 = vadd.f32 0.0, %v2161
      %v2163 = vpop.f32.mrb[0].mxu0
      %v2164 = vadd.f32 0.0, %v2163
      %2165 = vmatprep.mubr.bf16.mxu0 0
      %2166 = vmatmul.mubr.bf16.gmra.mrb[0].mxu0 %v1040
      %v2167 = vpop.f32.mrb[0].mxu0
      %v2168 = vadd.f32 0.0, %v2167
      %v2169 = vpop.f32.mrb[0].mxu0
      %v2170 = vadd.f32 0.0, %v2169
      %v2171 = vpop.f32.mrb[0].mxu0
      %v2172 = vadd.f32 0.0, %v2171
      %v2173 = vpop.f32.mrb[0].mxu0
      %v2174 = vadd.f32 0.0, %v2173
      %2175 = vmatprep.mubr.bf16.mxu0 0
      %2176 = vmatmul.mubr.bf16.gmra.mrb[0].mxu0 %v1043
      %v2177 = vpop.f32.mrb[0].mxu0
      %v2178 = vadd.f32 0.0, %v2177
      %v2179 = vpop.f32.mrb[0].mxu0
      %v2180 = vadd.f32 0.0, %v2179
      %v2181 = vpop.f32.mrb[0].mxu0
      %v2182 = vadd.f32 0.0, %v2181
      %v2183 = vpop.f32.mrb[0].mxu0
      %v2184 = vadd.f32 0.0, %v2183
      %2185 = vmatprep.mubr.bf16.mxu0 0
      %2186 = vmatmul.mubr.bf16.gmra.mrb[0].mxu0 %v1046
      %v2187 = vpop.f32.mrb[0].mxu0
      %v2188 = vadd.f32 0.0, %v2187
      %v2189 = vpop.f32.mrb[0].mxu0
      %v2190 = vadd.f32 0.0, %v2189
      %v2191 = vpop.f32.mrb[0].mxu0
      %v2192 = vadd.f32 0.0, %v2191
      %v2193 = vpop.f32.mrb[0].mxu0
      %v2194 = vadd.f32 0.0, %v2193
      %2195 = vmatprep.mubr.bf16.mxu0 0
      %2196 = vmatmul.mubr.bf16.gmra.mrb[0].mxu0 %v1049
      %v2197 = vpop.f32.mrb[0].mxu0
      %v2198 = vadd.f32 0.0, %v2197
      %v2199 = vpop.f32.mrb[0].mxu0
      %v2200 = vadd.f32 0.0, %v2199
      %v2201 = vpop.f32.mrb[0].mxu0
      %v2202 = vadd.f32 0.0, %v2201
      %v2203 = vpop.f32.mrb[0].mxu0
      %v2204 = vadd.f32 0.0, %v2203
      %2205 = vdwg.mxu0
      %2206 = vmatprep.subr.bf16.mxu0 0
      %2207 = vmatpush1.bf16.xpose.msra.mxu0 %v1196
      %2208 = vmatprep.subr.bf16.mxu0 0
      %2209 = vmatpush1.bf16.xpose.msra.mxu0 %v1199
      %2210 = vmatprep.subr.bf16.mxu0 0
      %2211 = vmatpush1.bf16.xpose.msra.mxu0 %v1202
      %2212 = vmatprep.subr.bf16.mxu0 0
      %2213 = vmatpush1.bf16.xpose.msra.mxu0 %v1205
      %2214 = vmatprep.subr.bf16.mxu0 0
      %2215 = vmatpush1.bf16.xpose.msra.mxu0 %v1208
      %2216 = vmatprep.subr.bf16.mxu0 0
      %2217 = vmatpush1.bf16.xpose.msra.mxu0 %v1211
      %2218 = vmatprep.subr.bf16.mxu0 0
      %2219 = vmatpush1.bf16.xpose.msra.mxu0 %v1214
      %2220 = vmatprep.subr.bf16.mxu0 0
      %2221 = vmatpush1.bf16.xpose.msra.mxu0 %v1217
      %2222 = vmatprep.subr.bf16.mxu0 0
      %2223 = vmatpush1.bf16.xpose.msra.mxu0 %v1220
      %2224 = vmatprep.subr.bf16.mxu0 0
      %2225 = vmatpush1.bf16.xpose.msra.mxu0 %v1223
      %2226 = vmatprep.subr.bf16.mxu0 0
      %2227 = vmatpush1.bf16.xpose.msra.mxu0 %v1226
      %2228 = vmatprep.subr.bf16.mxu0 0
      %2229 = vmatpush1.bf16.xpose.msra.mxu0 %v1229
      %2230 = vmatprep.subr.bf16.mxu0 0
      %2231 = vmatpush1.bf16.xpose.msra.mxu0 %v1232
      %2232 = vmatprep.subr.bf16.mxu0 0
      %2233 = vmatpush1.bf16.xpose.msra.mxu0 %v1235
      %2234 = vmatprep.subr.bf16.mxu0 0
      %2235 = vmatpush1.bf16.xpose.msra.mxu0 %v1238
      %2236 = vmatprep.subr.bf16.mxu0 0
      %2237 = vmatpush1.bf16.xpose.msra.mxu0 %v1241
      %2238 = vmatprep.mubr.bf16.mxu0 0
      %2239 = vmatmul.mubr.bf16.gmra.mrb[0].mxu0 %v1004
      %v2240 = vpop.f32.mrb[0].mxu0
      %v2241 = vadd.f32 0.0, %v2240
      %v2242 = vpop.f32.mrb[0].mxu0
      %v2243 = vadd.f32 0.0, %v2242
      %v2244 = vpop.f32.mrb[0].mxu0
      %v2245 = vadd.f32 0.0, %v2244
      %v2246 = vpop.f32.mrb[0].mxu0
      %v2247 = vadd.f32 0.0, %v2246
      %2248 = vmatprep.mubr.bf16.mxu0 0
      %2249 = vmatmul.mubr.bf16.gmra.mrb[0].mxu0 %v1007
      %v2250 = vpop.f32.mrb[0].mxu0
      %v2251 = vadd.f32 0.0, %v2250
      %v2252 = vpop.f32.mrb[0].mxu0
      %v2253 = vadd.f32 0.0, %v2252
      %v2254 = vpop.f32.mrb[0].mxu0
      %v2255 = vadd.f32 0.0, %v2254
      %v2256 = vpop.f32.mrb[0].mxu0
      %v2257 = vadd.f32 0.0, %v2256
      %2258 = vmatprep.mubr.bf16.mxu0 0
      %2259 = vmatmul.mubr.bf16.gmra.mrb[0].mxu0 %v1010
      %v2260 = vpop.f32.mrb[0].mxu0
      %v2261 = vadd.f32 0.0, %v2260
      %v2262 = vpop.f32.mrb[0].mxu0
      %v2263 = vadd.f32 0.0, %v2262
      %v2264 = vpop.f32.mrb[0].mxu0
      %v2265 = vadd.f32 0.0, %v2264
      %v2266 = vpop.f32.mrb[0].mxu0
      %v2267 = vadd.f32 0.0, %v2266
      %2268 = vmatprep.mubr.bf16.mxu0 0
      %2269 = vmatmul.mubr.bf16.gmra.mrb[0].mxu0 %v1013
      %v2270 = vpop.f32.mrb[0].mxu0
      %v2271 = vadd.f32 0.0, %v2270
      %v2272 = vpop.f32.mrb[0].mxu0
      %v2273 = vadd.f32 0.0, %v2272
      %v2274 = vpop.f32.mrb[0].mxu0
      %v2275 = vadd.f32 0.0, %v2274
      %v2276 = vpop.f32.mrb[0].mxu0
      %v2277 = vadd.f32 0.0, %v2276
      %2278 = vmatprep.mubr.bf16.mxu0 0
      %2279 = vmatmul.mubr.bf16.gmra.mrb[0].mxu0 %v1016
      %v2280 = vpop.f32.mrb[0].mxu0
      %v2281 = vadd.f32 0.0, %v2280
      %v2282 = vpop.f32.mrb[0].mxu0
      %v2283 = vadd.f32 0.0, %v2282
      %v2284 = vpop.f32.mrb[0].mxu0
      %v2285 = vadd.f32 0.0, %v2284
      %v2286 = vpop.f32.mrb[0].mxu0
      %v2287 = vadd.f32 0.0, %v2286
      %2288 = vmatprep.mubr.bf16.mxu0 0
      %2289 = vmatmul.mubr.bf16.gmra.mrb[0].mxu0 %v1019
      %v2290 = vpop.f32.mrb[0].mxu0
      %v2291 = vadd.f32 0.0, %v2290
      %v2292 = vpop.f32.mrb[0].mxu0
      %v2293 = vadd.f32 0.0, %v2292
      %v2294 = vpop.f32.mrb[0].mxu0
      %v2295 = vadd.f32 0.0, %v2294
      %v2296 = vpop.f32.mrb[0].mxu0
      %v2297 = vadd.f32 0.0, %v2296
      %2298 = vmatprep.mubr.bf16.mxu0 0
      %2299 = vmatmul.mubr.bf16.gmra.mrb[0].mxu0 %v1022
      %v2300 = vpop.f32.mrb[0].mxu0
      %v2301 = vadd.f32 0.0, %v2300
      %v2302 = vpop.f32.mrb[0].mxu0
      %v2303 = vadd.f32 0.0, %v2302
      %v2304 = vpop.f32.mrb[0].mxu0
      %v2305 = vadd.f32 0.0, %v2304
      %v2306 = vpop.f32.mrb[0].mxu0
      %v2307 = vadd.f32 0.0, %v2306
      %2308 = vmatprep.mubr.bf16.mxu0 0
      %2309 = vmatmul.mubr.bf16.gmra.mrb[0].mxu0 %v1025
      %v2310 = vpop.f32.mrb[0].mxu0
      %v2311 = vadd.f32 0.0, %v2310
      %v2312 = vpop.f32.mrb[0].mxu0
      %v2313 = vadd.f32 0.0, %v2312
      %v2314 = vpop.f32.mrb[0].mxu0
      %v2315 = vadd.f32 0.0, %v2314
      %v2316 = vpop.f32.mrb[0].mxu0
      %v2317 = vadd.f32 0.0, %v2316
      %2318 = vmatprep.mubr.bf16.mxu0 0
      %2319 = vmatmul.mubr.bf16.gmra.mrb[0].mxu0 %v1028
      %v2320 = vpop.f32.mrb[0].mxu0
      %v2321 = vadd.f32 0.0, %v2320
      %v2322 = vpop.f32.mrb[0].mxu0
      %v2323 = vadd.f32 0.0, %v2322
      %v2324 = vpop.f32.mrb[0].mxu0
      %v2325 = vadd.f32 0.0, %v2324
      %v2326 = vpop.f32.mrb[0].mxu0
      %v2327 = vadd.f32 0.0, %v2326
      %2328 = vmatprep.mubr.bf16.mxu0 0
      %2329 = vmatmul.mubr.bf16.gmra.mrb[0].mxu0 %v1031
      %v2330 = vpop.f32.mrb[0].mxu0
      %v2331 = vadd.f32 0.0, %v2330
      %v2332 = vpop.f32.mrb[0].mxu0
      %v2333 = vadd.f32 0.0, %v2332
      %v2334 = vpop.f32.mrb[0].mxu0
      %v2335 = vadd.f32 0.0, %v2334
      %v2336 = vpop.f32.mrb[0].mxu0
      %v2337 = vadd.f32 0.0, %v2336
      %2338 = vmatprep.mubr.bf16.mxu0 0
      %2339 = vmatmul.mubr.bf16.gmra.mrb[0].mxu0 %v1034
      %v2340 = vpop.f32.mrb[0].mxu0
      %v2341 = vadd.f32 0.0, %v2340
      %v2342 = vpop.f32.mrb[0].mxu0
      %v2343 = vadd.f32 0.0, %v2342
      %v2344 = vpop.f32.mrb[0].mxu0
      %v2345 = vadd.f32 0.0, %v2344
      %v2346 = vpop.f32.mrb[0].mxu0
      %v2347 = vadd.f32 0.0, %v2346
      %2348 = vmatprep.mubr.bf16.mxu0 0
      %2349 = vmatmul.mubr.bf16.gmra.mrb[0].mxu0 %v1037
      %v2350 = vpop.f32.mrb[0].mxu0
      %v2351 = vadd.f32 0.0, %v2350
      %v2352 = vpop.f32.mrb[0].mxu0
      %v2353 = vadd.f32 0.0, %v2352
      %v2354 = vpop.f32.mrb[0].mxu0
      %v2355 = vadd.f32 0.0, %v2354
      %v2356 = vpop.f32.mrb[0].mxu0
      %v2357 = vadd.f32 0.0, %v2356
      %2358 = vmatprep.mubr.bf16.mxu0 0
      %2359 = vmatmul.mubr.bf16.gmra.mrb[0].mxu0 %v1040
      %v2360 = vpop.f32.mrb[0].mxu0
      %v2361 = vadd.f32 0.0, %v2360
      %v2362 = vpop.f32.mrb[0].mxu0
      %v2363 = vadd.f32 0.0, %v2362
      %v2364 = vpop.f32.mrb[0].mxu0
      %v2365 = vadd.f32 0.0, %v2364
      %v2366 = vpop.f32.mrb[0].mxu0
      %v2367 = vadd.f32 0.0, %v2366
      %2368 = vmatprep.mubr.bf16.mxu0 0
      %2369 = vmatmul.mubr.bf16.gmra.mrb[0].mxu0 %v1043
      %v2370 = vpop.f32.mrb[0].mxu0
      %v2371 = vadd.f32 0.0, %v2370
      %v2372 = vpop.f32.mrb[0].mxu0
      %v2373 = vadd.f32 0.0, %v2372
      %v2374 = vpop.f32.mrb[0].mxu0
      %v2375 = vadd.f32 0.0, %v2374
      %v2376 = vpop.f32.mrb[0].mxu0
      %v2377 = vadd.f32 0.0, %v2376
      %2378 = vmatprep.mubr.bf16.mxu0 0
      %2379 = vmatmul.mubr.bf16.gmra.mrb[0].mxu0 %v1046
      %v2380 = vpop.f32.mrb[0].mxu0
      %v2381 = vadd.f32 0.0, %v2380
      %v2382 = vpop.f32.mrb[0].mxu0
      %v2383 = vadd.f32 0.0, %v2382
      %v2384 = vpop.f32.mrb[0].mxu0
      %v2385 = vadd.f32 0.0, %v2384
      %v2386 = vpop.f32.mrb[0].mxu0
      %v2387 = vadd.f32 0.0, %v2386
      %2388 = vmatprep.mubr.bf16.mxu0 0
      %2389 = vmatmul.mubr.bf16.gmra.mrb[0].mxu0 %v1049
      %v2390 = vpop.f32.mrb[0].mxu0
      %v2391 = vadd.f32 0.0, %v2390
      %v2392 = vpop.f32.mrb[0].mxu0
      %v2393 = vadd.f32 0.0, %v2392
      %v2394 = vpop.f32.mrb[0].mxu0
      %v2395 = vadd.f32 0.0, %v2394
      %v2396 = vpop.f32.mrb[0].mxu0
      %v2397 = vadd.f32 0.0, %v2396
      %2398 = vdwg.mxu0
      %2399 = vmatprep.subr.bf16.mxu0 0
      %2400 = vmatpush1.bf16.xpose.msra.mxu0 %v1244
      %2401 = vmatprep.subr.bf16.mxu0 0
      %2402 = vmatpush1.bf16.xpose.msra.mxu0 %v1247
      %2403 = vmatprep.subr.bf16.mxu0 0
      %2404 = vmatpush1.bf16.xpose.msra.mxu0 %v1250
      %2405 = vmatprep.subr.bf16.mxu0 0
      %2406 = vmatpush1.bf16.xpose.msra.mxu0 %v1253
      %2407 = vmatprep.subr.bf16.mxu0 0
      %2408 = vmatpush1.bf16.xpose.msra.mxu0 %v1256
      %2409 = vmatprep.subr.bf16.mxu0 0
      %2410 = vmatpush1.bf16.xpose.msra.mxu0 %v1259
      %2411 = vmatprep.subr.bf16.mxu0 0
      %2412 = vmatpush1.bf16.xpose.msra.mxu0 %v1262
      %2413 = vmatprep.subr.bf16.mxu0 0
      %2414 = vmatpush1.bf16.xpose.msra.mxu0 %v1265
      %2415 = vmatprep.subr.bf16.mxu0 0
      %2416 = vmatpush1.bf16.xpose.msra.mxu0 %v1268
      %2417 = vmatprep.subr.bf16.mxu0 0
      %2418 = vmatpush1.bf16.xpose.msra.mxu0 %v1271
      %2419 = vmatprep.subr.bf16.mxu0 0
      %2420 = vmatpush1.bf16.xpose.msra.mxu0 %v1274
      %2421 = vmatprep.subr.bf16.mxu0 0
      %2422 = vmatpush1.bf16.xpose.msra.mxu0 %v1277
      %2423 = vmatprep.subr.bf16.mxu0 0
      %2424 = vmatpush1.bf16.xpose.msra.mxu0 %v1280
      %2425 = vmatprep.subr.bf16.mxu0 0
      %2426 = vmatpush1.bf16.xpose.msra.mxu0 %v1283
      %2427 = vmatprep.subr.bf16.mxu0 0
      %2428 = vmatpush1.bf16.xpose.msra.mxu0 %v1286
      %2429 = vmatprep.subr.bf16.mxu0 0
      %2430 = vmatpush1.bf16.xpose.msra.mxu0 %v1289
      %2431 = vmatprep.mubr.bf16.mxu0 0
      %2432 = vmatmul.mubr.bf16.gmra.mrb[0].mxu0 %v1004
      %v2433 = vpop.f32.mrb[0].mxu0
      %v2434 = vadd.f32 0.0, %v2433
      %v2435 = vpop.f32.mrb[0].mxu0
      %v2436 = vadd.f32 0.0, %v2435
      %v2437 = vpop.f32.mrb[0].mxu0
      %v2438 = vadd.f32 0.0, %v2437
      %v2439 = vpop.f32.mrb[0].mxu0
      %v2440 = vadd.f32 0.0, %v2439
      %2441 = vmatprep.mubr.bf16.mxu0 0
      %2442 = vmatmul.mubr.bf16.gmra.mrb[0].mxu0 %v1007
      %v2443 = vpop.f32.mrb[0].mxu0
      %v2444 = vadd.f32 0.0, %v2443
      %v2445 = vpop.f32.mrb[0].mxu0
      %v2446 = vadd.f32 0.0, %v2445
      %v2447 = vpop.f32.mrb[0].mxu0
      %v2448 = vadd.f32 0.0, %v2447
      %v2449 = vpop.f32.mrb[0].mxu0
      %v2450 = vadd.f32 0.0, %v2449
      %2451 = vmatprep.mubr.bf16.mxu0 0
      %2452 = vmatmul.mubr.bf16.gmra.mrb[0].mxu0 %v1010
      %v2453 = vpop.f32.mrb[0].mxu0
      %v2454 = vadd.f32 0.0, %v2453
      %v2455 = vpop.f32.mrb[0].mxu0
      %v2456 = vadd.f32 0.0, %v2455
      %v2457 = vpop.f32.mrb[0].mxu0
      %v2458 = vadd.f32 0.0, %v2457
      %v2459 = vpop.f32.mrb[0].mxu0
      %v2460 = vadd.f32 0.0, %v2459
      %2461 = vmatprep.mubr.bf16.mxu0 0
      %2462 = vmatmul.mubr.bf16.gmra.mrb[0].mxu0 %v1013
      %v2463 = vpop.f32.mrb[0].mxu0
      %v2464 = vadd.f32 0.0, %v2463
      %v2465 = vpop.f32.mrb[0].mxu0
      %v2466 = vadd.f32 0.0, %v2465
      %v2467 = vpop.f32.mrb[0].mxu0
      %v2468 = vadd.f32 0.0, %v2467
      %v2469 = vpop.f32.mrb[0].mxu0
      %v2470 = vadd.f32 0.0, %v2469
      %2471 = vmatprep.mubr.bf16.mxu0 0
      %2472 = vmatmul.mubr.bf16.gmra.mrb[0].mxu0 %v1016
      %v2473 = vpop.f32.mrb[0].mxu0
      %v2474 = vadd.f32 0.0, %v2473
      %v2475 = vpop.f32.mrb[0].mxu0
      %v2476 = vadd.f32 0.0, %v2475
      %v2477 = vpop.f32.mrb[0].mxu0
      %v2478 = vadd.f32 0.0, %v2477
      %v2479 = vpop.f32.mrb[0].mxu0
      %v2480 = vadd.f32 0.0, %v2479
      %2481 = vmatprep.mubr.bf16.mxu0 0
      %2482 = vmatmul.mubr.bf16.gmra.mrb[0].mxu0 %v1019
      %v2483 = vpop.f32.mrb[0].mxu0
      %v2484 = vadd.f32 0.0, %v2483
      %v2485 = vpop.f32.mrb[0].mxu0
      %v2486 = vadd.f32 0.0, %v2485
      %v2487 = vpop.f32.mrb[0].mxu0
      %v2488 = vadd.f32 0.0, %v2487
      %v2489 = vpop.f32.mrb[0].mxu0
      %v2490 = vadd.f32 0.0, %v2489
      %2491 = vmatprep.mubr.bf16.mxu0 0
      %2492 = vmatmul.mubr.bf16.gmra.mrb[0].mxu0 %v1022
      %v2493 = vpop.f32.mrb[0].mxu0
      %v2494 = vadd.f32 0.0, %v2493
      %v2495 = vpop.f32.mrb[0].mxu0
      %v2496 = vadd.f32 0.0, %v2495
      %v2497 = vpop.f32.mrb[0].mxu0
      %v2498 = vadd.f32 0.0, %v2497
      %v2499 = vpop.f32.mrb[0].mxu0
      %v2500 = vadd.f32 0.0, %v2499
      %2501 = vmatprep.mubr.bf16.mxu0 0
      %2502 = vmatmul.mubr.bf16.gmra.mrb[0].mxu0 %v1025
      %v2503 = vpop.f32.mrb[0].mxu0
      %v2504 = vadd.f32 0.0, %v2503
      %v2505 = vpop.f32.mrb[0].mxu0
      %v2506 = vadd.f32 0.0, %v2505
      %v2507 = vpop.f32.mrb[0].mxu0
      %v2508 = vadd.f32 0.0, %v2507
      %v2509 = vpop.f32.mrb[0].mxu0
      %v2510 = vadd.f32 0.0, %v2509
      %2511 = vmatprep.mubr.bf16.mxu0 0
      %2512 = vmatmul.mubr.bf16.gmra.mrb[0].mxu0 %v1028
      %v2513 = vpop.f32.mrb[0].mxu0
      %v2514 = vadd.f32 0.0, %v2513
      %v2515 = vpop.f32.mrb[0].mxu0
      %v2516 = vadd.f32 0.0, %v2515
      %v2517 = vpop.f32.mrb[0].mxu0
      %v2518 = vadd.f32 0.0, %v2517
      %v2519 = vpop.f32.mrb[0].mxu0
      %v2520 = vadd.f32 0.0, %v2519
      %2521 = vmatprep.mubr.bf16.mxu0 0
      %2522 = vmatmul.mubr.bf16.gmra.mrb[0].mxu0 %v1031
      %v2523 = vpop.f32.mrb[0].mxu0
      %v2524 = vadd.f32 0.0, %v2523
      %v2525 = vpop.f32.mrb[0].mxu0
      %v2526 = vadd.f32 0.0, %v2525
      %v2527 = vpop.f32.mrb[0].mxu0
      %v2528 = vadd.f32 0.0, %v2527
      %v2529 = vpop.f32.mrb[0].mxu0
      %v2530 = vadd.f32 0.0, %v2529
      %2531 = vmatprep.mubr.bf16.mxu0 0
      %2532 = vmatmul.mubr.bf16.gmra.mrb[0].mxu0 %v1034
      %v2533 = vpop.f32.mrb[0].mxu0
      %v2534 = vadd.f32 0.0, %v2533
      %v2535 = vpop.f32.mrb[0].mxu0
      %v2536 = vadd.f32 0.0, %v2535
      %v2537 = vpop.f32.mrb[0].mxu0
      %v2538 = vadd.f32 0.0, %v2537
      %v2539 = vpop.f32.mrb[0].mxu0
      %v2540 = vadd.f32 0.0, %v2539
      %2541 = vmatprep.mubr.bf16.mxu0 0
      %2542 = vmatmul.mubr.bf16.gmra.mrb[0].mxu0 %v1037
      %v2543 = vpop.f32.mrb[0].mxu0
      %v2544 = vadd.f32 0.0, %v2543
      %v2545 = vpop.f32.mrb[0].mxu0
      %v2546 = vadd.f32 0.0, %v2545
      %v2547 = vpop.f32.mrb[0].mxu0
      %v2548 = vadd.f32 0.0, %v2547
      %v2549 = vpop.f32.mrb[0].mxu0
      %v2550 = vadd.f32 0.0, %v2549
      %2551 = vmatprep.mubr.bf16.mxu0 0
      %2552 = vmatmul.mubr.bf16.gmra.mrb[0].mxu0 %v1040
      %v2553 = vpop.f32.mrb[0].mxu0
      %v2554 = vadd.f32 0.0, %v2553
      %v2555 = vpop.f32.mrb[0].mxu0
      %v2556 = vadd.f32 0.0, %v2555
      %v2557 = vpop.f32.mrb[0].mxu0
      %v2558 = vadd.f32 0.0, %v2557
      %v2559 = vpop.f32.mrb[0].mxu0
      %v2560 = vadd.f32 0.0, %v2559
      %2561 = vmatprep.mubr.bf16.mxu0 0
      %2562 = vmatmul.mubr.bf16.gmra.mrb[0].mxu0 %v1043
      %v2563 = vpop.f32.mrb[0].mxu0
      %v2564 = vadd.f32 0.0, %v2563
      %v2565 = vpop.f32.mrb[0].mxu0
      %v2566 = vadd.f32 0.0, %v2565
      %v2567 = vpop.f32.mrb[0].mxu0
      %v2568 = vadd.f32 0.0, %v2567
      %v2569 = vpop.f32.mrb[0].mxu0
      %v2570 = vadd.f32 0.0, %v2569
      %2571 = vmatprep.mubr.bf16.mxu0 0
      %2572 = vmatmul.mubr.bf16.gmra.mrb[0].mxu0 %v1046
      %v2573 = vpop.f32.mrb[0].mxu0
      %v2574 = vadd.f32 0.0, %v2573
      %v2575 = vpop.f32.mrb[0].mxu0
      %v2576 = vadd.f32 0.0, %v2575
      %v2577 = vpop.f32.mrb[0].mxu0
      %v2578 = vadd.f32 0.0, %v2577
      %v2579 = vpop.f32.mrb[0].mxu0
      %v2580 = vadd.f32 0.0, %v2579
      %2581 = vmatprep.mubr.bf16.mxu0 0
      %2582 = vmatmul.mubr.bf16.gmra.mrb[0].mxu0 %v1049
      %v2583 = vpop.f32.mrb[0].mxu0
      %v2584 = vadd.f32 0.0, %v2583
      %v2585 = vpop.f32.mrb[0].mxu0
      %v2586 = vadd.f32 0.0, %v2585
      %v2587 = vpop.f32.mrb[0].mxu0
      %v2588 = vadd.f32 0.0, %v2587
      %v2589 = vpop.f32.mrb[0].mxu0
      %v2590 = vadd.f32 0.0, %v2589
      %2591 = vdwg.mxu0
      %2592 = vmatprep.subr.bf16.mxu0 0
      %2593 = vmatpush1.bf16.xpose.msra.mxu0 %v1292
      %2594 = vmatprep.subr.bf16.mxu0 0
      %2595 = vmatpush1.bf16.xpose.msra.mxu0 %v1295
      %2596 = vmatprep.subr.bf16.mxu0 0
      %2597 = vmatpush1.bf16.xpose.msra.mxu0 %v1298
      %2598 = vmatprep.subr.bf16.mxu0 0
      %2599 = vmatpush1.bf16.xpose.msra.mxu0 %v1301
      %2600 = vmatprep.subr.bf16.mxu0 0
      %2601 = vmatpush1.bf16.xpose.msra.mxu0 %v1304
      %2602 = vmatprep.subr.bf16.mxu0 0
      %2603 = vmatpush1.bf16.xpose.msra.mxu0 %v1307
      %2604 = vmatprep.subr.bf16.mxu0 0
      %2605 = vmatpush1.bf16.xpose.msra.mxu0 %v1310
      %2606 = vmatprep.subr.bf16.mxu0 0
      %2607 = vmatpush1.bf16.xpose.msra.mxu0 %v1313
      %2608 = vmatprep.subr.bf16.mxu0 0
      %2609 = vmatpush1.bf16.xpose.msra.mxu0 %v1316
      %2610 = vmatprep.subr.bf16.mxu0 0
      %2611 = vmatpush1.bf16.xpose.msra.mxu0 %v1319
      %2612 = vmatprep.subr.bf16.mxu0 0
      %2613 = vmatpush1.bf16.xpose.msra.mxu0 %v1322
      %2614 = vmatprep.subr.bf16.mxu0 0
      %2615 = vmatpush1.bf16.xpose.msra.mxu0 %v1325
      %2616 = vmatprep.subr.bf16.mxu0 0
      %2617 = vmatpush1.bf16.xpose.msra.mxu0 %v1328
      %2618 = vmatprep.subr.bf16.mxu0 0
      %2619 = vmatpush1.bf16.xpose.msra.mxu0 %v1331
      %2620 = vmatprep.subr.bf16.mxu0 0
      %2621 = vmatpush1.bf16.xpose.msra.mxu0 %v1334
      %2622 = vmatprep.subr.bf16.mxu0 0
      %2623 = vmatpush1.bf16.xpose.msra.mxu0 %v1337
      %2624 = vmatprep.mubr.bf16.mxu0 0
      %2625 = vmatmul.mubr.bf16.gmra.mrb[0].mxu0 %v1004
      %v2626 = vpop.f32.mrb[0].mxu0
      %v2627 = vadd.f32 0.0, %v2626
      %v2628 = vpop.f32.mrb[0].mxu0
      %v2629 = vadd.f32 0.0, %v2628
      %v2630 = vpop.f32.mrb[0].mxu0
      %v2631 = vadd.f32 0.0, %v2630
      %v2632 = vpop.f32.mrb[0].mxu0
      %v2633 = vadd.f32 0.0, %v2632
      %2634 = vmatprep.mubr.bf16.mxu0 0
      %2635 = vmatmul.mubr.bf16.gmra.mrb[0].mxu0 %v1007
      %v2636 = vpop.f32.mrb[0].mxu0
      %v2637 = vadd.f32 0.0, %v2636
      %v2638 = vpop.f32.mrb[0].mxu0
      %v2639 = vadd.f32 0.0, %v2638
      %v2640 = vpop.f32.mrb[0].mxu0
      %v2641 = vadd.f32 0.0, %v2640
      %v2642 = vpop.f32.mrb[0].mxu0
      %v2643 = vadd.f32 0.0, %v2642
      %2644 = vmatprep.mubr.bf16.mxu0 0
      %2645 = vmatmul.mubr.bf16.gmra.mrb[0].mxu0 %v1010
      %v2646 = vpop.f32.mrb[0].mxu0
      %v2647 = vadd.f32 0.0, %v2646
      %v2648 = vpop.f32.mrb[0].mxu0
      %v2649 = vadd.f32 0.0, %v2648
      %v2650 = vpop.f32.mrb[0].mxu0
      %v2651 = vadd.f32 0.0, %v2650
      %v2652 = vpop.f32.mrb[0].mxu0
      %v2653 = vadd.f32 0.0, %v2652
      %2654 = vmatprep.mubr.bf16.mxu0 0
      %2655 = vmatmul.mubr.bf16.gmra.mrb[0].mxu0 %v1013
      %v2656 = vpop.f32.mrb[0].mxu0
      %v2657 = vadd.f32 0.0, %v2656
      %v2658 = vpop.f32.mrb[0].mxu0
      %v2659 = vadd.f32 0.0, %v2658
      %v2660 = vpop.f32.mrb[0].mxu0
      %v2661 = vadd.f32 0.0, %v2660
      %v2662 = vpop.f32.mrb[0].mxu0
      %v2663 = vadd.f32 0.0, %v2662
      %2664 = vmatprep.mubr.bf16.mxu0 0
      %2665 = vmatmul.mubr.bf16.gmra.mrb[0].mxu0 %v1016
      %v2666 = vpop.f32.mrb[0].mxu0
      %v2667 = vadd.f32 0.0, %v2666
      %v2668 = vpop.f32.mrb[0].mxu0
      %v2669 = vadd.f32 0.0, %v2668
      %v2670 = vpop.f32.mrb[0].mxu0
      %v2671 = vadd.f32 0.0, %v2670
      %v2672 = vpop.f32.mrb[0].mxu0
      %v2673 = vadd.f32 0.0, %v2672
      %2674 = vmatprep.mubr.bf16.mxu0 0
      %2675 = vmatmul.mubr.bf16.gmra.mrb[0].mxu0 %v1019
      %v2676 = vpop.f32.mrb[0].mxu0
      %v2677 = vadd.f32 0.0, %v2676
      %v2678 = vpop.f32.mrb[0].mxu0
      %v2679 = vadd.f32 0.0, %v2678
      %v2680 = vpop.f32.mrb[0].mxu0
      %v2681 = vadd.f32 0.0, %v2680
      %v2682 = vpop.f32.mrb[0].mxu0
      %v2683 = vadd.f32 0.0, %v2682
      %2684 = vmatprep.mubr.bf16.mxu0 0
      %2685 = vmatmul.mubr.bf16.gmra.mrb[0].mxu0 %v1022
      %v2686 = vpop.f32.mrb[0].mxu0
      %v2687 = vadd.f32 0.0, %v2686
      %v2688 = vpop.f32.mrb[0].mxu0
      %v2689 = vadd.f32 0.0, %v2688
      %v2690 = vpop.f32.mrb[0].mxu0
      %v2691 = vadd.f32 0.0, %v2690
      %v2692 = vpop.f32.mrb[0].mxu0
      %v2693 = vadd.f32 0.0, %v2692
      %2694 = vmatprep.mubr.bf16.mxu0 0
      %2695 = vmatmul.mubr.bf16.gmra.mrb[0].mxu0 %v1025
      %v2696 = vpop.f32.mrb[0].mxu0
      %v2697 = vadd.f32 0.0, %v2696
      %v2698 = vpop.f32.mrb[0].mxu0
      %v2699 = vadd.f32 0.0, %v2698
      %v2700 = vpop.f32.mrb[0].mxu0
      %v2701 = vadd.f32 0.0, %v2700
      %v2702 = vpop.f32.mrb[0].mxu0
      %v2703 = vadd.f32 0.0, %v2702
      %2704 = vmatprep.mubr.bf16.mxu0 0
      %2705 = vmatmul.mubr.bf16.gmra.mrb[0].mxu0 %v1028
      %v2706 = vpop.f32.mrb[0].mxu0
      %v2707 = vadd.f32 0.0, %v2706
      %v2708 = vpop.f32.mrb[0].mxu0
      %v2709 = vadd.f32 0.0, %v2708
      %v2710 = vpop.f32.mrb[0].mxu0
      %v2711 = vadd.f32 0.0, %v2710
      %v2712 = vpop.f32.mrb[0].mxu0
      %v2713 = vadd.f32 0.0, %v2712
      %2714 = vmatprep.mubr.bf16.mxu0 0
      %2715 = vmatmul.mubr.bf16.gmra.mrb[0].mxu0 %v1031
      %v2716 = vpop.f32.mrb[0].mxu0
      %v2717 = vadd.f32 0.0, %v2716
      %v2718 = vpop.f32.mrb[0].mxu0
      %v2719 = vadd.f32 0.0, %v2718
      %v2720 = vpop.f32.mrb[0].mxu0
      %v2721 = vadd.f32 0.0, %v2720
      %v2722 = vpop.f32.mrb[0].mxu0
      %v2723 = vadd.f32 0.0, %v2722
      %2724 = vmatprep.mubr.bf16.mxu0 0
      %2725 = vmatmul.mubr.bf16.gmra.mrb[0].mxu0 %v1034
      %v2726 = vpop.f32.mrb[0].mxu0
      %v2727 = vadd.f32 0.0, %v2726
      %v2728 = vpop.f32.mrb[0].mxu0
      %v2729 = vadd.f32 0.0, %v2728
      %v2730 = vpop.f32.mrb[0].mxu0
      %v2731 = vadd.f32 0.0, %v2730
      %v2732 = vpop.f32.mrb[0].mxu0
      %v2733 = vadd.f32 0.0, %v2732
      %2734 = vmatprep.mubr.bf16.mxu0 0
      %2735 = vmatmul.mubr.bf16.gmra.mrb[0].mxu0 %v1037
      %v2736 = vpop.f32.mrb[0].mxu0
      %v2737 = vadd.f32 0.0, %v2736
      %v2738 = vpop.f32.mrb[0].mxu0
      %v2739 = vadd.f32 0.0, %v2738
      %v2740 = vpop.f32.mrb[0].mxu0
      %v2741 = vadd.f32 0.0, %v2740
      %v2742 = vpop.f32.mrb[0].mxu0
      %v2743 = vadd.f32 0.0, %v2742
      %2744 = vmatprep.mubr.bf16.mxu0 0
      %2745 = vmatmul.mubr.bf16.gmra.mrb[0].mxu0 %v1040
      %v2746 = vpop.f32.mrb[0].mxu0
      %v2747 = vadd.f32 0.0, %v2746
      %v2748 = vpop.f32.mrb[0].mxu0
      %v2749 = vadd.f32 0.0, %v2748
      %v2750 = vpop.f32.mrb[0].mxu0
      %v2751 = vadd.f32 0.0, %v2750
      %v2752 = vpop.f32.mrb[0].mxu0
      %v2753 = vadd.f32 0.0, %v2752
      %2754 = vmatprep.mubr.bf16.mxu0 0
      %2755 = vmatmul.mubr.bf16.gmra.mrb[0].mxu0 %v1043
      %v2756 = vpop.f32.mrb[0].mxu0
      %v2757 = vadd.f32 0.0, %v2756
      %v2758 = vpop.f32.mrb[0].mxu0
      %v2759 = vadd.f32 0.0, %v2758
      %v2760 = vpop.f32.mrb[0].mxu0
      %v2761 = vadd.f32 0.0, %v2760
      %v2762 = vpop.f32.mrb[0].mxu0
      %v2763 = vadd.f32 0.0, %v2762
      %2764 = vmatprep.mubr.bf16.mxu0 0
      %2765 = vmatmul.mubr.bf16.gmra.mrb[0].mxu0 %v1046
      %v2766 = vpop.f32.mrb[0].mxu0
      %v2767 = vadd.f32 0.0, %v2766
      %v2768 = vpop.f32.mrb[0].mxu0
      %v2769 = vadd.f32 0.0, %v2768
      %v2770 = vpop.f32.mrb[0].mxu0
      %v2771 = vadd.f32 0.0, %v2770
      %v2772 = vpop.f32.mrb[0].mxu0
      %v2773 = vadd.f32 0.0, %v2772
      %2774 = vmatprep.mubr.bf16.mxu0 0
      %2775 = vmatmul.mubr.bf16.gmra.mrb[0].mxu0 %v1049
      %v2776 = vpop.f32.mrb[0].mxu0
      %v2777 = vadd.f32 0.0, %v2776
      %v2778 = vpop.f32.mrb[0].mxu0
      %v2779 = vadd.f32 0.0, %v2778
      %v2780 = vpop.f32.mrb[0].mxu0
      %v2781 = vadd.f32 0.0, %v2780
      %v2782 = vpop.f32.mrb[0].mxu0
      %v2783 = vadd.f32 0.0, %v2782
      %2784 = vdwg.mxu0
      %2785 = vmatprep.subr.bf16.mxu0 0
      %2786 = vmatpush1.bf16.xpose.msra.mxu0 %v1340
      %2787 = vmatprep.subr.bf16.mxu0 0
      %2788 = vmatpush1.bf16.xpose.msra.mxu0 %v1343
      %2789 = vmatprep.subr.bf16.mxu0 0
      %2790 = vmatpush1.bf16.xpose.msra.mxu0 %v1346
      %2791 = vmatprep.subr.bf16.mxu0 0
      %2792 = vmatpush1.bf16.xpose.msra.mxu0 %v1349
      %2793 = vmatprep.subr.bf16.mxu0 0
      %2794 = vmatpush1.bf16.xpose.msra.mxu0 %v1352
      %2795 = vmatprep.subr.bf16.mxu0 0
      %2796 = vmatpush1.bf16.xpose.msra.mxu0 %v1355
      %2797 = vmatprep.subr.bf16.mxu0 0
      %2798 = vmatpush1.bf16.xpose.msra.mxu0 %v1358
      %2799 = vmatprep.subr.bf16.mxu0 0
      %2800 = vmatpush1.bf16.xpose.msra.mxu0 %v1361
      %2801 = vmatprep.subr.bf16.mxu0 0
      %2802 = vmatpush1.bf16.xpose.msra.mxu0 %v1364
      %2803 = vmatprep.subr.bf16.mxu0 0
      %2804 = vmatpush1.bf16.xpose.msra.mxu0 %v1367
      %2805 = vmatprep.subr.bf16.mxu0 0
      %2806 = vmatpush1.bf16.xpose.msra.mxu0 %v1370
      %2807 = vmatprep.subr.bf16.mxu0 0
      %2808 = vmatpush1.bf16.xpose.msra.mxu0 %v1373
      %2809 = vmatprep.subr.bf16.mxu0 0
      %2810 = vmatpush1.bf16.xpose.msra.mxu0 %v1376
      %2811 = vmatprep.subr.bf16.mxu0 0
      %2812 = vmatpush1.bf16.xpose.msra.mxu0 %v1379
      %2813 = vmatprep.subr.bf16.mxu0 0
      %2814 = vmatpush1.bf16.xpose.msra.mxu0 %v1382
      %2815 = vmatprep.subr.bf16.mxu0 0
      %2816 = vmatpush1.bf16.xpose.msra.mxu0 %v1385
      %2817 = vmatprep.mubr.bf16.mxu0 0
      %2818 = vmatmul.mubr.bf16.gmra.mrb[0].mxu0 %v1004
      %v2819 = vpop.f32.mrb[0].mxu0
      %v2820 = vadd.f32 0.0, %v2819
      %v2821 = vpop.f32.mrb[0].mxu0
      %v2822 = vadd.f32 0.0, %v2821
      %v2823 = vpop.f32.mrb[0].mxu0
      %v2824 = vadd.f32 0.0, %v2823
      %v2825 = vpop.f32.mrb[0].mxu0
      %v2826 = vadd.f32 0.0, %v2825
      %2827 = vmatprep.mubr.bf16.mxu0 0
      %2828 = vmatmul.mubr.bf16.gmra.mrb[0].mxu0 %v1007
      %v2829 = vpop.f32.mrb[0].mxu0
      %v2830 = vadd.f32 0.0, %v2829
      %v2831 = vpop.f32.mrb[0].mxu0
      %v2832 = vadd.f32 0.0, %v2831
      %v2833 = vpop.f32.mrb[0].mxu0
      %v2834 = vadd.f32 0.0, %v2833
      %v2835 = vpop.f32.mrb[0].mxu0
      %v2836 = vadd.f32 0.0, %v2835
      %2837 = vmatprep.mubr.bf16.mxu0 0
      %2838 = vmatmul.mubr.bf16.gmra.mrb[0].mxu0 %v1010
      %v2839 = vpop.f32.mrb[0].mxu0
      %v2840 = vadd.f32 0.0, %v2839
      %v2841 = vpop.f32.mrb[0].mxu0
      %v2842 = vadd.f32 0.0, %v2841
      %v2843 = vpop.f32.mrb[0].mxu0
      %v2844 = vadd.f32 0.0, %v2843
      %v2845 = vpop.f32.mrb[0].mxu0
      %v2846 = vadd.f32 0.0, %v2845
      %2847 = vmatprep.mubr.bf16.mxu0 0
      %2848 = vmatmul.mubr.bf16.gmra.mrb[0].mxu0 %v1013
      %v2849 = vpop.f32.mrb[0].mxu0
      %v2850 = vadd.f32 0.0, %v2849
      %v2851 = vpop.f32.mrb[0].mxu0
      %v2852 = vadd.f32 0.0, %v2851
      %v2853 = vpop.f32.mrb[0].mxu0
      %v2854 = vadd.f32 0.0, %v2853
      %v2855 = vpop.f32.mrb[0].mxu0
      %v2856 = vadd.f32 0.0, %v2855
      %2857 = vmatprep.mubr.bf16.mxu0 0
      %2858 = vmatmul.mubr.bf16.gmra.mrb[0].mxu0 %v1016
      %v2859 = vpop.f32.mrb[0].mxu0
      %v2860 = vadd.f32 0.0, %v2859
      %v2861 = vpop.f32.mrb[0].mxu0
      %v2862 = vadd.f32 0.0, %v2861
      %v2863 = vpop.f32.mrb[0].mxu0
      %v2864 = vadd.f32 0.0, %v2863
      %v2865 = vpop.f32.mrb[0].mxu0
      %v2866 = vadd.f32 0.0, %v2865
      %2867 = vmatprep.mubr.bf16.mxu0 0
      %2868 = vmatmul.mubr.bf16.gmra.mrb[0].mxu0 %v1019
      %v2869 = vpop.f32.mrb[0].mxu0
      %v2870 = vadd.f32 0.0, %v2869
      %v2871 = vpop.f32.mrb[0].mxu0
      %v2872 = vadd.f32 0.0, %v2871
      %v2873 = vpop.f32.mrb[0].mxu0
      %v2874 = vadd.f32 0.0, %v2873
      %v2875 = vpop.f32.mrb[0].mxu0
      %v2876 = vadd.f32 0.0, %v2875
      %2877 = vmatprep.mubr.bf16.mxu0 0
      %2878 = vmatmul.mubr.bf16.gmra.mrb[0].mxu0 %v1022
      %v2879 = vpop.f32.mrb[0].mxu0
      %v2880 = vadd.f32 0.0, %v2879
      %v2881 = vpop.f32.mrb[0].mxu0
      %v2882 = vadd.f32 0.0, %v2881
      %v2883 = vpop.f32.mrb[0].mxu0
      %v2884 = vadd.f32 0.0, %v2883
      %v2885 = vpop.f32.mrb[0].mxu0
      %v2886 = vadd.f32 0.0, %v2885
      %2887 = vmatprep.mubr.bf16.mxu0 0
      %2888 = vmatmul.mubr.bf16.gmra.mrb[0].mxu0 %v1025
      %v2889 = vpop.f32.mrb[0].mxu0
      %v2890 = vadd.f32 0.0, %v2889
      %v2891 = vpop.f32.mrb[0].mxu0
      %v2892 = vadd.f32 0.0, %v2891
      %v2893 = vpop.f32.mrb[0].mxu0
      %v2894 = vadd.f32 0.0, %v2893
      %v2895 = vpop.f32.mrb[0].mxu0
      %v2896 = vadd.f32 0.0, %v2895
      %2897 = vmatprep.mubr.bf16.mxu0 0
      %2898 = vmatmul.mubr.bf16.gmra.mrb[0].mxu0 %v1028
      %v2899 = vpop.f32.mrb[0].mxu0
      %v2900 = vadd.f32 0.0, %v2899
      %v2901 = vpop.f32.mrb[0].mxu0
      %v2902 = vadd.f32 0.0, %v2901
      %v2903 = vpop.f32.mrb[0].mxu0
      %v2904 = vadd.f32 0.0, %v2903
      %v2905 = vpop.f32.mrb[0].mxu0
      %v2906 = vadd.f32 0.0, %v2905
      %2907 = vmatprep.mubr.bf16.mxu0 0
      %2908 = vmatmul.mubr.bf16.gmra.mrb[0].mxu0 %v1031
      %v2909 = vpop.f32.mrb[0].mxu0
      %v2910 = vadd.f32 0.0, %v2909
      %v2911 = vpop.f32.mrb[0].mxu0
      %v2912 = vadd.f32 0.0, %v2911
      %v2913 = vpop.f32.mrb[0].mxu0
      %v2914 = vadd.f32 0.0, %v2913
      %v2915 = vpop.f32.mrb[0].mxu0
      %v2916 = vadd.f32 0.0, %v2915
      %2917 = vmatprep.mubr.bf16.mxu0 0
      %2918 = vmatmul.mubr.bf16.gmra.mrb[0].mxu0 %v1034
      %v2919 = vpop.f32.mrb[0].mxu0
      %v2920 = vadd.f32 0.0, %v2919
      %v2921 = vpop.f32.mrb[0].mxu0
      %v2922 = vadd.f32 0.0, %v2921
      %v2923 = vpop.f32.mrb[0].mxu0
      %v2924 = vadd.f32 0.0, %v2923
      %v2925 = vpop.f32.mrb[0].mxu0
      %v2926 = vadd.f32 0.0, %v2925
      %2927 = vmatprep.mubr.bf16.mxu0 0
      %2928 = vmatmul.mubr.bf16.gmra.mrb[0].mxu0 %v1037
      %v2929 = vpop.f32.mrb[0].mxu0
      %v2930 = vadd.f32 0.0, %v2929
      %v2931 = vpop.f32.mrb[0].mxu0
      %v2932 = vadd.f32 0.0, %v2931
      %v2933 = vpop.f32.mrb[0].mxu0
      %v2934 = vadd.f32 0.0, %v2933
      %v2935 = vpop.f32.mrb[0].mxu0
      %v2936 = vadd.f32 0.0, %v2935
      %2937 = vmatprep.mubr.bf16.mxu0 0
      %2938 = vmatmul.mubr.bf16.gmra.mrb[0].mxu0 %v1040
      %v2939 = vpop.f32.mrb[0].mxu0
      %v2940 = vadd.f32 0.0, %v2939
      %v2941 = vpop.f32.mrb[0].mxu0
      %v2942 = vadd.f32 0.0, %v2941
      %v2943 = vpop.f32.mrb[0].mxu0
      %v2944 = vadd.f32 0.0, %v2943
      %v2945 = vpop.f32.mrb[0].mxu0
      %v2946 = vadd.f32 0.0, %v2945
      %2947 = vmatprep.mubr.bf16.mxu0 0
      %2948 = vmatmul.mubr.bf16.gmra.mrb[0].mxu0 %v1043
      %v2949 = vpop.f32.mrb[0].mxu0
      %v2950 = vadd.f32 0.0, %v2949
      %v2951 = vpop.f32.mrb[0].mxu0
      %v2952 = vadd.f32 0.0, %v2951
      %v2953 = vpop.f32.mrb[0].mxu0
      %v2954 = vadd.f32 0.0, %v2953
      %v2955 = vpop.f32.mrb[0].mxu0
      %v2956 = vadd.f32 0.0, %v2955
      %2957 = vmatprep.mubr.bf16.mxu0 0
      %2958 = vmatmul.mubr.bf16.gmra.mrb[0].mxu0 %v1046
      %v2959 = vpop.f32.mrb[0].mxu0
      %v2960 = vadd.f32 0.0, %v2959
      %v2961 = vpop.f32.mrb[0].mxu0
      %v2962 = vadd.f32 0.0, %v2961
      %v2963 = vpop.f32.mrb[0].mxu0
      %v2964 = vadd.f32 0.0, %v2963
      %v2965 = vpop.f32.mrb[0].mxu0
      %v2966 = vadd.f32 0.0, %v2965
      %2967 = vmatprep.mubr.bf16.mxu0 0
      %2968 = vmatmul.mubr.bf16.gmra.mrb[0].mxu0 %v1049
      %v2969 = vpop.f32.mrb[0].mxu0
      %v2970 = vadd.f32 0.0, %v2969
      %v2971 = vpop.f32.mrb[0].mxu0
      %v2972 = vadd.f32 0.0, %v2971
      %v2973 = vpop.f32.mrb[0].mxu0
      %v2974 = vadd.f32 0.0, %v2973
      %v2975 = vpop.f32.mrb[0].mxu0
      %v2976 = vadd.f32 0.0, %v2975
      %2977 = vdwg.mxu0
      %2978 = vmatprep.subr.bf16.mxu0 0
      %2979 = vmatpush1.bf16.xpose.msra.mxu0 %v1388
      %2980 = vmatprep.subr.bf16.mxu0 0
      %2981 = vmatpush1.bf16.xpose.msra.mxu0 %v1391
      %2982 = vmatprep.subr.bf16.mxu0 0
      %2983 = vmatpush1.bf16.xpose.msra.mxu0 %v1394
      %2984 = vmatprep.subr.bf16.mxu0 0
      %2985 = vmatpush1.bf16.xpose.msra.mxu0 %v1397
      %2986 = vmatprep.subr.bf16.mxu0 0
      %2987 = vmatpush1.bf16.xpose.msra.mxu0 %v1400
      %2988 = vmatprep.subr.bf16.mxu0 0
      %2989 = vmatpush1.bf16.xpose.msra.mxu0 %v1403
      %2990 = vmatprep.subr.bf16.mxu0 0
      %2991 = vmatpush1.bf16.xpose.msra.mxu0 %v1406
      %2992 = vmatprep.subr.bf16.mxu0 0
      %2993 = vmatpush1.bf16.xpose.msra.mxu0 %v1409
      %2994 = vmatprep.subr.bf16.mxu0 0
      %2995 = vmatpush1.bf16.xpose.msra.mxu0 %v1412
      %2996 = vmatprep.subr.bf16.mxu0 0
      %2997 = vmatpush1.bf16.xpose.msra.mxu0 %v1415
      %2998 = vmatprep.subr.bf16.mxu0 0
      %2999 = vmatpush1.bf16.xpose.msra.mxu0 %v1418
      %3000 = vmatprep.subr.bf16.mxu0 0
      %3001 = vmatpush1.bf16.xpose.msra.mxu0 %v1421
      %3002 = vmatprep.subr.bf16.mxu0 0
      %3003 = vmatpush1.bf16.xpose.msra.mxu0 %v1424
      %3004 = vmatprep.subr.bf16.mxu0 0
      %3005 = vmatpush1.bf16.xpose.msra.mxu0 %v1427
      %3006 = vmatprep.subr.bf16.mxu0 0
      %3007 = vmatpush1.bf16.xpose.msra.mxu0 %v1430
      %3008 = vmatprep.subr.bf16.mxu0 0
      %3009 = vmatpush1.bf16.xpose.msra.mxu0 %v1433
      %3010 = vmatprep.mubr.bf16.mxu0 0
      %3011 = vmatmul.mubr.bf16.gmra.mrb[0].mxu0 %v1004
      %v3012 = vpop.f32.mrb[0].mxu0
      %v3013 = vadd.f32 0.0, %v3012
      %v3014 = vpop.f32.mrb[0].mxu0
      %v3015 = vadd.f32 0.0, %v3014
      %v3016 = vpop.f32.mrb[0].mxu0
      %v3017 = vadd.f32 0.0, %v3016
      %v3018 = vpop.f32.mrb[0].mxu0
      %v3019 = vadd.f32 0.0, %v3018
      %3020 = vmatprep.mubr.bf16.mxu0 0
      %3021 = vmatmul.mubr.bf16.gmra.mrb[0].mxu0 %v1007
      %v3022 = vpop.f32.mrb[0].mxu0
      %v3023 = vadd.f32 0.0, %v3022
      %v3024 = vpop.f32.mrb[0].mxu0
      %v3025 = vadd.f32 0.0, %v3024
      %v3026 = vpop.f32.mrb[0].mxu0
      %v3027 = vadd.f32 0.0, %v3026
      %v3028 = vpop.f32.mrb[0].mxu0
      %v3029 = vadd.f32 0.0, %v3028
      %3030 = vmatprep.mubr.bf16.mxu0 0
      %3031 = vmatmul.mubr.bf16.gmra.mrb[0].mxu0 %v1010
      %v3032 = vpop.f32.mrb[0].mxu0
      %v3033 = vadd.f32 0.0, %v3032
      %v3034 = vpop.f32.mrb[0].mxu0
      %v3035 = vadd.f32 0.0, %v3034
      %v3036 = vpop.f32.mrb[0].mxu0
      %v3037 = vadd.f32 0.0, %v3036
      %v3038 = vpop.f32.mrb[0].mxu0
      %v3039 = vadd.f32 0.0, %v3038
      %3040 = vmatprep.mubr.bf16.mxu0 0
      %3041 = vmatmul.mubr.bf16.gmra.mrb[0].mxu0 %v1013
      %v3042 = vpop.f32.mrb[0].mxu0
      %v3043 = vadd.f32 0.0, %v3042
      %v3044 = vpop.f32.mrb[0].mxu0
      %v3045 = vadd.f32 0.0, %v3044
      %v3046 = vpop.f32.mrb[0].mxu0
      %v3047 = vadd.f32 0.0, %v3046
      %v3048 = vpop.f32.mrb[0].mxu0
      %v3049 = vadd.f32 0.0, %v3048
      %3050 = vmatprep.mubr.bf16.mxu0 0
      %3051 = vmatmul.mubr.bf16.gmra.mrb[0].mxu0 %v1016
      %v3052 = vpop.f32.mrb[0].mxu0
      %v3053 = vadd.f32 0.0, %v3052
      %v3054 = vpop.f32.mrb[0].mxu0
      %v3055 = vadd.f32 0.0, %v3054
      %v3056 = vpop.f32.mrb[0].mxu0
      %v3057 = vadd.f32 0.0, %v3056
      %v3058 = vpop.f32.mrb[0].mxu0
      %v3059 = vadd.f32 0.0, %v3058
      %3060 = vmatprep.mubr.bf16.mxu0 0
      %3061 = vmatmul.mubr.bf16.gmra.mrb[0].mxu0 %v1019
      %v3062 = vpop.f32.mrb[0].mxu0
      %v3063 = vadd.f32 0.0, %v3062
      %v3064 = vpop.f32.mrb[0].mxu0
      %v3065 = vadd.f32 0.0, %v3064
      %v3066 = vpop.f32.mrb[0].mxu0
      %v3067 = vadd.f32 0.0, %v3066
      %v3068 = vpop.f32.mrb[0].mxu0
      %v3069 = vadd.f32 0.0, %v3068
      %3070 = vmatprep.mubr.bf16.mxu0 0
      %3071 = vmatmul.mubr.bf16.gmra.mrb[0].mxu0 %v1022
      %v3072 = vpop.f32.mrb[0].mxu0
      %v3073 = vadd.f32 0.0, %v3072
      %v3074 = vpop.f32.mrb[0].mxu0
      %v3075 = vadd.f32 0.0, %v3074
      %v3076 = vpop.f32.mrb[0].mxu0
      %v3077 = vadd.f32 0.0, %v3076
      %v3078 = vpop.f32.mrb[0].mxu0
      %v3079 = vadd.f32 0.0, %v3078
      %3080 = vmatprep.mubr.bf16.mxu0 0
      %3081 = vmatmul.mubr.bf16.gmra.mrb[0].mxu0 %v1025
      %v3082 = vpop.f32.mrb[0].mxu0
      %v3083 = vadd.f32 0.0, %v3082
      %v3084 = vpop.f32.mrb[0].mxu0
      %v3085 = vadd.f32 0.0, %v3084
      %v3086 = vpop.f32.mrb[0].mxu0
      %v3087 = vadd.f32 0.0, %v3086
      %v3088 = vpop.f32.mrb[0].mxu0
      %v3089 = vadd.f32 0.0, %v3088
      %3090 = vmatprep.mubr.bf16.mxu0 0
      %3091 = vmatmul.mubr.bf16.gmra.mrb[0].mxu0 %v1028
      %v3092 = vpop.f32.mrb[0].mxu0
      %v3093 = vadd.f32 0.0, %v3092
      %v3094 = vpop.f32.mrb[0].mxu0
      %v3095 = vadd.f32 0.0, %v3094
      %v3096 = vpop.f32.mrb[0].mxu0
      %v3097 = vadd.f32 0.0, %v3096
      %v3098 = vpop.f32.mrb[0].mxu0
      %v3099 = vadd.f32 0.0, %v3098
      %3100 = vmatprep.mubr.bf16.mxu0 0
      %3101 = vmatmul.mubr.bf16.gmra.mrb[0].mxu0 %v1031
      %v3102 = vpop.f32.mrb[0].mxu0
      %v3103 = vadd.f32 0.0, %v3102
      %v3104 = vpop.f32.mrb[0].mxu0
      %v3105 = vadd.f32 0.0, %v3104
      %v3106 = vpop.f32.mrb[0].mxu0
      %v3107 = vadd.f32 0.0, %v3106
      %v3108 = vpop.f32.mrb[0].mxu0
      %v3109 = vadd.f32 0.0, %v3108
      %3110 = vmatprep.mubr.bf16.mxu0 0
      %3111 = vmatmul.mubr.bf16.gmra.mrb[0].mxu0 %v1034
      %v3112 = vpop.f32.mrb[0].mxu0
      %v3113 = vadd.f32 0.0, %v3112
      %v3114 = vpop.f32.mrb[0].mxu0
      %v3115 = vadd.f32 0.0, %v3114
      %v3116 = vpop.f32.mrb[0].mxu0
      %v3117 = vadd.f32 0.0, %v3116
      %v3118 = vpop.f32.mrb[0].mxu0
      %v3119 = vadd.f32 0.0, %v3118
      %3120 = vmatprep.mubr.bf16.mxu0 0
      %3121 = vmatmul.mubr.bf16.gmra.mrb[0].mxu0 %v1037
      %v3122 = vpop.f32.mrb[0].mxu0
      %v3123 = vadd.f32 0.0, %v3122
      %v3124 = vpop.f32.mrb[0].mxu0
      %v3125 = vadd.f32 0.0, %v3124
      %v3126 = vpop.f32.mrb[0].mxu0
      %v3127 = vadd.f32 0.0, %v3126
      %v3128 = vpop.f32.mrb[0].mxu0
      %v3129 = vadd.f32 0.0, %v3128
      %3130 = vmatprep.mubr.bf16.mxu0 0
      %3131 = vmatmul.mubr.bf16.gmra.mrb[0].mxu0 %v1040
      %v3132 = vpop.f32.mrb[0].mxu0
      %v3133 = vadd.f32 0.0, %v3132
      %v3134 = vpop.f32.mrb[0].mxu0
      %v3135 = vadd.f32 0.0, %v3134
      %v3136 = vpop.f32.mrb[0].mxu0
      %v3137 = vadd.f32 0.0, %v3136
      %v3138 = vpop.f32.mrb[0].mxu0
      %v3139 = vadd.f32 0.0, %v3138
      %3140 = vmatprep.mubr.bf16.mxu0 0
      %3141 = vmatmul.mubr.bf16.gmra.mrb[0].mxu0 %v1043
      %v3142 = vpop.f32.mrb[0].mxu0
      %v3143 = vadd.f32 0.0, %v3142
      %v3144 = vpop.f32.mrb[0].mxu0
      %v3145 = vadd.f32 0.0, %v3144
      %v3146 = vpop.f32.mrb[0].mxu0
      %v3147 = vadd.f32 0.0, %v3146
      %v3148 = vpop.f32.mrb[0].mxu0
      %v3149 = vadd.f32 0.0, %v3148
      %3150 = vmatprep.mubr.bf16.mxu0 0
      %3151 = vmatmul.mubr.bf16.gmra.mrb[0].mxu0 %v1046
      %v3152 = vpop.f32.mrb[0].mxu0
      %v3153 = vadd.f32 0.0, %v3152
      %v3154 = vpop.f32.mrb[0].mxu0
      %v3155 = vadd.f32 0.0, %v3154
      %v3156 = vpop.f32.mrb[0].mxu0
      %v3157 = vadd.f32 0.0, %v3156
      %v3158 = vpop.f32.mrb[0].mxu0
      %v3159 = vadd.f32 0.0, %v3158
      %3160 = vmatprep.mubr.bf16.mxu0 0
      %3161 = vmatmul.mubr.bf16.gmra.mrb[0].mxu0 %v1049
      %v3162 = vpop.f32.mrb[0].mxu0
      %v3163 = vadd.f32 0.0, %v3162
      %v3164 = vpop.f32.mrb[0].mxu0
      %v3165 = vadd.f32 0.0, %v3164
      %v3166 = vpop.f32.mrb[0].mxu0
      %v3167 = vadd.f32 0.0, %v3166
      %v3168 = vpop.f32.mrb[0].mxu0
      %v3169 = vadd.f32 0.0, %v3168
      %3170 = vdwg.mxu0
      %3171 = vmatprep.subr.bf16.mxu0 0
      %3172 = vmatpush1.bf16.xpose.msra.mxu0 %v1436
      %3173 = vmatprep.subr.bf16.mxu0 0
      %3174 = vmatpush1.bf16.xpose.msra.mxu0 %v1439
      %3175 = vmatprep.subr.bf16.mxu0 0
      %3176 = vmatpush1.bf16.xpose.msra.mxu0 %v1442
      %3177 = vmatprep.subr.bf16.mxu0 0
      %3178 = vmatpush1.bf16.xpose.msra.mxu0 %v1445
      %3179 = vmatprep.subr.bf16.mxu0 0
      %3180 = vmatpush1.bf16.xpose.msra.mxu0 %v1448
      %3181 = vmatprep.subr.bf16.mxu0 0
      %3182 = vmatpush1.bf16.xpose.msra.mxu0 %v1451
      %3183 = vmatprep.subr.bf16.mxu0 0
      %3184 = vmatpush1.bf16.xpose.msra.mxu0 %v1454
      %3185 = vmatprep.subr.bf16.mxu0 0
      %3186 = vmatpush1.bf16.xpose.msra.mxu0 %v1457
      %3187 = vmatprep.subr.bf16.mxu0 0
      %3188 = vmatpush1.bf16.xpose.msra.mxu0 %v1460
      %3189 = vmatprep.subr.bf16.mxu0 0
      %3190 = vmatpush1.bf16.xpose.msra.mxu0 %v1463
      %3191 = vmatprep.subr.bf16.mxu0 0
      %3192 = vmatpush1.bf16.xpose.msra.mxu0 %v1466
      %3193 = vmatprep.subr.bf16.mxu0 0
      %3194 = vmatpush1.bf16.xpose.msra.mxu0 %v1469
      %3195 = vmatprep.subr.bf16.mxu0 0
      %3196 = vmatpush1.bf16.xpose.msra.mxu0 %v1472
      %3197 = vmatprep.subr.bf16.mxu0 0
      %3198 = vmatpush1.bf16.xpose.msra.mxu0 %v1475
      %3199 = vmatprep.subr.bf16.mxu0 0
      %3200 = vmatpush1.bf16.xpose.msra.mxu0 %v1478
      %3201 = vmatprep.subr.bf16.mxu0 0
      %3202 = vmatpush1.bf16.xpose.msra.mxu0 %v1481
      %3203 = vmatprep.mubr.bf16.mxu0 0
      %3204 = vmatmul.mubr.bf16.gmra.mrb[0].mxu0 %v1004
      %v3205 = vpop.f32.mrb[0].mxu0
      %v3206 = vadd.f32 0.0, %v3205
      %v3207 = vpop.f32.mrb[0].mxu0
      %v3208 = vadd.f32 0.0, %v3207
      %v3209 = vpop.f32.mrb[0].mxu0
      %v3210 = vadd.f32 0.0, %v3209
      %v3211 = vpop.f32.mrb[0].mxu0
      %v3212 = vadd.f32 0.0, %v3211
      %3213 = vmatprep.mubr.bf16.mxu0 0
      %3214 = vmatmul.mubr.bf16.gmra.mrb[0].mxu0 %v1007
      %v3215 = vpop.f32.mrb[0].mxu0
      %v3216 = vadd.f32 0.0, %v3215
      %v3217 = vpop.f32.mrb[0].mxu0
      %v3218 = vadd.f32 0.0, %v3217
      %v3219 = vpop.f32.mrb[0].mxu0
      %v3220 = vadd.f32 0.0, %v3219
      %v3221 = vpop.f32.mrb[0].mxu0
      %v3222 = vadd.f32 0.0, %v3221
      %3223 = vmatprep.mubr.bf16.mxu0 0
      %3224 = vmatmul.mubr.bf16.gmra.mrb[0].mxu0 %v1010
      %v3225 = vpop.f32.mrb[0].mxu0
      %v3226 = vadd.f32 0.0, %v3225
      %v3227 = vpop.f32.mrb[0].mxu0
      %v3228 = vadd.f32 0.0, %v3227
      %v3229 = vpop.f32.mrb[0].mxu0
      %v3230 = vadd.f32 0.0, %v3229
      %v3231 = vpop.f32.mrb[0].mxu0
      %v3232 = vadd.f32 0.0, %v3231
      %3233 = vmatprep.mubr.bf16.mxu0 0
      %3234 = vmatmul.mubr.bf16.gmra.mrb[0].mxu0 %v1013
      %v3235 = vpop.f32.mrb[0].mxu0
      %v3236 = vadd.f32 0.0, %v3235
      %v3237 = vpop.f32.mrb[0].mxu0
      %v3238 = vadd.f32 0.0, %v3237
      %v3239 = vpop.f32.mrb[0].mxu0
      %v3240 = vadd.f32 0.0, %v3239
      %v3241 = vpop.f32.mrb[0].mxu0
      %v3242 = vadd.f32 0.0, %v3241
      %3243 = vmatprep.mubr.bf16.mxu0 0
      %3244 = vmatmul.mubr.bf16.gmra.mrb[0].mxu0 %v1016
      %v3245 = vpop.f32.mrb[0].mxu0
      %v3246 = vadd.f32 0.0, %v3245
      %v3247 = vpop.f32.mrb[0].mxu0
      %v3248 = vadd.f32 0.0, %v3247
      %v3249 = vpop.f32.mrb[0].mxu0
      %v3250 = vadd.f32 0.0, %v3249
      %v3251 = vpop.f32.mrb[0].mxu0
      %v3252 = vadd.f32 0.0, %v3251
      %3253 = vmatprep.mubr.bf16.mxu0 0
      %3254 = vmatmul.mubr.bf16.gmra.mrb[0].mxu0 %v1019
      %v3255 = vpop.f32.mrb[0].mxu0
      %v3256 = vadd.f32 0.0, %v3255
      %v3257 = vpop.f32.mrb[0].mxu0
      %v3258 = vadd.f32 0.0, %v3257
      %v3259 = vpop.f32.mrb[0].mxu0
      %v3260 = vadd.f32 0.0, %v3259
      %v3261 = vpop.f32.mrb[0].mxu0
      %v3262 = vadd.f32 0.0, %v3261
      %3263 = vmatprep.mubr.bf16.mxu0 0
      %3264 = vmatmul.mubr.bf16.gmra.mrb[0].mxu0 %v1022
      %v3265 = vpop.f32.mrb[0].mxu0
      %v3266 = vadd.f32 0.0, %v3265
      %v3267 = vpop.f32.mrb[0].mxu0
      %v3268 = vadd.f32 0.0, %v3267
      %v3269 = vpop.f32.mrb[0].mxu0
      %v3270 = vadd.f32 0.0, %v3269
      %v3271 = vpop.f32.mrb[0].mxu0
      %v3272 = vadd.f32 0.0, %v3271
      %3273 = vmatprep.mubr.bf16.mxu0 0
      %3274 = vmatmul.mubr.bf16.gmra.mrb[0].mxu0 %v1025
      %v3275 = vpop.f32.mrb[0].mxu0
      %v3276 = vadd.f32 0.0, %v3275
      %v3277 = vpop.f32.mrb[0].mxu0
      %v3278 = vadd.f32 0.0, %v3277
      %v3279 = vpop.f32.mrb[0].mxu0
      %v3280 = vadd.f32 0.0, %v3279
      %v3281 = vpop.f32.mrb[0].mxu0
      %v3282 = vadd.f32 0.0, %v3281
      %3283 = vmatprep.mubr.bf16.mxu0 0
      %3284 = vmatmul.mubr.bf16.gmra.mrb[0].mxu0 %v1028
      %v3285 = vpop.f32.mrb[0].mxu0
      %v3286 = vadd.f32 0.0, %v3285
      %v3287 = vpop.f32.mrb[0].mxu0
      %v3288 = vadd.f32 0.0, %v3287
      %v3289 = vpop.f32.mrb[0].mxu0
      %v3290 = vadd.f32 0.0, %v3289
      %v3291 = vpop.f32.mrb[0].mxu0
      %v3292 = vadd.f32 0.0, %v3291
      %3293 = vmatprep.mubr.bf16.mxu0 0
      %3294 = vmatmul.mubr.bf16.gmra.mrb[0].mxu0 %v1031
      %v3295 = vpop.f32.mrb[0].mxu0
      %v3296 = vadd.f32 0.0, %v3295
      %v3297 = vpop.f32.mrb[0].mxu0
      %v3298 = vadd.f32 0.0, %v3297
      %v3299 = vpop.f32.mrb[0].mxu0
      %v3300 = vadd.f32 0.0, %v3299
      %v3301 = vpop.f32.mrb[0].mxu0
      %v3302 = vadd.f32 0.0, %v3301
      %3303 = vmatprep.mubr.bf16.mxu0 0
      %3304 = vmatmul.mubr.bf16.gmra.mrb[0].mxu0 %v1034
      %v3305 = vpop.f32.mrb[0].mxu0
      %v3306 = vadd.f32 0.0, %v3305
      %v3307 = vpop.f32.mrb[0].mxu0
      %v3308 = vadd.f32 0.0, %v3307
      %v3309 = vpop.f32.mrb[0].mxu0
      %v3310 = vadd.f32 0.0, %v3309
      %v3311 = vpop.f32.mrb[0].mxu0
      %v3312 = vadd.f32 0.0, %v3311
      %3313 = vmatprep.mubr.bf16.mxu0 0
      %3314 = vmatmul.mubr.bf16.gmra.mrb[0].mxu0 %v1037
      %v3315 = vpop.f32.mrb[0].mxu0
      %v3316 = vadd.f32 0.0, %v3315
      %v3317 = vpop.f32.mrb[0].mxu0
      %v3318 = vadd.f32 0.0, %v3317
      %v3319 = vpop.f32.mrb[0].mxu0
      %v3320 = vadd.f32 0.0, %v3319
      %v3321 = vpop.f32.mrb[0].mxu0
      %v3322 = vadd.f32 0.0, %v3321
      %3323 = vmatprep.mubr.bf16.mxu0 0
      %3324 = vmatmul.mubr.bf16.gmra.mrb[0].mxu0 %v1040
      %v3325 = vpop.f32.mrb[0].mxu0
      %v3326 = vadd.f32 0.0, %v3325
      %v3327 = vpop.f32.mrb[0].mxu0
      %v3328 = vadd.f32 0.0, %v3327
      %v3329 = vpop.f32.mrb[0].mxu0
      %v3330 = vadd.f32 0.0, %v3329
      %v3331 = vpop.f32.mrb[0].mxu0
      %v3332 = vadd.f32 0.0, %v3331
      %3333 = vmatprep.mubr.bf16.mxu0 0
      %3334 = vmatmul.mubr.bf16.gmra.mrb[0].mxu0 %v1043
      %v3335 = vpop.f32.mrb[0].mxu0
      %v3336 = vadd.f32 0.0, %v3335
      %v3337 = vpop.f32.mrb[0].mxu0
      %v3338 = vadd.f32 0.0, %v3337
      %v3339 = vpop.f32.mrb[0].mxu0
      %v3340 = vadd.f32 0.0, %v3339
      %v3341 = vpop.f32.mrb[0].mxu0
      %v3342 = vadd.f32 0.0, %v3341
      %3343 = vmatprep.mubr.bf16.mxu0 0
      %3344 = vmatmul.mubr.bf16.gmra.mrb[0].mxu0 %v1046
      %v3345 = vpop.f32.mrb[0].mxu0
      %v3346 = vadd.f32 0.0, %v3345
      %v3347 = vpop.f32.mrb[0].mxu0
      %v3348 = vadd.f32 0.0, %v3347
      %v3349 = vpop.f32.mrb[0].mxu0
      %v3350 = vadd.f32 0.0, %v3349
      %v3351 = vpop.f32.mrb[0].mxu0
      %v3352 = vadd.f32 0.0, %v3351
      %3353 = vmatprep.mubr.bf16.mxu0 0
      %3354 = vmatmul.mubr.bf16.gmra.mrb[0].mxu0 %v1049
      %v3355 = vpop.f32.mrb[0].mxu0
      %v3356 = vadd.f32 0.0, %v3355
      %v3357 = vpop.f32.mrb[0].mxu0
      %v3358 = vadd.f32 0.0, %v3357
      %v3359 = vpop.f32.mrb[0].mxu0
      %v3360 = vadd.f32 0.0, %v3359
      %v3361 = vpop.f32.mrb[0].mxu0
      %v3362 = vadd.f32 0.0, %v3361
      %3363 = vdwg.mxu0
      %3364 = vmatprep.subr.bf16.mxu0 0
      %3365 = vmatpush1.bf16.xpose.msra.mxu0 %v1484
      %3366 = vmatprep.subr.bf16.mxu0 0
      %3367 = vmatpush1.bf16.xpose.msra.mxu0 %v1487
      %3368 = vmatprep.subr.bf16.mxu0 0
      %3369 = vmatpush1.bf16.xpose.msra.mxu0 %v1490
      %3370 = vmatprep.subr.bf16.mxu0 0
      %3371 = vmatpush1.bf16.xpose.msra.mxu0 %v1493
      %3372 = vmatprep.subr.bf16.mxu0 0
      %3373 = vmatpush1.bf16.xpose.msra.mxu0 %v1496
      %3374 = vmatprep.subr.bf16.mxu0 0
      %3375 = vmatpush1.bf16.xpose.msra.mxu0 %v1499
      %3376 = vmatprep.subr.bf16.mxu0 0
      %3377 = vmatpush1.bf16.xpose.msra.mxu0 %v1502
      %3378 = vmatprep.subr.bf16.mxu0 0
      %3379 = vmatpush1.bf16.xpose.msra.mxu0 %v1505
      %3380 = vmatprep.subr.bf16.mxu0 0
      %3381 = vmatpush1.bf16.xpose.msra.mxu0 %v1508
      %3382 = vmatprep.subr.bf16.mxu0 0
      %3383 = vmatpush1.bf16.xpose.msra.mxu0 %v1511
      %3384 = vmatprep.subr.bf16.mxu0 0
      %3385 = vmatpush1.bf16.xpose.msra.mxu0 %v1514
      %3386 = vmatprep.subr.bf16.mxu0 0
      %3387 = vmatpush1.bf16.xpose.msra.mxu0 %v1517
      %3388 = vmatprep.subr.bf16.mxu0 0
      %3389 = vmatpush1.bf16.xpose.msra.mxu0 %v1520
      %3390 = vmatprep.subr.bf16.mxu0 0
      %3391 = vmatpush1.bf16.xpose.msra.mxu0 %v1523
      %3392 = vmatprep.subr.bf16.mxu0 0
      %3393 = vmatpush1.bf16.xpose.msra.mxu0 %v1526
      %3394 = vmatprep.subr.bf16.mxu0 0
      %3395 = vmatpush1.bf16.xpose.msra.mxu0 %v1529
      %3396 = vmatprep.mubr.bf16.mxu0 0
      %3397 = vmatmul.mubr.bf16.gmra.mrb[0].mxu0 %v1004
      %v3398 = vpop.f32.mrb[0].mxu0
      %v3399 = vadd.f32 0.0, %v3398
      %v3400 = vpop.f32.mrb[0].mxu0
      %v3401 = vadd.f32 0.0, %v3400
      %v3402 = vpop.f32.mrb[0].mxu0
      %v3403 = vadd.f32 0.0, %v3402
      %v3404 = vpop.f32.mrb[0].mxu0
      %v3405 = vadd.f32 0.0, %v3404
      %3406 = vmatprep.mubr.bf16.mxu0 0
      %3407 = vmatmul.mubr.bf16.gmra.mrb[0].mxu0 %v1007
      %v3408 = vpop.f32.mrb[0].mxu0
      %v3409 = vadd.f32 0.0, %v3408
      %v3410 = vpop.f32.mrb[0].mxu0
      %v3411 = vadd.f32 0.0, %v3410
      %v3412 = vpop.f32.mrb[0].mxu0
      %v3413 = vadd.f32 0.0, %v3412
      %v3414 = vpop.f32.mrb[0].mxu0
      %v3415 = vadd.f32 0.0, %v3414
      %3416 = vmatprep.mubr.bf16.mxu0 0
      %3417 = vmatmul.mubr.bf16.gmra.mrb[0].mxu0 %v1010
      %v3418 = vpop.f32.mrb[0].mxu0
      %v3419 = vadd.f32 0.0, %v3418
      %v3420 = vpop.f32.mrb[0].mxu0
      %v3421 = vadd.f32 0.0, %v3420
      %v3422 = vpop.f32.mrb[0].mxu0
      %v3423 = vadd.f32 0.0, %v3422
      %v3424 = vpop.f32.mrb[0].mxu0
      %v3425 = vadd.f32 0.0, %v3424
      %3426 = vmatprep.mubr.bf16.mxu0 0
      %3427 = vmatmul.mubr.bf16.gmra.mrb[0].mxu0 %v1013
      %v3428 = vpop.f32.mrb[0].mxu0
      %v3429 = vadd.f32 0.0, %v3428
      %v3430 = vpop.f32.mrb[0].mxu0
      %v3431 = vadd.f32 0.0, %v3430
      %v3432 = vpop.f32.mrb[0].mxu0
      %v3433 = vadd.f32 0.0, %v3432
      %v3434 = vpop.f32.mrb[0].mxu0
      %v3435 = vadd.f32 0.0, %v3434
      %3436 = vmatprep.mubr.bf16.mxu0 0
      %3437 = vmatmul.mubr.bf16.gmra.mrb[0].mxu0 %v1016
      %v3438 = vpop.f32.mrb[0].mxu0
      %v3439 = vadd.f32 0.0, %v3438
      %v3440 = vpop.f32.mrb[0].mxu0
      %v3441 = vadd.f32 0.0, %v3440
      %v3442 = vpop.f32.mrb[0].mxu0
      %v3443 = vadd.f32 0.0, %v3442
      %v3444 = vpop.f32.mrb[0].mxu0
      %v3445 = vadd.f32 0.0, %v3444
      %3446 = vmatprep.mubr.bf16.mxu0 0
      %3447 = vmatmul.mubr.bf16.gmra.mrb[0].mxu0 %v1019
      %v3448 = vpop.f32.mrb[0].mxu0
      %v3449 = vadd.f32 0.0, %v3448
      %v3450 = vpop.f32.mrb[0].mxu0
      %v3451 = vadd.f32 0.0, %v3450
      %v3452 = vpop.f32.mrb[0].mxu0
      %v3453 = vadd.f32 0.0, %v3452
      %v3454 = vpop.f32.mrb[0].mxu0
      %v3455 = vadd.f32 0.0, %v3454
      %3456 = vmatprep.mubr.bf16.mxu0 0
      %3457 = vmatmul.mubr.bf16.gmra.mrb[0].mxu0 %v1022
      %v3458 = vpop.f32.mrb[0].mxu0
      %v3459 = vadd.f32 0.0, %v3458
      %v3460 = vpop.f32.mrb[0].mxu0
      %v3461 = vadd.f32 0.0, %v3460
      %v3462 = vpop.f32.mrb[0].mxu0
      %v3463 = vadd.f32 0.0, %v3462
      %v3464 = vpop.f32.mrb[0].mxu0
      %v3465 = vadd.f32 0.0, %v3464
      %3466 = vmatprep.mubr.bf16.mxu0 0
      %3467 = vmatmul.mubr.bf16.gmra.mrb[0].mxu0 %v1025
      %v3468 = vpop.f32.mrb[0].mxu0
      %v3469 = vadd.f32 0.0, %v3468
      %v3470 = vpop.f32.mrb[0].mxu0
      %v3471 = vadd.f32 0.0, %v3470
      %v3472 = vpop.f32.mrb[0].mxu0
      %v3473 = vadd.f32 0.0, %v3472
      %v3474 = vpop.f32.mrb[0].mxu0
      %v3475 = vadd.f32 0.0, %v3474
      %3476 = vmatprep.mubr.bf16.mxu0 0
      %3477 = vmatmul.mubr.bf16.gmra.mrb[0].mxu0 %v1028
      %v3478 = vpop.f32.mrb[0].mxu0
      %v3479 = vadd.f32 0.0, %v3478
      %v3480 = vpop.f32.mrb[0].mxu0
      %v3481 = vadd.f32 0.0, %v3480
      %v3482 = vpop.f32.mrb[0].mxu0
      %v3483 = vadd.f32 0.0, %v3482
      %v3484 = vpop.f32.mrb[0].mxu0
      %v3485 = vadd.f32 0.0, %v3484
      %3486 = vmatprep.mubr.bf16.mxu0 0
      %3487 = vmatmul.mubr.bf16.gmra.mrb[0].mxu0 %v1031
      %v3488 = vpop.f32.mrb[0].mxu0
      %v3489 = vadd.f32 0.0, %v3488
      %v3490 = vpop.f32.mrb[0].mxu0
      %v3491 = vadd.f32 0.0, %v3490
      %v3492 = vpop.f32.mrb[0].mxu0
      %v3493 = vadd.f32 0.0, %v3492
      %v3494 = vpop.f32.mrb[0].mxu0
      %v3495 = vadd.f32 0.0, %v3494
      %3496 = vmatprep.mubr.bf16.mxu0 0
      %3497 = vmatmul.mubr.bf16.gmra.mrb[0].mxu0 %v1034
      %v3498 = vpop.f32.mrb[0].mxu0
      %v3499 = vadd.f32 0.0, %v3498
      %v3500 = vpop.f32.mrb[0].mxu0
      %v3501 = vadd.f32 0.0, %v3500
      %v3502 = vpop.f32.mrb[0].mxu0
      %v3503 = vadd.f32 0.0, %v3502
      %v3504 = vpop.f32.mrb[0].mxu0
      %v3505 = vadd.f32 0.0, %v3504
      %3506 = vmatprep.mubr.bf16.mxu0 0
      %3507 = vmatmul.mubr.bf16.gmra.mrb[0].mxu0 %v1037
      %v3508 = vpop.f32.mrb[0].mxu0
      %v3509 = vadd.f32 0.0, %v3508
      %v3510 = vpop.f32.mrb[0].mxu0
      %v3511 = vadd.f32 0.0, %v3510
      %v3512 = vpop.f32.mrb[0].mxu0
      %v3513 = vadd.f32 0.0, %v3512
      %v3514 = vpop.f32.mrb[0].mxu0
      %v3515 = vadd.f32 0.0, %v3514
      %3516 = vmatprep.mubr.bf16.mxu0 0
      %3517 = vmatmul.mubr.bf16.gmra.mrb[0].mxu0 %v1040
      %v3518 = vpop.f32.mrb[0].mxu0
      %v3519 = vadd.f32 0.0, %v3518
      %v3520 = vpop.f32.mrb[0].mxu0
      %v3521 = vadd.f32 0.0, %v3520
      %v3522 = vpop.f32.mrb[0].mxu0
      %v3523 = vadd.f32 0.0, %v3522
      %v3524 = vpop.f32.mrb[0].mxu0
      %v3525 = vadd.f32 0.0, %v3524
      %3526 = vmatprep.mubr.bf16.mxu0 0
      %3527 = vmatmul.mubr.bf16.gmra.mrb[0].mxu0 %v1043
      %v3528 = vpop.f32.mrb[0].mxu0
      %v3529 = vadd.f32 0.0, %v3528
      %v3530 = vpop.f32.mrb[0].mxu0
      %v3531 = vadd.f32 0.0, %v3530
      %v3532 = vpop.f32.mrb[0].mxu0
      %v3533 = vadd.f32 0.0, %v3532
      %v3534 = vpop.f32.mrb[0].mxu0
      %v3535 = vadd.f32 0.0, %v3534
      %3536 = vmatprep.mubr.bf16.mxu0 0
      %3537 = vmatmul.mubr.bf16.gmra.mrb[0].mxu0 %v1046
      %v3538 = vpop.f32.mrb[0].mxu0
      %v3539 = vadd.f32 0.0, %v3538
      %v3540 = vpop.f32.mrb[0].mxu0
      %v3541 = vadd.f32 0.0, %v3540
      %v3542 = vpop.f32.mrb[0].mxu0
      %v3543 = vadd.f32 0.0, %v3542
      %v3544 = vpop.f32.mrb[0].mxu0
      %v3545 = vadd.f32 0.0, %v3544
      %3546 = vmatprep.mubr.bf16.mxu0 0
      %3547 = vmatmul.mubr.bf16.gmra.mrb[0].mxu0 %v1049
      %v3548 = vpop.f32.mrb[0].mxu0
      %v3549 = vadd.f32 0.0, %v3548
      %v3550 = vpop.f32.mrb[0].mxu0
      %v3551 = vadd.f32 0.0, %v3550
      %v3552 = vpop.f32.mrb[0].mxu0
      %v3553 = vadd.f32 0.0, %v3552
      %v3554 = vpop.f32.mrb[0].mxu0
      %v3555 = vadd.f32 0.0, %v3554
      %3556 = vdwg.mxu0
      %3557 = vmatprep.subr.bf16.mxu0 0
      %3558 = vmatpush1.bf16.xpose.msra.mxu0 %v1532
      %3559 = vmatprep.subr.bf16.mxu0 0
      %3560 = vmatpush1.bf16.xpose.msra.mxu0 %v1535
      %3561 = vmatprep.subr.bf16.mxu0 0
      %3562 = vmatpush1.bf16.xpose.msra.mxu0 %v1538
      %3563 = vmatprep.subr.bf16.mxu0 0
      %3564 = vmatpush1.bf16.xpose.msra.mxu0 %v1541
      %3565 = vmatprep.subr.bf16.mxu0 0
      %3566 = vmatpush1.bf16.xpose.msra.mxu0 %v1544
      %3567 = vmatprep.subr.bf16.mxu0 0
      %3568 = vmatpush1.bf16.xpose.msra.mxu0 %v1547
      %3569 = vmatprep.subr.bf16.mxu0 0
      %3570 = vmatpush1.bf16.xpose.msra.mxu0 %v1550
      %3571 = vmatprep.subr.bf16.mxu0 0
      %3572 = vmatpush1.bf16.xpose.msra.mxu0 %v1553
      %3573 = vmatprep.subr.bf16.mxu0 0
      %3574 = vmatpush1.bf16.xpose.msra.mxu0 %v1556
      %3575 = vmatprep.subr.bf16.mxu0 0
      %3576 = vmatpush1.bf16.xpose.msra.mxu0 %v1559
      %3577 = vmatprep.subr.bf16.mxu0 0
      %3578 = vmatpush1.bf16.xpose.msra.mxu0 %v1562
      %3579 = vmatprep.subr.bf16.mxu0 0
      %3580 = vmatpush1.bf16.xpose.msra.mxu0 %v1565
      %3581 = vmatprep.subr.bf16.mxu0 0
      %3582 = vmatpush1.bf16.xpose.msra.mxu0 %v1568
      %3583 = vmatprep.subr.bf16.mxu0 0
      %3584 = vmatpush1.bf16.xpose.msra.mxu0 %v1571
      %3585 = vmatprep.subr.bf16.mxu0 0
      %3586 = vmatpush1.bf16.xpose.msra.mxu0 %v1574
      %3587 = vmatprep.subr.bf16.mxu0 0
      %3588 = vmatpush1.bf16.xpose.msra.mxu0 %v1577
      %3589 = vmatprep.mubr.bf16.mxu0 0
      %3590 = vmatmul.mubr.bf16.gmra.mrb[0].mxu0 %v1004
      %v3591 = vpop.f32.mrb[0].mxu0
      %v3592 = vadd.f32 0.0, %v3591
      %v3593 = vpop.f32.mrb[0].mxu0
      %v3594 = vadd.f32 0.0, %v3593
      %v3595 = vpop.f32.mrb[0].mxu0
      %v3596 = vadd.f32 0.0, %v3595
      %v3597 = vpop.f32.mrb[0].mxu0
      %v3598 = vadd.f32 0.0, %v3597
      %3599 = vmatprep.mubr.bf16.mxu0 0
      %3600 = vmatmul.mubr.bf16.gmra.mrb[0].mxu0 %v1007
      %v3601 = vpop.f32.mrb[0].mxu0
      %v3602 = vadd.f32 0.0, %v3601
      %v3603 = vpop.f32.mrb[0].mxu0
      %v3604 = vadd.f32 0.0, %v3603
      %v3605 = vpop.f32.mrb[0].mxu0
      %v3606 = vadd.f32 0.0, %v3605
      %v3607 = vpop.f32.mrb[0].mxu0
      %v3608 = vadd.f32 0.0, %v3607
      %3609 = vmatprep.mubr.bf16.mxu0 0
      %3610 = vmatmul.mubr.bf16.gmra.mrb[0].mxu0 %v1010
      %v3611 = vpop.f32.mrb[0].mxu0
      %v3612 = vadd.f32 0.0, %v3611
      %v3613 = vpop.f32.mrb[0].mxu0
      %v3614 = vadd.f32 0.0, %v3613
      %v3615 = vpop.f32.mrb[0].mxu0
      %v3616 = vadd.f32 0.0, %v3615
      %v3617 = vpop.f32.mrb[0].mxu0
      %v3618 = vadd.f32 0.0, %v3617
      %3619 = vmatprep.mubr.bf16.mxu0 0
      %3620 = vmatmul.mubr.bf16.gmra.mrb[0].mxu0 %v1013
      %v3621 = vpop.f32.mrb[0].mxu0
      %v3622 = vadd.f32 0.0, %v3621
      %v3623 = vpop.f32.mrb[0].mxu0
      %v3624 = vadd.f32 0.0, %v3623
      %v3625 = vpop.f32.mrb[0].mxu0
      %v3626 = vadd.f32 0.0, %v3625
      %v3627 = vpop.f32.mrb[0].mxu0
      %v3628 = vadd.f32 0.0, %v3627
      %3629 = vmatprep.mubr.bf16.mxu0 0
      %3630 = vmatmul.mubr.bf16.gmra.mrb[0].mxu0 %v1016
      %v3631 = vpop.f32.mrb[0].mxu0
      %v3632 = vadd.f32 0.0, %v3631
      %v3633 = vpop.f32.mrb[0].mxu0
      %v3634 = vadd.f32 0.0, %v3633
      %v3635 = vpop.f32.mrb[0].mxu0
      %v3636 = vadd.f32 0.0, %v3635
      %v3637 = vpop.f32.mrb[0].mxu0
      %v3638 = vadd.f32 0.0, %v3637
      %3639 = vmatprep.mubr.bf16.mxu0 0
      %3640 = vmatmul.mubr.bf16.gmra.mrb[0].mxu0 %v1019
      %v3641 = vpop.f32.mrb[0].mxu0
      %v3642 = vadd.f32 0.0, %v3641
      %v3643 = vpop.f32.mrb[0].mxu0
      %v3644 = vadd.f32 0.0, %v3643
      %v3645 = vpop.f32.mrb[0].mxu0
      %v3646 = vadd.f32 0.0, %v3645
      %v3647 = vpop.f32.mrb[0].mxu0
      %v3648 = vadd.f32 0.0, %v3647
      %3649 = vmatprep.mubr.bf16.mxu0 0
      %3650 = vmatmul.mubr.bf16.gmra.mrb[0].mxu0 %v1022
      %v3651 = vpop.f32.mrb[0].mxu0
      %v3652 = vadd.f32 0.0, %v3651
      %v3653 = vpop.f32.mrb[0].mxu0
      %v3654 = vadd.f32 0.0, %v3653
      %v3655 = vpop.f32.mrb[0].mxu0
      %v3656 = vadd.f32 0.0, %v3655
      %v3657 = vpop.f32.mrb[0].mxu0
      %v3658 = vadd.f32 0.0, %v3657
      %3659 = vmatprep.mubr.bf16.mxu0 0
      %3660 = vmatmul.mubr.bf16.gmra.mrb[0].mxu0 %v1025
      %v3661 = vpop.f32.mrb[0].mxu0
      %v3662 = vadd.f32 0.0, %v3661
      %v3663 = vpop.f32.mrb[0].mxu0
      %v3664 = vadd.f32 0.0, %v3663
      %v3665 = vpop.f32.mrb[0].mxu0
      %v3666 = vadd.f32 0.0, %v3665
      %v3667 = vpop.f32.mrb[0].mxu0
      %v3668 = vadd.f32 0.0, %v3667
      %3669 = vmatprep.mubr.bf16.mxu0 0
      %3670 = vmatmul.mubr.bf16.gmra.mrb[0].mxu0 %v1028
      %v3671 = vpop.f32.mrb[0].mxu0
      %v3672 = vadd.f32 0.0, %v3671
      %v3673 = vpop.f32.mrb[0].mxu0
      %v3674 = vadd.f32 0.0, %v3673
      %v3675 = vpop.f32.mrb[0].mxu0
      %v3676 = vadd.f32 0.0, %v3675
      %v3677 = vpop.f32.mrb[0].mxu0
      %v3678 = vadd.f32 0.0, %v3677
      %3679 = vmatprep.mubr.bf16.mxu0 0
      %3680 = vmatmul.mubr.bf16.gmra.mrb[0].mxu0 %v1031
      %v3681 = vpop.f32.mrb[0].mxu0
      %v3682 = vadd.f32 0.0, %v3681
      %v3683 = vpop.f32.mrb[0].mxu0
      %v3684 = vadd.f32 0.0, %v3683
      %v3685 = vpop.f32.mrb[0].mxu0
      %v3686 = vadd.f32 0.0, %v3685
      %v3687 = vpop.f32.mrb[0].mxu0
      %v3688 = vadd.f32 0.0, %v3687
      %3689 = vmatprep.mubr.bf16.mxu0 0
      %3690 = vmatmul.mubr.bf16.gmra.mrb[0].mxu0 %v1034
      %v3691 = vpop.f32.mrb[0].mxu0
      %v3692 = vadd.f32 0.0, %v3691
      %v3693 = vpop.f32.mrb[0].mxu0
      %v3694 = vadd.f32 0.0, %v3693
      %v3695 = vpop.f32.mrb[0].mxu0
      %v3696 = vadd.f32 0.0, %v3695
      %v3697 = vpop.f32.mrb[0].mxu0
      %v3698 = vadd.f32 0.0, %v3697
      %3699 = vmatprep.mubr.bf16.mxu0 0
      %3700 = vmatmul.mubr.bf16.gmra.mrb[0].mxu0 %v1037
      %v3701 = vpop.f32.mrb[0].mxu0
      %v3702 = vadd.f32 0.0, %v3701
      %v3703 = vpop.f32.mrb[0].mxu0
      %v3704 = vadd.f32 0.0, %v3703
      %v3705 = vpop.f32.mrb[0].mxu0
      %v3706 = vadd.f32 0.0, %v3705
      %v3707 = vpop.f32.mrb[0].mxu0
      %v3708 = vadd.f32 0.0, %v3707
      %3709 = vmatprep.mubr.bf16.mxu0 0
      %3710 = vmatmul.mubr.bf16.gmra.mrb[0].mxu0 %v1040
      %v3711 = vpop.f32.mrb[0].mxu0
      %v3712 = vadd.f32 0.0, %v3711
      %v3713 = vpop.f32.mrb[0].mxu0
      %v3714 = vadd.f32 0.0, %v3713
      %v3715 = vpop.f32.mrb[0].mxu0
      %v3716 = vadd.f32 0.0, %v3715
      %v3717 = vpop.f32.mrb[0].mxu0
      %v3718 = vadd.f32 0.0, %v3717
      %3719 = vmatprep.mubr.bf16.mxu0 0
      %3720 = vmatmul.mubr.bf16.gmra.mrb[0].mxu0 %v1043
      %v3721 = vpop.f32.mrb[0].mxu0
      %v3722 = vadd.f32 0.0, %v3721
      %v3723 = vpop.f32.mrb[0].mxu0
      %v3724 = vadd.f32 0.0, %v3723
      %v3725 = vpop.f32.mrb[0].mxu0
      %v3726 = vadd.f32 0.0, %v3725
      %v3727 = vpop.f32.mrb[0].mxu0
      %v3728 = vadd.f32 0.0, %v3727
      %3729 = vmatprep.mubr.bf16.mxu0 0
      %3730 = vmatmul.mubr.bf16.gmra.mrb[0].mxu0 %v1046
      %v3731 = vpop.f32.mrb[0].mxu0
      %v3732 = vadd.f32 0.0, %v3731
      %v3733 = vpop.f32.mrb[0].mxu0
      %v3734 = vadd.f32 0.0, %v3733
      %v3735 = vpop.f32.mrb[0].mxu0
      %v3736 = vadd.f32 0.0, %v3735
      %v3737 = vpop.f32.mrb[0].mxu0
      %v3738 = vadd.f32 0.0, %v3737
      %3739 = vmatprep.mubr.bf16.mxu0 0
      %3740 = vmatmul.mubr.bf16.gmra.mrb[0].mxu0 %v1049
      %v3741 = vpop.f32.mrb[0].mxu0
      %v3742 = vadd.f32 0.0, %v3741
      %v3743 = vpop.f32.mrb[0].mxu0
      %v3744 = vadd.f32 0.0, %v3743
      %v3745 = vpop.f32.mrb[0].mxu0
      %v3746 = vadd.f32 0.0, %v3745
      %v3747 = vpop.f32.mrb[0].mxu0
      %v3748 = vadd.f32 0.0, %v3747
      %3749 = vdwg.mxu0
      %3750 = vmatprep.subr.bf16.mxu0 0
      %3751 = vmatpush1.bf16.xpose.msra.mxu0 %v1580
      %3752 = vmatprep.subr.bf16.mxu0 0
      %3753 = vmatpush1.bf16.xpose.msra.mxu0 %v1583
      %3754 = vmatprep.subr.bf16.mxu0 0
      %3755 = vmatpush1.bf16.xpose.msra.mxu0 %v1586
      %3756 = vmatprep.subr.bf16.mxu0 0
      %3757 = vmatpush1.bf16.xpose.msra.mxu0 %v1589
      %3758 = vmatprep.subr.bf16.mxu0 0
      %3759 = vmatpush1.bf16.xpose.msra.mxu0 %v1592
      %3760 = vmatprep.subr.bf16.mxu0 0
      %3761 = vmatpush1.bf16.xpose.msra.mxu0 %v1595
      %3762 = vmatprep.subr.bf16.mxu0 0
      %3763 = vmatpush1.bf16.xpose.msra.mxu0 %v1598
      %3764 = vmatprep.subr.bf16.mxu0 0
      %3765 = vmatpush1.bf16.xpose.msra.mxu0 %v1601
      %3766 = vmatprep.subr.bf16.mxu0 0
      %3767 = vmatpush1.bf16.xpose.msra.mxu0 %v1604
      %3768 = vmatprep.subr.bf16.mxu0 0
      %3769 = vmatpush1.bf16.xpose.msra.mxu0 %v1607
      %3770 = vmatprep.subr.bf16.mxu0 0
      %3771 = vmatpush1.bf16.xpose.msra.mxu0 %v1610
      %3772 = vmatprep.subr.bf16.mxu0 0
      %3773 = vmatpush1.bf16.xpose.msra.mxu0 %v1613
      %3774 = vmatprep.subr.bf16.mxu0 0
      %3775 = vmatpush1.bf16.xpose.msra.mxu0 %v1616
      %3776 = vmatprep.subr.bf16.mxu0 0
      %3777 = vmatpush1.bf16.xpose.msra.mxu0 %v1619
      %3778 = vmatprep.subr.bf16.mxu0 0
      %3779 = vmatpush1.bf16.xpose.msra.mxu0 %v1622
      %3780 = vmatprep.subr.bf16.mxu0 0
      %3781 = vmatpush1.bf16.xpose.msra.mxu0 %v1625
      %3782 = vmatprep.mubr.bf16.mxu0 0
      %3783 = vmatmul.mubr.bf16.gmra.mrb[0].mxu0 %v1004
      %v3784 = vpop.f32.mrb[0].mxu0
      %v3785 = vadd.f32 0.0, %v3784
      %v3786 = vpop.f32.mrb[0].mxu0
      %v3787 = vadd.f32 0.0, %v3786
      %v3788 = vpop.f32.mrb[0].mxu0
      %v3789 = vadd.f32 0.0, %v3788
      %v3790 = vpop.f32.mrb[0].mxu0
      %v3791 = vadd.f32 0.0, %v3790
      %3792 = vmatprep.mubr.bf16.mxu0 0
      %3793 = vmatmul.mubr.bf16.gmra.mrb[0].mxu0 %v1007
      %v3794 = vpop.f32.mrb[0].mxu0
      %v3795 = vadd.f32 0.0, %v3794
      %v3796 = vpop.f32.mrb[0].mxu0
      %v3797 = vadd.f32 0.0, %v3796
      %v3798 = vpop.f32.mrb[0].mxu0
      %v3799 = vadd.f32 0.0, %v3798
      %v3800 = vpop.f32.mrb[0].mxu0
      %v3801 = vadd.f32 0.0, %v3800
      %3802 = vmatprep.mubr.bf16.mxu0 0
      %3803 = vmatmul.mubr.bf16.gmra.mrb[0].mxu0 %v1010
      %v3804 = vpop.f32.mrb[0].mxu0
      %v3805 = vadd.f32 0.0, %v3804
      %v3806 = vpop.f32.mrb[0].mxu0
      %v3807 = vadd.f32 0.0, %v3806
      %v3808 = vpop.f32.mrb[0].mxu0
      %v3809 = vadd.f32 0.0, %v3808
      %v3810 = vpop.f32.mrb[0].mxu0
      %v3811 = vadd.f32 0.0, %v3810
      %3812 = vmatprep.mubr.bf16.mxu0 0
      %3813 = vmatmul.mubr.bf16.gmra.mrb[0].mxu0 %v1013
      %v3814 = vpop.f32.mrb[0].mxu0
      %v3815 = vadd.f32 0.0, %v3814
      %v3816 = vpop.f32.mrb[0].mxu0
      %v3817 = vadd.f32 0.0, %v3816
      %v3818 = vpop.f32.mrb[0].mxu0
      %v3819 = vadd.f32 0.0, %v3818
      %v3820 = vpop.f32.mrb[0].mxu0
      %v3821 = vadd.f32 0.0, %v3820
      %3822 = vmatprep.mubr.bf16.mxu0 0
      %3823 = vmatmul.mubr.bf16.gmra.mrb[0].mxu0 %v1016
      %v3824 = vpop.f32.mrb[0].mxu0
      %v3825 = vadd.f32 0.0, %v3824
      %v3826 = vpop.f32.mrb[0].mxu0
      %v3827 = vadd.f32 0.0, %v3826
      %v3828 = vpop.f32.mrb[0].mxu0
      %v3829 = vadd.f32 0.0, %v3828
      %v3830 = vpop.f32.mrb[0].mxu0
      %v3831 = vadd.f32 0.0, %v3830
      %3832 = vmatprep.mubr.bf16.mxu0 0
      %3833 = vmatmul.mubr.bf16.gmra.mrb[0].mxu0 %v1019
      %v3834 = vpop.f32.mrb[0].mxu0
      %v3835 = vadd.f32 0.0, %v3834
      %v3836 = vpop.f32.mrb[0].mxu0
      %v3837 = vadd.f32 0.0, %v3836
      %v3838 = vpop.f32.mrb[0].mxu0
      %v3839 = vadd.f32 0.0, %v3838
      %v3840 = vpop.f32.mrb[0].mxu0
      %v3841 = vadd.f32 0.0, %v3840
      %3842 = vmatprep.mubr.bf16.mxu0 0
      %3843 = vmatmul.mubr.bf16.gmra.mrb[0].mxu0 %v1022
      %v3844 = vpop.f32.mrb[0].mxu0
      %v3845 = vadd.f32 0.0, %v3844
      %v3846 = vpop.f32.mrb[0].mxu0
      %v3847 = vadd.f32 0.0, %v3846
      %v3848 = vpop.f32.mrb[0].mxu0
      %v3849 = vadd.f32 0.0, %v3848
      %v3850 = vpop.f32.mrb[0].mxu0
      %v3851 = vadd.f32 0.0, %v3850
      %3852 = vmatprep.mubr.bf16.mxu0 0
      %3853 = vmatmul.mubr.bf16.gmra.mrb[0].mxu0 %v1025
      %v3854 = vpop.f32.mrb[0].mxu0
      %v3855 = vadd.f32 0.0, %v3854
      %v3856 = vpop.f32.mrb[0].mxu0
      %v3857 = vadd.f32 0.0, %v3856
      %v3858 = vpop.f32.mrb[0].mxu0
      %v3859 = vadd.f32 0.0, %v3858
      %v3860 = vpop.f32.mrb[0].mxu0
      %v3861 = vadd.f32 0.0, %v3860
      %3862 = vmatprep.mubr.bf16.mxu0 0
      %3863 = vmatmul.mubr.bf16.gmra.mrb[0].mxu0 %v1028
      %v3864 = vpop.f32.mrb[0].mxu0
      %v3865 = vadd.f32 0.0, %v3864
      %v3866 = vpop.f32.mrb[0].mxu0
      %v3867 = vadd.f32 0.0, %v3866
      %v3868 = vpop.f32.mrb[0].mxu0
      %v3869 = vadd.f32 0.0, %v3868
      %v3870 = vpop.f32.mrb[0].mxu0
      %v3871 = vadd.f32 0.0, %v3870
      %3872 = vmatprep.mubr.bf16.mxu0 0
      %3873 = vmatmul.mubr.bf16.gmra.mrb[0].mxu0 %v1031
      %v3874 = vpop.f32.mrb[0].mxu0
      %v3875 = vadd.f32 0.0, %v3874
      %v3876 = vpop.f32.mrb[0].mxu0
      %v3877 = vadd.f32 0.0, %v3876
      %v3878 = vpop.f32.mrb[0].mxu0
      %v3879 = vadd.f32 0.0, %v3878
      %v3880 = vpop.f32.mrb[0].mxu0
      %v3881 = vadd.f32 0.0, %v3880
      %3882 = vmatprep.mubr.bf16.mxu0 0
      %3883 = vmatmul.mubr.bf16.gmra.mrb[0].mxu0 %v1034
      %v3884 = vpop.f32.mrb[0].mxu0
      %v3885 = vadd.f32 0.0, %v3884
      %v3886 = vpop.f32.mrb[0].mxu0
      %v3887 = vadd.f32 0.0, %v3886
      %v3888 = vpop.f32.mrb[0].mxu0
      %v3889 = vadd.f32 0.0, %v3888
      %v3890 = vpop.f32.mrb[0].mxu0
      %v3891 = vadd.f32 0.0, %v3890
      %3892 = vmatprep.mubr.bf16.mxu0 0
      %3893 = vmatmul.mubr.bf16.gmra.mrb[0].mxu0 %v1037
      %v3894 = vpop.f32.mrb[0].mxu0
      %v3895 = vadd.f32 0.0, %v3894
      %v3896 = vpop.f32.mrb[0].mxu0
      %v3897 = vadd.f32 0.0, %v3896
      %v3898 = vpop.f32.mrb[0].mxu0
      %v3899 = vadd.f32 0.0, %v3898
      %v3900 = vpop.f32.mrb[0].mxu0
      %v3901 = vadd.f32 0.0, %v3900
      %3902 = vmatprep.mubr.bf16.mxu0 0
      %3903 = vmatmul.mubr.bf16.gmra.mrb[0].mxu0 %v1040
      %v3904 = vpop.f32.mrb[0].mxu0
      %v3905 = vadd.f32 0.0, %v3904
      %v3906 = vpop.f32.mrb[0].mxu0
      %v3907 = vadd.f32 0.0, %v3906
      %v3908 = vpop.f32.mrb[0].mxu0
      %v3909 = vadd.f32 0.0, %v3908
      %v3910 = vpop.f32.mrb[0].mxu0
      %v3911 = vadd.f32 0.0, %v3910
      %3912 = vmatprep.mubr.bf16.mxu0 0
      %3913 = vmatmul.mubr.bf16.gmra.mrb[0].mxu0 %v1043
      %v3914 = vpop.f32.mrb[0].mxu0
      %v3915 = vadd.f32 0.0, %v3914
      %v3916 = vpop.f32.mrb[0].mxu0
      %v3917 = vadd.f32 0.0, %v3916
      %v3918 = vpop.f32.mrb[0].mxu0
      %v3919 = vadd.f32 0.0, %v3918
      %v3920 = vpop.f32.mrb[0].mxu0
      %v3921 = vadd.f32 0.0, %v3920
      %3922 = vmatprep.mubr.bf16.mxu0 0
      %3923 = vmatmul.mubr.bf16.gmra.mrb[0].mxu0 %v1046
      %v3924 = vpop.f32.mrb[0].mxu0
      %v3925 = vadd.f32 0.0, %v3924
      %v3926 = vpop.f32.mrb[0].mxu0
      %v3927 = vadd.f32 0.0, %v3926
      %v3928 = vpop.f32.mrb[0].mxu0
      %v3929 = vadd.f32 0.0, %v3928
      %v3930 = vpop.f32.mrb[0].mxu0
      %v3931 = vadd.f32 0.0, %v3930
      %3932 = vmatprep.mubr.bf16.mxu0 0
      %3933 = vmatmul.mubr.bf16.gmra.mrb[0].mxu0 %v1049
      %v3934 = vpop.f32.mrb[0].mxu0
      %v3935 = vadd.f32 0.0, %v3934
      %v3936 = vpop.f32.mrb[0].mxu0
      %v3937 = vadd.f32 0.0, %v3936
      %v3938 = vpop.f32.mrb[0].mxu0
      %v3939 = vadd.f32 0.0, %v3938
      %v3940 = vpop.f32.mrb[0].mxu0
      %v3941 = vadd.f32 0.0, %v3940
      %3942 = vdwg.mxu0
      %v3943 = vld [vmem:[%s268] sm:$0xff]
      %v3944 = vld [vmem:[%s268 + $0x8] sm:$0xff]
      %v3945 = vld [vmem:[%s268 + $0x10] sm:$0xff]
      %vm3946 = vcmp.ge.f32.partialorder %v3943, 0.0
      %vm3947 = vcmp.ge.f32.partialorder %v3944, 0.0
      %vm3948 = vcmp.ge.f32.partialorder %v3945, 0.0
      %v3949 = vsel %vm3946, 1, 0
      %v3950 = vsel %vm3947, 1, 0
      %v3951 = vsel %vm3948, 1, 0
      %v3952 = vlaneseq
      %v3953 = vshrl.u32 %v3952, 7
      %v3954 = vsub.s32 0, %v3953
      %v3955 = vrot.slane %v3949, %v3954
      %v3956 = vlaneseq
      %v3957 = vshrl.u32 %v3956, 7
      %v3958 = vsub.s32 1, %v3957
      %v3959 = vrot.slane %v3949, %v3958
      %v3960 = vlaneseq
      %v3961 = vshrl.u32 %v3960, 7
      %v3962 = vsub.s32 2, %v3961
      %v3963 = vrot.slane %v3949, %v3962
      %v3964 = vlaneseq
      %v3965 = vshrl.u32 %v3964, 7
      %v3966 = vsub.s32 3, %v3965
      %v3967 = vrot.slane %v3949, %v3966
      %v3968 = vlaneseq
      %v3969 = vshrl.u32 %v3968, 7
      %v3970 = vsub.s32 4, %v3969
      %v3971 = vrot.slane %v3949, %v3970
      %v3972 = vlaneseq
      %v3973 = vshrl.u32 %v3972, 7
      %v3974 = vsub.s32 5, %v3973
      %v3975 = vrot.slane %v3949, %v3974
      %v3976 = vlaneseq
      %v3977 = vshrl.u32 %v3976, 7
      %v3978 = vsub.s32 6, %v3977
      %v3979 = vrot.slane %v3949, %v3978
      %v3980 = vlaneseq
      %v3981 = vshrl.u32 %v3980, 7
      %v3982 = vsub.s32 7, %v3981
      %v3983 = vrot.slane %v3949, %v3982
      %v3984 = vlaneseq
      %v3985 = vshrl.u32 %v3984, 7
      %v3986 = vsub.s32 0, %v3985
      %v3987 = vrot.slane %v3950, %v3986
      %v3988 = vlaneseq
      %v3989 = vshrl.u32 %v3988, 7
      %v3990 = vsub.s32 1, %v3989
      %v3991 = vrot.slane %v3950, %v3990
      %v3992 = vlaneseq
      %v3993 = vshrl.u32 %v3992, 7
      %v3994 = vsub.s32 2, %v3993
      %v3995 = vrot.slane %v3950, %v3994
      %v3996 = vlaneseq
      %v3997 = vshrl.u32 %v3996, 7
      %v3998 = vsub.s32 3, %v3997
      %v3999 = vrot.slane %v3950, %v3998
      %v4000 = vlaneseq
      %v4001 = vshrl.u32 %v4000, 7
      %v4002 = vsub.s32 4, %v4001
      %v4003 = vrot.slane %v3950, %v4002
      %v4004 = vlaneseq
      %v4005 = vshrl.u32 %v4004, 7
      %v4006 = vsub.s32 5, %v4005
      %v4007 = vrot.slane %v3950, %v4006
      %v4008 = vlaneseq
      %v4009 = vshrl.u32 %v4008, 7
      %v4010 = vsub.s32 6, %v4009
      %v4011 = vrot.slane %v3950, %v4010
      %v4012 = vlaneseq
      %v4013 = vshrl.u32 %v4012, 7
      %v4014 = vsub.s32 7, %v4013
      %v4015 = vrot.slane %v3950, %v4014
      %v4016 = vlaneseq
      %v4017 = vshrl.u32 %v4016, 7
      %v4018 = vsub.s32 0, %v4017
      %v4019 = vrot.slane %v3951, %v4018
      %v4020 = vlaneseq
      %v4021 = vshrl.u32 %v4020, 7
      %v4022 = vsub.s32 1, %v4021
      %v4023 = vrot.slane %v3951, %v4022
      %v4024 = vlaneseq
      %v4025 = vshrl.u32 %v4024, 7
      %v4026 = vsub.s32 2, %v4025
      %v4027 = vrot.slane %v3951, %v4026
      %v4028 = vlaneseq
      %v4029 = vshrl.u32 %v4028, 7
      %v4030 = vsub.s32 3, %v4029
      %v4031 = vrot.slane %v3951, %v4030
      %v4032 = vlaneseq
      %v4033 = vshrl.u32 %v4032, 7
      %v4034 = vsub.s32 4, %v4033
      %v4035 = vrot.slane %v3951, %v4034
      %v4036 = vlaneseq
      %v4037 = vshrl.u32 %v4036, 7
      %v4038 = vsub.s32 5, %v4037
      %v4039 = vrot.slane %v3951, %v4038
      %v4040 = vlaneseq
      %v4041 = vshrl.u32 %v4040, 7
      %v4042 = vsub.s32 6, %v4041
      %v4043 = vrot.slane %v3951, %v4042
      %v4044 = vlaneseq
      %v4045 = vshrl.u32 %v4044, 7
      %v4046 = vsub.s32 7, %v4045
      %v4047 = vrot.slane %v3951, %v4046
      %vm4048 = vcmp.eq.s32.totalorder %v3955, 1
      %vm4049 = vcmp.eq.s32.totalorder %v3959, 1
      %vm4050 = vcmp.eq.s32.totalorder %v3963, 1
      %vm4051 = vcmp.eq.s32.totalorder %v3967, 1
      %vm4052 = vcmp.eq.s32.totalorder %v3971, 1
      %vm4053 = vcmp.eq.s32.totalorder %v3975, 1
      %vm4054 = vcmp.eq.s32.totalorder %v3979, 1
      %vm4055 = vcmp.eq.s32.totalorder %v3983, 1
      %vm4056 = vcmp.eq.s32.totalorder %v3987, 1
      %vm4057 = vcmp.eq.s32.totalorder %v3991, 1
      %vm4058 = vcmp.eq.s32.totalorder %v3995, 1
      %vm4059 = vcmp.eq.s32.totalorder %v3999, 1
      %vm4060 = vcmp.eq.s32.totalorder %v4003, 1
      %vm4061 = vcmp.eq.s32.totalorder %v4007, 1
      %vm4062 = vcmp.eq.s32.totalorder %v4011, 1
      %vm4063 = vcmp.eq.s32.totalorder %v4015, 1
      %vm4064 = vcmp.eq.s32.totalorder %v4019, 1
      %vm4065 = vcmp.eq.s32.totalorder %v4023, 1
      %vm4066 = vcmp.eq.s32.totalorder %v4027, 1
      %vm4067 = vcmp.eq.s32.totalorder %v4031, 1
      %vm4068 = vcmp.eq.s32.totalorder %v4035, 1
      %vm4069 = vcmp.eq.s32.totalorder %v4039, 1
      %vm4070 = vcmp.eq.s32.totalorder %v4043, 1
      %vm4071 = vcmp.eq.s32.totalorder %v4047, 1
      %v4072 = vsel %vm4048, %v1662, -1e+30
      %v4073 = vsel %vm4049, %v1664, -1e+30
      %v4074 = vsel %vm4050, %v1855, -1e+30
      %v4075 = vsel %vm4051, %v1857, -1e+30
      %v4076 = vsel %vm4052, %v2048, -1e+30
      %v4077 = vsel %vm4053, %v2050, -1e+30
      %v4078 = vsel %vm4054, %v2241, -1e+30
      %v4079 = vsel %vm4055, %v2243, -1e+30
      %v4080 = vsel %vm4056, %v2434, -1e+30
      %v4081 = vsel %vm4057, %v2436, -1e+30
      %v4082 = vsel %vm4058, %v2627, -1e+30
      %v4083 = vsel %vm4059, %v2629, -1e+30
      %v4084 = vsel %vm4060, %v2820, -1e+30
      %v4085 = vsel %vm4061, %v2822, -1e+30
      %v4086 = vsel %vm4062, %v3013, -1e+30
      %v4087 = vsel %vm4063, %v3015, -1e+30
      %v4088 = vsel %vm4064, %v3206, -1e+30
      %v4089 = vsel %vm4065, %v3208, -1e+30
      %v4090 = vsel %vm4066, %v3399, -1e+30
      %v4091 = vsel %vm4067, %v3401, -1e+30
      %v4092 = vsel %vm4068, %v3592, -1e+30
      %v4093 = vsel %vm4069, %v3594, -1e+30
      %v4094 = vsel %vm4070, %v3785, -1e+30
      %v4095 = vsel %vm4071, %v3787, -1e+30
      %v4096 = vsel %vm4048, %v1666, -1e+30
      %v4097 = vsel %vm4049, %v1668, -1e+30
      %v4098 = vsel %vm4050, %v1859, -1e+30
      %v4099 = vsel %vm4051, %v1861, -1e+30
      %v4100 = vsel %vm4052, %v2052, -1e+30
      %v4101 = vsel %vm4053, %v2054, -1e+30
      %v4102 = vsel %vm4054, %v2245, -1e+30
      %v4103 = vsel %vm4055, %v2247, -1e+30
      %v4104 = vsel %vm4056, %v2438, -1e+30
      %v4105 = vsel %vm4057, %v2440, -1e+30
      %v4106 = vsel %vm4058, %v2631, -1e+30
      %v4107 = vsel %vm4059, %v2633, -1e+30
      %v4108 = vsel %vm4060, %v2824, -1e+30
      %v4109 = vsel %vm4061, %v2826, -1e+30
      %v4110 = vsel %vm4062, %v3017, -1e+30
      %v4111 = vsel %vm4063, %v3019, -1e+30
      %v4112 = vsel %vm4064, %v3210, -1e+30
      %v4113 = vsel %vm4065, %v3212, -1e+30
      %v4114 = vsel %vm4066, %v3403, -1e+30
      %v4115 = vsel %vm4067, %v3405, -1e+30
      %v4116 = vsel %vm4068, %v3596, -1e+30
      %v4117 = vsel %vm4069, %v3598, -1e+30
      %v4118 = vsel %vm4070, %v3789, -1e+30
      %v4119 = vsel %vm4071, %v3791, -1e+30
      %v4120 = vsel %vm4048, %v1672, -1e+30
      %v4121 = vsel %vm4049, %v1674, -1e+30
      %v4122 = vsel %vm4050, %v1865, -1e+30
      %v4123 = vsel %vm4051, %v1867, -1e+30
      %v4124 = vsel %vm4052, %v2058, -1e+30
      %v4125 = vsel %vm4053, %v2060, -1e+30
      %v4126 = vsel %vm4054, %v2251, -1e+30
      %v4127 = vsel %vm4055, %v2253, -1e+30
      %v4128 = vsel %vm4056, %v2444, -1e+30
      %v4129 = vsel %vm4057, %v2446, -1e+30
      %v4130 = vsel %vm4058, %v2637, -1e+30
      %v4131 = vsel %vm4059, %v2639, -1e+30
      %v4132 = vsel %vm4060, %v2830, -1e+30
      %v4133 = vsel %vm4061, %v2832, -1e+30
      %v4134 = vsel %vm4062, %v3023, -1e+30
      %v4135 = vsel %vm4063, %v3025, -1e+30
      %v4136 = vsel %vm4064, %v3216, -1e+30
      %v4137 = vsel %vm4065, %v3218, -1e+30
      %v4138 = vsel %vm4066, %v3409, -1e+30
      %v4139 = vsel %vm4067, %v3411, -1e+30
      %v4140 = vsel %vm4068, %v3602, -1e+30
      %v4141 = vsel %vm4069, %v3604, -1e+30
      %v4142 = vsel %vm4070, %v3795, -1e+30
      %v4143 = vsel %vm4071, %v3797, -1e+30
      %v4144 = vsel %vm4048, %v1676, -1e+30
      %v4145 = vsel %vm4049, %v1678, -1e+30
      %v4146 = vsel %vm4050, %v1869, -1e+30
      %v4147 = vsel %vm4051, %v1871, -1e+30
      %v4148 = vsel %vm4052, %v2062, -1e+30
      %v4149 = vsel %vm4053, %v2064, -1e+30
      %v4150 = vsel %vm4054, %v2255, -1e+30
      %v4151 = vsel %vm4055, %v2257, -1e+30
      %v4152 = vsel %vm4056, %v2448, -1e+30
      %v4153 = vsel %vm4057, %v2450, -1e+30
      %v4154 = vsel %vm4058, %v2641, -1e+30
      %v4155 = vsel %vm4059, %v2643, -1e+30
      %v4156 = vsel %vm4060, %v2834, -1e+30
      %v4157 = vsel %vm4061, %v2836, -1e+30
      %v4158 = vsel %vm4062, %v3027, -1e+30
      %v4159 = vsel %vm4063, %v3029, -1e+30
      %v4160 = vsel %vm4064, %v3220, -1e+30
      %v4161 = vsel %vm4065, %v3222, -1e+30
      %v4162 = vsel %vm4066, %v3413, -1e+30
      %v4163 = vsel %vm4067, %v3415, -1e+30
      %v4164 = vsel %vm4068, %v3606, -1e+30
      %v4165 = vsel %vm4069, %v3608, -1e+30
      %v4166 = vsel %vm4070, %v3799, -1e+30
      %v4167 = vsel %vm4071, %v3801, -1e+30
      %v4168 = vsel %vm4048, %v1682, -1e+30
      %v4169 = vsel %vm4049, %v1684, -1e+30
      %v4170 = vsel %vm4050, %v1875, -1e+30
      %v4171 = vsel %vm4051, %v1877, -1e+30
      %v4172 = vsel %vm4052, %v2068, -1e+30
      %v4173 = vsel %vm4053, %v2070, -1e+30
      %v4174 = vsel %vm4054, %v2261, -1e+30
      %v4175 = vsel %vm4055, %v2263, -1e+30
      %v4176 = vsel %vm4056, %v2454, -1e+30
      %v4177 = vsel %vm4057, %v2456, -1e+30
      %v4178 = vsel %vm4058, %v2647, -1e+30
      %v4179 = vsel %vm4059, %v2649, -1e+30
      %v4180 = vsel %vm4060, %v2840, -1e+30
      %v4181 = vsel %vm4061, %v2842, -1e+30
      %v4182 = vsel %vm4062, %v3033, -1e+30
      %v4183 = vsel %vm4063, %v3035, -1e+30
      %v4184 = vsel %vm4064, %v3226, -1e+30
      %v4185 = vsel %vm4065, %v3228, -1e+30
      %v4186 = vsel %vm4066, %v3419, -1e+30
      %v4187 = vsel %vm4067, %v3421, -1e+30
      %v4188 = vsel %vm4068, %v3612, -1e+30
      %v4189 = vsel %vm4069, %v3614, -1e+30
      %v4190 = vsel %vm4070, %v3805, -1e+30
      %v4191 = vsel %vm4071, %v3807, -1e+30
      %v4192 = vsel %vm4048, %v1686, -1e+30
      %v4193 = vsel %vm4049, %v1688, -1e+30
      %v4194 = vsel %vm4050, %v1879, -1e+30
      %v4195 = vsel %vm4051, %v1881, -1e+30
      %v4196 = vsel %vm4052, %v2072, -1e+30
      %v4197 = vsel %vm4053, %v2074, -1e+30
      %v4198 = vsel %vm4054, %v2265, -1e+30
      %v4199 = vsel %vm4055, %v2267, -1e+30
      %v4200 = vsel %vm4056, %v2458, -1e+30
      %v4201 = vsel %vm4057, %v2460, -1e+30
      %v4202 = vsel %vm4058, %v2651, -1e+30
      %v4203 = vsel %vm4059, %v2653, -1e+30
      %v4204 = vsel %vm4060, %v2844, -1e+30
      %v4205 = vsel %vm4061, %v2846, -1e+30
      %v4206 = vsel %vm4062, %v3037, -1e+30
      %v4207 = vsel %vm4063, %v3039, -1e+30
      %v4208 = vsel %vm4064, %v3230, -1e+30
      %v4209 = vsel %vm4065, %v3232, -1e+30
      %v4210 = vsel %vm4066, %v3423, -1e+30
      %v4211 = vsel %vm4067, %v3425, -1e+30
      %v4212 = vsel %vm4068, %v3616, -1e+30
      %v4213 = vsel %vm4069, %v3618, -1e+30
      %v4214 = vsel %vm4070, %v3809, -1e+30
      %v4215 = vsel %vm4071, %v3811, -1e+30
      %v4216 = vsel %vm4048, %v1692, -1e+30
      %v4217 = vsel %vm4049, %v1694, -1e+30
      %v4218 = vsel %vm4050, %v1885, -1e+30
      %v4219 = vsel %vm4051, %v1887, -1e+30
      %v4220 = vsel %vm4052, %v2078, -1e+30
      %v4221 = vsel %vm4053, %v2080, -1e+30
      %v4222 = vsel %vm4054, %v2271, -1e+30
      %v4223 = vsel %vm4055, %v2273, -1e+30
      %v4224 = vsel %vm4056, %v2464, -1e+30
      %v4225 = vsel %vm4057, %v2466, -1e+30
      %v4226 = vsel %vm4058, %v2657, -1e+30
      %v4227 = vsel %vm4059, %v2659, -1e+30
      %v4228 = vsel %vm4060, %v2850, -1e+30
      %v4229 = vsel %vm4061, %v2852, -1e+30
      %v4230 = vsel %vm4062, %v3043, -1e+30
      %v4231 = vsel %vm4063, %v3045, -1e+30
      %v4232 = vsel %vm4064, %v3236, -1e+30
      %v4233 = vsel %vm4065, %v3238, -1e+30
      %v4234 = vsel %vm4066, %v3429, -1e+30
      %v4235 = vsel %vm4067, %v3431, -1e+30
      %v4236 = vsel %vm4068, %v3622, -1e+30
      %v4237 = vsel %vm4069, %v3624, -1e+30
      %v4238 = vsel %vm4070, %v3815, -1e+30
      %v4239 = vsel %vm4071, %v3817, -1e+30
      %v4240 = vsel %vm4048, %v1696, -1e+30
      %v4241 = vsel %vm4049, %v1698, -1e+30
      %v4242 = vsel %vm4050, %v1889, -1e+30
      %v4243 = vsel %vm4051, %v1891, -1e+30
      %v4244 = vsel %vm4052, %v2082, -1e+30
      %v4245 = vsel %vm4053, %v2084, -1e+30
      %v4246 = vsel %vm4054, %v2275, -1e+30
      %v4247 = vsel %vm4055, %v2277, -1e+30
      %v4248 = vsel %vm4056, %v2468, -1e+30
      %v4249 = vsel %vm4057, %v2470, -1e+30
      %v4250 = vsel %vm4058, %v2661, -1e+30
      %v4251 = vsel %vm4059, %v2663, -1e+30
      %v4252 = vsel %vm4060, %v2854, -1e+30
      %v4253 = vsel %vm4061, %v2856, -1e+30
      %v4254 = vsel %vm4062, %v3047, -1e+30
      %v4255 = vsel %vm4063, %v3049, -1e+30
      %v4256 = vsel %vm4064, %v3240, -1e+30
      %v4257 = vsel %vm4065, %v3242, -1e+30
      %v4258 = vsel %vm4066, %v3433, -1e+30
      %v4259 = vsel %vm4067, %v3435, -1e+30
      %v4260 = vsel %vm4068, %v3626, -1e+30
      %v4261 = vsel %vm4069, %v3628, -1e+30
      %v4262 = vsel %vm4070, %v3819, -1e+30
      %v4263 = vsel %vm4071, %v3821, -1e+30
      %v4264 = vsel %vm4048, %v1702, -1e+30
      %v4265 = vsel %vm4049, %v1704, -1e+30
      %v4266 = vsel %vm4050, %v1895, -1e+30
      %v4267 = vsel %vm4051, %v1897, -1e+30
      %v4268 = vsel %vm4052, %v2088, -1e+30
      %v4269 = vsel %vm4053, %v2090, -1e+30
      %v4270 = vsel %vm4054, %v2281, -1e+30
      %v4271 = vsel %vm4055, %v2283, -1e+30
      %v4272 = vsel %vm4056, %v2474, -1e+30
      %v4273 = vsel %vm4057, %v2476, -1e+30
      %v4274 = vsel %vm4058, %v2667, -1e+30
      %v4275 = vsel %vm4059, %v2669, -1e+30
      %v4276 = vsel %vm4060, %v2860, -1e+30
      %v4277 = vsel %vm4061, %v2862, -1e+30
      %v4278 = vsel %vm4062, %v3053, -1e+30
      %v4279 = vsel %vm4063, %v3055, -1e+30
      %v4280 = vsel %vm4064, %v3246, -1e+30
      %v4281 = vsel %vm4065, %v3248, -1e+30
      %v4282 = vsel %vm4066, %v3439, -1e+30
      %v4283 = vsel %vm4067, %v3441, -1e+30
      %v4284 = vsel %vm4068, %v3632, -1e+30
      %v4285 = vsel %vm4069, %v3634, -1e+30
      %v4286 = vsel %vm4070, %v3825, -1e+30
      %v4287 = vsel %vm4071, %v3827, -1e+30
      %v4288 = vsel %vm4048, %v1706, -1e+30
      %v4289 = vsel %vm4049, %v1708, -1e+30
      %v4290 = vsel %vm4050, %v1899, -1e+30
      %v4291 = vsel %vm4051, %v1901, -1e+30
      %v4292 = vsel %vm4052, %v2092, -1e+30
      %v4293 = vsel %vm4053, %v2094, -1e+30
      %v4294 = vsel %vm4054, %v2285, -1e+30
      %v4295 = vsel %vm4055, %v2287, -1e+30
      %v4296 = vsel %vm4056, %v2478, -1e+30
      %v4297 = vsel %vm4057, %v2480, -1e+30
      %v4298 = vsel %vm4058, %v2671, -1e+30
      %v4299 = vsel %vm4059, %v2673, -1e+30
      %v4300 = vsel %vm4060, %v2864, -1e+30
      %v4301 = vsel %vm4061, %v2866, -1e+30
      %v4302 = vsel %vm4062, %v3057, -1e+30
      %v4303 = vsel %vm4063, %v3059, -1e+30
      %v4304 = vsel %vm4064, %v3250, -1e+30
      %v4305 = vsel %vm4065, %v3252, -1e+30
      %v4306 = vsel %vm4066, %v3443, -1e+30
      %v4307 = vsel %vm4067, %v3445, -1e+30
      %v4308 = vsel %vm4068, %v3636, -1e+30
      %v4309 = vsel %vm4069, %v3638, -1e+30
      %v4310 = vsel %vm4070, %v3829, -1e+30
      %v4311 = vsel %vm4071, %v3831, -1e+30
      %v4312 = vsel %vm4048, %v1712, -1e+30
      %v4313 = vsel %vm4049, %v1714, -1e+30
      %v4314 = vsel %vm4050, %v1905, -1e+30
      %v4315 = vsel %vm4051, %v1907, -1e+30
      %v4316 = vsel %vm4052, %v2098, -1e+30
      %v4317 = vsel %vm4053, %v2100, -1e+30
      %v4318 = vsel %vm4054, %v2291, -1e+30
      %v4319 = vsel %vm4055, %v2293, -1e+30
      %v4320 = vsel %vm4056, %v2484, -1e+30
      %v4321 = vsel %vm4057, %v2486, -1e+30
      %v4322 = vsel %vm4058, %v2677, -1e+30
      %v4323 = vsel %vm4059, %v2679, -1e+30
      %v4324 = vsel %vm4060, %v2870, -1e+30
      %v4325 = vsel %vm4061, %v2872, -1e+30
      %v4326 = vsel %vm4062, %v3063, -1e+30
      %v4327 = vsel %vm4063, %v3065, -1e+30
      %v4328 = vsel %vm4064, %v3256, -1e+30
      %v4329 = vsel %vm4065, %v3258, -1e+30
      %v4330 = vsel %vm4066, %v3449, -1e+30
      %v4331 = vsel %vm4067, %v3451, -1e+30
      %v4332 = vsel %vm4068, %v3642, -1e+30
      %v4333 = vsel %vm4069, %v3644, -1e+30
      %v4334 = vsel %vm4070, %v3835, -1e+30
      %v4335 = vsel %vm4071, %v3837, -1e+30
      %v4336 = vsel %vm4048, %v1716, -1e+30
      %v4337 = vsel %vm4049, %v1718, -1e+30
      %v4338 = vsel %vm4050, %v1909, -1e+30
      %v4339 = vsel %vm4051, %v1911, -1e+30
      %v4340 = vsel %vm4052, %v2102, -1e+30
      %v4341 = vsel %vm4053, %v2104, -1e+30
      %v4342 = vsel %vm4054, %v2295, -1e+30
      %v4343 = vsel %vm4055, %v2297, -1e+30
      %v4344 = vsel %vm4056, %v2488, -1e+30
      %v4345 = vsel %vm4057, %v2490, -1e+30
      %v4346 = vsel %vm4058, %v2681, -1e+30
      %v4347 = vsel %vm4059, %v2683, -1e+30
      %v4348 = vsel %vm4060, %v2874, -1e+30
      %v4349 = vsel %vm4061, %v2876, -1e+30
      %v4350 = vsel %vm4062, %v3067, -1e+30
      %v4351 = vsel %vm4063, %v3069, -1e+30
      %v4352 = vsel %vm4064, %v3260, -1e+30
      %v4353 = vsel %vm4065, %v3262, -1e+30
      %v4354 = vsel %vm4066, %v3453, -1e+30
      %v4355 = vsel %vm4067, %v3455, -1e+30
      %v4356 = vsel %vm4068, %v3646, -1e+30
      %v4357 = vsel %vm4069, %v3648, -1e+30
      %v4358 = vsel %vm4070, %v3839, -1e+30
      %v4359 = vsel %vm4071, %v3841, -1e+30
      %v4360 = vsel %vm4048, %v1722, -1e+30
      %v4361 = vsel %vm4049, %v1724, -1e+30
      %v4362 = vsel %vm4050, %v1915, -1e+30
      %v4363 = vsel %vm4051, %v1917, -1e+30
      %v4364 = vsel %vm4052, %v2108, -1e+30
      %v4365 = vsel %vm4053, %v2110, -1e+30
      %v4366 = vsel %vm4054, %v2301, -1e+30
      %v4367 = vsel %vm4055, %v2303, -1e+30
      %v4368 = vsel %vm4056, %v2494, -1e+30
      %v4369 = vsel %vm4057, %v2496, -1e+30
      %v4370 = vsel %vm4058, %v2687, -1e+30
      %v4371 = vsel %vm4059, %v2689, -1e+30
      %v4372 = vsel %vm4060, %v2880, -1e+30
      %v4373 = vsel %vm4061, %v2882, -1e+30
      %v4374 = vsel %vm4062, %v3073, -1e+30
      %v4375 = vsel %vm4063, %v3075, -1e+30
      %v4376 = vsel %vm4064, %v3266, -1e+30
      %v4377 = vsel %vm4065, %v3268, -1e+30
      %v4378 = vsel %vm4066, %v3459, -1e+30
      %v4379 = vsel %vm4067, %v3461, -1e+30
      %v4380 = vsel %vm4068, %v3652, -1e+30
      %v4381 = vsel %vm4069, %v3654, -1e+30
      %v4382 = vsel %vm4070, %v3845, -1e+30
      %v4383 = vsel %vm4071, %v3847, -1e+30
      %v4384 = vsel %vm4048, %v1726, -1e+30
      %v4385 = vsel %vm4049, %v1728, -1e+30
      %v4386 = vsel %vm4050, %v1919, -1e+30
      %v4387 = vsel %vm4051, %v1921, -1e+30
      %v4388 = vsel %vm4052, %v2112, -1e+30
      %v4389 = vsel %vm4053, %v2114, -1e+30
      %v4390 = vsel %vm4054, %v2305, -1e+30
      %v4391 = vsel %vm4055, %v2307, -1e+30
      %v4392 = vsel %vm4056, %v2498, -1e+30
      %v4393 = vsel %vm4057, %v2500, -1e+30
      %v4394 = vsel %vm4058, %v2691, -1e+30
      %v4395 = vsel %vm4059, %v2693, -1e+30
      %v4396 = vsel %vm4060, %v2884, -1e+30
      %v4397 = vsel %vm4061, %v2886, -1e+30
      %v4398 = vsel %vm4062, %v3077, -1e+30
      %v4399 = vsel %vm4063, %v3079, -1e+30
      %v4400 = vsel %vm4064, %v3270, -1e+30
      %v4401 = vsel %vm4065, %v3272, -1e+30
      %v4402 = vsel %vm4066, %v3463, -1e+30
      %v4403 = vsel %vm4067, %v3465, -1e+30
      %v4404 = vsel %vm4068, %v3656, -1e+30
      %v4405 = vsel %vm4069, %v3658, -1e+30
      %v4406 = vsel %vm4070, %v3849, -1e+30
      %v4407 = vsel %vm4071, %v3851, -1e+30
      %v4408 = vsel %vm4048, %v1732, -1e+30
      %v4409 = vsel %vm4049, %v1734, -1e+30
      %v4410 = vsel %vm4050, %v1925, -1e+30
      %v4411 = vsel %vm4051, %v1927, -1e+30
      %v4412 = vsel %vm4052, %v2118, -1e+30
      %v4413 = vsel %vm4053, %v2120, -1e+30
      %v4414 = vsel %vm4054, %v2311, -1e+30
      %v4415 = vsel %vm4055, %v2313, -1e+30
      %v4416 = vsel %vm4056, %v2504, -1e+30
      %v4417 = vsel %vm4057, %v2506, -1e+30
      %v4418 = vsel %vm4058, %v2697, -1e+30
      %v4419 = vsel %vm4059, %v2699, -1e+30
      %v4420 = vsel %vm4060, %v2890, -1e+30
      %v4421 = vsel %vm4061, %v2892, -1e+30
      %v4422 = vsel %vm4062, %v3083, -1e+30
      %v4423 = vsel %vm4063, %v3085, -1e+30
      %v4424 = vsel %vm4064, %v3276, -1e+30
      %v4425 = vsel %vm4065, %v3278, -1e+30
      %v4426 = vsel %vm4066, %v3469, -1e+30
      %v4427 = vsel %vm4067, %v3471, -1e+30
      %v4428 = vsel %vm4068, %v3662, -1e+30
      %v4429 = vsel %vm4069, %v3664, -1e+30
      %v4430 = vsel %vm4070, %v3855, -1e+30
      %v4431 = vsel %vm4071, %v3857, -1e+30
      %v4432 = vsel %vm4048, %v1736, -1e+30
      %v4433 = vsel %vm4049, %v1738, -1e+30
      %v4434 = vsel %vm4050, %v1929, -1e+30
      %v4435 = vsel %vm4051, %v1931, -1e+30
      %v4436 = vsel %vm4052, %v2122, -1e+30
      %v4437 = vsel %vm4053, %v2124, -1e+30
      %v4438 = vsel %vm4054, %v2315, -1e+30
      %v4439 = vsel %vm4055, %v2317, -1e+30
      %v4440 = vsel %vm4056, %v2508, -1e+30
      %v4441 = vsel %vm4057, %v2510, -1e+30
      %v4442 = vsel %vm4058, %v2701, -1e+30
      %v4443 = vsel %vm4059, %v2703, -1e+30
      %v4444 = vsel %vm4060, %v2894, -1e+30
      %v4445 = vsel %vm4061, %v2896, -1e+30
      %v4446 = vsel %vm4062, %v3087, -1e+30
      %v4447 = vsel %vm4063, %v3089, -1e+30
      %v4448 = vsel %vm4064, %v3280, -1e+30
      %v4449 = vsel %vm4065, %v3282, -1e+30
      %v4450 = vsel %vm4066, %v3473, -1e+30
      %v4451 = vsel %vm4067, %v3475, -1e+30
      %v4452 = vsel %vm4068, %v3666, -1e+30
      %v4453 = vsel %vm4069, %v3668, -1e+30
      %v4454 = vsel %vm4070, %v3859, -1e+30
      %v4455 = vsel %vm4071, %v3861, -1e+30
      %v4456 = vsel %vm4048, %v1742, -1e+30
      %v4457 = vsel %vm4049, %v1744, -1e+30
      %v4458 = vsel %vm4050, %v1935, -1e+30
      %v4459 = vsel %vm4051, %v1937, -1e+30
      %v4460 = vsel %vm4052, %v2128, -1e+30
      %v4461 = vsel %vm4053, %v2130, -1e+30
      %v4462 = vsel %vm4054, %v2321, -1e+30
      %v4463 = vsel %vm4055, %v2323, -1e+30
      %v4464 = vsel %vm4056, %v2514, -1e+30
      %v4465 = vsel %vm4057, %v2516, -1e+30
      %v4466 = vsel %vm4058, %v2707, -1e+30
      %v4467 = vsel %vm4059, %v2709, -1e+30
      %v4468 = vsel %vm4060, %v2900, -1e+30
      %v4469 = vsel %vm4061, %v2902, -1e+30
      %v4470 = vsel %vm4062, %v3093, -1e+30
      %v4471 = vsel %vm4063, %v3095, -1e+30
      %v4472 = vsel %vm4064, %v3286, -1e+30
      %v4473 = vsel %vm4065, %v3288, -1e+30
      %v4474 = vsel %vm4066, %v3479, -1e+30
      %v4475 = vsel %vm4067, %v3481, -1e+30
      %v4476 = vsel %vm4068, %v3672, -1e+30
      %v4477 = vsel %vm4069, %v3674, -1e+30
      %v4478 = vsel %vm4070, %v3865, -1e+30
      %v4479 = vsel %vm4071, %v3867, -1e+30
      %v4480 = vsel %vm4048, %v1746, -1e+30
      %v4481 = vsel %vm4049, %v1748, -1e+30
      %v4482 = vsel %vm4050, %v1939, -1e+30
      %v4483 = vsel %vm4051, %v1941, -1e+30
      %v4484 = vsel %vm4052, %v2132, -1e+30
      %v4485 = vsel %vm4053, %v2134, -1e+30
      %v4486 = vsel %vm4054, %v2325, -1e+30
      %v4487 = vsel %vm4055, %v2327, -1e+30
      %v4488 = vsel %vm4056, %v2518, -1e+30
      %v4489 = vsel %vm4057, %v2520, -1e+30
      %v4490 = vsel %vm4058, %v2711, -1e+30
      %v4491 = vsel %vm4059, %v2713, -1e+30
      %v4492 = vsel %vm4060, %v2904, -1e+30
      %v4493 = vsel %vm4061, %v2906, -1e+30
      %v4494 = vsel %vm4062, %v3097, -1e+30
      %v4495 = vsel %vm4063, %v3099, -1e+30
      %v4496 = vsel %vm4064, %v3290, -1e+30
      %v4497 = vsel %vm4065, %v3292, -1e+30
      %v4498 = vsel %vm4066, %v3483, -1e+30
      %v4499 = vsel %vm4067, %v3485, -1e+30
      %v4500 = vsel %vm4068, %v3676, -1e+30
      %v4501 = vsel %vm4069, %v3678, -1e+30
      %v4502 = vsel %vm4070, %v3869, -1e+30
      %v4503 = vsel %vm4071, %v3871, -1e+30
      %v4504 = vsel %vm4048, %v1752, -1e+30
      %v4505 = vsel %vm4049, %v1754, -1e+30
      %v4506 = vsel %vm4050, %v1945, -1e+30
      %v4507 = vsel %vm4051, %v1947, -1e+30
      %v4508 = vsel %vm4052, %v2138, -1e+30
      %v4509 = vsel %vm4053, %v2140, -1e+30
      %v4510 = vsel %vm4054, %v2331, -1e+30
      %v4511 = vsel %vm4055, %v2333, -1e+30
      %v4512 = vsel %vm4056, %v2524, -1e+30
      %v4513 = vsel %vm4057, %v2526, -1e+30
      %v4514 = vsel %vm4058, %v2717, -1e+30
      %v4515 = vsel %vm4059, %v2719, -1e+30
      %v4516 = vsel %vm4060, %v2910, -1e+30
      %v4517 = vsel %vm4061, %v2912, -1e+30
      %v4518 = vsel %vm4062, %v3103, -1e+30
      %v4519 = vsel %vm4063, %v3105, -1e+30
      %v4520 = vsel %vm4064, %v3296, -1e+30
      %v4521 = vsel %vm4065, %v3298, -1e+30
      %v4522 = vsel %vm4066, %v3489, -1e+30
      %v4523 = vsel %vm4067, %v3491, -1e+30
      %v4524 = vsel %vm4068, %v3682, -1e+30
      %v4525 = vsel %vm4069, %v3684, -1e+30
      %v4526 = vsel %vm4070, %v3875, -1e+30
      %v4527 = vsel %vm4071, %v3877, -1e+30
      %v4528 = vsel %vm4048, %v1756, -1e+30
      %v4529 = vsel %vm4049, %v1758, -1e+30
      %v4530 = vsel %vm4050, %v1949, -1e+30
      %v4531 = vsel %vm4051, %v1951, -1e+30
      %v4532 = vsel %vm4052, %v2142, -1e+30
      %v4533 = vsel %vm4053, %v2144, -1e+30
      %v4534 = vsel %vm4054, %v2335, -1e+30
      %v4535 = vsel %vm4055, %v2337, -1e+30
      %v4536 = vsel %vm4056, %v2528, -1e+30
      %v4537 = vsel %vm4057, %v2530, -1e+30
      %v4538 = vsel %vm4058, %v2721, -1e+30
      %v4539 = vsel %vm4059, %v2723, -1e+30
      %v4540 = vsel %vm4060, %v2914, -1e+30
      %v4541 = vsel %vm4061, %v2916, -1e+30
      %v4542 = vsel %vm4062, %v3107, -1e+30
      %v4543 = vsel %vm4063, %v3109, -1e+30
      %v4544 = vsel %vm4064, %v3300, -1e+30
      %v4545 = vsel %vm4065, %v3302, -1e+30
      %v4546 = vsel %vm4066, %v3493, -1e+30
      %v4547 = vsel %vm4067, %v3495, -1e+30
      %v4548 = vsel %vm4068, %v3686, -1e+30
      %v4549 = vsel %vm4069, %v3688, -1e+30
      %v4550 = vsel %vm4070, %v3879, -1e+30
      %v4551 = vsel %vm4071, %v3881, -1e+30
      %v4552 = vsel %vm4048, %v1762, -1e+30
      %v4553 = vsel %vm4049, %v1764, -1e+30
      %v4554 = vsel %vm4050, %v1955, -1e+30
      %v4555 = vsel %vm4051, %v1957, -1e+30
      %v4556 = vsel %vm4052, %v2148, -1e+30
      %v4557 = vsel %vm4053, %v2150, -1e+30
      %v4558 = vsel %vm4054, %v2341, -1e+30
      %v4559 = vsel %vm4055, %v2343, -1e+30
      %v4560 = vsel %vm4056, %v2534, -1e+30
      %v4561 = vsel %vm4057, %v2536, -1e+30
      %v4562 = vsel %vm4058, %v2727, -1e+30
      %v4563 = vsel %vm4059, %v2729, -1e+30
      %v4564 = vsel %vm4060, %v2920, -1e+30
      %v4565 = vsel %vm4061, %v2922, -1e+30
      %v4566 = vsel %vm4062, %v3113, -1e+30
      %v4567 = vsel %vm4063, %v3115, -1e+30
      %v4568 = vsel %vm4064, %v3306, -1e+30
      %v4569 = vsel %vm4065, %v3308, -1e+30
      %v4570 = vsel %vm4066, %v3499, -1e+30
      %v4571 = vsel %vm4067, %v3501, -1e+30
      %v4572 = vsel %vm4068, %v3692, -1e+30
      %v4573 = vsel %vm4069, %v3694, -1e+30
      %v4574 = vsel %vm4070, %v3885, -1e+30
      %v4575 = vsel %vm4071, %v3887, -1e+30
      %v4576 = vsel %vm4048, %v1766, -1e+30
      %v4577 = vsel %vm4049, %v1768, -1e+30
      %v4578 = vsel %vm4050, %v1959, -1e+30
      %v4579 = vsel %vm4051, %v1961, -1e+30
      %v4580 = vsel %vm4052, %v2152, -1e+30
      %v4581 = vsel %vm4053, %v2154, -1e+30
      %v4582 = vsel %vm4054, %v2345, -1e+30
      %v4583 = vsel %vm4055, %v2347, -1e+30
      %v4584 = vsel %vm4056, %v2538, -1e+30
      %v4585 = vsel %vm4057, %v2540, -1e+30
      %v4586 = vsel %vm4058, %v2731, -1e+30
      %v4587 = vsel %vm4059, %v2733, -1e+30
      %v4588 = vsel %vm4060, %v2924, -1e+30
      %v4589 = vsel %vm4061, %v2926, -1e+30
      %v4590 = vsel %vm4062, %v3117, -1e+30
      %v4591 = vsel %vm4063, %v3119, -1e+30
      %v4592 = vsel %vm4064, %v3310, -1e+30
      %v4593 = vsel %vm4065, %v3312, -1e+30
      %v4594 = vsel %vm4066, %v3503, -1e+30
      %v4595 = vsel %vm4067, %v3505, -1e+30
      %v4596 = vsel %vm4068, %v3696, -1e+30
      %v4597 = vsel %vm4069, %v3698, -1e+30
      %v4598 = vsel %vm4070, %v3889, -1e+30
      %v4599 = vsel %vm4071, %v3891, -1e+30
      %v4600 = vsel %vm4048, %v1772, -1e+30
      %v4601 = vsel %vm4049, %v1774, -1e+30
      %v4602 = vsel %vm4050, %v1965, -1e+30
      %v4603 = vsel %vm4051, %v1967, -1e+30
      %v4604 = vsel %vm4052, %v2158, -1e+30
      %v4605 = vsel %vm4053, %v2160, -1e+30
      %v4606 = vsel %vm4054, %v2351, -1e+30
      %v4607 = vsel %vm4055, %v2353, -1e+30
      %v4608 = vsel %vm4056, %v2544, -1e+30
      %v4609 = vsel %vm4057, %v2546, -1e+30
      %v4610 = vsel %vm4058, %v2737, -1e+30
      %v4611 = vsel %vm4059, %v2739, -1e+30
      %v4612 = vsel %vm4060, %v2930, -1e+30
      %v4613 = vsel %vm4061, %v2932, -1e+30
      %v4614 = vsel %vm4062, %v3123, -1e+30
      %v4615 = vsel %vm4063, %v3125, -1e+30
      %v4616 = vsel %vm4064, %v3316, -1e+30
      %v4617 = vsel %vm4065, %v3318, -1e+30
      %v4618 = vsel %vm4066, %v3509, -1e+30
      %v4619 = vsel %vm4067, %v3511, -1e+30
      %v4620 = vsel %vm4068, %v3702, -1e+30
      %v4621 = vsel %vm4069, %v3704, -1e+30
      %v4622 = vsel %vm4070, %v3895, -1e+30
      %v4623 = vsel %vm4071, %v3897, -1e+30
      %v4624 = vsel %vm4048, %v1776, -1e+30
      %v4625 = vsel %vm4049, %v1778, -1e+30
      %v4626 = vsel %vm4050, %v1969, -1e+30
      %v4627 = vsel %vm4051, %v1971, -1e+30
      %v4628 = vsel %vm4052, %v2162, -1e+30
      %v4629 = vsel %vm4053, %v2164, -1e+30
      %v4630 = vsel %vm4054, %v2355, -1e+30
      %v4631 = vsel %vm4055, %v2357, -1e+30
      %v4632 = vsel %vm4056, %v2548, -1e+30
      %v4633 = vsel %vm4057, %v2550, -1e+30
      %v4634 = vsel %vm4058, %v2741, -1e+30
      %v4635 = vsel %vm4059, %v2743, -1e+30
      %v4636 = vsel %vm4060, %v2934, -1e+30
      %v4637 = vsel %vm4061, %v2936, -1e+30
      %v4638 = vsel %vm4062, %v3127, -1e+30
      %v4639 = vsel %vm4063, %v3129, -1e+30
      %v4640 = vsel %vm4064, %v3320, -1e+30
      %v4641 = vsel %vm4065, %v3322, -1e+30
      %v4642 = vsel %vm4066, %v3513, -1e+30
      %v4643 = vsel %vm4067, %v3515, -1e+30
      %v4644 = vsel %vm4068, %v3706, -1e+30
      %v4645 = vsel %vm4069, %v3708, -1e+30
      %v4646 = vsel %vm4070, %v3899, -1e+30
      %v4647 = vsel %vm4071, %v3901, -1e+30
      %v4648 = vsel %vm4048, %v1782, -1e+30
      %v4649 = vsel %vm4049, %v1784, -1e+30
      %v4650 = vsel %vm4050, %v1975, -1e+30
      %v4651 = vsel %vm4051, %v1977, -1e+30
      %v4652 = vsel %vm4052, %v2168, -1e+30
      %v4653 = vsel %vm4053, %v2170, -1e+30
      %v4654 = vsel %vm4054, %v2361, -1e+30
      %v4655 = vsel %vm4055, %v2363, -1e+30
      %v4656 = vsel %vm4056, %v2554, -1e+30
      %v4657 = vsel %vm4057, %v2556, -1e+30
      %v4658 = vsel %vm4058, %v2747, -1e+30
      %v4659 = vsel %vm4059, %v2749, -1e+30
      %v4660 = vsel %vm4060, %v2940, -1e+30
      %v4661 = vsel %vm4061, %v2942, -1e+30
      %v4662 = vsel %vm4062, %v3133, -1e+30
      %v4663 = vsel %vm4063, %v3135, -1e+30
      %v4664 = vsel %vm4064, %v3326, -1e+30
      %v4665 = vsel %vm4065, %v3328, -1e+30
      %v4666 = vsel %vm4066, %v3519, -1e+30
      %v4667 = vsel %vm4067, %v3521, -1e+30
      %v4668 = vsel %vm4068, %v3712, -1e+30
      %v4669 = vsel %vm4069, %v3714, -1e+30
      %v4670 = vsel %vm4070, %v3905, -1e+30
      %v4671 = vsel %vm4071, %v3907, -1e+30
      %v4672 = vsel %vm4048, %v1786, -1e+30
      %v4673 = vsel %vm4049, %v1788, -1e+30
      %v4674 = vsel %vm4050, %v1979, -1e+30
      %v4675 = vsel %vm4051, %v1981, -1e+30
      %v4676 = vsel %vm4052, %v2172, -1e+30
      %v4677 = vsel %vm4053, %v2174, -1e+30
      %v4678 = vsel %vm4054, %v2365, -1e+30
      %v4679 = vsel %vm4055, %v2367, -1e+30
      %v4680 = vsel %vm4056, %v2558, -1e+30
      %v4681 = vsel %vm4057, %v2560, -1e+30
      %v4682 = vsel %vm4058, %v2751, -1e+30
      %v4683 = vsel %vm4059, %v2753, -1e+30
      %v4684 = vsel %vm4060, %v2944, -1e+30
      %v4685 = vsel %vm4061, %v2946, -1e+30
      %v4686 = vsel %vm4062, %v3137, -1e+30
      %v4687 = vsel %vm4063, %v3139, -1e+30
      %v4688 = vsel %vm4064, %v3330, -1e+30
      %v4689 = vsel %vm4065, %v3332, -1e+30
      %v4690 = vsel %vm4066, %v3523, -1e+30
      %v4691 = vsel %vm4067, %v3525, -1e+30
      %v4692 = vsel %vm4068, %v3716, -1e+30
      %v4693 = vsel %vm4069, %v3718, -1e+30
      %v4694 = vsel %vm4070, %v3909, -1e+30
      %v4695 = vsel %vm4071, %v3911, -1e+30
      %v4696 = vsel %vm4048, %v1792, -1e+30
      %v4697 = vsel %vm4049, %v1794, -1e+30
      %v4698 = vsel %vm4050, %v1985, -1e+30
      %v4699 = vsel %vm4051, %v1987, -1e+30
      %v4700 = vsel %vm4052, %v2178, -1e+30
      %v4701 = vsel %vm4053, %v2180, -1e+30
      %v4702 = vsel %vm4054, %v2371, -1e+30
      %v4703 = vsel %vm4055, %v2373, -1e+30
      %v4704 = vsel %vm4056, %v2564, -1e+30
      %v4705 = vsel %vm4057, %v2566, -1e+30
      %v4706 = vsel %vm4058, %v2757, -1e+30
      %v4707 = vsel %vm4059, %v2759, -1e+30
      %v4708 = vsel %vm4060, %v2950, -1e+30
      %v4709 = vsel %vm4061, %v2952, -1e+30
      %v4710 = vsel %vm4062, %v3143, -1e+30
      %v4711 = vsel %vm4063, %v3145, -1e+30
      %v4712 = vsel %vm4064, %v3336, -1e+30
      %v4713 = vsel %vm4065, %v3338, -1e+30
      %v4714 = vsel %vm4066, %v3529, -1e+30
      %v4715 = vsel %vm4067, %v3531, -1e+30
      %v4716 = vsel %vm4068, %v3722, -1e+30
      %v4717 = vsel %vm4069, %v3724, -1e+30
      %v4718 = vsel %vm4070, %v3915, -1e+30
      %v4719 = vsel %vm4071, %v3917, -1e+30
      %v4720 = vsel %vm4048, %v1796, -1e+30
      %v4721 = vsel %vm4049, %v1798, -1e+30
      %v4722 = vsel %vm4050, %v1989, -1e+30
      %v4723 = vsel %vm4051, %v1991, -1e+30
      %v4724 = vsel %vm4052, %v2182, -1e+30
      %v4725 = vsel %vm4053, %v2184, -1e+30
      %v4726 = vsel %vm4054, %v2375, -1e+30
      %v4727 = vsel %vm4055, %v2377, -1e+30
      %v4728 = vsel %vm4056, %v2568, -1e+30
      %v4729 = vsel %vm4057, %v2570, -1e+30
      %v4730 = vsel %vm4058, %v2761, -1e+30
      %v4731 = vsel %vm4059, %v2763, -1e+30
      %v4732 = vsel %vm4060, %v2954, -1e+30
      %v4733 = vsel %vm4061, %v2956, -1e+30
      %v4734 = vsel %vm4062, %v3147, -1e+30
      %v4735 = vsel %vm4063, %v3149, -1e+30
      %v4736 = vsel %vm4064, %v3340, -1e+30
      %v4737 = vsel %vm4065, %v3342, -1e+30
      %v4738 = vsel %vm4066, %v3533, -1e+30
      %v4739 = vsel %vm4067, %v3535, -1e+30
      %v4740 = vsel %vm4068, %v3726, -1e+30
      %v4741 = vsel %vm4069, %v3728, -1e+30
      %v4742 = vsel %vm4070, %v3919, -1e+30
      %v4743 = vsel %vm4071, %v3921, -1e+30
      %v4744 = vsel %vm4048, %v1802, -1e+30
      %v4745 = vsel %vm4049, %v1804, -1e+30
      %v4746 = vsel %vm4050, %v1995, -1e+30
      %v4747 = vsel %vm4051, %v1997, -1e+30
      %v4748 = vsel %vm4052, %v2188, -1e+30
      %v4749 = vsel %vm4053, %v2190, -1e+30
      %v4750 = vsel %vm4054, %v2381, -1e+30
      %v4751 = vsel %vm4055, %v2383, -1e+30
      %v4752 = vsel %vm4056, %v2574, -1e+30
      %v4753 = vsel %vm4057, %v2576, -1e+30
      %v4754 = vsel %vm4058, %v2767, -1e+30
      %v4755 = vsel %vm4059, %v2769, -1e+30
      %v4756 = vsel %vm4060, %v2960, -1e+30
      %v4757 = vsel %vm4061, %v2962, -1e+30
      %v4758 = vsel %vm4062, %v3153, -1e+30
      %v4759 = vsel %vm4063, %v3155, -1e+30
      %v4760 = vsel %vm4064, %v3346, -1e+30
      %v4761 = vsel %vm4065, %v3348, -1e+30
      %v4762 = vsel %vm4066, %v3539, -1e+30
      %v4763 = vsel %vm4067, %v3541, -1e+30
      %v4764 = vsel %vm4068, %v3732, -1e+30
      %v4765 = vsel %vm4069, %v3734, -1e+30
      %v4766 = vsel %vm4070, %v3925, -1e+30
      %v4767 = vsel %vm4071, %v3927, -1e+30
      %v4768 = vsel %vm4048, %v1806, -1e+30
      %v4769 = vsel %vm4049, %v1808, -1e+30
      %v4770 = vsel %vm4050, %v1999, -1e+30
      %v4771 = vsel %vm4051, %v2001, -1e+30
      %v4772 = vsel %vm4052, %v2192, -1e+30
      %v4773 = vsel %vm4053, %v2194, -1e+30
      %v4774 = vsel %vm4054, %v2385, -1e+30
      %v4775 = vsel %vm4055, %v2387, -1e+30
      %v4776 = vsel %vm4056, %v2578, -1e+30
      %v4777 = vsel %vm4057, %v2580, -1e+30
      %v4778 = vsel %vm4058, %v2771, -1e+30
      %v4779 = vsel %vm4059, %v2773, -1e+30
      %v4780 = vsel %vm4060, %v2964, -1e+30
      %v4781 = vsel %vm4061, %v2966, -1e+30
      %v4782 = vsel %vm4062, %v3157, -1e+30
      %v4783 = vsel %vm4063, %v3159, -1e+30
      %v4784 = vsel %vm4064, %v3350, -1e+30
      %v4785 = vsel %vm4065, %v3352, -1e+30
      %v4786 = vsel %vm4066, %v3543, -1e+30
      %v4787 = vsel %vm4067, %v3545, -1e+30
      %v4788 = vsel %vm4068, %v3736, -1e+30
      %v4789 = vsel %vm4069, %v3738, -1e+30
      %v4790 = vsel %vm4070, %v3929, -1e+30
      %v4791 = vsel %vm4071, %v3931, -1e+30
      %v4792 = vsel %vm4048, %v1812, -1e+30
      %v4793 = vsel %vm4049, %v1814, -1e+30
      %v4794 = vsel %vm4050, %v2005, -1e+30
      %v4795 = vsel %vm4051, %v2007, -1e+30
      %v4796 = vsel %vm4052, %v2198, -1e+30
      %v4797 = vsel %vm4053, %v2200, -1e+30
      %v4798 = vsel %vm4054, %v2391, -1e+30
      %v4799 = vsel %vm4055, %v2393, -1e+30
      %v4800 = vsel %vm4056, %v2584, -1e+30
      %v4801 = vsel %vm4057, %v2586, -1e+30
      %v4802 = vsel %vm4058, %v2777, -1e+30
      %v4803 = vsel %vm4059, %v2779, -1e+30
      %v4804 = vsel %vm4060, %v2970, -1e+30
      %v4805 = vsel %vm4061, %v2972, -1e+30
      %v4806 = vsel %vm4062, %v3163, -1e+30
      %v4807 = vsel %vm4063, %v3165, -1e+30
      %v4808 = vsel %vm4064, %v3356, -1e+30
      %v4809 = vsel %vm4065, %v3358, -1e+30
      %v4810 = vsel %vm4066, %v3549, -1e+30
      %v4811 = vsel %vm4067, %v3551, -1e+30
      %v4812 = vsel %vm4068, %v3742, -1e+30
      %v4813 = vsel %vm4069, %v3744, -1e+30
      %v4814 = vsel %vm4070, %v3935, -1e+30
      %v4815 = vsel %vm4071, %v3937, -1e+30
      %v4816 = vsel %vm4048, %v1816, -1e+30
      %v4817 = vsel %vm4049, %v1818, -1e+30
      %v4818 = vsel %vm4050, %v2009, -1e+30
      %v4819 = vsel %vm4051, %v2011, -1e+30
      %v4820 = vsel %vm4052, %v2202, -1e+30
      %v4821 = vsel %vm4053, %v2204, -1e+30
      %v4822 = vsel %vm4054, %v2395, -1e+30
      %v4823 = vsel %vm4055, %v2397, -1e+30
      %v4824 = vsel %vm4056, %v2588, -1e+30
      %v4825 = vsel %vm4057, %v2590, -1e+30
      %v4826 = vsel %vm4058, %v2781, -1e+30
      %v4827 = vsel %vm4059, %v2783, -1e+30
      %v4828 = vsel %vm4060, %v2974, -1e+30
      %v4829 = vsel %vm4061, %v2976, -1e+30
      %v4830 = vsel %vm4062, %v3167, -1e+30
      %v4831 = vsel %vm4063, %v3169, -1e+30
      %v4832 = vsel %vm4064, %v3360, -1e+30
      %v4833 = vsel %vm4065, %v3362, -1e+30
      %v4834 = vsel %vm4066, %v3553, -1e+30
      %v4835 = vsel %vm4067, %v3555, -1e+30
      %v4836 = vsel %vm4068, %v3746, -1e+30
      %v4837 = vsel %vm4069, %v3748, -1e+30
      %v4838 = vsel %vm4070, %v3939, -1e+30
      %v4839 = vsel %vm4071, %v3941, -1e+30
      %v4840 = vld [vmem:[#allocation2] sm:$0xff]
      %v4841 = vld [vmem:[#allocation2 + $0x8] sm:$0xff]
      %v4842 = vld [vmem:[#allocation2 + $0x10] sm:$0xff]
      %v4843 = vld [vmem:[#allocation2 + $0x18] sm:$0xff]
      %v4844 = vld [vmem:[#allocation2 + $0x20] sm:$0xff]
      %v4845 = vld [vmem:[#allocation2 + $0x28] sm:$0xff]
      %v4846 = vld [vmem:[#allocation2 + $0x30] sm:$0xff]
      %v4847 = vld [vmem:[#allocation2 + $0x38] sm:$0xff]
      %v4848 = vld [vmem:[#allocation2 + $0x40] sm:$0xff]
      %v4849 = vld [vmem:[#allocation2 + $0x48] sm:$0xff]
      %v4850 = vld [vmem:[#allocation2 + $0x50] sm:$0xff]
      %v4851 = vld [vmem:[#allocation2 + $0x58] sm:$0xff]
      %v4852 = vld [vmem:[#allocation2 + $0x60] sm:$0xff]
      %v4853 = vld [vmem:[#allocation2 + $0x68] sm:$0xff]
      %v4854 = vld [vmem:[#allocation2 + $0x70] sm:$0xff]
      %v4855 = vld [vmem:[#allocation2 + $0x78] sm:$0xff]
      %v4856 = vld [vmem:[#allocation2 + $0x80] sm:$0xff]
      %v4857 = vld [vmem:[#allocation2 + $0x88] sm:$0xff]
      %v4858 = vld [vmem:[#allocation2 + $0x90] sm:$0xff]
      %v4859 = vld [vmem:[#allocation2 + $0x98] sm:$0xff]
      %v4860 = vld [vmem:[#allocation2 + $0xa0] sm:$0xff]
      %v4861 = vld [vmem:[#allocation2 + $0xa8] sm:$0xff]
      %v4862 = vld [vmem:[#allocation2 + $0xb0] sm:$0xff]
      %v4863 = vld [vmem:[#allocation2 + $0xb8] sm:$0xff]
      %v4864 = vld [vmem:[#allocation2 + $0xc0] sm:$0xff]
      %v4865 = vld [vmem:[#allocation2 + $0xc8] sm:$0xff]
      %v4866 = vld [vmem:[#allocation2 + $0xd0] sm:$0xff]
      %v4867 = vld [vmem:[#allocation2 + $0xd8] sm:$0xff]
      %v4868 = vld [vmem:[#allocation2 + $0xe0] sm:$0xff]
      %v4869 = vld [vmem:[#allocation2 + $0xe8] sm:$0xff]
      %v4870 = vld [vmem:[#allocation2 + $0xf0] sm:$0xff]
      %v4871 = vld [vmem:[#allocation2 + $0xf8] sm:$0xff]
      %v4872 = vmax.f32 %v4072, %v4073
      %v4873 = vmax.f32 %v4872, %v4074
      %v4874 = vmax.f32 %v4873, %v4075
      %v4875 = vmax.f32 %v4874, %v4076
      %v4876 = vmax.f32 %v4875, %v4077
      %v4877 = vmax.f32 %v4876, %v4078
      %v4878 = vmax.f32 %v4877, %v4079
      %v4879 = vmax.f32 %v4878, %v4080
      %v4880 = vmax.f32 %v4879, %v4081
      %v4881 = vmax.f32 %v4880, %v4082
      %v4882 = vmax.f32 %v4881, %v4083
      %v4883 = vmax.f32 %v4882, %v4084
      %v4884 = vmax.f32 %v4883, %v4085
      %v4885 = vmax.f32 %v4884, %v4086
      %v4886 = vmax.f32 %v4885, %v4087
      %v4887 = vmax.f32 %v4886, %v4088
      %v4888 = vmax.f32 %v4887, %v4089
      %v4889 = vmax.f32 %v4888, %v4090
      %v4890 = vmax.f32 %v4889, %v4091
      %v4891 = vmax.f32 %v4890, %v4092
      %v4892 = vmax.f32 %v4891, %v4093
      %v4893 = vmax.f32 %v4892, %v4094
      %v4894 = vmax.f32 %v4893, %v4095
      %4895 = vmax.xlane.f32.xlu0 %v4894
      %v4896 = vpop.xlane.xlu0 %4895
      %v4897 = vmax.f32 %v4096, %v4097
      %v4898 = vmax.f32 %v4897, %v4098
      %v4899 = vmax.f32 %v4898, %v4099
      %v4900 = vmax.f32 %v4899, %v4100
      %v4901 = vmax.f32 %v4900, %v4101
      %v4902 = vmax.f32 %v4901, %v4102
      %v4903 = vmax.f32 %v4902, %v4103
      %v4904 = vmax.f32 %v4903, %v4104
      %v4905 = vmax.f32 %v4904, %v4105
      %v4906 = vmax.f32 %v4905, %v4106
      %v4907 = vmax.f32 %v4906, %v4107
      %v4908 = vmax.f32 %v4907, %v4108
      %v4909 = vmax.f32 %v4908, %v4109
      %v4910 = vmax.f32 %v4909, %v4110
      %v4911 = vmax.f32 %v4910, %v4111
      %v4912 = vmax.f32 %v4911, %v4112
      %v4913 = vmax.f32 %v4912, %v4113
      %v4914 = vmax.f32 %v4913, %v4114
      %v4915 = vmax.f32 %v4914, %v4115
      %v4916 = vmax.f32 %v4915, %v4116
      %v4917 = vmax.f32 %v4916, %v4117
      %v4918 = vmax.f32 %v4917, %v4118
      %v4919 = vmax.f32 %v4918, %v4119
      %4920 = vmax.xlane.f32.xlu0 %v4919
      %v4921 = vpop.xlane.xlu0 %4920
      %v4922 = vmax.f32 %v4120, %v4121
      %v4923 = vmax.f32 %v4922, %v4122
      %v4924 = vmax.f32 %v4923, %v4123
      %v4925 = vmax.f32 %v4924, %v4124
      %v4926 = vmax.f32 %v4925, %v4125
      %v4927 = vmax.f32 %v4926, %v4126
      %v4928 = vmax.f32 %v4927, %v4127
      %v4929 = vmax.f32 %v4928, %v4128
      %v4930 = vmax.f32 %v4929, %v4129
      %v4931 = vmax.f32 %v4930, %v4130
      %v4932 = vmax.f32 %v4931, %v4131
      %v4933 = vmax.f32 %v4932, %v4132
      %v4934 = vmax.f32 %v4933, %v4133
      %v4935 = vmax.f32 %v4934, %v4134
      %v4936 = vmax.f32 %v4935, %v4135
      %v4937 = vmax.f32 %v4936, %v4136
      %v4938 = vmax.f32 %v4937, %v4137
      %v4939 = vmax.f32 %v4938, %v4138
      %v4940 = vmax.f32 %v4939, %v4139
      %v4941 = vmax.f32 %v4940, %v4140
      %v4942 = vmax.f32 %v4941, %v4141
      %v4943 = vmax.f32 %v4942, %v4142
      %v4944 = vmax.f32 %v4943, %v4143
      %4945 = vmax.xlane.f32.xlu0 %v4944
      %v4946 = vpop.xlane.xlu0 %4945
      %v4947 = vmax.f32 %v4144, %v4145
      %v4948 = vmax.f32 %v4947, %v4146
      %v4949 = vmax.f32 %v4948, %v4147
      %v4950 = vmax.f32 %v4949, %v4148
      %v4951 = vmax.f32 %v4950, %v4149
      %v4952 = vmax.f32 %v4951, %v4150
      %v4953 = vmax.f32 %v4952, %v4151
      %v4954 = vmax.f32 %v4953, %v4152
      %v4955 = vmax.f32 %v4954, %v4153
      %v4956 = vmax.f32 %v4955, %v4154
      %v4957 = vmax.f32 %v4956, %v4155
      %v4958 = vmax.f32 %v4957, %v4156
      %v4959 = vmax.f32 %v4958, %v4157
      %v4960 = vmax.f32 %v4959, %v4158
      %v4961 = vmax.f32 %v4960, %v4159
      %v4962 = vmax.f32 %v4961, %v4160
      %v4963 = vmax.f32 %v4962, %v4161
      %v4964 = vmax.f32 %v4963, %v4162
      %v4965 = vmax.f32 %v4964, %v4163
      %v4966 = vmax.f32 %v4965, %v4164
      %v4967 = vmax.f32 %v4966, %v4165
      %v4968 = vmax.f32 %v4967, %v4166
      %v4969 = vmax.f32 %v4968, %v4167
      %4970 = vmax.xlane.f32.xlu0 %v4969
      %v4971 = vpop.xlane.xlu0 %4970
      %v4972 = vmax.f32 %v4168, %v4169
      %v4973 = vmax.f32 %v4972, %v4170
      %v4974 = vmax.f32 %v4973, %v4171
      %v4975 = vmax.f32 %v4974, %v4172
      %v4976 = vmax.f32 %v4975, %v4173
      %v4977 = vmax.f32 %v4976, %v4174
      %v4978 = vmax.f32 %v4977, %v4175
      %v4979 = vmax.f32 %v4978, %v4176
      %v4980 = vmax.f32 %v4979, %v4177
      %v4981 = vmax.f32 %v4980, %v4178
      %v4982 = vmax.f32 %v4981, %v4179
      %v4983 = vmax.f32 %v4982, %v4180
      %v4984 = vmax.f32 %v4983, %v4181
      %v4985 = vmax.f32 %v4984, %v4182
      %v4986 = vmax.f32 %v4985, %v4183
      %v4987 = vmax.f32 %v4986, %v4184
      %v4988 = vmax.f32 %v4987, %v4185
      %v4989 = vmax.f32 %v4988, %v4186
      %v4990 = vmax.f32 %v4989, %v4187
      %v4991 = vmax.f32 %v4990, %v4188
      %v4992 = vmax.f32 %v4991, %v4189
      %v4993 = vmax.f32 %v4992, %v4190
      %v4994 = vmax.f32 %v4993, %v4191
      %4995 = vmax.xlane.f32.xlu0 %v4994
      %v4996 = vpop.xlane.xlu0 %4995
      %v4997 = vmax.f32 %v4192, %v4193
      %v4998 = vmax.f32 %v4997, %v4194
      %v4999 = vmax.f32 %v4998, %v4195
      %v5000 = vmax.f32 %v4999, %v4196
      %v5001 = vmax.f32 %v5000, %v4197
      %v5002 = vmax.f32 %v5001, %v4198
      %v5003 = vmax.f32 %v5002, %v4199
      %v5004 = vmax.f32 %v5003, %v4200
      %v5005 = vmax.f32 %v5004, %v4201
      %v5006 = vmax.f32 %v5005, %v4202
      %v5007 = vmax.f32 %v5006, %v4203
      %v5008 = vmax.f32 %v5007, %v4204
      %v5009 = vmax.f32 %v5008, %v4205
      %v5010 = vmax.f32 %v5009, %v4206
      %v5011 = vmax.f32 %v5010, %v4207
      %v5012 = vmax.f32 %v5011, %v4208
      %v5013 = vmax.f32 %v5012, %v4209
      %v5014 = vmax.f32 %v5013, %v4210
      %v5015 = vmax.f32 %v5014, %v4211
      %v5016 = vmax.f32 %v5015, %v4212
      %v5017 = vmax.f32 %v5016, %v4213
      %v5018 = vmax.f32 %v5017, %v4214
      %v5019 = vmax.f32 %v5018, %v4215
      %5020 = vmax.xlane.f32.xlu0 %v5019
      %v5021 = vpop.xlane.xlu0 %5020
      %v5022 = vmax.f32 %v4216, %v4217
      %v5023 = vmax.f32 %v5022, %v4218
      %v5024 = vmax.f32 %v5023, %v4219
      %v5025 = vmax.f32 %v5024, %v4220
      %v5026 = vmax.f32 %v5025, %v4221
      %v5027 = vmax.f32 %v5026, %v4222
      %v5028 = vmax.f32 %v5027, %v4223
      %v5029 = vmax.f32 %v5028, %v4224
      %v5030 = vmax.f32 %v5029, %v4225
      %v5031 = vmax.f32 %v5030, %v4226
      %v5032 = vmax.f32 %v5031, %v4227
      %v5033 = vmax.f32 %v5032, %v4228
      %v5034 = vmax.f32 %v5033, %v4229
      %v5035 = vmax.f32 %v5034, %v4230
      %v5036 = vmax.f32 %v5035, %v4231
      %v5037 = vmax.f32 %v5036, %v4232
      %v5038 = vmax.f32 %v5037, %v4233
      %v5039 = vmax.f32 %v5038, %v4234
      %v5040 = vmax.f32 %v5039, %v4235
      %v5041 = vmax.f32 %v5040, %v4236
      %v5042 = vmax.f32 %v5041, %v4237
      %v5043 = vmax.f32 %v5042, %v4238
      %v5044 = vmax.f32 %v5043, %v4239
      %5045 = vmax.xlane.f32.xlu0 %v5044
      %v5046 = vpop.xlane.xlu0 %5045
      %v5047 = vmax.f32 %v4240, %v4241
      %v5048 = vmax.f32 %v5047, %v4242
      %v5049 = vmax.f32 %v5048, %v4243
      %v5050 = vmax.f32 %v5049, %v4244
      %v5051 = vmax.f32 %v5050, %v4245
      %v5052 = vmax.f32 %v5051, %v4246
      %v5053 = vmax.f32 %v5052, %v4247
      %v5054 = vmax.f32 %v5053, %v4248
      %v5055 = vmax.f32 %v5054, %v4249
      %v5056 = vmax.f32 %v5055, %v4250
      %v5057 = vmax.f32 %v5056, %v4251
      %v5058 = vmax.f32 %v5057, %v4252
      %v5059 = vmax.f32 %v5058, %v4253
      %v5060 = vmax.f32 %v5059, %v4254
      %v5061 = vmax.f32 %v5060, %v4255
      %v5062 = vmax.f32 %v5061, %v4256
      %v5063 = vmax.f32 %v5062, %v4257
      %v5064 = vmax.f32 %v5063, %v4258
      %v5065 = vmax.f32 %v5064, %v4259
      %v5066 = vmax.f32 %v5065, %v4260
      %v5067 = vmax.f32 %v5066, %v4261
      %v5068 = vmax.f32 %v5067, %v4262
      %v5069 = vmax.f32 %v5068, %v4263
      %5070 = vmax.xlane.f32.xlu0 %v5069
      %v5071 = vpop.xlane.xlu0 %5070
      %v5072 = vmax.f32 %v4264, %v4265
      %v5073 = vmax.f32 %v5072, %v4266
      %v5074 = vmax.f32 %v5073, %v4267
      %v5075 = vmax.f32 %v5074, %v4268
      %v5076 = vmax.f32 %v5075, %v4269
      %v5077 = vmax.f32 %v5076, %v4270
      %v5078 = vmax.f32 %v5077, %v4271
      %v5079 = vmax.f32 %v5078, %v4272
      %v5080 = vmax.f32 %v5079, %v4273
      %v5081 = vmax.f32 %v5080, %v4274
      %v5082 = vmax.f32 %v5081, %v4275
      %v5083 = vmax.f32 %v5082, %v4276
      %v5084 = vmax.f32 %v5083, %v4277
      %v5085 = vmax.f32 %v5084, %v4278
      %v5086 = vmax.f32 %v5085, %v4279
      %v5087 = vmax.f32 %v5086, %v4280
      %v5088 = vmax.f32 %v5087, %v4281
      %v5089 = vmax.f32 %v5088, %v4282
      %v5090 = vmax.f32 %v5089, %v4283
      %v5091 = vmax.f32 %v5090, %v4284
      %v5092 = vmax.f32 %v5091, %v4285
      %v5093 = vmax.f32 %v5092, %v4286
      %v5094 = vmax.f32 %v5093, %v4287
      %5095 = vmax.xlane.f32.xlu0 %v5094
      %v5096 = vpop.xlane.xlu0 %5095
      %v5097 = vmax.f32 %v4288, %v4289
      %v5098 = vmax.f32 %v5097, %v4290
      %v5099 = vmax.f32 %v5098, %v4291
      %v5100 = vmax.f32 %v5099, %v4292
      %v5101 = vmax.f32 %v5100, %v4293
      %v5102 = vmax.f32 %v5101, %v4294
      %v5103 = vmax.f32 %v5102, %v4295
      %v5104 = vmax.f32 %v5103, %v4296
      %v5105 = vmax.f32 %v5104, %v4297
      %v5106 = vmax.f32 %v5105, %v4298
      %v5107 = vmax.f32 %v5106, %v4299
      %v5108 = vmax.f32 %v5107, %v4300
      %v5109 = vmax.f32 %v5108, %v4301
      %v5110 = vmax.f32 %v5109, %v4302
      %v5111 = vmax.f32 %v5110, %v4303
      %v5112 = vmax.f32 %v5111, %v4304
      %v5113 = vmax.f32 %v5112, %v4305
      %v5114 = vmax.f32 %v5113, %v4306
      %v5115 = vmax.f32 %v5114, %v4307
      %v5116 = vmax.f32 %v5115, %v4308
      %v5117 = vmax.f32 %v5116, %v4309
      %v5118 = vmax.f32 %v5117, %v4310
      %v5119 = vmax.f32 %v5118, %v4311
      %5120 = vmax.xlane.f32.xlu0 %v5119
      %v5121 = vpop.xlane.xlu0 %5120
      %v5122 = vmax.f32 %v4312, %v4313
      %v5123 = vmax.f32 %v5122, %v4314
      %v5124 = vmax.f32 %v5123, %v4315
      %v5125 = vmax.f32 %v5124, %v4316
      %v5126 = vmax.f32 %v5125, %v4317
      %v5127 = vmax.f32 %v5126, %v4318
      %v5128 = vmax.f32 %v5127, %v4319
      %v5129 = vmax.f32 %v5128, %v4320
      %v5130 = vmax.f32 %v5129, %v4321
      %v5131 = vmax.f32 %v5130, %v4322
      %v5132 = vmax.f32 %v5131, %v4323
      %v5133 = vmax.f32 %v5132, %v4324
      %v5134 = vmax.f32 %v5133, %v4325
      %v5135 = vmax.f32 %v5134, %v4326
      %v5136 = vmax.f32 %v5135, %v4327
      %v5137 = vmax.f32 %v5136, %v4328
      %v5138 = vmax.f32 %v5137, %v4329
      %v5139 = vmax.f32 %v5138, %v4330
      %v5140 = vmax.f32 %v5139, %v4331
      %v5141 = vmax.f32 %v5140, %v4332
      %v5142 = vmax.f32 %v5141, %v4333
      %v5143 = vmax.f32 %v5142, %v4334
      %v5144 = vmax.f32 %v5143, %v4335
      %5145 = vmax.xlane.f32.xlu0 %v5144
      %v5146 = vpop.xlane.xlu0 %5145
      %v5147 = vmax.f32 %v4336, %v4337
      %v5148 = vmax.f32 %v5147, %v4338
      %v5149 = vmax.f32 %v5148, %v4339
      %v5150 = vmax.f32 %v5149, %v4340
      %v5151 = vmax.f32 %v5150, %v4341
      %v5152 = vmax.f32 %v5151, %v4342
      %v5153 = vmax.f32 %v5152, %v4343
      %v5154 = vmax.f32 %v5153, %v4344
      %v5155 = vmax.f32 %v5154, %v4345
      %v5156 = vmax.f32 %v5155, %v4346
      %v5157 = vmax.f32 %v5156, %v4347
      %v5158 = vmax.f32 %v5157, %v4348
      %v5159 = vmax.f32 %v5158, %v4349
      %v5160 = vmax.f32 %v5159, %v4350
      %v5161 = vmax.f32 %v5160, %v4351
      %v5162 = vmax.f32 %v5161, %v4352
      %v5163 = vmax.f32 %v5162, %v4353
      %v5164 = vmax.f32 %v5163, %v4354
      %v5165 = vmax.f32 %v5164, %v4355
      %v5166 = vmax.f32 %v5165, %v4356
      %v5167 = vmax.f32 %v5166, %v4357
      %v5168 = vmax.f32 %v5167, %v4358
      %v5169 = vmax.f32 %v5168, %v4359
      %5170 = vmax.xlane.f32.xlu0 %v5169
      %v5171 = vpop.xlane.xlu0 %5170
      %v5172 = vmax.f32 %v4360, %v4361
      %v5173 = vmax.f32 %v5172, %v4362
      %v5174 = vmax.f32 %v5173, %v4363
      %v5175 = vmax.f32 %v5174, %v4364
      %v5176 = vmax.f32 %v5175, %v4365
      %v5177 = vmax.f32 %v5176, %v4366
      %v5178 = vmax.f32 %v5177, %v4367
      %v5179 = vmax.f32 %v5178, %v4368
      %v5180 = vmax.f32 %v5179, %v4369
      %v5181 = vmax.f32 %v5180, %v4370
      %v5182 = vmax.f32 %v5181, %v4371
      %v5183 = vmax.f32 %v5182, %v4372
      %v5184 = vmax.f32 %v5183, %v4373
      %v5185 = vmax.f32 %v5184, %v4374
      %v5186 = vmax.f32 %v5185, %v4375
      %v5187 = vmax.f32 %v5186, %v4376
      %v5188 = vmax.f32 %v5187, %v4377
      %v5189 = vmax.f32 %v5188, %v4378
      %v5190 = vmax.f32 %v5189, %v4379
      %v5191 = vmax.f32 %v5190, %v4380
      %v5192 = vmax.f32 %v5191, %v4381
      %v5193 = vmax.f32 %v5192, %v4382
      %v5194 = vmax.f32 %v5193, %v4383
      %5195 = vmax.xlane.f32.xlu0 %v5194
      %v5196 = vpop.xlane.xlu0 %5195
      %v5197 = vmax.f32 %v4384, %v4385
      %v5198 = vmax.f32 %v5197, %v4386
      %v5199 = vmax.f32 %v5198, %v4387
      %v5200 = vmax.f32 %v5199, %v4388
      %v5201 = vmax.f32 %v5200, %v4389
      %v5202 = vmax.f32 %v5201, %v4390
      %v5203 = vmax.f32 %v5202, %v4391
      %v5204 = vmax.f32 %v5203, %v4392
      %v5205 = vmax.f32 %v5204, %v4393
      %v5206 = vmax.f32 %v5205, %v4394
      %v5207 = vmax.f32 %v5206, %v4395
      %v5208 = vmax.f32 %v5207, %v4396
      %v5209 = vmax.f32 %v5208, %v4397
      %v5210 = vmax.f32 %v5209, %v4398
      %v5211 = vmax.f32 %v5210, %v4399
      %v5212 = vmax.f32 %v5211, %v4400
      %v5213 = vmax.f32 %v5212, %v4401
      %v5214 = vmax.f32 %v5213, %v4402
      %v5215 = vmax.f32 %v5214, %v4403
      %v5216 = vmax.f32 %v5215, %v4404
      %v5217 = vmax.f32 %v5216, %v4405
      %v5218 = vmax.f32 %v5217, %v4406
      %v5219 = vmax.f32 %v5218, %v4407
      %5220 = vmax.xlane.f32.xlu0 %v5219
      %v5221 = vpop.xlane.xlu0 %5220
      %v5222 = vmax.f32 %v4408, %v4409
      %v5223 = vmax.f32 %v5222, %v4410
      %v5224 = vmax.f32 %v5223, %v4411
      %v5225 = vmax.f32 %v5224, %v4412
      %v5226 = vmax.f32 %v5225, %v4413
      %v5227 = vmax.f32 %v5226, %v4414
      %v5228 = vmax.f32 %v5227, %v4415
      %v5229 = vmax.f32 %v5228, %v4416
      %v5230 = vmax.f32 %v5229, %v4417
      %v5231 = vmax.f32 %v5230, %v4418
      %v5232 = vmax.f32 %v5231, %v4419
      %v5233 = vmax.f32 %v5232, %v4420
      %v5234 = vmax.f32 %v5233, %v4421
      %v5235 = vmax.f32 %v5234, %v4422
      %v5236 = vmax.f32 %v5235, %v4423
      %v5237 = vmax.f32 %v5236, %v4424
      %v5238 = vmax.f32 %v5237, %v4425
      %v5239 = vmax.f32 %v5238, %v4426
      %v5240 = vmax.f32 %v5239, %v4427
      %v5241 = vmax.f32 %v5240, %v4428
      %v5242 = vmax.f32 %v5241, %v4429
      %v5243 = vmax.f32 %v5242, %v4430
      %v5244 = vmax.f32 %v5243, %v4431
      %5245 = vmax.xlane.f32.xlu0 %v5244
      %v5246 = vpop.xlane.xlu0 %5245
      %v5247 = vmax.f32 %v4432, %v4433
      %v5248 = vmax.f32 %v5247, %v4434
      %v5249 = vmax.f32 %v5248, %v4435
      %v5250 = vmax.f32 %v5249, %v4436
      %v5251 = vmax.f32 %v5250, %v4437
      %v5252 = vmax.f32 %v5251, %v4438
      %v5253 = vmax.f32 %v5252, %v4439
      %v5254 = vmax.f32 %v5253, %v4440
      %v5255 = vmax.f32 %v5254, %v4441
      %v5256 = vmax.f32 %v5255, %v4442
      %v5257 = vmax.f32 %v5256, %v4443
      %v5258 = vmax.f32 %v5257, %v4444
      %v5259 = vmax.f32 %v5258, %v4445
      %v5260 = vmax.f32 %v5259, %v4446
      %v5261 = vmax.f32 %v5260, %v4447
      %v5262 = vmax.f32 %v5261, %v4448
      %v5263 = vmax.f32 %v5262, %v4449
      %v5264 = vmax.f32 %v5263, %v4450
      %v5265 = vmax.f32 %v5264, %v4451
      %v5266 = vmax.f32 %v5265, %v4452
      %v5267 = vmax.f32 %v5266, %v4453
      %v5268 = vmax.f32 %v5267, %v4454
      %v5269 = vmax.f32 %v5268, %v4455
      %5270 = vmax.xlane.f32.xlu0 %v5269
      %v5271 = vpop.xlane.xlu0 %5270
      %v5272 = vmax.f32 %v4456, %v4457
      %v5273 = vmax.f32 %v5272, %v4458
      %v5274 = vmax.f32 %v5273, %v4459
      %v5275 = vmax.f32 %v5274, %v4460
      %v5276 = vmax.f32 %v5275, %v4461
      %v5277 = vmax.f32 %v5276, %v4462
      %v5278 = vmax.f32 %v5277, %v4463
      %v5279 = vmax.f32 %v5278, %v4464
      %v5280 = vmax.f32 %v5279, %v4465
      %v5281 = vmax.f32 %v5280, %v4466
      %v5282 = vmax.f32 %v5281, %v4467
      %v5283 = vmax.f32 %v5282, %v4468
      %v5284 = vmax.f32 %v5283, %v4469
      %v5285 = vmax.f32 %v5284, %v4470
      %v5286 = vmax.f32 %v5285, %v4471
      %v5287 = vmax.f32 %v5286, %v4472
      %v5288 = vmax.f32 %v5287, %v4473
      %v5289 = vmax.f32 %v5288, %v4474
      %v5290 = vmax.f32 %v5289, %v4475
      %v5291 = vmax.f32 %v5290, %v4476
      %v5292 = vmax.f32 %v5291, %v4477
      %v5293 = vmax.f32 %v5292, %v4478
      %v5294 = vmax.f32 %v5293, %v4479
      %5295 = vmax.xlane.f32.xlu0 %v5294
      %v5296 = vpop.xlane.xlu0 %5295
      %v5297 = vmax.f32 %v4480, %v4481
      %v5298 = vmax.f32 %v5297, %v4482
      %v5299 = vmax.f32 %v5298, %v4483
      %v5300 = vmax.f32 %v5299, %v4484
      %v5301 = vmax.f32 %v5300, %v4485
      %v5302 = vmax.f32 %v5301, %v4486
      %v5303 = vmax.f32 %v5302, %v4487
      %v5304 = vmax.f32 %v5303, %v4488
      %v5305 = vmax.f32 %v5304, %v4489
      %v5306 = vmax.f32 %v5305, %v4490
      %v5307 = vmax.f32 %v5306, %v4491
      %v5308 = vmax.f32 %v5307, %v4492
      %v5309 = vmax.f32 %v5308, %v4493
      %v5310 = vmax.f32 %v5309, %v4494
      %v5311 = vmax.f32 %v5310, %v4495
      %v5312 = vmax.f32 %v5311, %v4496
      %v5313 = vmax.f32 %v5312, %v4497
      %v5314 = vmax.f32 %v5313, %v4498
      %v5315 = vmax.f32 %v5314, %v4499
      %v5316 = vmax.f32 %v5315, %v4500
      %v5317 = vmax.f32 %v5316, %v4501
      %v5318 = vmax.f32 %v5317, %v4502
      %v5319 = vmax.f32 %v5318, %v4503
      %5320 = vmax.xlane.f32.xlu0 %v5319
      %v5321 = vpop.xlane.xlu0 %5320
      %v5322 = vmax.f32 %v4504, %v4505
      %v5323 = vmax.f32 %v5322, %v4506
      %v5324 = vmax.f32 %v5323, %v4507
      %v5325 = vmax.f32 %v5324, %v4508
      %v5326 = vmax.f32 %v5325, %v4509
      %v5327 = vmax.f32 %v5326, %v4510
      %v5328 = vmax.f32 %v5327, %v4511
      %v5329 = vmax.f32 %v5328, %v4512
      %v5330 = vmax.f32 %v5329, %v4513
      %v5331 = vmax.f32 %v5330, %v4514
      %v5332 = vmax.f32 %v5331, %v4515
      %v5333 = vmax.f32 %v5332, %v4516
      %v5334 = vmax.f32 %v5333, %v4517
      %v5335 = vmax.f32 %v5334, %v4518
      %v5336 = vmax.f32 %v5335, %v4519
      %v5337 = vmax.f32 %v5336, %v4520
      %v5338 = vmax.f32 %v5337, %v4521
      %v5339 = vmax.f32 %v5338, %v4522
      %v5340 = vmax.f32 %v5339, %v4523
      %v5341 = vmax.f32 %v5340, %v4524
      %v5342 = vmax.f32 %v5341, %v4525
      %v5343 = vmax.f32 %v5342, %v4526
      %v5344 = vmax.f32 %v5343, %v4527
      %5345 = vmax.xlane.f32.xlu0 %v5344
      %v5346 = vpop.xlane.xlu0 %5345
      %v5347 = vmax.f32 %v4528, %v4529
      %v5348 = vmax.f32 %v5347, %v4530
      %v5349 = vmax.f32 %v5348, %v4531
      %v5350 = vmax.f32 %v5349, %v4532
      %v5351 = vmax.f32 %v5350, %v4533
      %v5352 = vmax.f32 %v5351, %v4534
      %v5353 = vmax.f32 %v5352, %v4535
      %v5354 = vmax.f32 %v5353, %v4536
      %v5355 = vmax.f32 %v5354, %v4537
      %v5356 = vmax.f32 %v5355, %v4538
      %v5357 = vmax.f32 %v5356, %v4539
      %v5358 = vmax.f32 %v5357, %v4540
      %v5359 = vmax.f32 %v5358, %v4541
      %v5360 = vmax.f32 %v5359, %v4542
      %v5361 = vmax.f32 %v5360, %v4543
      %v5362 = vmax.f32 %v5361, %v4544
      %v5363 = vmax.f32 %v5362, %v4545
      %v5364 = vmax.f32 %v5363, %v4546
      %v5365 = vmax.f32 %v5364, %v4547
      %v5366 = vmax.f32 %v5365, %v4548
      %v5367 = vmax.f32 %v5366, %v4549
      %v5368 = vmax.f32 %v5367, %v4550
      %v5369 = vmax.f32 %v5368, %v4551
      %5370 = vmax.xlane.f32.xlu0 %v5369
      %v5371 = vpop.xlane.xlu0 %5370
      %v5372 = vmax.f32 %v4552, %v4553
      %v5373 = vmax.f32 %v5372, %v4554
      %v5374 = vmax.f32 %v5373, %v4555
      %v5375 = vmax.f32 %v5374, %v4556
      %v5376 = vmax.f32 %v5375, %v4557
      %v5377 = vmax.f32 %v5376, %v4558
      %v5378 = vmax.f32 %v5377, %v4559
      %v5379 = vmax.f32 %v5378, %v4560
      %v5380 = vmax.f32 %v5379, %v4561
      %v5381 = vmax.f32 %v5380, %v4562
      %v5382 = vmax.f32 %v5381, %v4563
      %v5383 = vmax.f32 %v5382, %v4564
      %v5384 = vmax.f32 %v5383, %v4565
      %v5385 = vmax.f32 %v5384, %v4566
      %v5386 = vmax.f32 %v5385, %v4567
      %v5387 = vmax.f32 %v5386, %v4568
      %v5388 = vmax.f32 %v5387, %v4569
      %v5389 = vmax.f32 %v5388, %v4570
      %v5390 = vmax.f32 %v5389, %v4571
      %v5391 = vmax.f32 %v5390, %v4572
      %v5392 = vmax.f32 %v5391, %v4573
      %v5393 = vmax.f32 %v5392, %v4574
      %v5394 = vmax.f32 %v5393, %v4575
      %5395 = vmax.xlane.f32.xlu0 %v5394
      %v5396 = vpop.xlane.xlu0 %5395
      %v5397 = vmax.f32 %v4576, %v4577
      %v5398 = vmax.f32 %v5397, %v4578
      %v5399 = vmax.f32 %v5398, %v4579
      %v5400 = vmax.f32 %v5399, %v4580
      %v5401 = vmax.f32 %v5400, %v4581
      %v5402 = vmax.f32 %v5401, %v4582
      %v5403 = vmax.f32 %v5402, %v4583
      %v5404 = vmax.f32 %v5403, %v4584
      %v5405 = vmax.f32 %v5404, %v4585
      %v5406 = vmax.f32 %v5405, %v4586
      %v5407 = vmax.f32 %v5406, %v4587
      %v5408 = vmax.f32 %v5407, %v4588
      %v5409 = vmax.f32 %v5408, %v4589
      %v5410 = vmax.f32 %v5409, %v4590
      %v5411 = vmax.f32 %v5410, %v4591
      %v5412 = vmax.f32 %v5411, %v4592
      %v5413 = vmax.f32 %v5412, %v4593
      %v5414 = vmax.f32 %v5413, %v4594
      %v5415 = vmax.f32 %v5414, %v4595
      %v5416 = vmax.f32 %v5415, %v4596
      %v5417 = vmax.f32 %v5416, %v4597
      %v5418 = vmax.f32 %v5417, %v4598
      %v5419 = vmax.f32 %v5418, %v4599
      %5420 = vmax.xlane.f32.xlu0 %v5419
      %v5421 = vpop.xlane.xlu0 %5420
      %v5422 = vmax.f32 %v4600, %v4601
      %v5423 = vmax.f32 %v5422, %v4602
      %v5424 = vmax.f32 %v5423, %v4603
      %v5425 = vmax.f32 %v5424, %v4604
      %v5426 = vmax.f32 %v5425, %v4605
      %v5427 = vmax.f32 %v5426, %v4606
      %v5428 = vmax.f32 %v5427, %v4607
      %v5429 = vmax.f32 %v5428, %v4608
      %v5430 = vmax.f32 %v5429, %v4609
      %v5431 = vmax.f32 %v5430, %v4610
      %v5432 = vmax.f32 %v5431, %v4611
      %v5433 = vmax.f32 %v5432, %v4612
      %v5434 = vmax.f32 %v5433, %v4613
      %v5435 = vmax.f32 %v5434, %v4614
      %v5436 = vmax.f32 %v5435, %v4615
      %v5437 = vmax.f32 %v5436, %v4616
      %v5438 = vmax.f32 %v5437, %v4617
      %v5439 = vmax.f32 %v5438, %v4618
      %v5440 = vmax.f32 %v5439, %v4619
      %v5441 = vmax.f32 %v5440, %v4620
      %v5442 = vmax.f32 %v5441, %v4621
      %v5443 = vmax.f32 %v5442, %v4622
      %v5444 = vmax.f32 %v5443, %v4623
      %5445 = vmax.xlane.f32.xlu0 %v5444
      %v5446 = vpop.xlane.xlu0 %5445
      %v5447 = vmax.f32 %v4624, %v4625
      %v5448 = vmax.f32 %v5447, %v4626
      %v5449 = vmax.f32 %v5448, %v4627
      %v5450 = vmax.f32 %v5449, %v4628
      %v5451 = vmax.f32 %v5450, %v4629
      %v5452 = vmax.f32 %v5451, %v4630
      %v5453 = vmax.f32 %v5452, %v4631
      %v5454 = vmax.f32 %v5453, %v4632
      %v5455 = vmax.f32 %v5454, %v4633
      %v5456 = vmax.f32 %v5455, %v4634
      %v5457 = vmax.f32 %v5456, %v4635
      %v5458 = vmax.f32 %v5457, %v4636
      %v5459 = vmax.f32 %v5458, %v4637
      %v5460 = vmax.f32 %v5459, %v4638
      %v5461 = vmax.f32 %v5460, %v4639
      %v5462 = vmax.f32 %v5461, %v4640
      %v5463 = vmax.f32 %v5462, %v4641
      %v5464 = vmax.f32 %v5463, %v4642
      %v5465 = vmax.f32 %v5464, %v4643
      %v5466 = vmax.f32 %v5465, %v4644
      %v5467 = vmax.f32 %v5466, %v4645
      %v5468 = vmax.f32 %v5467, %v4646
      %v5469 = vmax.f32 %v5468, %v4647
      %5470 = vmax.xlane.f32.xlu0 %v5469
      %v5471 = vpop.xlane.xlu0 %5470
      %v5472 = vmax.f32 %v4648, %v4649
      %v5473 = vmax.f32 %v5472, %v4650
      %v5474 = vmax.f32 %v5473, %v4651
      %v5475 = vmax.f32 %v5474, %v4652
      %v5476 = vmax.f32 %v5475, %v4653
      %v5477 = vmax.f32 %v5476, %v4654
      %v5478 = vmax.f32 %v5477, %v4655
      %v5479 = vmax.f32 %v5478, %v4656
      %v5480 = vmax.f32 %v5479, %v4657
      %v5481 = vmax.f32 %v5480, %v4658
      %v5482 = vmax.f32 %v5481, %v4659
      %v5483 = vmax.f32 %v5482, %v4660
      %v5484 = vmax.f32 %v5483, %v4661
      %v5485 = vmax.f32 %v5484, %v4662
      %v5486 = vmax.f32 %v5485, %v4663
      %v5487 = vmax.f32 %v5486, %v4664
      %v5488 = vmax.f32 %v5487, %v4665
      %v5489 = vmax.f32 %v5488, %v4666
      %v5490 = vmax.f32 %v5489, %v4667
      %v5491 = vmax.f32 %v5490, %v4668
      %v5492 = vmax.f32 %v5491, %v4669
      %v5493 = vmax.f32 %v5492, %v4670
      %v5494 = vmax.f32 %v5493, %v4671
      %5495 = vmax.xlane.f32.xlu0 %v5494
      %v5496 = vpop.xlane.xlu0 %5495
      %v5497 = vmax.f32 %v4672, %v4673
      %v5498 = vmax.f32 %v5497, %v4674
      %v5499 = vmax.f32 %v5498, %v4675
      %v5500 = vmax.f32 %v5499, %v4676
      %v5501 = vmax.f32 %v5500, %v4677
      %v5502 = vmax.f32 %v5501, %v4678
      %v5503 = vmax.f32 %v5502, %v4679
      %v5504 = vmax.f32 %v5503, %v4680
      %v5505 = vmax.f32 %v5504, %v4681
      %v5506 = vmax.f32 %v5505, %v4682
      %v5507 = vmax.f32 %v5506, %v4683
      %v5508 = vmax.f32 %v5507, %v4684
      %v5509 = vmax.f32 %v5508, %v4685
      %v5510 = vmax.f32 %v5509, %v4686
      %v5511 = vmax.f32 %v5510, %v4687
      %v5512 = vmax.f32 %v5511, %v4688
      %v5513 = vmax.f32 %v5512, %v4689
      %v5514 = vmax.f32 %v5513, %v4690
      %v5515 = vmax.f32 %v5514, %v4691
      %v5516 = vmax.f32 %v5515, %v4692
      %v5517 = vmax.f32 %v5516, %v4693
      %v5518 = vmax.f32 %v5517, %v4694
      %v5519 = vmax.f32 %v5518, %v4695
      %5520 = vmax.xlane.f32.xlu0 %v5519
      %v5521 = vpop.xlane.xlu0 %5520
      %v5522 = vmax.f32 %v4696, %v4697
      %v5523 = vmax.f32 %v5522, %v4698
      %v5524 = vmax.f32 %v5523, %v4699
      %v5525 = vmax.f32 %v5524, %v4700
      %v5526 = vmax.f32 %v5525, %v4701
      %v5527 = vmax.f32 %v5526, %v4702
      %v5528 = vmax.f32 %v5527, %v4703
      %v5529 = vmax.f32 %v5528, %v4704
      %v5530 = vmax.f32 %v5529, %v4705
      %v5531 = vmax.f32 %v5530, %v4706
      %v5532 = vmax.f32 %v5531, %v4707
      %v5533 = vmax.f32 %v5532, %v4708
      %v5534 = vmax.f32 %v5533, %v4709
      %v5535 = vmax.f32 %v5534, %v4710
      %v5536 = vmax.f32 %v5535, %v4711
      %v5537 = vmax.f32 %v5536, %v4712
      %v5538 = vmax.f32 %v5537, %v4713
      %v5539 = vmax.f32 %v5538, %v4714
      %v5540 = vmax.f32 %v5539, %v4715
      %v5541 = vmax.f32 %v5540, %v4716
      %v5542 = vmax.f32 %v5541, %v4717
      %v5543 = vmax.f32 %v5542, %v4718
      %v5544 = vmax.f32 %v5543, %v4719
      %5545 = vmax.xlane.f32.xlu0 %v5544
      %v5546 = vpop.xlane.xlu0 %5545
      %v5547 = vmax.f32 %v4720, %v4721
      %v5548 = vmax.f32 %v5547, %v4722
      %v5549 = vmax.f32 %v5548, %v4723
      %v5550 = vmax.f32 %v5549, %v4724
      %v5551 = vmax.f32 %v5550, %v4725
      %v5552 = vmax.f32 %v5551, %v4726
      %v5553 = vmax.f32 %v5552, %v4727
      %v5554 = vmax.f32 %v5553, %v4728
      %v5555 = vmax.f32 %v5554, %v4729
      %v5556 = vmax.f32 %v5555, %v4730
      %v5557 = vmax.f32 %v5556, %v4731
      %v5558 = vmax.f32 %v5557, %v4732
      %v5559 = vmax.f32 %v5558, %v4733
      %v5560 = vmax.f32 %v5559, %v4734
      %v5561 = vmax.f32 %v5560, %v4735
      %v5562 = vmax.f32 %v5561, %v4736
      %v5563 = vmax.f32 %v5562, %v4737
      %v5564 = vmax.f32 %v5563, %v4738
      %v5565 = vmax.f32 %v5564, %v4739
      %v5566 = vmax.f32 %v5565, %v4740
      %v5567 = vmax.f32 %v5566, %v4741
      %v5568 = vmax.f32 %v5567, %v4742
      %v5569 = vmax.f32 %v5568, %v4743
      %5570 = vmax.xlane.f32.xlu0 %v5569
      %v5571 = vpop.xlane.xlu0 %5570
      %v5572 = vmax.f32 %v4744, %v4745
      %v5573 = vmax.f32 %v5572, %v4746
      %v5574 = vmax.f32 %v5573, %v4747
      %v5575 = vmax.f32 %v5574, %v4748
      %v5576 = vmax.f32 %v5575, %v4749
      %v5577 = vmax.f32 %v5576, %v4750
      %v5578 = vmax.f32 %v5577, %v4751
      %v5579 = vmax.f32 %v5578, %v4752
      %v5580 = vmax.f32 %v5579, %v4753
      %v5581 = vmax.f32 %v5580, %v4754
      %v5582 = vmax.f32 %v5581, %v4755
      %v5583 = vmax.f32 %v5582, %v4756
      %v5584 = vmax.f32 %v5583, %v4757
      %v5585 = vmax.f32 %v5584, %v4758
      %v5586 = vmax.f32 %v5585, %v4759
      %v5587 = vmax.f32 %v5586, %v4760
      %v5588 = vmax.f32 %v5587, %v4761
      %v5589 = vmax.f32 %v5588, %v4762
      %v5590 = vmax.f32 %v5589, %v4763
      %v5591 = vmax.f32 %v5590, %v4764
      %v5592 = vmax.f32 %v5591, %v4765
      %v5593 = vmax.f32 %v5592, %v4766
      %v5594 = vmax.f32 %v5593, %v4767
      %5595 = vmax.xlane.f32.xlu0 %v5594
      %v5596 = vpop.xlane.xlu0 %5595
      %v5597 = vmax.f32 %v4768, %v4769
      %v5598 = vmax.f32 %v5597, %v4770
      %v5599 = vmax.f32 %v5598, %v4771
      %v5600 = vmax.f32 %v5599, %v4772
      %v5601 = vmax.f32 %v5600, %v4773
      %v5602 = vmax.f32 %v5601, %v4774
      %v5603 = vmax.f32 %v5602, %v4775
      %v5604 = vmax.f32 %v5603, %v4776
      %v5605 = vmax.f32 %v5604, %v4777
      %v5606 = vmax.f32 %v5605, %v4778
      %v5607 = vmax.f32 %v5606, %v4779
      %v5608 = vmax.f32 %v5607, %v4780
      %v5609 = vmax.f32 %v5608, %v4781
      %v5610 = vmax.f32 %v5609, %v4782
      %v5611 = vmax.f32 %v5610, %v4783
      %v5612 = vmax.f32 %v5611, %v4784
      %v5613 = vmax.f32 %v5612, %v4785
      %v5614 = vmax.f32 %v5613, %v4786
      %v5615 = vmax.f32 %v5614, %v4787
      %v5616 = vmax.f32 %v5615, %v4788
      %v5617 = vmax.f32 %v5616, %v4789
      %v5618 = vmax.f32 %v5617, %v4790
      %v5619 = vmax.f32 %v5618, %v4791
      %5620 = vmax.xlane.f32.xlu0 %v5619
      %v5621 = vpop.xlane.xlu0 %5620
      %v5622 = vmax.f32 %v4792, %v4793
      %v5623 = vmax.f32 %v5622, %v4794
      %v5624 = vmax.f32 %v5623, %v4795
      %v5625 = vmax.f32 %v5624, %v4796
      %v5626 = vmax.f32 %v5625, %v4797
      %v5627 = vmax.f32 %v5626, %v4798
      %v5628 = vmax.f32 %v5627, %v4799
      %v5629 = vmax.f32 %v5628, %v4800
      %v5630 = vmax.f32 %v5629, %v4801
      %v5631 = vmax.f32 %v5630, %v4802
      %v5632 = vmax.f32 %v5631, %v4803
      %v5633 = vmax.f32 %v5632, %v4804
      %v5634 = vmax.f32 %v5633, %v4805
      %v5635 = vmax.f32 %v5634, %v4806
      %v5636 = vmax.f32 %v5635, %v4807
      %v5637 = vmax.f32 %v5636, %v4808
      %v5638 = vmax.f32 %v5637, %v4809
      %v5639 = vmax.f32 %v5638, %v4810
      %v5640 = vmax.f32 %v5639, %v4811
      %v5641 = vmax.f32 %v5640, %v4812
      %v5642 = vmax.f32 %v5641, %v4813
      %v5643 = vmax.f32 %v5642, %v4814
      %v5644 = vmax.f32 %v5643, %v4815
      %5645 = vmax.xlane.f32.xlu0 %v5644
      %v5646 = vpop.xlane.xlu0 %5645
      %v5647 = vmax.f32 %v4816, %v4817
      %v5648 = vmax.f32 %v5647, %v4818
      %v5649 = vmax.f32 %v5648, %v4819
      %v5650 = vmax.f32 %v5649, %v4820
      %v5651 = vmax.f32 %v5650, %v4821
      %v5652 = vmax.f32 %v5651, %v4822
      %v5653 = vmax.f32 %v5652, %v4823
      %v5654 = vmax.f32 %v5653, %v4824
      %v5655 = vmax.f32 %v5654, %v4825
      %v5656 = vmax.f32 %v5655, %v4826
      %v5657 = vmax.f32 %v5656, %v4827
      %v5658 = vmax.f32 %v5657, %v4828
      %v5659 = vmax.f32 %v5658, %v4829
      %v5660 = vmax.f32 %v5659, %v4830
      %v5661 = vmax.f32 %v5660, %v4831
      %v5662 = vmax.f32 %v5661, %v4832
      %v5663 = vmax.f32 %v5662, %v4833
      %v5664 = vmax.f32 %v5663, %v4834
      %v5665 = vmax.f32 %v5664, %v4835
      %v5666 = vmax.f32 %v5665, %v4836
      %v5667 = vmax.f32 %v5666, %v4837
      %v5668 = vmax.f32 %v5667, %v4838
      %v5669 = vmax.f32 %v5668, %v4839
      %5670 = vmax.xlane.f32.xlu0 %v5669
      %v5671 = vpop.xlane.xlu0 %5670
      %v5672 = vmax.f32 %v4840, %v4896
      %v5673 = vmax.f32 %v4841, %v4921
      %v5674 = vmax.f32 %v4842, %v4946
      %v5675 = vmax.f32 %v4843, %v4971
      %v5676 = vmax.f32 %v4844, %v4996
      %v5677 = vmax.f32 %v4845, %v5021
      %v5678 = vmax.f32 %v4846, %v5046
      %v5679 = vmax.f32 %v4847, %v5071
      %v5680 = vmax.f32 %v4848, %v5096
      %v5681 = vmax.f32 %v4849, %v5121
      %v5682 = vmax.f32 %v4850, %v5146
      %v5683 = vmax.f32 %v4851, %v5171
      %v5684 = vmax.f32 %v4852, %v5196
      %v5685 = vmax.f32 %v4853, %v5221
      %v5686 = vmax.f32 %v4854, %v5246
      %v5687 = vmax.f32 %v4855, %v5271
      %v5688 = vmax.f32 %v4856, %v5296
      %v5689 = vmax.f32 %v4857, %v5321
      %v5690 = vmax.f32 %v4858, %v5346
      %v5691 = vmax.f32 %v4859, %v5371
      %v5692 = vmax.f32 %v4860, %v5396
      %v5693 = vmax.f32 %v4861, %v5421
      %v5694 = vmax.f32 %v4862, %v5446
      %v5695 = vmax.f32 %v4863, %v5471
      %v5696 = vmax.f32 %v4864, %v5496
      %v5697 = vmax.f32 %v4865, %v5521
      %v5698 = vmax.f32 %v4866, %v5546
      %v5699 = vmax.f32 %v4867, %v5571
      %v5700 = vmax.f32 %v4868, %v5596
      %v5701 = vmax.f32 %v4869, %v5621
      %v5702 = vmax.f32 %v4870, %v5646
      %v5703 = vmax.f32 %v4871, %v5671
      %v5704 = vld [vmem:[%s251] sm:$0xff]
      %v5705 = vld [vmem:[%s251 + $0x8] sm:$0xff]
      %v5706 = vld [vmem:[%s251 + $0x10] sm:$0xff]
      %v5707 = vld [vmem:[%s251 + $0x18] sm:$0xff]
      %v5708 = vld [vmem:[%s251 + $0x20] sm:$0xff]
      %v5709 = vld [vmem:[%s251 + $0x28] sm:$0xff]
      %v5710 = vld [vmem:[%s251 + $0x30] sm:$0xff]
      %v5711 = vld [vmem:[%s251 + $0x38] sm:$0xff]
      %v5712 = vld [vmem:[%s251 + $0x40] sm:$0xff]
      %v5713 = vld [vmem:[%s251 + $0x48] sm:$0xff]
      %v5714 = vld [vmem:[%s251 + $0x50] sm:$0xff]
      %v5715 = vld [vmem:[%s251 + $0x58] sm:$0xff]
      %v5716 = vld [vmem:[%s251 + $0x60] sm:$0xff]
      %v5717 = vld [vmem:[%s251 + $0x68] sm:$0xff]
      %v5718 = vld [vmem:[%s251 + $0x70] sm:$0xff]
      %v5719 = vld [vmem:[%s251 + $0x78] sm:$0xff]
      %v5720 = vld [vmem:[%s251 + $0x80] sm:$0xff]
      %v5721 = vld [vmem:[%s251 + $0x88] sm:$0xff]
      %v5722 = vld [vmem:[%s251 + $0x90] sm:$0xff]
      %v5723 = vld [vmem:[%s251 + $0x98] sm:$0xff]
      %v5724 = vld [vmem:[%s251 + $0xa0] sm:$0xff]
      %v5725 = vld [vmem:[%s251 + $0xa8] sm:$0xff]
      %v5726 = vld [vmem:[%s251 + $0xb0] sm:$0xff]
      %v5727 = vld [vmem:[%s251 + $0xb8] sm:$0xff]
      %v5728 = vld [vmem:[%s251 + $0xc0] sm:$0xff]
      %v5729 = vld [vmem:[%s251 + $0xc8] sm:$0xff]
      %v5730 = vld [vmem:[%s251 + $0xd0] sm:$0xff]
      %v5731 = vld [vmem:[%s251 + $0xd8] sm:$0xff]
      %v5732 = vld [vmem:[%s251 + $0xe0] sm:$0xff]
      %v5733 = vld [vmem:[%s251 + $0xe8] sm:$0xff]
      %v5734 = vld [vmem:[%s251 + $0xf0] sm:$0xff]
      %v5735 = vld [vmem:[%s251 + $0xf8] sm:$0xff]
      %5737 = vset.pattern.permute.xlu0 0
      %5738 = vperm.xlu0 %5737, %v5704
      %v5739 = vpop.permute.xlu0 %5738
      %5742 = vset.pattern.permute.xlu0 0
      %5743 = vperm.xlu0 %5742, %v5705
      %v5744 = vpop.permute.xlu0 %5743
      %5747 = vset.pattern.permute.xlu0 0
      %5748 = vperm.xlu0 %5747, %v5706
      %v5749 = vpop.permute.xlu0 %5748
      %5752 = vset.pattern.permute.xlu0 0
      %5753 = vperm.xlu0 %5752, %v5707
      %v5754 = vpop.permute.xlu0 %5753
      %5757 = vset.pattern.permute.xlu0 0
      %5758 = vperm.xlu0 %5757, %v5708
      %v5759 = vpop.permute.xlu0 %5758
      %5762 = vset.pattern.permute.xlu0 0
      %5763 = vperm.xlu0 %5762, %v5709
      %v5764 = vpop.permute.xlu0 %5763
      %5767 = vset.pattern.permute.xlu0 0
      %5768 = vperm.xlu0 %5767, %v5710
      %v5769 = vpop.permute.xlu0 %5768
      %5772 = vset.pattern.permute.xlu0 0
      %5773 = vperm.xlu0 %5772, %v5711
      %v5774 = vpop.permute.xlu0 %5773
      %5777 = vset.pattern.permute.xlu0 0
      %5778 = vperm.xlu0 %5777, %v5712
      %v5779 = vpop.permute.xlu0 %5778
      %5782 = vset.pattern.permute.xlu0 0
      %5783 = vperm.xlu0 %5782, %v5713
      %v5784 = vpop.permute.xlu0 %5783
      %5787 = vset.pattern.permute.xlu0 0
      %5788 = vperm.xlu0 %5787, %v5714
      %v5789 = vpop.permute.xlu0 %5788
      %5792 = vset.pattern.permute.xlu0 0
      %5793 = vperm.xlu0 %5792, %v5715
      %v5794 = vpop.permute.xlu0 %5793
      %5797 = vset.pattern.permute.xlu0 0
      %5798 = vperm.xlu0 %5797, %v5716
      %v5799 = vpop.permute.xlu0 %5798
      %5802 = vset.pattern.permute.xlu0 0
      %5803 = vperm.xlu0 %5802, %v5717
      %v5804 = vpop.permute.xlu0 %5803
      %5807 = vset.pattern.permute.xlu0 0
      %5808 = vperm.xlu0 %5807, %v5718
      %v5809 = vpop.permute.xlu0 %5808
      %5812 = vset.pattern.permute.xlu0 0
      %5813 = vperm.xlu0 %5812, %v5719
      %v5814 = vpop.permute.xlu0 %5813
      %5817 = vset.pattern.permute.xlu0 0
      %5818 = vperm.xlu0 %5817, %v5720
      %v5819 = vpop.permute.xlu0 %5818
      %5822 = vset.pattern.permute.xlu0 0
      %5823 = vperm.xlu0 %5822, %v5721
      %v5824 = vpop.permute.xlu0 %5823
      %5827 = vset.pattern.permute.xlu0 0
      %5828 = vperm.xlu0 %5827, %v5722
      %v5829 = vpop.permute.xlu0 %5828
      %5832 = vset.pattern.permute.xlu0 0
      %5833 = vperm.xlu0 %5832, %v5723
      %v5834 = vpop.permute.xlu0 %5833
      %5837 = vset.pattern.permute.xlu0 0
      %5838 = vperm.xlu0 %5837, %v5724
      %v5839 = vpop.permute.xlu0 %5838
      %5842 = vset.pattern.permute.xlu0 0
      %5843 = vperm.xlu0 %5842, %v5725
      %v5844 = vpop.permute.xlu0 %5843
      %5847 = vset.pattern.permute.xlu0 0
      %5848 = vperm.xlu0 %5847, %v5726
      %v5849 = vpop.permute.xlu0 %5848
      %5852 = vset.pattern.permute.xlu0 0
      %5853 = vperm.xlu0 %5852, %v5727
      %v5854 = vpop.permute.xlu0 %5853
      %5857 = vset.pattern.permute.xlu0 0
      %5858 = vperm.xlu0 %5857, %v5728
      %v5859 = vpop.permute.xlu0 %5858
      %5862 = vset.pattern.permute.xlu0 0
      %5863 = vperm.xlu0 %5862, %v5729
      %v5864 = vpop.permute.xlu0 %5863
      %5867 = vset.pattern.permute.xlu0 0
      %5868 = vperm.xlu0 %5867, %v5730
      %v5869 = vpop.permute.xlu0 %5868
      %5872 = vset.pattern.permute.xlu0 0
      %5873 = vperm.xlu0 %5872, %v5731
      %v5874 = vpop.permute.xlu0 %5873
      %5877 = vset.pattern.permute.xlu0 0
      %5878 = vperm.xlu0 %5877, %v5732
      %v5879 = vpop.permute.xlu0 %5878
      %5882 = vset.pattern.permute.xlu0 0
      %5883 = vperm.xlu0 %5882, %v5733
      %v5884 = vpop.permute.xlu0 %5883
      %5887 = vset.pattern.permute.xlu0 0
      %5888 = vperm.xlu0 %5887, %v5734
      %v5889 = vpop.permute.xlu0 %5888
      %5892 = vset.pattern.permute.xlu0 0
      %5893 = vperm.xlu0 %5892, %v5735
      %v5894 = vpop.permute.xlu0 %5893
      %v5899 = vlaneseq
      %v5900 = vshrl.u32 %v5899, 7
      %v5901 = vsub.s32 0, %v5900
      %v5902 = vrot.slane %v3943, %v5901
      %v5903 = vlaneseq
      %v5904 = vshrl.u32 %v5903, 7
      %v5905 = vsub.s32 1, %v5904
      %v5906 = vrot.slane %v3943, %v5905
      %v5907 = vlaneseq
      %v5908 = vshrl.u32 %v5907, 7
      %v5909 = vsub.s32 2, %v5908
      %v5910 = vrot.slane %v3943, %v5909
      %v5911 = vlaneseq
      %v5912 = vshrl.u32 %v5911, 7
      %v5913 = vsub.s32 3, %v5912
      %v5914 = vrot.slane %v3943, %v5913
      %v5915 = vlaneseq
      %v5916 = vshrl.u32 %v5915, 7
      %v5917 = vsub.s32 4, %v5916
      %v5918 = vrot.slane %v3943, %v5917
      %v5919 = vlaneseq
      %v5920 = vshrl.u32 %v5919, 7
      %v5921 = vsub.s32 5, %v5920
      %v5922 = vrot.slane %v3943, %v5921
      %v5923 = vlaneseq
      %v5924 = vshrl.u32 %v5923, 7
      %v5925 = vsub.s32 6, %v5924
      %v5926 = vrot.slane %v3943, %v5925
      %v5927 = vlaneseq
      %v5928 = vshrl.u32 %v5927, 7
      %v5929 = vsub.s32 7, %v5928
      %v5930 = vrot.slane %v3943, %v5929
      %v5931 = vlaneseq
      %v5932 = vshrl.u32 %v5931, 7
      %v5933 = vsub.s32 0, %v5932
      %v5934 = vrot.slane %v3944, %v5933
      %v5935 = vlaneseq
      %v5936 = vshrl.u32 %v5935, 7
      %v5937 = vsub.s32 1, %v5936
      %v5938 = vrot.slane %v3944, %v5937
      %v5939 = vlaneseq
      %v5940 = vshrl.u32 %v5939, 7
      %v5941 = vsub.s32 2, %v5940
      %v5942 = vrot.slane %v3944, %v5941
      %v5943 = vlaneseq
      %v5944 = vshrl.u32 %v5943, 7
      %v5945 = vsub.s32 3, %v5944
      %v5946 = vrot.slane %v3944, %v5945
      %v5947 = vlaneseq
      %v5948 = vshrl.u32 %v5947, 7
      %v5949 = vsub.s32 4, %v5948
      %v5950 = vrot.slane %v3944, %v5949
      %v5951 = vlaneseq
      %v5952 = vshrl.u32 %v5951, 7
      %v5953 = vsub.s32 5, %v5952
      %v5954 = vrot.slane %v3944, %v5953
      %v5955 = vlaneseq
      %v5956 = vshrl.u32 %v5955, 7
      %v5957 = vsub.s32 6, %v5956
      %v5958 = vrot.slane %v3944, %v5957
      %v5959 = vlaneseq
      %v5960 = vshrl.u32 %v5959, 7
      %v5961 = vsub.s32 7, %v5960
      %v5962 = vrot.slane %v3944, %v5961
      %v5963 = vlaneseq
      %v5964 = vshrl.u32 %v5963, 7
      %v5965 = vsub.s32 0, %v5964
      %v5966 = vrot.slane %v3945, %v5965
      %v5967 = vlaneseq
      %v5968 = vshrl.u32 %v5967, 7
      %v5969 = vsub.s32 1, %v5968
      %v5970 = vrot.slane %v3945, %v5969
      %v5971 = vlaneseq
      %v5972 = vshrl.u32 %v5971, 7
      %v5973 = vsub.s32 2, %v5972
      %v5974 = vrot.slane %v3945, %v5973
      %v5975 = vlaneseq
      %v5976 = vshrl.u32 %v5975, 7
      %v5977 = vsub.s32 3, %v5976
      %v5978 = vrot.slane %v3945, %v5977
      %v5979 = vlaneseq
      %v5980 = vshrl.u32 %v5979, 7
      %v5981 = vsub.s32 4, %v5980
      %v5982 = vrot.slane %v3945, %v5981
      %v5983 = vlaneseq
      %v5984 = vshrl.u32 %v5983, 7
      %v5985 = vsub.s32 5, %v5984
      %v5986 = vrot.slane %v3945, %v5985
      %v5987 = vlaneseq
      %v5988 = vshrl.u32 %v5987, 7
      %v5989 = vsub.s32 6, %v5988
      %v5990 = vrot.slane %v3945, %v5989
      %v5991 = vlaneseq
      %v5992 = vshrl.u32 %v5991, 7
      %v5993 = vsub.s32 7, %v5992
      %v5994 = vrot.slane %v3945, %v5993
      %vm6019 = vcmp.ne.f32.partialorder %v5739, %v5902
      %vm6020 = vcmp.ne.f32.partialorder %v5739, %v5906
      %vm6021 = vcmp.ne.f32.partialorder %v5739, %v5910
      %vm6022 = vcmp.ne.f32.partialorder %v5739, %v5914
      %vm6023 = vcmp.ne.f32.partialorder %v5739, %v5918
      %vm6024 = vcmp.ne.f32.partialorder %v5739, %v5922
      %vm6025 = vcmp.ne.f32.partialorder %v5739, %v5926
      %vm6026 = vcmp.ne.f32.partialorder %v5739, %v5930
      %vm6027 = vcmp.ne.f32.partialorder %v5739, %v5934
      %vm6028 = vcmp.ne.f32.partialorder %v5739, %v5938
      %vm6029 = vcmp.ne.f32.partialorder %v5739, %v5942
      %vm6030 = vcmp.ne.f32.partialorder %v5739, %v5946
      %vm6031 = vcmp.ne.f32.partialorder %v5739, %v5950
      %vm6032 = vcmp.ne.f32.partialorder %v5739, %v5954
      %vm6033 = vcmp.ne.f32.partialorder %v5739, %v5958
      %vm6034 = vcmp.ne.f32.partialorder %v5739, %v5962
      %vm6035 = vcmp.ne.f32.partialorder %v5739, %v5966
      %vm6036 = vcmp.ne.f32.partialorder %v5739, %v5970
      %vm6037 = vcmp.ne.f32.partialorder %v5739, %v5974
      %vm6038 = vcmp.ne.f32.partialorder %v5739, %v5978
      %vm6039 = vcmp.ne.f32.partialorder %v5739, %v5982
      %vm6040 = vcmp.ne.f32.partialorder %v5739, %v5986
      %vm6041 = vcmp.ne.f32.partialorder %v5739, %v5990
      %vm6042 = vcmp.ne.f32.partialorder %v5739, %v5994
      %vm6043 = vcmp.ne.f32.partialorder %v5744, %v5902
      %vm6044 = vcmp.ne.f32.partialorder %v5744, %v5906
      %vm6045 = vcmp.ne.f32.partialorder %v5744, %v5910
      %vm6046 = vcmp.ne.f32.partialorder %v5744, %v5914
      %vm6047 = vcmp.ne.f32.partialorder %v5744, %v5918
      %vm6048 = vcmp.ne.f32.partialorder %v5744, %v5922
      %vm6049 = vcmp.ne.f32.partialorder %v5744, %v5926
      %vm6050 = vcmp.ne.f32.partialorder %v5744, %v5930
      %vm6051 = vcmp.ne.f32.partialorder %v5744, %v5934
      %vm6052 = vcmp.ne.f32.partialorder %v5744, %v5938
      %vm6053 = vcmp.ne.f32.partialorder %v5744, %v5942
      %vm6054 = vcmp.ne.f32.partialorder %v5744, %v5946
      %vm6055 = vcmp.ne.f32.partialorder %v5744, %v5950
      %vm6056 = vcmp.ne.f32.partialorder %v5744, %v5954
      %vm6057 = vcmp.ne.f32.partialorder %v5744, %v5958
      %vm6058 = vcmp.ne.f32.partialorder %v5744, %v5962
      %vm6059 = vcmp.ne.f32.partialorder %v5744, %v5966
      %vm6060 = vcmp.ne.f32.partialorder %v5744, %v5970
      %vm6061 = vcmp.ne.f32.partialorder %v5744, %v5974
      %vm6062 = vcmp.ne.f32.partialorder %v5744, %v5978
      %vm6063 = vcmp.ne.f32.partialorder %v5744, %v5982
      %vm6064 = vcmp.ne.f32.partialorder %v5744, %v5986
      %vm6065 = vcmp.ne.f32.partialorder %v5744, %v5990
      %vm6066 = vcmp.ne.f32.partialorder %v5744, %v5994
      %vm6067 = vcmp.ne.f32.partialorder %v5749, %v5902
      %vm6068 = vcmp.ne.f32.partialorder %v5749, %v5906
      %vm6069 = vcmp.ne.f32.partialorder %v5749, %v5910
      %vm6070 = vcmp.ne.f32.partialorder %v5749, %v5914
      %vm6071 = vcmp.ne.f32.partialorder %v5749, %v5918
      %vm6072 = vcmp.ne.f32.partialorder %v5749, %v5922
      %vm6073 = vcmp.ne.f32.partialorder %v5749, %v5926
      %vm6074 = vcmp.ne.f32.partialorder %v5749, %v5930
      %vm6075 = vcmp.ne.f32.partialorder %v5749, %v5934
      %vm6076 = vcmp.ne.f32.partialorder %v5749, %v5938
      %vm6077 = vcmp.ne.f32.partialorder %v5749, %v5942
      %vm6078 = vcmp.ne.f32.partialorder %v5749, %v5946
      %vm6079 = vcmp.ne.f32.partialorder %v5749, %v5950
      %vm6080 = vcmp.ne.f32.partialorder %v5749, %v5954
      %vm6081 = vcmp.ne.f32.partialorder %v5749, %v5958
      %vm6082 = vcmp.ne.f32.partialorder %v5749, %v5962
      %vm6083 = vcmp.ne.f32.partialorder %v5749, %v5966
      %vm6084 = vcmp.ne.f32.partialorder %v5749, %v5970
      %vm6085 = vcmp.ne.f32.partialorder %v5749, %v5974
      %vm6086 = vcmp.ne.f32.partialorder %v5749, %v5978
      %vm6087 = vcmp.ne.f32.partialorder %v5749, %v5982
      %vm6088 = vcmp.ne.f32.partialorder %v5749, %v5986
      %vm6089 = vcmp.ne.f32.partialorder %v5749, %v5990
      %vm6090 = vcmp.ne.f32.partialorder %v5749, %v5994
      %vm6091 = vcmp.ne.f32.partialorder %v5754, %v5902
      %vm6092 = vcmp.ne.f32.partialorder %v5754, %v5906
      %vm6093 = vcmp.ne.f32.partialorder %v5754, %v5910
      %vm6094 = vcmp.ne.f32.partialorder %v5754, %v5914
      %vm6095 = vcmp.ne.f32.partialorder %v5754, %v5918
      %vm6096 = vcmp.ne.f32.partialorder %v5754, %v5922
      %vm6097 = vcmp.ne.f32.partialorder %v5754, %v5926
      %vm6098 = vcmp.ne.f32.partialorder %v5754, %v5930
      %vm6099 = vcmp.ne.f32.partialorder %v5754, %v5934
      %vm6100 = vcmp.ne.f32.partialorder %v5754, %v5938
      %vm6101 = vcmp.ne.f32.partialorder %v5754, %v5942
      %vm6102 = vcmp.ne.f32.partialorder %v5754, %v5946
      %vm6103 = vcmp.ne.f32.partialorder %v5754, %v5950
      %vm6104 = vcmp.ne.f32.partialorder %v5754, %v5954
      %vm6105 = vcmp.ne.f32.partialorder %v5754, %v5958
      %vm6106 = vcmp.ne.f32.partialorder %v5754, %v5962
      %vm6107 = vcmp.ne.f32.partialorder %v5754, %v5966
      %vm6108 = vcmp.ne.f32.partialorder %v5754, %v5970
      %vm6109 = vcmp.ne.f32.partialorder %v5754, %v5974
      %vm6110 = vcmp.ne.f32.partialorder %v5754, %v5978
      %vm6111 = vcmp.ne.f32.partialorder %v5754, %v5982
      %vm6112 = vcmp.ne.f32.partialorder %v5754, %v5986
      %vm6113 = vcmp.ne.f32.partialorder %v5754, %v5990
      %vm6114 = vcmp.ne.f32.partialorder %v5754, %v5994
      %vm6115 = vcmp.ne.f32.partialorder %v5759, %v5902
      %vm6116 = vcmp.ne.f32.partialorder %v5759, %v5906
      %vm6117 = vcmp.ne.f32.partialorder %v5759, %v5910
      %vm6118 = vcmp.ne.f32.partialorder %v5759, %v5914
      %vm6119 = vcmp.ne.f32.partialorder %v5759, %v5918
      %vm6120 = vcmp.ne.f32.partialorder %v5759, %v5922
      %vm6121 = vcmp.ne.f32.partialorder %v5759, %v5926
      %vm6122 = vcmp.ne.f32.partialorder %v5759, %v5930
      %vm6123 = vcmp.ne.f32.partialorder %v5759, %v5934
      %vm6124 = vcmp.ne.f32.partialorder %v5759, %v5938
      %vm6125 = vcmp.ne.f32.partialorder %v5759, %v5942
      %vm6126 = vcmp.ne.f32.partialorder %v5759, %v5946
      %vm6127 = vcmp.ne.f32.partialorder %v5759, %v5950
      %vm6128 = vcmp.ne.f32.partialorder %v5759, %v5954
      %vm6129 = vcmp.ne.f32.partialorder %v5759, %v5958
      %vm6130 = vcmp.ne.f32.partialorder %v5759, %v5962
      %vm6131 = vcmp.ne.f32.partialorder %v5759, %v5966
      %vm6132 = vcmp.ne.f32.partialorder %v5759, %v5970
      %vm6133 = vcmp.ne.f32.partialorder %v5759, %v5974
      %vm6134 = vcmp.ne.f32.partialorder %v5759, %v5978
      %vm6135 = vcmp.ne.f32.partialorder %v5759, %v5982
      %vm6136 = vcmp.ne.f32.partialorder %v5759, %v5986
      %vm6137 = vcmp.ne.f32.partialorder %v5759, %v5990
      %vm6138 = vcmp.ne.f32.partialorder %v5759, %v5994
      %vm6139 = vcmp.ne.f32.partialorder %v5764, %v5902
      %vm6140 = vcmp.ne.f32.partialorder %v5764, %v5906
      %vm6141 = vcmp.ne.f32.partialorder %v5764, %v5910
      %vm6142 = vcmp.ne.f32.partialorder %v5764, %v5914
      %vm6143 = vcmp.ne.f32.partialorder %v5764, %v5918
      %vm6144 = vcmp.ne.f32.partialorder %v5764, %v5922
      %vm6145 = vcmp.ne.f32.partialorder %v5764, %v5926
      %vm6146 = vcmp.ne.f32.partialorder %v5764, %v5930
      %vm6147 = vcmp.ne.f32.partialorder %v5764, %v5934
      %vm6148 = vcmp.ne.f32.partialorder %v5764, %v5938
      %vm6149 = vcmp.ne.f32.partialorder %v5764, %v5942
      %vm6150 = vcmp.ne.f32.partialorder %v5764, %v5946
      %vm6151 = vcmp.ne.f32.partialorder %v5764, %v5950
      %vm6152 = vcmp.ne.f32.partialorder %v5764, %v5954
      %vm6153 = vcmp.ne.f32.partialorder %v5764, %v5958
      %vm6154 = vcmp.ne.f32.partialorder %v5764, %v5962
      %vm6155 = vcmp.ne.f32.partialorder %v5764, %v5966
      %vm6156 = vcmp.ne.f32.partialorder %v5764, %v5970
      %vm6157 = vcmp.ne.f32.partialorder %v5764, %v5974
      %vm6158 = vcmp.ne.f32.partialorder %v5764, %v5978
      %vm6159 = vcmp.ne.f32.partialorder %v5764, %v5982
      %vm6160 = vcmp.ne.f32.partialorder %v5764, %v5986
      %vm6161 = vcmp.ne.f32.partialorder %v5764, %v5990
      %vm6162 = vcmp.ne.f32.partialorder %v5764, %v5994
      %vm6163 = vcmp.ne.f32.partialorder %v5769, %v5902
      %vm6164 = vcmp.ne.f32.partialorder %v5769, %v5906
      %vm6165 = vcmp.ne.f32.partialorder %v5769, %v5910
      %vm6166 = vcmp.ne.f32.partialorder %v5769, %v5914
      %vm6167 = vcmp.ne.f32.partialorder %v5769, %v5918
      %vm6168 = vcmp.ne.f32.partialorder %v5769, %v5922
      %vm6169 = vcmp.ne.f32.partialorder %v5769, %v5926
      %vm6170 = vcmp.ne.f32.partialorder %v5769, %v5930
      %vm6171 = vcmp.ne.f32.partialorder %v5769, %v5934
      %vm6172 = vcmp.ne.f32.partialorder %v5769, %v5938
      %vm6173 = vcmp.ne.f32.partialorder %v5769, %v5942
      %vm6174 = vcmp.ne.f32.partialorder %v5769, %v5946
      %vm6175 = vcmp.ne.f32.partialorder %v5769, %v5950
      %vm6176 = vcmp.ne.f32.partialorder %v5769, %v5954
      %vm6177 = vcmp.ne.f32.partialorder %v5769, %v5958
      %vm6178 = vcmp.ne.f32.partialorder %v5769, %v5962
      %vm6179 = vcmp.ne.f32.partialorder %v5769, %v5966
      %vm6180 = vcmp.ne.f32.partialorder %v5769, %v5970
      %vm6181 = vcmp.ne.f32.partialorder %v5769, %v5974
      %vm6182 = vcmp.ne.f32.partialorder %v5769, %v5978
      %vm6183 = vcmp.ne.f32.partialorder %v5769, %v5982
      %vm6184 = vcmp.ne.f32.partialorder %v5769, %v5986
      %vm6185 = vcmp.ne.f32.partialorder %v5769, %v5990
      %vm6186 = vcmp.ne.f32.partialorder %v5769, %v5994
      %vm6187 = vcmp.ne.f32.partialorder %v5774, %v5902
      %vm6188 = vcmp.ne.f32.partialorder %v5774, %v5906
      %vm6189 = vcmp.ne.f32.partialorder %v5774, %v5910
      %vm6190 = vcmp.ne.f32.partialorder %v5774, %v5914
      %vm6191 = vcmp.ne.f32.partialorder %v5774, %v5918
      %vm6192 = vcmp.ne.f32.partialorder %v5774, %v5922
      %vm6193 = vcmp.ne.f32.partialorder %v5774, %v5926
      %vm6194 = vcmp.ne.f32.partialorder %v5774, %v5930
      %vm6195 = vcmp.ne.f32.partialorder %v5774, %v5934
      %vm6196 = vcmp.ne.f32.partialorder %v5774, %v5938
      %vm6197 = vcmp.ne.f32.partialorder %v5774, %v5942
      %vm6198 = vcmp.ne.f32.partialorder %v5774, %v5946
      %vm6199 = vcmp.ne.f32.partialorder %v5774, %v5950
      %vm6200 = vcmp.ne.f32.partialorder %v5774, %v5954
      %vm6201 = vcmp.ne.f32.partialorder %v5774, %v5958
      %vm6202 = vcmp.ne.f32.partialorder %v5774, %v5962
      %vm6203 = vcmp.ne.f32.partialorder %v5774, %v5966
      %vm6204 = vcmp.ne.f32.partialorder %v5774, %v5970
      %vm6205 = vcmp.ne.f32.partialorder %v5774, %v5974
      %vm6206 = vcmp.ne.f32.partialorder %v5774, %v5978
      %vm6207 = vcmp.ne.f32.partialorder %v5774, %v5982
      %vm6208 = vcmp.ne.f32.partialorder %v5774, %v5986
      %vm6209 = vcmp.ne.f32.partialorder %v5774, %v5990
      %vm6210 = vcmp.ne.f32.partialorder %v5774, %v5994
      %vm6211 = vcmp.ne.f32.partialorder %v5779, %v5902
      %vm6212 = vcmp.ne.f32.partialorder %v5779, %v5906
      %vm6213 = vcmp.ne.f32.partialorder %v5779, %v5910
      %vm6214 = vcmp.ne.f32.partialorder %v5779, %v5914
      %vm6215 = vcmp.ne.f32.partialorder %v5779, %v5918
      %vm6216 = vcmp.ne.f32.partialorder %v5779, %v5922
      %vm6217 = vcmp.ne.f32.partialorder %v5779, %v5926
      %vm6218 = vcmp.ne.f32.partialorder %v5779, %v5930
      %vm6219 = vcmp.ne.f32.partialorder %v5779, %v5934
      %vm6220 = vcmp.ne.f32.partialorder %v5779, %v5938
      %vm6221 = vcmp.ne.f32.partialorder %v5779, %v5942
      %vm6222 = vcmp.ne.f32.partialorder %v5779, %v5946
      %vm6223 = vcmp.ne.f32.partialorder %v5779, %v5950
      %vm6224 = vcmp.ne.f32.partialorder %v5779, %v5954
      %vm6225 = vcmp.ne.f32.partialorder %v5779, %v5958
      %vm6226 = vcmp.ne.f32.partialorder %v5779, %v5962
      %vm6227 = vcmp.ne.f32.partialorder %v5779, %v5966
      %vm6228 = vcmp.ne.f32.partialorder %v5779, %v5970
      %vm6229 = vcmp.ne.f32.partialorder %v5779, %v5974
      %vm6230 = vcmp.ne.f32.partialorder %v5779, %v5978
      %vm6231 = vcmp.ne.f32.partialorder %v5779, %v5982
      %vm6232 = vcmp.ne.f32.partialorder %v5779, %v5986
      %vm6233 = vcmp.ne.f32.partialorder %v5779, %v5990
      %vm6234 = vcmp.ne.f32.partialorder %v5779, %v5994
      %vm6235 = vcmp.ne.f32.partialorder %v5784, %v5902
      %vm6236 = vcmp.ne.f32.partialorder %v5784, %v5906
      %vm6237 = vcmp.ne.f32.partialorder %v5784, %v5910
      %vm6238 = vcmp.ne.f32.partialorder %v5784, %v5914
      %vm6239 = vcmp.ne.f32.partialorder %v5784, %v5918
      %vm6240 = vcmp.ne.f32.partialorder %v5784, %v5922
      %vm6241 = vcmp.ne.f32.partialorder %v5784, %v5926
      %vm6242 = vcmp.ne.f32.partialorder %v5784, %v5930
      %vm6243 = vcmp.ne.f32.partialorder %v5784, %v5934
      %vm6244 = vcmp.ne.f32.partialorder %v5784, %v5938
      %vm6245 = vcmp.ne.f32.partialorder %v5784, %v5942
      %vm6246 = vcmp.ne.f32.partialorder %v5784, %v5946
      %vm6247 = vcmp.ne.f32.partialorder %v5784, %v5950
      %vm6248 = vcmp.ne.f32.partialorder %v5784, %v5954
      %vm6249 = vcmp.ne.f32.partialorder %v5784, %v5958
      %vm6250 = vcmp.ne.f32.partialorder %v5784, %v5962
      %vm6251 = vcmp.ne.f32.partialorder %v5784, %v5966
      %vm6252 = vcmp.ne.f32.partialorder %v5784, %v5970
      %vm6253 = vcmp.ne.f32.partialorder %v5784, %v5974
      %vm6254 = vcmp.ne.f32.partialorder %v5784, %v5978
      %vm6255 = vcmp.ne.f32.partialorder %v5784, %v5982
      %vm6256 = vcmp.ne.f32.partialorder %v5784, %v5986
      %vm6257 = vcmp.ne.f32.partialorder %v5784, %v5990
      %vm6258 = vcmp.ne.f32.partialorder %v5784, %v5994
      %vm6259 = vcmp.ne.f32.partialorder %v5789, %v5902
      %vm6260 = vcmp.ne.f32.partialorder %v5789, %v5906
      %vm6261 = vcmp.ne.f32.partialorder %v5789, %v5910
      %vm6262 = vcmp.ne.f32.partialorder %v5789, %v5914
      %vm6263 = vcmp.ne.f32.partialorder %v5789, %v5918
      %vm6264 = vcmp.ne.f32.partialorder %v5789, %v5922
      %vm6265 = vcmp.ne.f32.partialorder %v5789, %v5926
      %vm6266 = vcmp.ne.f32.partialorder %v5789, %v5930
      %vm6267 = vcmp.ne.f32.partialorder %v5789, %v5934
      %vm6268 = vcmp.ne.f32.partialorder %v5789, %v5938
      %vm6269 = vcmp.ne.f32.partialorder %v5789, %v5942
      %vm6270 = vcmp.ne.f32.partialorder %v5789, %v5946
      %vm6271 = vcmp.ne.f32.partialorder %v5789, %v5950
      %vm6272 = vcmp.ne.f32.partialorder %v5789, %v5954
      %vm6273 = vcmp.ne.f32.partialorder %v5789, %v5958
      %vm6274 = vcmp.ne.f32.partialorder %v5789, %v5962
      %vm6275 = vcmp.ne.f32.partialorder %v5789, %v5966
      %vm6276 = vcmp.ne.f32.partialorder %v5789, %v5970
      %vm6277 = vcmp.ne.f32.partialorder %v5789, %v5974
      %vm6278 = vcmp.ne.f32.partialorder %v5789, %v5978
      %vm6279 = vcmp.ne.f32.partialorder %v5789, %v5982
      %vm6280 = vcmp.ne.f32.partialorder %v5789, %v5986
      %vm6281 = vcmp.ne.f32.partialorder %v5789, %v5990
      %vm6282 = vcmp.ne.f32.partialorder %v5789, %v5994
      %vm6283 = vcmp.ne.f32.partialorder %v5794, %v5902
      %vm6284 = vcmp.ne.f32.partialorder %v5794, %v5906
      %vm6285 = vcmp.ne.f32.partialorder %v5794, %v5910
      %vm6286 = vcmp.ne.f32.partialorder %v5794, %v5914
      %vm6287 = vcmp.ne.f32.partialorder %v5794, %v5918
      %vm6288 = vcmp.ne.f32.partialorder %v5794, %v5922
      %vm6289 = vcmp.ne.f32.partialorder %v5794, %v5926
      %vm6290 = vcmp.ne.f32.partialorder %v5794, %v5930
      %vm6291 = vcmp.ne.f32.partialorder %v5794, %v5934
      %vm6292 = vcmp.ne.f32.partialorder %v5794, %v5938
      %vm6293 = vcmp.ne.f32.partialorder %v5794, %v5942
      %vm6294 = vcmp.ne.f32.partialorder %v5794, %v5946
      %vm6295 = vcmp.ne.f32.partialorder %v5794, %v5950
      %vm6296 = vcmp.ne.f32.partialorder %v5794, %v5954
      %vm6297 = vcmp.ne.f32.partialorder %v5794, %v5958
      %vm6298 = vcmp.ne.f32.partialorder %v5794, %v5962
      %vm6299 = vcmp.ne.f32.partialorder %v5794, %v5966
      %vm6300 = vcmp.ne.f32.partialorder %v5794, %v5970
      %vm6301 = vcmp.ne.f32.partialorder %v5794, %v5974
      %vm6302 = vcmp.ne.f32.partialorder %v5794, %v5978
      %vm6303 = vcmp.ne.f32.partialorder %v5794, %v5982
      %vm6304 = vcmp.ne.f32.partialorder %v5794, %v5986
      %vm6305 = vcmp.ne.f32.partialorder %v5794, %v5990
      %vm6306 = vcmp.ne.f32.partialorder %v5794, %v5994
      %vm6307 = vcmp.ne.f32.partialorder %v5799, %v5902
      %vm6308 = vcmp.ne.f32.partialorder %v5799, %v5906
      %vm6309 = vcmp.ne.f32.partialorder %v5799, %v5910
      %vm6310 = vcmp.ne.f32.partialorder %v5799, %v5914
      %vm6311 = vcmp.ne.f32.partialorder %v5799, %v5918
      %vm6312 = vcmp.ne.f32.partialorder %v5799, %v5922
      %vm6313 = vcmp.ne.f32.partialorder %v5799, %v5926
      %vm6314 = vcmp.ne.f32.partialorder %v5799, %v5930
      %vm6315 = vcmp.ne.f32.partialorder %v5799, %v5934
      %vm6316 = vcmp.ne.f32.partialorder %v5799, %v5938
      %vm6317 = vcmp.ne.f32.partialorder %v5799, %v5942
      %vm6318 = vcmp.ne.f32.partialorder %v5799, %v5946
      %vm6319 = vcmp.ne.f32.partialorder %v5799, %v5950
      %vm6320 = vcmp.ne.f32.partialorder %v5799, %v5954
      %vm6321 = vcmp.ne.f32.partialorder %v5799, %v5958
      %vm6322 = vcmp.ne.f32.partialorder %v5799, %v5962
      %vm6323 = vcmp.ne.f32.partialorder %v5799, %v5966
      %vm6324 = vcmp.ne.f32.partialorder %v5799, %v5970
      %vm6325 = vcmp.ne.f32.partialorder %v5799, %v5974
      %vm6326 = vcmp.ne.f32.partialorder %v5799, %v5978
      %vm6327 = vcmp.ne.f32.partialorder %v5799, %v5982
      %vm6328 = vcmp.ne.f32.partialorder %v5799, %v5986
      %vm6329 = vcmp.ne.f32.partialorder %v5799, %v5990
      %vm6330 = vcmp.ne.f32.partialorder %v5799, %v5994
      %vm6331 = vcmp.ne.f32.partialorder %v5804, %v5902
      %vm6332 = vcmp.ne.f32.partialorder %v5804, %v5906
      %vm6333 = vcmp.ne.f32.partialorder %v5804, %v5910
      %vm6334 = vcmp.ne.f32.partialorder %v5804, %v5914
      %vm6335 = vcmp.ne.f32.partialorder %v5804, %v5918
      %vm6336 = vcmp.ne.f32.partialorder %v5804, %v5922
      %vm6337 = vcmp.ne.f32.partialorder %v5804, %v5926
      %vm6338 = vcmp.ne.f32.partialorder %v5804, %v5930
      %vm6339 = vcmp.ne.f32.partialorder %v5804, %v5934
      %vm6340 = vcmp.ne.f32.partialorder %v5804, %v5938
      %vm6341 = vcmp.ne.f32.partialorder %v5804, %v5942
      %vm6342 = vcmp.ne.f32.partialorder %v5804, %v5946
      %vm6343 = vcmp.ne.f32.partialorder %v5804, %v5950
      %vm6344 = vcmp.ne.f32.partialorder %v5804, %v5954
      %vm6345 = vcmp.ne.f32.partialorder %v5804, %v5958
      %vm6346 = vcmp.ne.f32.partialorder %v5804, %v5962
      %vm6347 = vcmp.ne.f32.partialorder %v5804, %v5966
      %vm6348 = vcmp.ne.f32.partialorder %v5804, %v5970
      %vm6349 = vcmp.ne.f32.partialorder %v5804, %v5974
      %vm6350 = vcmp.ne.f32.partialorder %v5804, %v5978
      %vm6351 = vcmp.ne.f32.partialorder %v5804, %v5982
      %vm6352 = vcmp.ne.f32.partialorder %v5804, %v5986
      %vm6353 = vcmp.ne.f32.partialorder %v5804, %v5990
      %vm6354 = vcmp.ne.f32.partialorder %v5804, %v5994
      %vm6355 = vcmp.ne.f32.partialorder %v5809, %v5902
      %vm6356 = vcmp.ne.f32.partialorder %v5809, %v5906
      %vm6357 = vcmp.ne.f32.partialorder %v5809, %v5910
      %vm6358 = vcmp.ne.f32.partialorder %v5809, %v5914
      %vm6359 = vcmp.ne.f32.partialorder %v5809, %v5918
      %vm6360 = vcmp.ne.f32.partialorder %v5809, %v5922
      %vm6361 = vcmp.ne.f32.partialorder %v5809, %v5926
      %vm6362 = vcmp.ne.f32.partialorder %v5809, %v5930
      %vm6363 = vcmp.ne.f32.partialorder %v5809, %v5934
      %vm6364 = vcmp.ne.f32.partialorder %v5809, %v5938
      %vm6365 = vcmp.ne.f32.partialorder %v5809, %v5942
      %vm6366 = vcmp.ne.f32.partialorder %v5809, %v5946
      %vm6367 = vcmp.ne.f32.partialorder %v5809, %v5950
      %vm6368 = vcmp.ne.f32.partialorder %v5809, %v5954
      %vm6369 = vcmp.ne.f32.partialorder %v5809, %v5958
      %vm6370 = vcmp.ne.f32.partialorder %v5809, %v5962
      %vm6371 = vcmp.ne.f32.partialorder %v5809, %v5966
      %vm6372 = vcmp.ne.f32.partialorder %v5809, %v5970
      %vm6373 = vcmp.ne.f32.partialorder %v5809, %v5974
      %vm6374 = vcmp.ne.f32.partialorder %v5809, %v5978
      %vm6375 = vcmp.ne.f32.partialorder %v5809, %v5982
      %vm6376 = vcmp.ne.f32.partialorder %v5809, %v5986
      %vm6377 = vcmp.ne.f32.partialorder %v5809, %v5990
      %vm6378 = vcmp.ne.f32.partialorder %v5809, %v5994
      %vm6379 = vcmp.ne.f32.partialorder %v5814, %v5902
      %vm6380 = vcmp.ne.f32.partialorder %v5814, %v5906
      %vm6381 = vcmp.ne.f32.partialorder %v5814, %v5910
      %vm6382 = vcmp.ne.f32.partialorder %v5814, %v5914
      %vm6383 = vcmp.ne.f32.partialorder %v5814, %v5918
      %vm6384 = vcmp.ne.f32.partialorder %v5814, %v5922
      %vm6385 = vcmp.ne.f32.partialorder %v5814, %v5926
      %vm6386 = vcmp.ne.f32.partialorder %v5814, %v5930
      %vm6387 = vcmp.ne.f32.partialorder %v5814, %v5934
      %vm6388 = vcmp.ne.f32.partialorder %v5814, %v5938
      %vm6389 = vcmp.ne.f32.partialorder %v5814, %v5942
      %vm6390 = vcmp.ne.f32.partialorder %v5814, %v5946
      %vm6391 = vcmp.ne.f32.partialorder %v5814, %v5950
      %vm6392 = vcmp.ne.f32.partialorder %v5814, %v5954
      %vm6393 = vcmp.ne.f32.partialorder %v5814, %v5958
      %vm6394 = vcmp.ne.f32.partialorder %v5814, %v5962
      %vm6395 = vcmp.ne.f32.partialorder %v5814, %v5966
      %vm6396 = vcmp.ne.f32.partialorder %v5814, %v5970
      %vm6397 = vcmp.ne.f32.partialorder %v5814, %v5974
      %vm6398 = vcmp.ne.f32.partialorder %v5814, %v5978
      %vm6399 = vcmp.ne.f32.partialorder %v5814, %v5982
      %vm6400 = vcmp.ne.f32.partialorder %v5814, %v5986
      %vm6401 = vcmp.ne.f32.partialorder %v5814, %v5990
      %vm6402 = vcmp.ne.f32.partialorder %v5814, %v5994
      %vm6403 = vcmp.ne.f32.partialorder %v5819, %v5902
      %vm6404 = vcmp.ne.f32.partialorder %v5819, %v5906
      %vm6405 = vcmp.ne.f32.partialorder %v5819, %v5910
      %vm6406 = vcmp.ne.f32.partialorder %v5819, %v5914
      %vm6407 = vcmp.ne.f32.partialorder %v5819, %v5918
      %vm6408 = vcmp.ne.f32.partialorder %v5819, %v5922
      %vm6409 = vcmp.ne.f32.partialorder %v5819, %v5926
      %vm6410 = vcmp.ne.f32.partialorder %v5819, %v5930
      %vm6411 = vcmp.ne.f32.partialorder %v5819, %v5934
      %vm6412 = vcmp.ne.f32.partialorder %v5819, %v5938
      %vm6413 = vcmp.ne.f32.partialorder %v5819, %v5942
      %vm6414 = vcmp.ne.f32.partialorder %v5819, %v5946
      %vm6415 = vcmp.ne.f32.partialorder %v5819, %v5950
      %vm6416 = vcmp.ne.f32.partialorder %v5819, %v5954
      %vm6417 = vcmp.ne.f32.partialorder %v5819, %v5958
      %vm6418 = vcmp.ne.f32.partialorder %v5819, %v5962
      %vm6419 = vcmp.ne.f32.partialorder %v5819, %v5966
      %vm6420 = vcmp.ne.f32.partialorder %v5819, %v5970
      %vm6421 = vcmp.ne.f32.partialorder %v5819, %v5974
      %vm6422 = vcmp.ne.f32.partialorder %v5819, %v5978
      %vm6423 = vcmp.ne.f32.partialorder %v5819, %v5982
      %vm6424 = vcmp.ne.f32.partialorder %v5819, %v5986
      %vm6425 = vcmp.ne.f32.partialorder %v5819, %v5990
      %vm6426 = vcmp.ne.f32.partialorder %v5819, %v5994
      %vm6427 = vcmp.ne.f32.partialorder %v5824, %v5902
      %vm6428 = vcmp.ne.f32.partialorder %v5824, %v5906
      %vm6429 = vcmp.ne.f32.partialorder %v5824, %v5910
      %vm6430 = vcmp.ne.f32.partialorder %v5824, %v5914
      %vm6431 = vcmp.ne.f32.partialorder %v5824, %v5918
      %vm6432 = vcmp.ne.f32.partialorder %v5824, %v5922
      %vm6433 = vcmp.ne.f32.partialorder %v5824, %v5926
      %vm6434 = vcmp.ne.f32.partialorder %v5824, %v5930
      %vm6435 = vcmp.ne.f32.partialorder %v5824, %v5934
      %vm6436 = vcmp.ne.f32.partialorder %v5824, %v5938
      %vm6437 = vcmp.ne.f32.partialorder %v5824, %v5942
      %vm6438 = vcmp.ne.f32.partialorder %v5824, %v5946
      %vm6439 = vcmp.ne.f32.partialorder %v5824, %v5950
      %vm6440 = vcmp.ne.f32.partialorder %v5824, %v5954
      %vm6441 = vcmp.ne.f32.partialorder %v5824, %v5958
      %vm6442 = vcmp.ne.f32.partialorder %v5824, %v5962
      %vm6443 = vcmp.ne.f32.partialorder %v5824, %v5966
      %vm6444 = vcmp.ne.f32.partialorder %v5824, %v5970
      %vm6445 = vcmp.ne.f32.partialorder %v5824, %v5974
      %vm6446 = vcmp.ne.f32.partialorder %v5824, %v5978
      %vm6447 = vcmp.ne.f32.partialorder %v5824, %v5982
      %vm6448 = vcmp.ne.f32.partialorder %v5824, %v5986
      %vm6449 = vcmp.ne.f32.partialorder %v5824, %v5990
      %vm6450 = vcmp.ne.f32.partialorder %v5824, %v5994
      %vm6451 = vcmp.ne.f32.partialorder %v5829, %v5902
      %vm6452 = vcmp.ne.f32.partialorder %v5829, %v5906
      %vm6453 = vcmp.ne.f32.partialorder %v5829, %v5910
      %vm6454 = vcmp.ne.f32.partialorder %v5829, %v5914
      %vm6455 = vcmp.ne.f32.partialorder %v5829, %v5918
      %vm6456 = vcmp.ne.f32.partialorder %v5829, %v5922
      %vm6457 = vcmp.ne.f32.partialorder %v5829, %v5926
      %vm6458 = vcmp.ne.f32.partialorder %v5829, %v5930
      %vm6459 = vcmp.ne.f32.partialorder %v5829, %v5934
      %vm6460 = vcmp.ne.f32.partialorder %v5829, %v5938
      %vm6461 = vcmp.ne.f32.partialorder %v5829, %v5942
      %vm6462 = vcmp.ne.f32.partialorder %v5829, %v5946
      %vm6463 = vcmp.ne.f32.partialorder %v5829, %v5950
      %vm6464 = vcmp.ne.f32.partialorder %v5829, %v5954
      %vm6465 = vcmp.ne.f32.partialorder %v5829, %v5958
      %vm6466 = vcmp.ne.f32.partialorder %v5829, %v5962
      %vm6467 = vcmp.ne.f32.partialorder %v5829, %v5966
      %vm6468 = vcmp.ne.f32.partialorder %v5829, %v5970
      %vm6469 = vcmp.ne.f32.partialorder %v5829, %v5974
      %vm6470 = vcmp.ne.f32.partialorder %v5829, %v5978
      %vm6471 = vcmp.ne.f32.partialorder %v5829, %v5982
      %vm6472 = vcmp.ne.f32.partialorder %v5829, %v5986
      %vm6473 = vcmp.ne.f32.partialorder %v5829, %v5990
      %vm6474 = vcmp.ne.f32.partialorder %v5829, %v5994
      %vm6475 = vcmp.ne.f32.partialorder %v5834, %v5902
      %vm6476 = vcmp.ne.f32.partialorder %v5834, %v5906
      %vm6477 = vcmp.ne.f32.partialorder %v5834, %v5910
      %vm6478 = vcmp.ne.f32.partialorder %v5834, %v5914
      %vm6479 = vcmp.ne.f32.partialorder %v5834, %v5918
      %vm6480 = vcmp.ne.f32.partialorder %v5834, %v5922
      %vm6481 = vcmp.ne.f32.partialorder %v5834, %v5926
      %vm6482 = vcmp.ne.f32.partialorder %v5834, %v5930
      %vm6483 = vcmp.ne.f32.partialorder %v5834, %v5934
      %vm6484 = vcmp.ne.f32.partialorder %v5834, %v5938
      %vm6485 = vcmp.ne.f32.partialorder %v5834, %v5942
      %vm6486 = vcmp.ne.f32.partialorder %v5834, %v5946
      %vm6487 = vcmp.ne.f32.partialorder %v5834, %v5950
      %vm6488 = vcmp.ne.f32.partialorder %v5834, %v5954
      %vm6489 = vcmp.ne.f32.partialorder %v5834, %v5958
      %vm6490 = vcmp.ne.f32.partialorder %v5834, %v5962
      %vm6491 = vcmp.ne.f32.partialorder %v5834, %v5966
      %vm6492 = vcmp.ne.f32.partialorder %v5834, %v5970
      %vm6493 = vcmp.ne.f32.partialorder %v5834, %v5974
      %vm6494 = vcmp.ne.f32.partialorder %v5834, %v5978
      %vm6495 = vcmp.ne.f32.partialorder %v5834, %v5982
      %vm6496 = vcmp.ne.f32.partialorder %v5834, %v5986
      %vm6497 = vcmp.ne.f32.partialorder %v5834, %v5990
      %vm6498 = vcmp.ne.f32.partialorder %v5834, %v5994
      %vm6499 = vcmp.ne.f32.partialorder %v5839, %v5902
      %vm6500 = vcmp.ne.f32.partialorder %v5839, %v5906
      %vm6501 = vcmp.ne.f32.partialorder %v5839, %v5910
      %vm6502 = vcmp.ne.f32.partialorder %v5839, %v5914
      %vm6503 = vcmp.ne.f32.partialorder %v5839, %v5918
      %vm6504 = vcmp.ne.f32.partialorder %v5839, %v5922
      %vm6505 = vcmp.ne.f32.partialorder %v5839, %v5926
      %vm6506 = vcmp.ne.f32.partialorder %v5839, %v5930
      %vm6507 = vcmp.ne.f32.partialorder %v5839, %v5934
      %vm6508 = vcmp.ne.f32.partialorder %v5839, %v5938
      %vm6509 = vcmp.ne.f32.partialorder %v5839, %v5942
      %vm6510 = vcmp.ne.f32.partialorder %v5839, %v5946
      %vm6511 = vcmp.ne.f32.partialorder %v5839, %v5950
      %vm6512 = vcmp.ne.f32.partialorder %v5839, %v5954
      %vm6513 = vcmp.ne.f32.partialorder %v5839, %v5958
      %vm6514 = vcmp.ne.f32.partialorder %v5839, %v5962
      %vm6515 = vcmp.ne.f32.partialorder %v5839, %v5966
      %vm6516 = vcmp.ne.f32.partialorder %v5839, %v5970
      %vm6517 = vcmp.ne.f32.partialorder %v5839, %v5974
      %vm6518 = vcmp.ne.f32.partialorder %v5839, %v5978
      %vm6519 = vcmp.ne.f32.partialorder %v5839, %v5982
      %vm6520 = vcmp.ne.f32.partialorder %v5839, %v5986
      %vm6521 = vcmp.ne.f32.partialorder %v5839, %v5990
      %vm6522 = vcmp.ne.f32.partialorder %v5839, %v5994
      %vm6523 = vcmp.ne.f32.partialorder %v5844, %v5902
      %vm6524 = vcmp.ne.f32.partialorder %v5844, %v5906
      %vm6525 = vcmp.ne.f32.partialorder %v5844, %v5910
      %vm6526 = vcmp.ne.f32.partialorder %v5844, %v5914
      %vm6527 = vcmp.ne.f32.partialorder %v5844, %v5918
      %vm6528 = vcmp.ne.f32.partialorder %v5844, %v5922
      %vm6529 = vcmp.ne.f32.partialorder %v5844, %v5926
      %vm6530 = vcmp.ne.f32.partialorder %v5844, %v5930
      %vm6531 = vcmp.ne.f32.partialorder %v5844, %v5934
      %vm6532 = vcmp.ne.f32.partialorder %v5844, %v5938
      %vm6533 = vcmp.ne.f32.partialorder %v5844, %v5942
      %vm6534 = vcmp.ne.f32.partialorder %v5844, %v5946
      %vm6535 = vcmp.ne.f32.partialorder %v5844, %v5950
      %vm6536 = vcmp.ne.f32.partialorder %v5844, %v5954
      %vm6537 = vcmp.ne.f32.partialorder %v5844, %v5958
      %vm6538 = vcmp.ne.f32.partialorder %v5844, %v5962
      %vm6539 = vcmp.ne.f32.partialorder %v5844, %v5966
      %vm6540 = vcmp.ne.f32.partialorder %v5844, %v5970
      %vm6541 = vcmp.ne.f32.partialorder %v5844, %v5974
      %vm6542 = vcmp.ne.f32.partialorder %v5844, %v5978
      %vm6543 = vcmp.ne.f32.partialorder %v5844, %v5982
      %vm6544 = vcmp.ne.f32.partialorder %v5844, %v5986
      %vm6545 = vcmp.ne.f32.partialorder %v5844, %v5990
      %vm6546 = vcmp.ne.f32.partialorder %v5844, %v5994
      %vm6547 = vcmp.ne.f32.partialorder %v5849, %v5902
      %vm6548 = vcmp.ne.f32.partialorder %v5849, %v5906
      %vm6549 = vcmp.ne.f32.partialorder %v5849, %v5910
      %vm6550 = vcmp.ne.f32.partialorder %v5849, %v5914
      %vm6551 = vcmp.ne.f32.partialorder %v5849, %v5918
      %vm6552 = vcmp.ne.f32.partialorder %v5849, %v5922
      %vm6553 = vcmp.ne.f32.partialorder %v5849, %v5926
      %vm6554 = vcmp.ne.f32.partialorder %v5849, %v5930
      %vm6555 = vcmp.ne.f32.partialorder %v5849, %v5934
      %vm6556 = vcmp.ne.f32.partialorder %v5849, %v5938
      %vm6557 = vcmp.ne.f32.partialorder %v5849, %v5942
      %vm6558 = vcmp.ne.f32.partialorder %v5849, %v5946
      %vm6559 = vcmp.ne.f32.partialorder %v5849, %v5950
      %vm6560 = vcmp.ne.f32.partialorder %v5849, %v5954
      %vm6561 = vcmp.ne.f32.partialorder %v5849, %v5958
      %vm6562 = vcmp.ne.f32.partialorder %v5849, %v5962
      %vm6563 = vcmp.ne.f32.partialorder %v5849, %v5966
      %vm6564 = vcmp.ne.f32.partialorder %v5849, %v5970
      %vm6565 = vcmp.ne.f32.partialorder %v5849, %v5974
      %vm6566 = vcmp.ne.f32.partialorder %v5849, %v5978
      %vm6567 = vcmp.ne.f32.partialorder %v5849, %v5982
      %vm6568 = vcmp.ne.f32.partialorder %v5849, %v5986
      %vm6569 = vcmp.ne.f32.partialorder %v5849, %v5990
      %vm6570 = vcmp.ne.f32.partialorder %v5849, %v5994
      %vm6571 = vcmp.ne.f32.partialorder %v5854, %v5902
      %vm6572 = vcmp.ne.f32.partialorder %v5854, %v5906
      %vm6573 = vcmp.ne.f32.partialorder %v5854, %v5910
      %vm6574 = vcmp.ne.f32.partialorder %v5854, %v5914
      %vm6575 = vcmp.ne.f32.partialorder %v5854, %v5918
      %vm6576 = vcmp.ne.f32.partialorder %v5854, %v5922
      %vm6577 = vcmp.ne.f32.partialorder %v5854, %v5926
      %vm6578 = vcmp.ne.f32.partialorder %v5854, %v5930
      %vm6579 = vcmp.ne.f32.partialorder %v5854, %v5934
      %vm6580 = vcmp.ne.f32.partialorder %v5854, %v5938
      %vm6581 = vcmp.ne.f32.partialorder %v5854, %v5942
      %vm6582 = vcmp.ne.f32.partialorder %v5854, %v5946
      %vm6583 = vcmp.ne.f32.partialorder %v5854, %v5950
      %vm6584 = vcmp.ne.f32.partialorder %v5854, %v5954
      %vm6585 = vcmp.ne.f32.partialorder %v5854, %v5958
      %vm6586 = vcmp.ne.f32.partialorder %v5854, %v5962
      %vm6587 = vcmp.ne.f32.partialorder %v5854, %v5966
      %vm6588 = vcmp.ne.f32.partialorder %v5854, %v5970
      %vm6589 = vcmp.ne.f32.partialorder %v5854, %v5974
      %vm6590 = vcmp.ne.f32.partialorder %v5854, %v5978
      %vm6591 = vcmp.ne.f32.partialorder %v5854, %v5982
      %vm6592 = vcmp.ne.f32.partialorder %v5854, %v5986
      %vm6593 = vcmp.ne.f32.partialorder %v5854, %v5990
      %vm6594 = vcmp.ne.f32.partialorder %v5854, %v5994
      %vm6595 = vcmp.ne.f32.partialorder %v5859, %v5902
      %vm6596 = vcmp.ne.f32.partialorder %v5859, %v5906
      %vm6597 = vcmp.ne.f32.partialorder %v5859, %v5910
      %vm6598 = vcmp.ne.f32.partialorder %v5859, %v5914
      %vm6599 = vcmp.ne.f32.partialorder %v5859, %v5918
      %vm6600 = vcmp.ne.f32.partialorder %v5859, %v5922
      %vm6601 = vcmp.ne.f32.partialorder %v5859, %v5926
      %vm6602 = vcmp.ne.f32.partialorder %v5859, %v5930
      %vm6603 = vcmp.ne.f32.partialorder %v5859, %v5934
      %vm6604 = vcmp.ne.f32.partialorder %v5859, %v5938
      %vm6605 = vcmp.ne.f32.partialorder %v5859, %v5942
      %vm6606 = vcmp.ne.f32.partialorder %v5859, %v5946
      %vm6607 = vcmp.ne.f32.partialorder %v5859, %v5950
      %vm6608 = vcmp.ne.f32.partialorder %v5859, %v5954
      %vm6609 = vcmp.ne.f32.partialorder %v5859, %v5958
      %vm6610 = vcmp.ne.f32.partialorder %v5859, %v5962
      %vm6611 = vcmp.ne.f32.partialorder %v5859, %v5966
      %vm6612 = vcmp.ne.f32.partialorder %v5859, %v5970
      %vm6613 = vcmp.ne.f32.partialorder %v5859, %v5974
      %vm6614 = vcmp.ne.f32.partialorder %v5859, %v5978
      %vm6615 = vcmp.ne.f32.partialorder %v5859, %v5982
      %vm6616 = vcmp.ne.f32.partialorder %v5859, %v5986
      %vm6617 = vcmp.ne.f32.partialorder %v5859, %v5990
      %vm6618 = vcmp.ne.f32.partialorder %v5859, %v5994
      %vm6619 = vcmp.ne.f32.partialorder %v5864, %v5902
      %vm6620 = vcmp.ne.f32.partialorder %v5864, %v5906
      %vm6621 = vcmp.ne.f32.partialorder %v5864, %v5910
      %vm6622 = vcmp.ne.f32.partialorder %v5864, %v5914
      %vm6623 = vcmp.ne.f32.partialorder %v5864, %v5918
      %vm6624 = vcmp.ne.f32.partialorder %v5864, %v5922
      %vm6625 = vcmp.ne.f32.partialorder %v5864, %v5926
      %vm6626 = vcmp.ne.f32.partialorder %v5864, %v5930
      %vm6627 = vcmp.ne.f32.partialorder %v5864, %v5934
      %vm6628 = vcmp.ne.f32.partialorder %v5864, %v5938
      %vm6629 = vcmp.ne.f32.partialorder %v5864, %v5942
      %vm6630 = vcmp.ne.f32.partialorder %v5864, %v5946
      %vm6631 = vcmp.ne.f32.partialorder %v5864, %v5950
      %vm6632 = vcmp.ne.f32.partialorder %v5864, %v5954
      %vm6633 = vcmp.ne.f32.partialorder %v5864, %v5958
      %vm6634 = vcmp.ne.f32.partialorder %v5864, %v5962
      %vm6635 = vcmp.ne.f32.partialorder %v5864, %v5966
      %vm6636 = vcmp.ne.f32.partialorder %v5864, %v5970
      %vm6637 = vcmp.ne.f32.partialorder %v5864, %v5974
      %vm6638 = vcmp.ne.f32.partialorder %v5864, %v5978
      %vm6639 = vcmp.ne.f32.partialorder %v5864, %v5982
      %vm6640 = vcmp.ne.f32.partialorder %v5864, %v5986
      %vm6641 = vcmp.ne.f32.partialorder %v5864, %v5990
      %vm6642 = vcmp.ne.f32.partialorder %v5864, %v5994
      %vm6643 = vcmp.ne.f32.partialorder %v5869, %v5902
      %vm6644 = vcmp.ne.f32.partialorder %v5869, %v5906
      %vm6645 = vcmp.ne.f32.partialorder %v5869, %v5910
      %vm6646 = vcmp.ne.f32.partialorder %v5869, %v5914
      %vm6647 = vcmp.ne.f32.partialorder %v5869, %v5918
      %vm6648 = vcmp.ne.f32.partialorder %v5869, %v5922
      %vm6649 = vcmp.ne.f32.partialorder %v5869, %v5926
      %vm6650 = vcmp.ne.f32.partialorder %v5869, %v5930
      %vm6651 = vcmp.ne.f32.partialorder %v5869, %v5934
      %vm6652 = vcmp.ne.f32.partialorder %v5869, %v5938
      %vm6653 = vcmp.ne.f32.partialorder %v5869, %v5942
      %vm6654 = vcmp.ne.f32.partialorder %v5869, %v5946
      %vm6655 = vcmp.ne.f32.partialorder %v5869, %v5950
      %vm6656 = vcmp.ne.f32.partialorder %v5869, %v5954
      %vm6657 = vcmp.ne.f32.partialorder %v5869, %v5958
      %vm6658 = vcmp.ne.f32.partialorder %v5869, %v5962
      %vm6659 = vcmp.ne.f32.partialorder %v5869, %v5966
      %vm6660 = vcmp.ne.f32.partialorder %v5869, %v5970
      %vm6661 = vcmp.ne.f32.partialorder %v5869, %v5974
      %vm6662 = vcmp.ne.f32.partialorder %v5869, %v5978
      %vm6663 = vcmp.ne.f32.partialorder %v5869, %v5982
      %vm6664 = vcmp.ne.f32.partialorder %v5869, %v5986
      %vm6665 = vcmp.ne.f32.partialorder %v5869, %v5990
      %vm6666 = vcmp.ne.f32.partialorder %v5869, %v5994
      %vm6667 = vcmp.ne.f32.partialorder %v5874, %v5902
      %vm6668 = vcmp.ne.f32.partialorder %v5874, %v5906
      %vm6669 = vcmp.ne.f32.partialorder %v5874, %v5910
      %vm6670 = vcmp.ne.f32.partialorder %v5874, %v5914
      %vm6671 = vcmp.ne.f32.partialorder %v5874, %v5918
      %vm6672 = vcmp.ne.f32.partialorder %v5874, %v5922
      %vm6673 = vcmp.ne.f32.partialorder %v5874, %v5926
      %vm6674 = vcmp.ne.f32.partialorder %v5874, %v5930
      %vm6675 = vcmp.ne.f32.partialorder %v5874, %v5934
      %vm6676 = vcmp.ne.f32.partialorder %v5874, %v5938
      %vm6677 = vcmp.ne.f32.partialorder %v5874, %v5942
      %vm6678 = vcmp.ne.f32.partialorder %v5874, %v5946
      %vm6679 = vcmp.ne.f32.partialorder %v5874, %v5950
      %vm6680 = vcmp.ne.f32.partialorder %v5874, %v5954
      %vm6681 = vcmp.ne.f32.partialorder %v5874, %v5958
      %vm6682 = vcmp.ne.f32.partialorder %v5874, %v5962
      %vm6683 = vcmp.ne.f32.partialorder %v5874, %v5966
      %vm6684 = vcmp.ne.f32.partialorder %v5874, %v5970
      %vm6685 = vcmp.ne.f32.partialorder %v5874, %v5974
      %vm6686 = vcmp.ne.f32.partialorder %v5874, %v5978
      %vm6687 = vcmp.ne.f32.partialorder %v5874, %v5982
      %vm6688 = vcmp.ne.f32.partialorder %v5874, %v5986
      %vm6689 = vcmp.ne.f32.partialorder %v5874, %v5990
      %vm6690 = vcmp.ne.f32.partialorder %v5874, %v5994
      %vm6691 = vcmp.ne.f32.partialorder %v5879, %v5902
      %vm6692 = vcmp.ne.f32.partialorder %v5879, %v5906
      %vm6693 = vcmp.ne.f32.partialorder %v5879, %v5910
      %vm6694 = vcmp.ne.f32.partialorder %v5879, %v5914
      %vm6695 = vcmp.ne.f32.partialorder %v5879, %v5918
      %vm6696 = vcmp.ne.f32.partialorder %v5879, %v5922
      %vm6697 = vcmp.ne.f32.partialorder %v5879, %v5926
      %vm6698 = vcmp.ne.f32.partialorder %v5879, %v5930
      %vm6699 = vcmp.ne.f32.partialorder %v5879, %v5934
      %vm6700 = vcmp.ne.f32.partialorder %v5879, %v5938
      %vm6701 = vcmp.ne.f32.partialorder %v5879, %v5942
      %vm6702 = vcmp.ne.f32.partialorder %v5879, %v5946
      %vm6703 = vcmp.ne.f32.partialorder %v5879, %v5950
      %vm6704 = vcmp.ne.f32.partialorder %v5879, %v5954
      %vm6705 = vcmp.ne.f32.partialorder %v5879, %v5958
      %vm6706 = vcmp.ne.f32.partialorder %v5879, %v5962
      %vm6707 = vcmp.ne.f32.partialorder %v5879, %v5966
      %vm6708 = vcmp.ne.f32.partialorder %v5879, %v5970
      %vm6709 = vcmp.ne.f32.partialorder %v5879, %v5974
      %vm6710 = vcmp.ne.f32.partialorder %v5879, %v5978
      %vm6711 = vcmp.ne.f32.partialorder %v5879, %v5982
      %vm6712 = vcmp.ne.f32.partialorder %v5879, %v5986
      %vm6713 = vcmp.ne.f32.partialorder %v5879, %v5990
      %vm6714 = vcmp.ne.f32.partialorder %v5879, %v5994
      %vm6715 = vcmp.ne.f32.partialorder %v5884, %v5902
      %vm6716 = vcmp.ne.f32.partialorder %v5884, %v5906
      %vm6717 = vcmp.ne.f32.partialorder %v5884, %v5910
      %vm6718 = vcmp.ne.f32.partialorder %v5884, %v5914
      %vm6719 = vcmp.ne.f32.partialorder %v5884, %v5918
      %vm6720 = vcmp.ne.f32.partialorder %v5884, %v5922
      %vm6721 = vcmp.ne.f32.partialorder %v5884, %v5926
      %vm6722 = vcmp.ne.f32.partialorder %v5884, %v5930
      %vm6723 = vcmp.ne.f32.partialorder %v5884, %v5934
      %vm6724 = vcmp.ne.f32.partialorder %v5884, %v5938
      %vm6725 = vcmp.ne.f32.partialorder %v5884, %v5942
      %vm6726 = vcmp.ne.f32.partialorder %v5884, %v5946
      %vm6727 = vcmp.ne.f32.partialorder %v5884, %v5950
      %vm6728 = vcmp.ne.f32.partialorder %v5884, %v5954
      %vm6729 = vcmp.ne.f32.partialorder %v5884, %v5958
      %vm6730 = vcmp.ne.f32.partialorder %v5884, %v5962
      %vm6731 = vcmp.ne.f32.partialorder %v5884, %v5966
      %vm6732 = vcmp.ne.f32.partialorder %v5884, %v5970
      %vm6733 = vcmp.ne.f32.partialorder %v5884, %v5974
      %vm6734 = vcmp.ne.f32.partialorder %v5884, %v5978
      %vm6735 = vcmp.ne.f32.partialorder %v5884, %v5982
      %vm6736 = vcmp.ne.f32.partialorder %v5884, %v5986
      %vm6737 = vcmp.ne.f32.partialorder %v5884, %v5990
      %vm6738 = vcmp.ne.f32.partialorder %v5884, %v5994
      %vm6739 = vcmp.ne.f32.partialorder %v5889, %v5902
      %vm6740 = vcmp.ne.f32.partialorder %v5889, %v5906
      %vm6741 = vcmp.ne.f32.partialorder %v5889, %v5910
      %vm6742 = vcmp.ne.f32.partialorder %v5889, %v5914
      %vm6743 = vcmp.ne.f32.partialorder %v5889, %v5918
      %vm6744 = vcmp.ne.f32.partialorder %v5889, %v5922
      %vm6745 = vcmp.ne.f32.partialorder %v5889, %v5926
      %vm6746 = vcmp.ne.f32.partialorder %v5889, %v5930
      %vm6747 = vcmp.ne.f32.partialorder %v5889, %v5934
      %vm6748 = vcmp.ne.f32.partialorder %v5889, %v5938
      %vm6749 = vcmp.ne.f32.partialorder %v5889, %v5942
      %vm6750 = vcmp.ne.f32.partialorder %v5889, %v5946
      %vm6751 = vcmp.ne.f32.partialorder %v5889, %v5950
      %vm6752 = vcmp.ne.f32.partialorder %v5889, %v5954
      %vm6753 = vcmp.ne.f32.partialorder %v5889, %v5958
      %vm6754 = vcmp.ne.f32.partialorder %v5889, %v5962
      %vm6755 = vcmp.ne.f32.partialorder %v5889, %v5966
      %vm6756 = vcmp.ne.f32.partialorder %v5889, %v5970
      %vm6757 = vcmp.ne.f32.partialorder %v5889, %v5974
      %vm6758 = vcmp.ne.f32.partialorder %v5889, %v5978
      %vm6759 = vcmp.ne.f32.partialorder %v5889, %v5982
      %vm6760 = vcmp.ne.f32.partialorder %v5889, %v5986
      %vm6761 = vcmp.ne.f32.partialorder %v5889, %v5990
      %vm6762 = vcmp.ne.f32.partialorder %v5889, %v5994
      %vm6763 = vcmp.ne.f32.partialorder %v5894, %v5902
      %vm6764 = vcmp.ne.f32.partialorder %v5894, %v5906
      %vm6765 = vcmp.ne.f32.partialorder %v5894, %v5910
      %vm6766 = vcmp.ne.f32.partialorder %v5894, %v5914
      %vm6767 = vcmp.ne.f32.partialorder %v5894, %v5918
      %vm6768 = vcmp.ne.f32.partialorder %v5894, %v5922
      %vm6769 = vcmp.ne.f32.partialorder %v5894, %v5926
      %vm6770 = vcmp.ne.f32.partialorder %v5894, %v5930
      %vm6771 = vcmp.ne.f32.partialorder %v5894, %v5934
      %vm6772 = vcmp.ne.f32.partialorder %v5894, %v5938
      %vm6773 = vcmp.ne.f32.partialorder %v5894, %v5942
      %vm6774 = vcmp.ne.f32.partialorder %v5894, %v5946
      %vm6775 = vcmp.ne.f32.partialorder %v5894, %v5950
      %vm6776 = vcmp.ne.f32.partialorder %v5894, %v5954
      %vm6777 = vcmp.ne.f32.partialorder %v5894, %v5958
      %vm6778 = vcmp.ne.f32.partialorder %v5894, %v5962
      %vm6779 = vcmp.ne.f32.partialorder %v5894, %v5966
      %vm6780 = vcmp.ne.f32.partialorder %v5894, %v5970
      %vm6781 = vcmp.ne.f32.partialorder %v5894, %v5974
      %vm6782 = vcmp.ne.f32.partialorder %v5894, %v5978
      %vm6783 = vcmp.ne.f32.partialorder %v5894, %v5982
      %vm6784 = vcmp.ne.f32.partialorder %v5894, %v5986
      %vm6785 = vcmp.ne.f32.partialorder %v5894, %v5990
      %vm6786 = vcmp.ne.f32.partialorder %v5894, %v5994
      %6788 = vset.pattern.permute.xlu0 0
      %6789 = vperm.xlu0 %6788, %v5672
      %v6790 = vpop.permute.xlu0 %6789
      %6793 = vset.pattern.permute.xlu0 0
      %6794 = vperm.xlu0 %6793, %v5673
      %v6795 = vpop.permute.xlu0 %6794
      %6798 = vset.pattern.permute.xlu0 0
      %6799 = vperm.xlu0 %6798, %v5674
      %v6800 = vpop.permute.xlu0 %6799
      %6803 = vset.pattern.permute.xlu0 0
      %6804 = vperm.xlu0 %6803, %v5675
      %v6805 = vpop.permute.xlu0 %6804
      %6808 = vset.pattern.permute.xlu0 0
      %6809 = vperm.xlu0 %6808, %v5676
      %v6810 = vpop.permute.xlu0 %6809
      %6813 = vset.pattern.permute.xlu0 0
      %6814 = vperm.xlu0 %6813, %v5677
      %v6815 = vpop.permute.xlu0 %6814
      %6818 = vset.pattern.permute.xlu0 0
      %6819 = vperm.xlu0 %6818, %v5678
      %v6820 = vpop.permute.xlu0 %6819
      %6823 = vset.pattern.permute.xlu0 0
      %6824 = vperm.xlu0 %6823, %v5679
      %v6825 = vpop.permute.xlu0 %6824
      %6828 = vset.pattern.permute.xlu0 0
      %6829 = vperm.xlu0 %6828, %v5680
      %v6830 = vpop.permute.xlu0 %6829
      %6833 = vset.pattern.permute.xlu0 0
      %6834 = vperm.xlu0 %6833, %v5681
      %v6835 = vpop.permute.xlu0 %6834
      %6838 = vset.pattern.permute.xlu0 0
      %6839 = vperm.xlu0 %6838, %v5682
      %v6840 = vpop.permute.xlu0 %6839
      %6843 = vset.pattern.permute.xlu0 0
      %6844 = vperm.xlu0 %6843, %v5683
      %v6845 = vpop.permute.xlu0 %6844
      %6848 = vset.pattern.permute.xlu0 0
      %6849 = vperm.xlu0 %6848, %v5684
      %v6850 = vpop.permute.xlu0 %6849
      %6853 = vset.pattern.permute.xlu0 0
      %6854 = vperm.xlu0 %6853, %v5685
      %v6855 = vpop.permute.xlu0 %6854
      %6858 = vset.pattern.permute.xlu0 0
      %6859 = vperm.xlu0 %6858, %v5686
      %v6860 = vpop.permute.xlu0 %6859
      %6863 = vset.pattern.permute.xlu0 0
      %6864 = vperm.xlu0 %6863, %v5687
      %v6865 = vpop.permute.xlu0 %6864
      %6868 = vset.pattern.permute.xlu0 0
      %6869 = vperm.xlu0 %6868, %v5688
      %v6870 = vpop.permute.xlu0 %6869
      %6873 = vset.pattern.permute.xlu0 0
      %6874 = vperm.xlu0 %6873, %v5689
      %v6875 = vpop.permute.xlu0 %6874
      %6878 = vset.pattern.permute.xlu0 0
      %6879 = vperm.xlu0 %6878, %v5690
      %v6880 = vpop.permute.xlu0 %6879
      %6883 = vset.pattern.permute.xlu0 0
      %6884 = vperm.xlu0 %6883, %v5691
      %v6885 = vpop.permute.xlu0 %6884
      %6888 = vset.pattern.permute.xlu0 0
      %6889 = vperm.xlu0 %6888, %v5692
      %v6890 = vpop.permute.xlu0 %6889
      %6893 = vset.pattern.permute.xlu0 0
      %6894 = vperm.xlu0 %6893, %v5693
      %v6895 = vpop.permute.xlu0 %6894
      %6898 = vset.pattern.permute.xlu0 0
      %6899 = vperm.xlu0 %6898, %v5694
      %v6900 = vpop.permute.xlu0 %6899
      %6903 = vset.pattern.permute.xlu0 0
      %6904 = vperm.xlu0 %6903, %v5695
      %v6905 = vpop.permute.xlu0 %6904
      %6908 = vset.pattern.permute.xlu0 0
      %6909 = vperm.xlu0 %6908, %v5696
      %v6910 = vpop.permute.xlu0 %6909
      %6913 = vset.pattern.permute.xlu0 0
      %6914 = vperm.xlu0 %6913, %v5697
      %v6915 = vpop.permute.xlu0 %6914
      %6918 = vset.pattern.permute.xlu0 0
      %6919 = vperm.xlu0 %6918, %v5698
      %v6920 = vpop.permute.xlu0 %6919
      %6923 = vset.pattern.permute.xlu0 0
      %6924 = vperm.xlu0 %6923, %v5699
      %v6925 = vpop.permute.xlu0 %6924
      %6928 = vset.pattern.permute.xlu0 0
      %6929 = vperm.xlu0 %6928, %v5700
      %v6930 = vpop.permute.xlu0 %6929
      %6933 = vset.pattern.permute.xlu0 0
      %6934 = vperm.xlu0 %6933, %v5701
      %v6935 = vpop.permute.xlu0 %6934
      %6938 = vset.pattern.permute.xlu0 0
      %6939 = vperm.xlu0 %6938, %v5702
      %v6940 = vpop.permute.xlu0 %6939
      %6943 = vset.pattern.permute.xlu0 0
      %6944 = vperm.xlu0 %6943, %v5703
      %v6945 = vpop.permute.xlu0 %6944
      %v6947 = vsub.f32 %v4072, %v6790
      %v6948 = vsub.f32 %v4073, %v6790
      %v6949 = vsub.f32 %v4074, %v6790
      %v6950 = vsub.f32 %v4075, %v6790
      %v6951 = vsub.f32 %v4076, %v6790
      %v6952 = vsub.f32 %v4077, %v6790
      %v6953 = vsub.f32 %v4078, %v6790
      %v6954 = vsub.f32 %v4079, %v6790
      %v6955 = vsub.f32 %v4080, %v6790
      %v6956 = vsub.f32 %v4081, %v6790
      %v6957 = vsub.f32 %v4082, %v6790
      %v6958 = vsub.f32 %v4083, %v6790
      %v6959 = vsub.f32 %v4084, %v6790
      %v6960 = vsub.f32 %v4085, %v6790
      %v6961 = vsub.f32 %v4086, %v6790
      %v6962 = vsub.f32 %v4087, %v6790
      %v6963 = vsub.f32 %v4088, %v6790
      %v6964 = vsub.f32 %v4089, %v6790
      %v6965 = vsub.f32 %v4090, %v6790
      %v6966 = vsub.f32 %v4091, %v6790
      %v6967 = vsub.f32 %v4092, %v6790
      %v6968 = vsub.f32 %v4093, %v6790
      %v6969 = vsub.f32 %v4094, %v6790
      %v6970 = vsub.f32 %v4095, %v6790
      %v6971 = vsub.f32 %v4096, %v6795
      %v6972 = vsub.f32 %v4097, %v6795
      %v6973 = vsub.f32 %v4098, %v6795
      %v6974 = vsub.f32 %v4099, %v6795
      %v6975 = vsub.f32 %v4100, %v6795
      %v6976 = vsub.f32 %v4101, %v6795
      %v6977 = vsub.f32 %v4102, %v6795
      %v6978 = vsub.f32 %v4103, %v6795
      %v6979 = vsub.f32 %v4104, %v6795
      %v6980 = vsub.f32 %v4105, %v6795
      %v6981 = vsub.f32 %v4106, %v6795
      %v6982 = vsub.f32 %v4107, %v6795
      %v6983 = vsub.f32 %v4108, %v6795
      %v6984 = vsub.f32 %v4109, %v6795
      %v6985 = vsub.f32 %v4110, %v6795
      %v6986 = vsub.f32 %v4111, %v6795
      %v6987 = vsub.f32 %v4112, %v6795
      %v6988 = vsub.f32 %v4113, %v6795
      %v6989 = vsub.f32 %v4114, %v6795
      %v6990 = vsub.f32 %v4115, %v6795
      %v6991 = vsub.f32 %v4116, %v6795
      %v6992 = vsub.f32 %v4117, %v6795
      %v6993 = vsub.f32 %v4118, %v6795
      %v6994 = vsub.f32 %v4119, %v6795
      %v6995 = vsub.f32 %v4120, %v6800
      %v6996 = vsub.f32 %v4121, %v6800
      %v6997 = vsub.f32 %v4122, %v6800
      %v6998 = vsub.f32 %v4123, %v6800
      %v6999 = vsub.f32 %v4124, %v6800
      %v7000 = vsub.f32 %v4125, %v6800
      %v7001 = vsub.f32 %v4126, %v6800
      %v7002 = vsub.f32 %v4127, %v6800
      %v7003 = vsub.f32 %v4128, %v6800
      %v7004 = vsub.f32 %v4129, %v6800
      %v7005 = vsub.f32 %v4130, %v6800
      %v7006 = vsub.f32 %v4131, %v6800
      %v7007 = vsub.f32 %v4132, %v6800
      %v7008 = vsub.f32 %v4133, %v6800
      %v7009 = vsub.f32 %v4134, %v6800
      %v7010 = vsub.f32 %v4135, %v6800
      %v7011 = vsub.f32 %v4136, %v6800
      %v7012 = vsub.f32 %v4137, %v6800
      %v7013 = vsub.f32 %v4138, %v6800
      %v7014 = vsub.f32 %v4139, %v6800
      %v7015 = vsub.f32 %v4140, %v6800
      %v7016 = vsub.f32 %v4141, %v6800
      %v7017 = vsub.f32 %v4142, %v6800
      %v7018 = vsub.f32 %v4143, %v6800
      %v7019 = vsub.f32 %v4144, %v6805
      %v7020 = vsub.f32 %v4145, %v6805
      %v7021 = vsub.f32 %v4146, %v6805
      %v7022 = vsub.f32 %v4147, %v6805
      %v7023 = vsub.f32 %v4148, %v6805
      %v7024 = vsub.f32 %v4149, %v6805
      %v7025 = vsub.f32 %v4150, %v6805
      %v7026 = vsub.f32 %v4151, %v6805
      %v7027 = vsub.f32 %v4152, %v6805
      %v7028 = vsub.f32 %v4153, %v6805
      %v7029 = vsub.f32 %v4154, %v6805
      %v7030 = vsub.f32 %v4155, %v6805
      %v7031 = vsub.f32 %v4156, %v6805
      %v7032 = vsub.f32 %v4157, %v6805
      %v7033 = vsub.f32 %v4158, %v6805
      %v7034 = vsub.f32 %v4159, %v6805
      %v7035 = vsub.f32 %v4160, %v6805
      %v7036 = vsub.f32 %v4161, %v6805
      %v7037 = vsub.f32 %v4162, %v6805
      %v7038 = vsub.f32 %v4163, %v6805
      %v7039 = vsub.f32 %v4164, %v6805
      %v7040 = vsub.f32 %v4165, %v6805
      %v7041 = vsub.f32 %v4166, %v6805
      %v7042 = vsub.f32 %v4167, %v6805
      %v7043 = vsub.f32 %v4168, %v6810
      %v7044 = vsub.f32 %v4169, %v6810
      %v7045 = vsub.f32 %v4170, %v6810
      %v7046 = vsub.f32 %v4171, %v6810
      %v7047 = vsub.f32 %v4172, %v6810
      %v7048 = vsub.f32 %v4173, %v6810
      %v7049 = vsub.f32 %v4174, %v6810
      %v7050 = vsub.f32 %v4175, %v6810
      %v7051 = vsub.f32 %v4176, %v6810
      %v7052 = vsub.f32 %v4177, %v6810
      %v7053 = vsub.f32 %v4178, %v6810
      %v7054 = vsub.f32 %v4179, %v6810
      %v7055 = vsub.f32 %v4180, %v6810
      %v7056 = vsub.f32 %v4181, %v6810
      %v7057 = vsub.f32 %v4182, %v6810
      %v7058 = vsub.f32 %v4183, %v6810
      %v7059 = vsub.f32 %v4184, %v6810
      %v7060 = vsub.f32 %v4185, %v6810
      %v7061 = vsub.f32 %v4186, %v6810
      %v7062 = vsub.f32 %v4187, %v6810
      %v7063 = vsub.f32 %v4188, %v6810
      %v7064 = vsub.f32 %v4189, %v6810
      %v7065 = vsub.f32 %v4190, %v6810
      %v7066 = vsub.f32 %v4191, %v6810
      %v7067 = vsub.f32 %v4192, %v6815
      %v7068 = vsub.f32 %v4193, %v6815
      %v7069 = vsub.f32 %v4194, %v6815
      %v7070 = vsub.f32 %v4195, %v6815
      %v7071 = vsub.f32 %v4196, %v6815
      %v7072 = vsub.f32 %v4197, %v6815
      %v7073 = vsub.f32 %v4198, %v6815
      %v7074 = vsub.f32 %v4199, %v6815
      %v7075 = vsub.f32 %v4200, %v6815
      %v7076 = vsub.f32 %v4201, %v6815
      %v7077 = vsub.f32 %v4202, %v6815
      %v7078 = vsub.f32 %v4203, %v6815
      %v7079 = vsub.f32 %v4204, %v6815
      %v7080 = vsub.f32 %v4205, %v6815
      %v7081 = vsub.f32 %v4206, %v6815
      %v7082 = vsub.f32 %v4207, %v6815
      %v7083 = vsub.f32 %v4208, %v6815
      %v7084 = vsub.f32 %v4209, %v6815
      %v7085 = vsub.f32 %v4210, %v6815
      %v7086 = vsub.f32 %v4211, %v6815
      %v7087 = vsub.f32 %v4212, %v6815
      %v7088 = vsub.f32 %v4213, %v6815
      %v7089 = vsub.f32 %v4214, %v6815
      %v7090 = vsub.f32 %v4215, %v6815
      %v7091 = vsub.f32 %v4216, %v6820
      %v7092 = vsub.f32 %v4217, %v6820
      %v7093 = vsub.f32 %v4218, %v6820
      %v7094 = vsub.f32 %v4219, %v6820
      %v7095 = vsub.f32 %v4220, %v6820
      %v7096 = vsub.f32 %v4221, %v6820
      %v7097 = vsub.f32 %v4222, %v6820
      %v7098 = vsub.f32 %v4223, %v6820
      %v7099 = vsub.f32 %v4224, %v6820
      %v7100 = vsub.f32 %v4225, %v6820
      %v7101 = vsub.f32 %v4226, %v6820
      %v7102 = vsub.f32 %v4227, %v6820
      %v7103 = vsub.f32 %v4228, %v6820
      %v7104 = vsub.f32 %v4229, %v6820
      %v7105 = vsub.f32 %v4230, %v6820
      %v7106 = vsub.f32 %v4231, %v6820
      %v7107 = vsub.f32 %v4232, %v6820
      %v7108 = vsub.f32 %v4233, %v6820
      %v7109 = vsub.f32 %v4234, %v6820
      %v7110 = vsub.f32 %v4235, %v6820
      %v7111 = vsub.f32 %v4236, %v6820
      %v7112 = vsub.f32 %v4237, %v6820
      %v7113 = vsub.f32 %v4238, %v6820
      %v7114 = vsub.f32 %v4239, %v6820
      %v7115 = vsub.f32 %v4240, %v6825
      %v7116 = vsub.f32 %v4241, %v6825
      %v7117 = vsub.f32 %v4242, %v6825
      %v7118 = vsub.f32 %v4243, %v6825
      %v7119 = vsub.f32 %v4244, %v6825
      %v7120 = vsub.f32 %v4245, %v6825
      %v7121 = vsub.f32 %v4246, %v6825
      %v7122 = vsub.f32 %v4247, %v6825
      %v7123 = vsub.f32 %v4248, %v6825
      %v7124 = vsub.f32 %v4249, %v6825
      %v7125 = vsub.f32 %v4250, %v6825
      %v7126 = vsub.f32 %v4251, %v6825
      %v7127 = vsub.f32 %v4252, %v6825
      %v7128 = vsub.f32 %v4253, %v6825
      %v7129 = vsub.f32 %v4254, %v6825
      %v7130 = vsub.f32 %v4255, %v6825
      %v7131 = vsub.f32 %v4256, %v6825
      %v7132 = vsub.f32 %v4257, %v6825
      %v7133 = vsub.f32 %v4258, %v6825
      %v7134 = vsub.f32 %v4259, %v6825
      %v7135 = vsub.f32 %v4260, %v6825
      %v7136 = vsub.f32 %v4261, %v6825
      %v7137 = vsub.f32 %v4262, %v6825
      %v7138 = vsub.f32 %v4263, %v6825
      %v7139 = vsub.f32 %v4264, %v6830
      %v7140 = vsub.f32 %v4265, %v6830
      %v7141 = vsub.f32 %v4266, %v6830
      %v7142 = vsub.f32 %v4267, %v6830
      %v7143 = vsub.f32 %v4268, %v6830
      %v7144 = vsub.f32 %v4269, %v6830
      %v7145 = vsub.f32 %v4270, %v6830
      %v7146 = vsub.f32 %v4271, %v6830
      %v7147 = vsub.f32 %v4272, %v6830
      %v7148 = vsub.f32 %v4273, %v6830
      %v7149 = vsub.f32 %v4274, %v6830
      %v7150 = vsub.f32 %v4275, %v6830
      %v7151 = vsub.f32 %v4276, %v6830
      %v7152 = vsub.f32 %v4277, %v6830
      %v7153 = vsub.f32 %v4278, %v6830
      %v7154 = vsub.f32 %v4279, %v6830
      %v7155 = vsub.f32 %v4280, %v6830
      %v7156 = vsub.f32 %v4281, %v6830
      %v7157 = vsub.f32 %v4282, %v6830
      %v7158 = vsub.f32 %v4283, %v6830
      %v7159 = vsub.f32 %v4284, %v6830
      %v7160 = vsub.f32 %v4285, %v6830
      %v7161 = vsub.f32 %v4286, %v6830
      %v7162 = vsub.f32 %v4287, %v6830
      %v7163 = vsub.f32 %v4288, %v6835
      %v7164 = vsub.f32 %v4289, %v6835
      %v7165 = vsub.f32 %v4290, %v6835
      %v7166 = vsub.f32 %v4291, %v6835
      %v7167 = vsub.f32 %v4292, %v6835
      %v7168 = vsub.f32 %v4293, %v6835
      %v7169 = vsub.f32 %v4294, %v6835
      %v7170 = vsub.f32 %v4295, %v6835
      %v7171 = vsub.f32 %v4296, %v6835
      %v7172 = vsub.f32 %v4297, %v6835
      %v7173 = vsub.f32 %v4298, %v6835
      %v7174 = vsub.f32 %v4299, %v6835
      %v7175 = vsub.f32 %v4300, %v6835
      %v7176 = vsub.f32 %v4301, %v6835
      %v7177 = vsub.f32 %v4302, %v6835
      %v7178 = vsub.f32 %v4303, %v6835
      %v7179 = vsub.f32 %v4304, %v6835
      %v7180 = vsub.f32 %v4305, %v6835
      %v7181 = vsub.f32 %v4306, %v6835
      %v7182 = vsub.f32 %v4307, %v6835
      %v7183 = vsub.f32 %v4308, %v6835
      %v7184 = vsub.f32 %v4309, %v6835
      %v7185 = vsub.f32 %v4310, %v6835
      %v7186 = vsub.f32 %v4311, %v6835
      %v7187 = vsub.f32 %v4312, %v6840
      %v7188 = vsub.f32 %v4313, %v6840
      %v7189 = vsub.f32 %v4314, %v6840
      %v7190 = vsub.f32 %v4315, %v6840
      %v7191 = vsub.f32 %v4316, %v6840
      %v7192 = vsub.f32 %v4317, %v6840
      %v7193 = vsub.f32 %v4318, %v6840
      %v7194 = vsub.f32 %v4319, %v6840
      %v7195 = vsub.f32 %v4320, %v6840
      %v7196 = vsub.f32 %v4321, %v6840
      %v7197 = vsub.f32 %v4322, %v6840
      %v7198 = vsub.f32 %v4323, %v6840
      %v7199 = vsub.f32 %v4324, %v6840
      %v7200 = vsub.f32 %v4325, %v6840
      %v7201 = vsub.f32 %v4326, %v6840
      %v7202 = vsub.f32 %v4327, %v6840
      %v7203 = vsub.f32 %v4328, %v6840
      %v7204 = vsub.f32 %v4329, %v6840
      %v7205 = vsub.f32 %v4330, %v6840
      %v7206 = vsub.f32 %v4331, %v6840
      %v7207 = vsub.f32 %v4332, %v6840
      %v7208 = vsub.f32 %v4333, %v6840
      %v7209 = vsub.f32 %v4334, %v6840
      %v7210 = vsub.f32 %v4335, %v6840
      %v7211 = vsub.f32 %v4336, %v6845
      %v7212 = vsub.f32 %v4337, %v6845
      %v7213 = vsub.f32 %v4338, %v6845
      %v7214 = vsub.f32 %v4339, %v6845
      %v7215 = vsub.f32 %v4340, %v6845
      %v7216 = vsub.f32 %v4341, %v6845
      %v7217 = vsub.f32 %v4342, %v6845
      %v7218 = vsub.f32 %v4343, %v6845
      %v7219 = vsub.f32 %v4344, %v6845
      %v7220 = vsub.f32 %v4345, %v6845
      %v7221 = vsub.f32 %v4346, %v6845
      %v7222 = vsub.f32 %v4347, %v6845
      %v7223 = vsub.f32 %v4348, %v6845
      %v7224 = vsub.f32 %v4349, %v6845
      %v7225 = vsub.f32 %v4350, %v6845
      %v7226 = vsub.f32 %v4351, %v6845
      %v7227 = vsub.f32 %v4352, %v6845
      %v7228 = vsub.f32 %v4353, %v6845
      %v7229 = vsub.f32 %v4354, %v6845
      %v7230 = vsub.f32 %v4355, %v6845
      %v7231 = vsub.f32 %v4356, %v6845
      %v7232 = vsub.f32 %v4357, %v6845
      %v7233 = vsub.f32 %v4358, %v6845
      %v7234 = vsub.f32 %v4359, %v6845
      %v7235 = vsub.f32 %v4360, %v6850
      %v7236 = vsub.f32 %v4361, %v6850
      %v7237 = vsub.f32 %v4362, %v6850
      %v7238 = vsub.f32 %v4363, %v6850
      %v7239 = vsub.f32 %v4364, %v6850
      %v7240 = vsub.f32 %v4365, %v6850
      %v7241 = vsub.f32 %v4366, %v6850
      %v7242 = vsub.f32 %v4367, %v6850
      %v7243 = vsub.f32 %v4368, %v6850
      %v7244 = vsub.f32 %v4369, %v6850
      %v7245 = vsub.f32 %v4370, %v6850
      %v7246 = vsub.f32 %v4371, %v6850
      %v7247 = vsub.f32 %v4372, %v6850
      %v7248 = vsub.f32 %v4373, %v6850
      %v7249 = vsub.f32 %v4374, %v6850
      %v7250 = vsub.f32 %v4375, %v6850
      %v7251 = vsub.f32 %v4376, %v6850
      %v7252 = vsub.f32 %v4377, %v6850
      %v7253 = vsub.f32 %v4378, %v6850
      %v7254 = vsub.f32 %v4379, %v6850
      %v7255 = vsub.f32 %v4380, %v6850
      %v7256 = vsub.f32 %v4381, %v6850
      %v7257 = vsub.f32 %v4382, %v6850
      %v7258 = vsub.f32 %v4383, %v6850
      %v7259 = vsub.f32 %v4384, %v6855
      %v7260 = vsub.f32 %v4385, %v6855
      %v7261 = vsub.f32 %v4386, %v6855
      %v7262 = vsub.f32 %v4387, %v6855
      %v7263 = vsub.f32 %v4388, %v6855
      %v7264 = vsub.f32 %v4389, %v6855
      %v7265 = vsub.f32 %v4390, %v6855
      %v7266 = vsub.f32 %v4391, %v6855
      %v7267 = vsub.f32 %v4392, %v6855
      %v7268 = vsub.f32 %v4393, %v6855
      %v7269 = vsub.f32 %v4394, %v6855
      %v7270 = vsub.f32 %v4395, %v6855
      %v7271 = vsub.f32 %v4396, %v6855
      %v7272 = vsub.f32 %v4397, %v6855
      %v7273 = vsub.f32 %v4398, %v6855
      %v7274 = vsub.f32 %v4399, %v6855
      %v7275 = vsub.f32 %v4400, %v6855
      %v7276 = vsub.f32 %v4401, %v6855
      %v7277 = vsub.f32 %v4402, %v6855
      %v7278 = vsub.f32 %v4403, %v6855
      %v7279 = vsub.f32 %v4404, %v6855
      %v7280 = vsub.f32 %v4405, %v6855
      %v7281 = vsub.f32 %v4406, %v6855
      %v7282 = vsub.f32 %v4407, %v6855
      %v7283 = vsub.f32 %v4408, %v6860
      %v7284 = vsub.f32 %v4409, %v6860
      %v7285 = vsub.f32 %v4410, %v6860
      %v7286 = vsub.f32 %v4411, %v6860
      %v7287 = vsub.f32 %v4412, %v6860
      %v7288 = vsub.f32 %v4413, %v6860
      %v7289 = vsub.f32 %v4414, %v6860
      %v7290 = vsub.f32 %v4415, %v6860
      %v7291 = vsub.f32 %v4416, %v6860
      %v7292 = vsub.f32 %v4417, %v6860
      %v7293 = vsub.f32 %v4418, %v6860
      %v7294 = vsub.f32 %v4419, %v6860
      %v7295 = vsub.f32 %v4420, %v6860
      %v7296 = vsub.f32 %v4421, %v6860
      %v7297 = vsub.f32 %v4422, %v6860
      %v7298 = vsub.f32 %v4423, %v6860
      %v7299 = vsub.f32 %v4424, %v6860
      %v7300 = vsub.f32 %v4425, %v6860
      %v7301 = vsub.f32 %v4426, %v6860
      %v7302 = vsub.f32 %v4427, %v6860
      %v7303 = vsub.f32 %v4428, %v6860
      %v7304 = vsub.f32 %v4429, %v6860
      %v7305 = vsub.f32 %v4430, %v6860
      %v7306 = vsub.f32 %v4431, %v6860
      %v7307 = vsub.f32 %v4432, %v6865
      %v7308 = vsub.f32 %v4433, %v6865
      %v7309 = vsub.f32 %v4434, %v6865
      %v7310 = vsub.f32 %v4435, %v6865
      %v7311 = vsub.f32 %v4436, %v6865
      %v7312 = vsub.f32 %v4437, %v6865
      %v7313 = vsub.f32 %v4438, %v6865
      %v7314 = vsub.f32 %v4439, %v6865
      %v7315 = vsub.f32 %v4440, %v6865
      %v7316 = vsub.f32 %v4441, %v6865
      %v7317 = vsub.f32 %v4442, %v6865
      %v7318 = vsub.f32 %v4443, %v6865
      %v7319 = vsub.f32 %v4444, %v6865
      %v7320 = vsub.f32 %v4445, %v6865
      %v7321 = vsub.f32 %v4446, %v6865
      %v7322 = vsub.f32 %v4447, %v6865
      %v7323 = vsub.f32 %v4448, %v6865
      %v7324 = vsub.f32 %v4449, %v6865
      %v7325 = vsub.f32 %v4450, %v6865
      %v7326 = vsub.f32 %v4451, %v6865
      %v7327 = vsub.f32 %v4452, %v6865
      %v7328 = vsub.f32 %v4453, %v6865
      %v7329 = vsub.f32 %v4454, %v6865
      %v7330 = vsub.f32 %v4455, %v6865
      %v7331 = vsub.f32 %v4456, %v6870
      %v7332 = vsub.f32 %v4457, %v6870
      %v7333 = vsub.f32 %v4458, %v6870
      %v7334 = vsub.f32 %v4459, %v6870
      %v7335 = vsub.f32 %v4460, %v6870
      %v7336 = vsub.f32 %v4461, %v6870
      %v7337 = vsub.f32 %v4462, %v6870
      %v7338 = vsub.f32 %v4463, %v6870
      %v7339 = vsub.f32 %v4464, %v6870
      %v7340 = vsub.f32 %v4465, %v6870
      %v7341 = vsub.f32 %v4466, %v6870
      %v7342 = vsub.f32 %v4467, %v6870
      %v7343 = vsub.f32 %v4468, %v6870
      %v7344 = vsub.f32 %v4469, %v6870
      %v7345 = vsub.f32 %v4470, %v6870
      %v7346 = vsub.f32 %v4471, %v6870
      %v7347 = vsub.f32 %v4472, %v6870
      %v7348 = vsub.f32 %v4473, %v6870
      %v7349 = vsub.f32 %v4474, %v6870
      %v7350 = vsub.f32 %v4475, %v6870
      %v7351 = vsub.f32 %v4476, %v6870
      %v7352 = vsub.f32 %v4477, %v6870
      %v7353 = vsub.f32 %v4478, %v6870
      %v7354 = vsub.f32 %v4479, %v6870
      %v7355 = vsub.f32 %v4480, %v6875
      %v7356 = vsub.f32 %v4481, %v6875
      %v7357 = vsub.f32 %v4482, %v6875
      %v7358 = vsub.f32 %v4483, %v6875
      %v7359 = vsub.f32 %v4484, %v6875
      %v7360 = vsub.f32 %v4485, %v6875
      %v7361 = vsub.f32 %v4486, %v6875
      %v7362 = vsub.f32 %v4487, %v6875
      %v7363 = vsub.f32 %v4488, %v6875
      %v7364 = vsub.f32 %v4489, %v6875
      %v7365 = vsub.f32 %v4490, %v6875
      %v7366 = vsub.f32 %v4491, %v6875
      %v7367 = vsub.f32 %v4492, %v6875
      %v7368 = vsub.f32 %v4493, %v6875
      %v7369 = vsub.f32 %v4494, %v6875
      %v7370 = vsub.f32 %v4495, %v6875
      %v7371 = vsub.f32 %v4496, %v6875
      %v7372 = vsub.f32 %v4497, %v6875
      %v7373 = vsub.f32 %v4498, %v6875
      %v7374 = vsub.f32 %v4499, %v6875
      %v7375 = vsub.f32 %v4500, %v6875
      %v7376 = vsub.f32 %v4501, %v6875
      %v7377 = vsub.f32 %v4502, %v6875
      %v7378 = vsub.f32 %v4503, %v6875
      %v7379 = vsub.f32 %v4504, %v6880
      %v7380 = vsub.f32 %v4505, %v6880
      %v7381 = vsub.f32 %v4506, %v6880
      %v7382 = vsub.f32 %v4507, %v6880
      %v7383 = vsub.f32 %v4508, %v6880
      %v7384 = vsub.f32 %v4509, %v6880
      %v7385 = vsub.f32 %v4510, %v6880
      %v7386 = vsub.f32 %v4511, %v6880
      %v7387 = vsub.f32 %v4512, %v6880
      %v7388 = vsub.f32 %v4513, %v6880
      %v7389 = vsub.f32 %v4514, %v6880
      %v7390 = vsub.f32 %v4515, %v6880
      %v7391 = vsub.f32 %v4516, %v6880
      %v7392 = vsub.f32 %v4517, %v6880
      %v7393 = vsub.f32 %v4518, %v6880
      %v7394 = vsub.f32 %v4519, %v6880
      %v7395 = vsub.f32 %v4520, %v6880
      %v7396 = vsub.f32 %v4521, %v6880
      %v7397 = vsub.f32 %v4522, %v6880
      %v7398 = vsub.f32 %v4523, %v6880
      %v7399 = vsub.f32 %v4524, %v6880
      %v7400 = vsub.f32 %v4525, %v6880
      %v7401 = vsub.f32 %v4526, %v6880
      %v7402 = vsub.f32 %v4527, %v6880
      %v7403 = vsub.f32 %v4528, %v6885
      %v7404 = vsub.f32 %v4529, %v6885
      %v7405 = vsub.f32 %v4530, %v6885
      %v7406 = vsub.f32 %v4531, %v6885
      %v7407 = vsub.f32 %v4532, %v6885
      %v7408 = vsub.f32 %v4533, %v6885
      %v7409 = vsub.f32 %v4534, %v6885
      %v7410 = vsub.f32 %v4535, %v6885
      %v7411 = vsub.f32 %v4536, %v6885
      %v7412 = vsub.f32 %v4537, %v6885
      %v7413 = vsub.f32 %v4538, %v6885
      %v7414 = vsub.f32 %v4539, %v6885
      %v7415 = vsub.f32 %v4540, %v6885
      %v7416 = vsub.f32 %v4541, %v6885
      %v7417 = vsub.f32 %v4542, %v6885
      %v7418 = vsub.f32 %v4543, %v6885
      %v7419 = vsub.f32 %v4544, %v6885
      %v7420 = vsub.f32 %v4545, %v6885
      %v7421 = vsub.f32 %v4546, %v6885
      %v7422 = vsub.f32 %v4547, %v6885
      %v7423 = vsub.f32 %v4548, %v6885
      %v7424 = vsub.f32 %v4549, %v6885
      %v7425 = vsub.f32 %v4550, %v6885
      %v7426 = vsub.f32 %v4551, %v6885
      %v7427 = vsub.f32 %v4552, %v6890
      %v7428 = vsub.f32 %v4553, %v6890
      %v7429 = vsub.f32 %v4554, %v6890
      %v7430 = vsub.f32 %v4555, %v6890
      %v7431 = vsub.f32 %v4556, %v6890
      %v7432 = vsub.f32 %v4557, %v6890
      %v7433 = vsub.f32 %v4558, %v6890
      %v7434 = vsub.f32 %v4559, %v6890
      %v7435 = vsub.f32 %v4560, %v6890
      %v7436 = vsub.f32 %v4561, %v6890
      %v7437 = vsub.f32 %v4562, %v6890
      %v7438 = vsub.f32 %v4563, %v6890
      %v7439 = vsub.f32 %v4564, %v6890
      %v7440 = vsub.f32 %v4565, %v6890
      %v7441 = vsub.f32 %v4566, %v6890
      %v7442 = vsub.f32 %v4567, %v6890
      %v7443 = vsub.f32 %v4568, %v6890
      %v7444 = vsub.f32 %v4569, %v6890
      %v7445 = vsub.f32 %v4570, %v6890
      %v7446 = vsub.f32 %v4571, %v6890
      %v7447 = vsub.f32 %v4572, %v6890
      %v7448 = vsub.f32 %v4573, %v6890
      %v7449 = vsub.f32 %v4574, %v6890
      %v7450 = vsub.f32 %v4575, %v6890
      %v7451 = vsub.f32 %v4576, %v6895
      %v7452 = vsub.f32 %v4577, %v6895
      %v7453 = vsub.f32 %v4578, %v6895
      %v7454 = vsub.f32 %v4579, %v6895
      %v7455 = vsub.f32 %v4580, %v6895
      %v7456 = vsub.f32 %v4581, %v6895
      %v7457 = vsub.f32 %v4582, %v6895
      %v7458 = vsub.f32 %v4583, %v6895
      %v7459 = vsub.f32 %v4584, %v6895
      %v7460 = vsub.f32 %v4585, %v6895
      %v7461 = vsub.f32 %v4586, %v6895
      %v7462 = vsub.f32 %v4587, %v6895
      %v7463 = vsub.f32 %v4588, %v6895
      %v7464 = vsub.f32 %v4589, %v6895
      %v7465 = vsub.f32 %v4590, %v6895
      %v7466 = vsub.f32 %v4591, %v6895
      %v7467 = vsub.f32 %v4592, %v6895
      %v7468 = vsub.f32 %v4593, %v6895
      %v7469 = vsub.f32 %v4594, %v6895
      %v7470 = vsub.f32 %v4595, %v6895
      %v7471 = vsub.f32 %v4596, %v6895
      %v7472 = vsub.f32 %v4597, %v6895
      %v7473 = vsub.f32 %v4598, %v6895
      %v7474 = vsub.f32 %v4599, %v6895
      %v7475 = vsub.f32 %v4600, %v6900
      %v7476 = vsub.f32 %v4601, %v6900
      %v7477 = vsub.f32 %v4602, %v6900
      %v7478 = vsub.f32 %v4603, %v6900
      %v7479 = vsub.f32 %v4604, %v6900
      %v7480 = vsub.f32 %v4605, %v6900
      %v7481 = vsub.f32 %v4606, %v6900
      %v7482 = vsub.f32 %v4607, %v6900
      %v7483 = vsub.f32 %v4608, %v6900
      %v7484 = vsub.f32 %v4609, %v6900
      %v7485 = vsub.f32 %v4610, %v6900
      %v7486 = vsub.f32 %v4611, %v6900
      %v7487 = vsub.f32 %v4612, %v6900
      %v7488 = vsub.f32 %v4613, %v6900
      %v7489 = vsub.f32 %v4614, %v6900
      %v7490 = vsub.f32 %v4615, %v6900
      %v7491 = vsub.f32 %v4616, %v6900
      %v7492 = vsub.f32 %v4617, %v6900
      %v7493 = vsub.f32 %v4618, %v6900
      %v7494 = vsub.f32 %v4619, %v6900
      %v7495 = vsub.f32 %v4620, %v6900
      %v7496 = vsub.f32 %v4621, %v6900
      %v7497 = vsub.f32 %v4622, %v6900
      %v7498 = vsub.f32 %v4623, %v6900
      %v7499 = vsub.f32 %v4624, %v6905
      %v7500 = vsub.f32 %v4625, %v6905
      %v7501 = vsub.f32 %v4626, %v6905
      %v7502 = vsub.f32 %v4627, %v6905
      %v7503 = vsub.f32 %v4628, %v6905
      %v7504 = vsub.f32 %v4629, %v6905
      %v7505 = vsub.f32 %v4630, %v6905
      %v7506 = vsub.f32 %v4631, %v6905
      %v7507 = vsub.f32 %v4632, %v6905
      %v7508 = vsub.f32 %v4633, %v6905
      %v7509 = vsub.f32 %v4634, %v6905
      %v7510 = vsub.f32 %v4635, %v6905
      %v7511 = vsub.f32 %v4636, %v6905
      %v7512 = vsub.f32 %v4637, %v6905
      %v7513 = vsub.f32 %v4638, %v6905
      %v7514 = vsub.f32 %v4639, %v6905
      %v7515 = vsub.f32 %v4640, %v6905
      %v7516 = vsub.f32 %v4641, %v6905
      %v7517 = vsub.f32 %v4642, %v6905
      %v7518 = vsub.f32 %v4643, %v6905
      %v7519 = vsub.f32 %v4644, %v6905
      %v7520 = vsub.f32 %v4645, %v6905
      %v7521 = vsub.f32 %v4646, %v6905
      %v7522 = vsub.f32 %v4647, %v6905
      %v7523 = vsub.f32 %v4648, %v6910
      %v7524 = vsub.f32 %v4649, %v6910
      %v7525 = vsub.f32 %v4650, %v6910
      %v7526 = vsub.f32 %v4651, %v6910
      %v7527 = vsub.f32 %v4652, %v6910
      %v7528 = vsub.f32 %v4653, %v6910
      %v7529 = vsub.f32 %v4654, %v6910
      %v7530 = vsub.f32 %v4655, %v6910
      %v7531 = vsub.f32 %v4656, %v6910
      %v7532 = vsub.f32 %v4657, %v6910
      %v7533 = vsub.f32 %v4658, %v6910
      %v7534 = vsub.f32 %v4659, %v6910
      %v7535 = vsub.f32 %v4660, %v6910
      %v7536 = vsub.f32 %v4661, %v6910
      %v7537 = vsub.f32 %v4662, %v6910
      %v7538 = vsub.f32 %v4663, %v6910
      %v7539 = vsub.f32 %v4664, %v6910
      %v7540 = vsub.f32 %v4665, %v6910
      %v7541 = vsub.f32 %v4666, %v6910
      %v7542 = vsub.f32 %v4667, %v6910
      %v7543 = vsub.f32 %v4668, %v6910
      %v7544 = vsub.f32 %v4669, %v6910
      %v7545 = vsub.f32 %v4670, %v6910
      %v7546 = vsub.f32 %v4671, %v6910
      %v7547 = vsub.f32 %v4672, %v6915
      %v7548 = vsub.f32 %v4673, %v6915
      %v7549 = vsub.f32 %v4674, %v6915
      %v7550 = vsub.f32 %v4675, %v6915
      %v7551 = vsub.f32 %v4676, %v6915
      %v7552 = vsub.f32 %v4677, %v6915
      %v7553 = vsub.f32 %v4678, %v6915
      %v7554 = vsub.f32 %v4679, %v6915
      %v7555 = vsub.f32 %v4680, %v6915
      %v7556 = vsub.f32 %v4681, %v6915
      %v7557 = vsub.f32 %v4682, %v6915
      %v7558 = vsub.f32 %v4683, %v6915
      %v7559 = vsub.f32 %v4684, %v6915
      %v7560 = vsub.f32 %v4685, %v6915
      %v7561 = vsub.f32 %v4686, %v6915
      %v7562 = vsub.f32 %v4687, %v6915
      %v7563 = vsub.f32 %v4688, %v6915
      %v7564 = vsub.f32 %v4689, %v6915
      %v7565 = vsub.f32 %v4690, %v6915
      %v7566 = vsub.f32 %v4691, %v6915
      %v7567 = vsub.f32 %v4692, %v6915
      %v7568 = vsub.f32 %v4693, %v6915
      %v7569 = vsub.f32 %v4694, %v6915
      %v7570 = vsub.f32 %v4695, %v6915
      %v7571 = vsub.f32 %v4696, %v6920
      %v7572 = vsub.f32 %v4697, %v6920
      %v7573 = vsub.f32 %v4698, %v6920
      %v7574 = vsub.f32 %v4699, %v6920
      %v7575 = vsub.f32 %v4700, %v6920
      %v7576 = vsub.f32 %v4701, %v6920
      %v7577 = vsub.f32 %v4702, %v6920
      %v7578 = vsub.f32 %v4703, %v6920
      %v7579 = vsub.f32 %v4704, %v6920
      %v7580 = vsub.f32 %v4705, %v6920
      %v7581 = vsub.f32 %v4706, %v6920
      %v7582 = vsub.f32 %v4707, %v6920
      %v7583 = vsub.f32 %v4708, %v6920
      %v7584 = vsub.f32 %v4709, %v6920
      %v7585 = vsub.f32 %v4710, %v6920
      %v7586 = vsub.f32 %v4711, %v6920
      %v7587 = vsub.f32 %v4712, %v6920
      %v7588 = vsub.f32 %v4713, %v6920
      %v7589 = vsub.f32 %v4714, %v6920
      %v7590 = vsub.f32 %v4715, %v6920
      %v7591 = vsub.f32 %v4716, %v6920
      %v7592 = vsub.f32 %v4717, %v6920
      %v7593 = vsub.f32 %v4718, %v6920
      %v7594 = vsub.f32 %v4719, %v6920
      %v7595 = vsub.f32 %v4720, %v6925
      %v7596 = vsub.f32 %v4721, %v6925
      %v7597 = vsub.f32 %v4722, %v6925
      %v7598 = vsub.f32 %v4723, %v6925
      %v7599 = vsub.f32 %v4724, %v6925
      %v7600 = vsub.f32 %v4725, %v6925
      %v7601 = vsub.f32 %v4726, %v6925
      %v7602 = vsub.f32 %v4727, %v6925
      %v7603 = vsub.f32 %v4728, %v6925
      %v7604 = vsub.f32 %v4729, %v6925
      %v7605 = vsub.f32 %v4730, %v6925
      %v7606 = vsub.f32 %v4731, %v6925
      %v7607 = vsub.f32 %v4732, %v6925
      %v7608 = vsub.f32 %v4733, %v6925
      %v7609 = vsub.f32 %v4734, %v6925
      %v7610 = vsub.f32 %v4735, %v6925
      %v7611 = vsub.f32 %v4736, %v6925
      %v7612 = vsub.f32 %v4737, %v6925
      %v7613 = vsub.f32 %v4738, %v6925
      %v7614 = vsub.f32 %v4739, %v6925
      %v7615 = vsub.f32 %v4740, %v6925
      %v7616 = vsub.f32 %v4741, %v6925
      %v7617 = vsub.f32 %v4742, %v6925
      %v7618 = vsub.f32 %v4743, %v6925
      %v7619 = vsub.f32 %v4744, %v6930
      %v7620 = vsub.f32 %v4745, %v6930
      %v7621 = vsub.f32 %v4746, %v6930
      %v7622 = vsub.f32 %v4747, %v6930
      %v7623 = vsub.f32 %v4748, %v6930
      %v7624 = vsub.f32 %v4749, %v6930
      %v7625 = vsub.f32 %v4750, %v6930
      %v7626 = vsub.f32 %v4751, %v6930
      %v7627 = vsub.f32 %v4752, %v6930
      %v7628 = vsub.f32 %v4753, %v6930
      %v7629 = vsub.f32 %v4754, %v6930
      %v7630 = vsub.f32 %v4755, %v6930
      %v7631 = vsub.f32 %v4756, %v6930
      %v7632 = vsub.f32 %v4757, %v6930
      %v7633 = vsub.f32 %v4758, %v6930
      %v7634 = vsub.f32 %v4759, %v6930
      %v7635 = vsub.f32 %v4760, %v6930
      %v7636 = vsub.f32 %v4761, %v6930
      %v7637 = vsub.f32 %v4762, %v6930
      %v7638 = vsub.f32 %v4763, %v6930
      %v7639 = vsub.f32 %v4764, %v6930
      %v7640 = vsub.f32 %v4765, %v6930
      %v7641 = vsub.f32 %v4766, %v6930
      %v7642 = vsub.f32 %v4767, %v6930
      %v7643 = vsub.f32 %v4768, %v6935
      %v7644 = vsub.f32 %v4769, %v6935
      %v7645 = vsub.f32 %v4770, %v6935
      %v7646 = vsub.f32 %v4771, %v6935
      %v7647 = vsub.f32 %v4772, %v6935
      %v7648 = vsub.f32 %v4773, %v6935
      %v7649 = vsub.f32 %v4774, %v6935
      %v7650 = vsub.f32 %v4775, %v6935
      %v7651 = vsub.f32 %v4776, %v6935
      %v7652 = vsub.f32 %v4777, %v6935
      %v7653 = vsub.f32 %v4778, %v6935
      %v7654 = vsub.f32 %v4779, %v6935
      %v7655 = vsub.f32 %v4780, %v6935
      %v7656 = vsub.f32 %v4781, %v6935
      %v7657 = vsub.f32 %v4782, %v6935
      %v7658 = vsub.f32 %v4783, %v6935
      %v7659 = vsub.f32 %v4784, %v6935
      %v7660 = vsub.f32 %v4785, %v6935
      %v7661 = vsub.f32 %v4786, %v6935
      %v7662 = vsub.f32 %v4787, %v6935
      %v7663 = vsub.f32 %v4788, %v6935
      %v7664 = vsub.f32 %v4789, %v6935
      %v7665 = vsub.f32 %v4790, %v6935
      %v7666 = vsub.f32 %v4791, %v6935
      %v7667 = vsub.f32 %v4792, %v6940
      %v7668 = vsub.f32 %v4793, %v6940
      %v7669 = vsub.f32 %v4794, %v6940
      %v7670 = vsub.f32 %v4795, %v6940
      %v7671 = vsub.f32 %v4796, %v6940
      %v7672 = vsub.f32 %v4797, %v6940
      %v7673 = vsub.f32 %v4798, %v6940
      %v7674 = vsub.f32 %v4799, %v6940
      %v7675 = vsub.f32 %v4800, %v6940
      %v7676 = vsub.f32 %v4801, %v6940
      %v7677 = vsub.f32 %v4802, %v6940
      %v7678 = vsub.f32 %v4803, %v6940
      %v7679 = vsub.f32 %v4804, %v6940
      %v7680 = vsub.f32 %v4805, %v6940
      %v7681 = vsub.f32 %v4806, %v6940
      %v7682 = vsub.f32 %v4807, %v6940
      %v7683 = vsub.f32 %v4808, %v6940
      %v7684 = vsub.f32 %v4809, %v6940
      %v7685 = vsub.f32 %v4810, %v6940
      %v7686 = vsub.f32 %v4811, %v6940
      %v7687 = vsub.f32 %v4812, %v6940
      %v7688 = vsub.f32 %v4813, %v6940
      %v7689 = vsub.f32 %v4814, %v6940
      %v7690 = vsub.f32 %v4815, %v6940
      %v7691 = vsub.f32 %v4816, %v6945
      %v7692 = vsub.f32 %v4817, %v6945
      %v7693 = vsub.f32 %v4818, %v6945
      %v7694 = vsub.f32 %v4819, %v6945
      %v7695 = vsub.f32 %v4820, %v6945
      %v7696 = vsub.f32 %v4821, %v6945
      %v7697 = vsub.f32 %v4822, %v6945
      %v7698 = vsub.f32 %v4823, %v6945
      %v7699 = vsub.f32 %v4824, %v6945
      %v7700 = vsub.f32 %v4825, %v6945
      %v7701 = vsub.f32 %v4826, %v6945
      %v7702 = vsub.f32 %v4827, %v6945
      %v7703 = vsub.f32 %v4828, %v6945
      %v7704 = vsub.f32 %v4829, %v6945
      %v7705 = vsub.f32 %v4830, %v6945
      %v7706 = vsub.f32 %v4831, %v6945
      %v7707 = vsub.f32 %v4832, %v6945
      %v7708 = vsub.f32 %v4833, %v6945
      %v7709 = vsub.f32 %v4834, %v6945
      %v7710 = vsub.f32 %v4835, %v6945
      %v7711 = vsub.f32 %v4836, %v6945
      %v7712 = vsub.f32 %v4837, %v6945
      %v7713 = vsub.f32 %v4838, %v6945
      %v7714 = vsub.f32 %v4839, %v6945
      %v7715 = vmul.f32 %v6947, 1.442695
      %v7716 = vpow.pop %v7715
      %v7717 = vmul.f32 %v6948, 1.442695
      %v7718 = vpow.pop %v7717
      %v7719 = vmul.f32 %v6949, 1.442695
      %v7720 = vpow.pop %v7719
      %v7721 = vmul.f32 %v6950, 1.442695
      %v7722 = vpow.pop %v7721
      %v7723 = vmul.f32 %v6951, 1.442695
      %v7724 = vpow.pop %v7723
      %v7725 = vmul.f32 %v6952, 1.442695
      %v7726 = vpow.pop %v7725
      %v7727 = vmul.f32 %v6953, 1.442695
      %v7728 = vpow.pop %v7727
      %v7729 = vmul.f32 %v6954, 1.442695
      %v7730 = vpow.pop %v7729
      %v7731 = vmul.f32 %v6955, 1.442695
      %v7732 = vpow.pop %v7731
      %v7733 = vmul.f32 %v6956, 1.442695
      %v7734 = vpow.pop %v7733
      %v7735 = vmul.f32 %v6957, 1.442695
      %v7736 = vpow.pop %v7735
      %v7737 = vmul.f32 %v6958, 1.442695
      %v7738 = vpow.pop %v7737
      %v7739 = vmul.f32 %v6959, 1.442695
      %v7740 = vpow.pop %v7739
      %v7741 = vmul.f32 %v6960, 1.442695
      %v7742 = vpow.pop %v7741
      %v7743 = vmul.f32 %v6961, 1.442695
      %v7744 = vpow.pop %v7743
      %v7745 = vmul.f32 %v6962, 1.442695
      %v7746 = vpow.pop %v7745
      %v7747 = vmul.f32 %v6963, 1.442695
      %v7748 = vpow.pop %v7747
      %v7749 = vmul.f32 %v6964, 1.442695
      %v7750 = vpow.pop %v7749
      %v7751 = vmul.f32 %v6965, 1.442695
      %v7752 = vpow.pop %v7751
      %v7753 = vmul.f32 %v6966, 1.442695
      %v7754 = vpow.pop %v7753
      %v7755 = vmul.f32 %v6967, 1.442695
      %v7756 = vpow.pop %v7755
      %v7757 = vmul.f32 %v6968, 1.442695
      %v7758 = vpow.pop %v7757
      %v7759 = vmul.f32 %v6969, 1.442695
      %v7760 = vpow.pop %v7759
      %v7761 = vmul.f32 %v6970, 1.442695
      %v7762 = vpow.pop %v7761
      %v7763 = vmul.f32 %v6971, 1.442695
      %v7764 = vpow.pop %v7763
      %v7765 = vmul.f32 %v6972, 1.442695
      %v7766 = vpow.pop %v7765
      %v7767 = vmul.f32 %v6973, 1.442695
      %v7768 = vpow.pop %v7767
      %v7769 = vmul.f32 %v6974, 1.442695
      %v7770 = vpow.pop %v7769
      %v7771 = vmul.f32 %v6975, 1.442695
      %v7772 = vpow.pop %v7771
      %v7773 = vmul.f32 %v6976, 1.442695
      %v7774 = vpow.pop %v7773
      %v7775 = vmul.f32 %v6977, 1.442695
      %v7776 = vpow.pop %v7775
      %v7777 = vmul.f32 %v6978, 1.442695
      %v7778 = vpow.pop %v7777
      %v7779 = vmul.f32 %v6979, 1.442695
      %v7780 = vpow.pop %v7779
      %v7781 = vmul.f32 %v6980, 1.442695
      %v7782 = vpow.pop %v7781
      %v7783 = vmul.f32 %v6981, 1.442695
      %v7784 = vpow.pop %v7783
      %v7785 = vmul.f32 %v6982, 1.442695
      %v7786 = vpow.pop %v7785
      %v7787 = vmul.f32 %v6983, 1.442695
      %v7788 = vpow.pop %v7787
      %v7789 = vmul.f32 %v6984, 1.442695
      %v7790 = vpow.pop %v7789
      %v7791 = vmul.f32 %v6985, 1.442695
      %v7792 = vpow.pop %v7791
      %v7793 = vmul.f32 %v6986, 1.442695
      %v7794 = vpow.pop %v7793
      %v7795 = vmul.f32 %v6987, 1.442695
      %v7796 = vpow.pop %v7795
      %v7797 = vmul.f32 %v6988, 1.442695
      %v7798 = vpow.pop %v7797
      %v7799 = vmul.f32 %v6989, 1.442695
      %v7800 = vpow.pop %v7799
      %v7801 = vmul.f32 %v6990, 1.442695
      %v7802 = vpow.pop %v7801
      %v7803 = vmul.f32 %v6991, 1.442695
      %v7804 = vpow.pop %v7803
      %v7805 = vmul.f32 %v6992, 1.442695
      %v7806 = vpow.pop %v7805
      %v7807 = vmul.f32 %v6993, 1.442695
      %v7808 = vpow.pop %v7807
      %v7809 = vmul.f32 %v6994, 1.442695
      %v7810 = vpow.pop %v7809
      %v7811 = vmul.f32 %v6995, 1.442695
      %v7812 = vpow.pop %v7811
      %v7813 = vmul.f32 %v6996, 1.442695
      %v7814 = vpow.pop %v7813
      %v7815 = vmul.f32 %v6997, 1.442695
      %v7816 = vpow.pop %v7815
      %v7817 = vmul.f32 %v6998, 1.442695
      %v7818 = vpow.pop %v7817
      %v7819 = vmul.f32 %v6999, 1.442695
      %v7820 = vpow.pop %v7819
      %v7821 = vmul.f32 %v7000, 1.442695
      %v7822 = vpow.pop %v7821
      %v7823 = vmul.f32 %v7001, 1.442695
      %v7824 = vpow.pop %v7823
      %v7825 = vmul.f32 %v7002, 1.442695
      %v7826 = vpow.pop %v7825
      %v7827 = vmul.f32 %v7003, 1.442695
      %v7828 = vpow.pop %v7827
      %v7829 = vmul.f32 %v7004, 1.442695
      %v7830 = vpow.pop %v7829
      %v7831 = vmul.f32 %v7005, 1.442695
      %v7832 = vpow.pop %v7831
      %v7833 = vmul.f32 %v7006, 1.442695
      %v7834 = vpow.pop %v7833
      %v7835 = vmul.f32 %v7007, 1.442695
      %v7836 = vpow.pop %v7835
      %v7837 = vmul.f32 %v7008, 1.442695
      %v7838 = vpow.pop %v7837
      %v7839 = vmul.f32 %v7009, 1.442695
      %v7840 = vpow.pop %v7839
      %v7841 = vmul.f32 %v7010, 1.442695
      %v7842 = vpow.pop %v7841
      %v7843 = vmul.f32 %v7011, 1.442695
      %v7844 = vpow.pop %v7843
      %v7845 = vmul.f32 %v7012, 1.442695
      %v7846 = vpow.pop %v7845
      %v7847 = vmul.f32 %v7013, 1.442695
      %v7848 = vpow.pop %v7847
      %v7849 = vmul.f32 %v7014, 1.442695
      %v7850 = vpow.pop %v7849
      %v7851 = vmul.f32 %v7015, 1.442695
      %v7852 = vpow.pop %v7851
      %v7853 = vmul.f32 %v7016, 1.442695
      %v7854 = vpow.pop %v7853
      %v7855 = vmul.f32 %v7017, 1.442695
      %v7856 = vpow.pop %v7855
      %v7857 = vmul.f32 %v7018, 1.442695
      %v7858 = vpow.pop %v7857
      %v7859 = vmul.f32 %v7019, 1.442695
      %v7860 = vpow.pop %v7859
      %v7861 = vmul.f32 %v7020, 1.442695
      %v7862 = vpow.pop %v7861
      %v7863 = vmul.f32 %v7021, 1.442695
      %v7864 = vpow.pop %v7863
      %v7865 = vmul.f32 %v7022, 1.442695
      %v7866 = vpow.pop %v7865
      %v7867 = vmul.f32 %v7023, 1.442695
      %v7868 = vpow.pop %v7867
      %v7869 = vmul.f32 %v7024, 1.442695
      %v7870 = vpow.pop %v7869
      %v7871 = vmul.f32 %v7025, 1.442695
      %v7872 = vpow.pop %v7871
      %v7873 = vmul.f32 %v7026, 1.442695
      %v7874 = vpow.pop %v7873
      %v7875 = vmul.f32 %v7027, 1.442695
      %v7876 = vpow.pop %v7875
      %v7877 = vmul.f32 %v7028, 1.442695
      %v7878 = vpow.pop %v7877
      %v7879 = vmul.f32 %v7029, 1.442695
      %v7880 = vpow.pop %v7879
      %v7881 = vmul.f32 %v7030, 1.442695
      %v7882 = vpow.pop %v7881
      %v7883 = vmul.f32 %v7031, 1.442695
      %v7884 = vpow.pop %v7883
      %v7885 = vmul.f32 %v7032, 1.442695
      %v7886 = vpow.pop %v7885
      %v7887 = vmul.f32 %v7033, 1.442695
      %v7888 = vpow.pop %v7887
      %v7889 = vmul.f32 %v7034, 1.442695
      %v7890 = vpow.pop %v7889
      %v7891 = vmul.f32 %v7035, 1.442695
      %v7892 = vpow.pop %v7891
      %v7893 = vmul.f32 %v7036, 1.442695
      %v7894 = vpow.pop %v7893
      %v7895 = vmul.f32 %v7037, 1.442695
      %v7896 = vpow.pop %v7895
      %v7897 = vmul.f32 %v7038, 1.442695
      %v7898 = vpow.pop %v7897
      %v7899 = vmul.f32 %v7039, 1.442695
      %v7900 = vpow.pop %v7899
      %v7901 = vmul.f32 %v7040, 1.442695
      %v7902 = vpow.pop %v7901
      %v7903 = vmul.f32 %v7041, 1.442695
      %v7904 = vpow.pop %v7903
      %v7905 = vmul.f32 %v7042, 1.442695
      %v7906 = vpow.pop %v7905
      %v7907 = vmul.f32 %v7043, 1.442695
      %v7908 = vpow.pop %v7907
      %v7909 = vmul.f32 %v7044, 1.442695
      %v7910 = vpow.pop %v7909
      %v7911 = vmul.f32 %v7045, 1.442695
      %v7912 = vpow.pop %v7911
      %v7913 = vmul.f32 %v7046, 1.442695
      %v7914 = vpow.pop %v7913
      %v7915 = vmul.f32 %v7047, 1.442695
      %v7916 = vpow.pop %v7915
      %v7917 = vmul.f32 %v7048, 1.442695
      %v7918 = vpow.pop %v7917
      %v7919 = vmul.f32 %v7049, 1.442695
      %v7920 = vpow.pop %v7919
      %v7921 = vmul.f32 %v7050, 1.442695
      %v7922 = vpow.pop %v7921
      %v7923 = vmul.f32 %v7051, 1.442695
      %v7924 = vpow.pop %v7923
      %v7925 = vmul.f32 %v7052, 1.442695
      %v7926 = vpow.pop %v7925
      %v7927 = vmul.f32 %v7053, 1.442695
      %v7928 = vpow.pop %v7927
      %v7929 = vmul.f32 %v7054, 1.442695
      %v7930 = vpow.pop %v7929
      %v7931 = vmul.f32 %v7055, 1.442695
      %v7932 = vpow.pop %v7931
      %v7933 = vmul.f32 %v7056, 1.442695
      %v7934 = vpow.pop %v7933
      %v7935 = vmul.f32 %v7057, 1.442695
      %v7936 = vpow.pop %v7935
      %v7937 = vmul.f32 %v7058, 1.442695
      %v7938 = vpow.pop %v7937
      %v7939 = vmul.f32 %v7059, 1.442695
      %v7940 = vpow.pop %v7939
      %v7941 = vmul.f32 %v7060, 1.442695
      %v7942 = vpow.pop %v7941
      %v7943 = vmul.f32 %v7061, 1.442695
      %v7944 = vpow.pop %v7943
      %v7945 = vmul.f32 %v7062, 1.442695
      %v7946 = vpow.pop %v7945
      %v7947 = vmul.f32 %v7063, 1.442695
      %v7948 = vpow.pop %v7947
      %v7949 = vmul.f32 %v7064, 1.442695
      %v7950 = vpow.pop %v7949
      %v7951 = vmul.f32 %v7065, 1.442695
      %v7952 = vpow.pop %v7951
      %v7953 = vmul.f32 %v7066, 1.442695
      %v7954 = vpow.pop %v7953
      %v7955 = vmul.f32 %v7067, 1.442695
      %v7956 = vpow.pop %v7955
      %v7957 = vmul.f32 %v7068, 1.442695
      %v7958 = vpow.pop %v7957
      %v7959 = vmul.f32 %v7069, 1.442695
      %v7960 = vpow.pop %v7959
      %v7961 = vmul.f32 %v7070, 1.442695
      %v7962 = vpow.pop %v7961
      %v7963 = vmul.f32 %v7071, 1.442695
      %v7964 = vpow.pop %v7963
      %v7965 = vmul.f32 %v7072, 1.442695
      %v7966 = vpow.pop %v7965
      %v7967 = vmul.f32 %v7073, 1.442695
      %v7968 = vpow.pop %v7967
      %v7969 = vmul.f32 %v7074, 1.442695
      %v7970 = vpow.pop %v7969
      %v7971 = vmul.f32 %v7075, 1.442695
      %v7972 = vpow.pop %v7971
      %v7973 = vmul.f32 %v7076, 1.442695
      %v7974 = vpow.pop %v7973
      %v7975 = vmul.f32 %v7077, 1.442695
      %v7976 = vpow.pop %v7975
      %v7977 = vmul.f32 %v7078, 1.442695
      %v7978 = vpow.pop %v7977
      %v7979 = vmul.f32 %v7079, 1.442695
      %v7980 = vpow.pop %v7979
      %v7981 = vmul.f32 %v7080, 1.442695
      %v7982 = vpow.pop %v7981
      %v7983 = vmul.f32 %v7081, 1.442695
      %v7984 = vpow.pop %v7983
      %v7985 = vmul.f32 %v7082, 1.442695
      %v7986 = vpow.pop %v7985
      %v7987 = vmul.f32 %v7083, 1.442695
      %v7988 = vpow.pop %v7987
      %v7989 = vmul.f32 %v7084, 1.442695
      %v7990 = vpow.pop %v7989
      %v7991 = vmul.f32 %v7085, 1.442695
      %v7992 = vpow.pop %v7991
      %v7993 = vmul.f32 %v7086, 1.442695
      %v7994 = vpow.pop %v7993
      %v7995 = vmul.f32 %v7087, 1.442695
      %v7996 = vpow.pop %v7995
      %v7997 = vmul.f32 %v7088, 1.442695
      %v7998 = vpow.pop %v7997
      %v7999 = vmul.f32 %v7089, 1.442695
      %v8000 = vpow.pop %v7999
      %v8001 = vmul.f32 %v7090, 1.442695
      %v8002 = vpow.pop %v8001
      %v8003 = vmul.f32 %v7091, 1.442695
      %v8004 = vpow.pop %v8003
      %v8005 = vmul.f32 %v7092, 1.442695
      %v8006 = vpow.pop %v8005
      %v8007 = vmul.f32 %v7093, 1.442695
      %v8008 = vpow.pop %v8007
      %v8009 = vmul.f32 %v7094, 1.442695
      %v8010 = vpow.pop %v8009
      %v8011 = vmul.f32 %v7095, 1.442695
      %v8012 = vpow.pop %v8011
      %v8013 = vmul.f32 %v7096, 1.442695
      %v8014 = vpow.pop %v8013
      %v8015 = vmul.f32 %v7097, 1.442695
      %v8016 = vpow.pop %v8015
      %v8017 = vmul.f32 %v7098, 1.442695
      %v8018 = vpow.pop %v8017
      %v8019 = vmul.f32 %v7099, 1.442695
      %v8020 = vpow.pop %v8019
      %v8021 = vmul.f32 %v7100, 1.442695
      %v8022 = vpow.pop %v8021
      %v8023 = vmul.f32 %v7101, 1.442695
      %v8024 = vpow.pop %v8023
      %v8025 = vmul.f32 %v7102, 1.442695
      %v8026 = vpow.pop %v8025
      %v8027 = vmul.f32 %v7103, 1.442695
      %v8028 = vpow.pop %v8027
      %v8029 = vmul.f32 %v7104, 1.442695
      %v8030 = vpow.pop %v8029
      %v8031 = vmul.f32 %v7105, 1.442695
      %v8032 = vpow.pop %v8031
      %v8033 = vmul.f32 %v7106, 1.442695
      %v8034 = vpow.pop %v8033
      %v8035 = vmul.f32 %v7107, 1.442695
      %v8036 = vpow.pop %v8035
      %v8037 = vmul.f32 %v7108, 1.442695
      %v8038 = vpow.pop %v8037
      %v8039 = vmul.f32 %v7109, 1.442695
      %v8040 = vpow.pop %v8039
      %v8041 = vmul.f32 %v7110, 1.442695
      %v8042 = vpow.pop %v8041
      %v8043 = vmul.f32 %v7111, 1.442695
      %v8044 = vpow.pop %v8043
      %v8045 = vmul.f32 %v7112, 1.442695
      %v8046 = vpow.pop %v8045
      %v8047 = vmul.f32 %v7113, 1.442695
      %v8048 = vpow.pop %v8047
      %v8049 = vmul.f32 %v7114, 1.442695
      %v8050 = vpow.pop %v8049
      %v8051 = vmul.f32 %v7115, 1.442695
      %v8052 = vpow.pop %v8051
      %v8053 = vmul.f32 %v7116, 1.442695
      %v8054 = vpow.pop %v8053
      %v8055 = vmul.f32 %v7117, 1.442695
      %v8056 = vpow.pop %v8055
      %v8057 = vmul.f32 %v7118, 1.442695
      %v8058 = vpow.pop %v8057
      %v8059 = vmul.f32 %v7119, 1.442695
      %v8060 = vpow.pop %v8059
      %v8061 = vmul.f32 %v7120, 1.442695
      %v8062 = vpow.pop %v8061
      %v8063 = vmul.f32 %v7121, 1.442695
      %v8064 = vpow.pop %v8063
      %v8065 = vmul.f32 %v7122, 1.442695
      %v8066 = vpow.pop %v8065
      %v8067 = vmul.f32 %v7123, 1.442695
      %v8068 = vpow.pop %v8067
      %v8069 = vmul.f32 %v7124, 1.442695
      %v8070 = vpow.pop %v8069
      %v8071 = vmul.f32 %v7125, 1.442695
      %v8072 = vpow.pop %v8071
      %v8073 = vmul.f32 %v7126, 1.442695
      %v8074 = vpow.pop %v8073
      %v8075 = vmul.f32 %v7127, 1.442695
      %v8076 = vpow.pop %v8075
      %v8077 = vmul.f32 %v7128, 1.442695
      %v8078 = vpow.pop %v8077
      %v8079 = vmul.f32 %v7129, 1.442695
      %v8080 = vpow.pop %v8079
      %v8081 = vmul.f32 %v7130, 1.442695
      %v8082 = vpow.pop %v8081
      %v8083 = vmul.f32 %v7131, 1.442695
      %v8084 = vpow.pop %v8083
      %v8085 = vmul.f32 %v7132, 1.442695
      %v8086 = vpow.pop %v8085
      %v8087 = vmul.f32 %v7133, 1.442695
      %v8088 = vpow.pop %v8087
      %v8089 = vmul.f32 %v7134, 1.442695
      %v8090 = vpow.pop %v8089
      %v8091 = vmul.f32 %v7135, 1.442695
      %v8092 = vpow.pop %v8091
      %v8093 = vmul.f32 %v7136, 1.442695
      %v8094 = vpow.pop %v8093
      %v8095 = vmul.f32 %v7137, 1.442695
      %v8096 = vpow.pop %v8095
      %v8097 = vmul.f32 %v7138, 1.442695
      %v8098 = vpow.pop %v8097
      %v8099 = vmul.f32 %v7139, 1.442695
      %v8100 = vpow.pop %v8099
      %v8101 = vmul.f32 %v7140, 1.442695
      %v8102 = vpow.pop %v8101
      %v8103 = vmul.f32 %v7141, 1.442695
      %v8104 = vpow.pop %v8103
      %v8105 = vmul.f32 %v7142, 1.442695
      %v8106 = vpow.pop %v8105
      %v8107 = vmul.f32 %v7143, 1.442695
      %v8108 = vpow.pop %v8107
      %v8109 = vmul.f32 %v7144, 1.442695
      %v8110 = vpow.pop %v8109
      %v8111 = vmul.f32 %v7145, 1.442695
      %v8112 = vpow.pop %v8111
      %v8113 = vmul.f32 %v7146, 1.442695
      %v8114 = vpow.pop %v8113
      %v8115 = vmul.f32 %v7147, 1.442695
      %v8116 = vpow.pop %v8115
      %v8117 = vmul.f32 %v7148, 1.442695
      %v8118 = vpow.pop %v8117
      %v8119 = vmul.f32 %v7149, 1.442695
      %v8120 = vpow.pop %v8119
      %v8121 = vmul.f32 %v7150, 1.442695
      %v8122 = vpow.pop %v8121
      %v8123 = vmul.f32 %v7151, 1.442695
      %v8124 = vpow.pop %v8123
      %v8125 = vmul.f32 %v7152, 1.442695
      %v8126 = vpow.pop %v8125
      %v8127 = vmul.f32 %v7153, 1.442695
      %v8128 = vpow.pop %v8127
      %v8129 = vmul.f32 %v7154, 1.442695
      %v8130 = vpow.pop %v8129
      %v8131 = vmul.f32 %v7155, 1.442695
      %v8132 = vpow.pop %v8131
      %v8133 = vmul.f32 %v7156, 1.442695
      %v8134 = vpow.pop %v8133
      %v8135 = vmul.f32 %v7157, 1.442695
      %v8136 = vpow.pop %v8135
      %v8137 = vmul.f32 %v7158, 1.442695
      %v8138 = vpow.pop %v8137
      %v8139 = vmul.f32 %v7159, 1.442695
      %v8140 = vpow.pop %v8139
      %v8141 = vmul.f32 %v7160, 1.442695
      %v8142 = vpow.pop %v8141
      %v8143 = vmul.f32 %v7161, 1.442695
      %v8144 = vpow.pop %v8143
      %v8145 = vmul.f32 %v7162, 1.442695
      %v8146 = vpow.pop %v8145
      %v8147 = vmul.f32 %v7163, 1.442695
      %v8148 = vpow.pop %v8147
      %v8149 = vmul.f32 %v7164, 1.442695
      %v8150 = vpow.pop %v8149
      %v8151 = vmul.f32 %v7165, 1.442695
      %v8152 = vpow.pop %v8151
      %v8153 = vmul.f32 %v7166, 1.442695
      %v8154 = vpow.pop %v8153
      %v8155 = vmul.f32 %v7167, 1.442695
      %v8156 = vpow.pop %v8155
      %v8157 = vmul.f32 %v7168, 1.442695
      %v8158 = vpow.pop %v8157
      %v8159 = vmul.f32 %v7169, 1.442695
      %v8160 = vpow.pop %v8159
      %v8161 = vmul.f32 %v7170, 1.442695
      %v8162 = vpow.pop %v8161
      %v8163 = vmul.f32 %v7171, 1.442695
      %v8164 = vpow.pop %v8163
      %v8165 = vmul.f32 %v7172, 1.442695
      %v8166 = vpow.pop %v8165
      %v8167 = vmul.f32 %v7173, 1.442695
      %v8168 = vpow.pop %v8167
      %v8169 = vmul.f32 %v7174, 1.442695
      %v8170 = vpow.pop %v8169
      %v8171 = vmul.f32 %v7175, 1.442695
      %v8172 = vpow.pop %v8171
      %v8173 = vmul.f32 %v7176, 1.442695
      %v8174 = vpow.pop %v8173
      %v8175 = vmul.f32 %v7177, 1.442695
      %v8176 = vpow.pop %v8175
      %v8177 = vmul.f32 %v7178, 1.442695
      %v8178 = vpow.pop %v8177
      %v8179 = vmul.f32 %v7179, 1.442695
      %v8180 = vpow.pop %v8179
      %v8181 = vmul.f32 %v7180, 1.442695
      %v8182 = vpow.pop %v8181
      %v8183 = vmul.f32 %v7181, 1.442695
      %v8184 = vpow.pop %v8183
      %v8185 = vmul.f32 %v7182, 1.442695
      %v8186 = vpow.pop %v8185
      %v8187 = vmul.f32 %v7183, 1.442695
      %v8188 = vpow.pop %v8187
      %v8189 = vmul.f32 %v7184, 1.442695
      %v8190 = vpow.pop %v8189
      %v8191 = vmul.f32 %v7185, 1.442695
      %v8192 = vpow.pop %v8191
      %v8193 = vmul.f32 %v7186, 1.442695
      %v8194 = vpow.pop %v8193
      %v8195 = vmul.f32 %v7187, 1.442695
      %v8196 = vpow.pop %v8195
      %v8197 = vmul.f32 %v7188, 1.442695
      %v8198 = vpow.pop %v8197
      %v8199 = vmul.f32 %v7189, 1.442695
      %v8200 = vpow.pop %v8199
      %v8201 = vmul.f32 %v7190, 1.442695
      %v8202 = vpow.pop %v8201
      %v8203 = vmul.f32 %v7191, 1.442695
      %v8204 = vpow.pop %v8203
      %v8205 = vmul.f32 %v7192, 1.442695
      %v8206 = vpow.pop %v8205
      %v8207 = vmul.f32 %v7193, 1.442695
      %v8208 = vpow.pop %v8207
      %v8209 = vmul.f32 %v7194, 1.442695
      %v8210 = vpow.pop %v8209
      %v8211 = vmul.f32 %v7195, 1.442695
      %v8212 = vpow.pop %v8211
      %v8213 = vmul.f32 %v7196, 1.442695
      %v8214 = vpow.pop %v8213
      %v8215 = vmul.f32 %v7197, 1.442695
      %v8216 = vpow.pop %v8215
      %v8217 = vmul.f32 %v7198, 1.442695
      %v8218 = vpow.pop %v8217
      %v8219 = vmul.f32 %v7199, 1.442695
      %v8220 = vpow.pop %v8219
      %v8221 = vmul.f32 %v7200, 1.442695
      %v8222 = vpow.pop %v8221
      %v8223 = vmul.f32 %v7201, 1.442695
      %v8224 = vpow.pop %v8223
      %v8225 = vmul.f32 %v7202, 1.442695
      %v8226 = vpow.pop %v8225
      %v8227 = vmul.f32 %v7203, 1.442695
      %v8228 = vpow.pop %v8227
      %v8229 = vmul.f32 %v7204, 1.442695
      %v8230 = vpow.pop %v8229
      %v8231 = vmul.f32 %v7205, 1.442695
      %v8232 = vpow.pop %v8231
      %v8233 = vmul.f32 %v7206, 1.442695
      %v8234 = vpow.pop %v8233
      %v8235 = vmul.f32 %v7207, 1.442695
      %v8236 = vpow.pop %v8235
      %v8237 = vmul.f32 %v7208, 1.442695
      %v8238 = vpow.pop %v8237
      %v8239 = vmul.f32 %v7209, 1.442695
      %v8240 = vpow.pop %v8239
      %v8241 = vmul.f32 %v7210, 1.442695
      %v8242 = vpow.pop %v8241
      %v8243 = vmul.f32 %v7211, 1.442695
      %v8244 = vpow.pop %v8243
      %v8245 = vmul.f32 %v7212, 1.442695
      %v8246 = vpow.pop %v8245
      %v8247 = vmul.f32 %v7213, 1.442695
      %v8248 = vpow.pop %v8247
      %v8249 = vmul.f32 %v7214, 1.442695
      %v8250 = vpow.pop %v8249
      %v8251 = vmul.f32 %v7215, 1.442695
      %v8252 = vpow.pop %v8251
      %v8253 = vmul.f32 %v7216, 1.442695
      %v8254 = vpow.pop %v8253
      %v8255 = vmul.f32 %v7217, 1.442695
      %v8256 = vpow.pop %v8255
      %v8257 = vmul.f32 %v7218, 1.442695
      %v8258 = vpow.pop %v8257
      %v8259 = vmul.f32 %v7219, 1.442695
      %v8260 = vpow.pop %v8259
      %v8261 = vmul.f32 %v7220, 1.442695
      %v8262 = vpow.pop %v8261
      %v8263 = vmul.f32 %v7221, 1.442695
      %v8264 = vpow.pop %v8263
      %v8265 = vmul.f32 %v7222, 1.442695
      %v8266 = vpow.pop %v8265
      %v8267 = vmul.f32 %v7223, 1.442695
      %v8268 = vpow.pop %v8267
      %v8269 = vmul.f32 %v7224, 1.442695
      %v8270 = vpow.pop %v8269
      %v8271 = vmul.f32 %v7225, 1.442695
      %v8272 = vpow.pop %v8271
      %v8273 = vmul.f32 %v7226, 1.442695
      %v8274 = vpow.pop %v8273
      %v8275 = vmul.f32 %v7227, 1.442695
      %v8276 = vpow.pop %v8275
      %v8277 = vmul.f32 %v7228, 1.442695
      %v8278 = vpow.pop %v8277
      %v8279 = vmul.f32 %v7229, 1.442695
      %v8280 = vpow.pop %v8279
      %v8281 = vmul.f32 %v7230, 1.442695
      %v8282 = vpow.pop %v8281
      %v8283 = vmul.f32 %v7231, 1.442695
      %v8284 = vpow.pop %v8283
      %v8285 = vmul.f32 %v7232, 1.442695
      %v8286 = vpow.pop %v8285
      %v8287 = vmul.f32 %v7233, 1.442695
      %v8288 = vpow.pop %v8287
      %v8289 = vmul.f32 %v7234, 1.442695
      %v8290 = vpow.pop %v8289
      %v8291 = vmul.f32 %v7235, 1.442695
      %v8292 = vpow.pop %v8291
      %v8293 = vmul.f32 %v7236, 1.442695
      %v8294 = vpow.pop %v8293
      %v8295 = vmul.f32 %v7237, 1.442695
      %v8296 = vpow.pop %v8295
      %v8297 = vmul.f32 %v7238, 1.442695
      %v8298 = vpow.pop %v8297
      %v8299 = vmul.f32 %v7239, 1.442695
      %v8300 = vpow.pop %v8299
      %v8301 = vmul.f32 %v7240, 1.442695
      %v8302 = vpow.pop %v8301
      %v8303 = vmul.f32 %v7241, 1.442695
      %v8304 = vpow.pop %v8303
      %v8305 = vmul.f32 %v7242, 1.442695
      %v8306 = vpow.pop %v8305
      %v8307 = vmul.f32 %v7243, 1.442695
      %v8308 = vpow.pop %v8307
      %v8309 = vmul.f32 %v7244, 1.442695
      %v8310 = vpow.pop %v8309
      %v8311 = vmul.f32 %v7245, 1.442695
      %v8312 = vpow.pop %v8311
      %v8313 = vmul.f32 %v7246, 1.442695
      %v8314 = vpow.pop %v8313
      %v8315 = vmul.f32 %v7247, 1.442695
      %v8316 = vpow.pop %v8315
      %v8317 = vmul.f32 %v7248, 1.442695
      %v8318 = vpow.pop %v8317
      %v8319 = vmul.f32 %v7249, 1.442695
      %v8320 = vpow.pop %v8319
      %v8321 = vmul.f32 %v7250, 1.442695
      %v8322 = vpow.pop %v8321
      %v8323 = vmul.f32 %v7251, 1.442695
      %v8324 = vpow.pop %v8323
      %v8325 = vmul.f32 %v7252, 1.442695
      %v8326 = vpow.pop %v8325
      %v8327 = vmul.f32 %v7253, 1.442695
      %v8328 = vpow.pop %v8327
      %v8329 = vmul.f32 %v7254, 1.442695
      %v8330 = vpow.pop %v8329
      %v8331 = vmul.f32 %v7255, 1.442695
      %v8332 = vpow.pop %v8331
      %v8333 = vmul.f32 %v7256, 1.442695
      %v8334 = vpow.pop %v8333
      %v8335 = vmul.f32 %v7257, 1.442695
      %v8336 = vpow.pop %v8335
      %v8337 = vmul.f32 %v7258, 1.442695
      %v8338 = vpow.pop %v8337
      %v8339 = vmul.f32 %v7259, 1.442695
      %v8340 = vpow.pop %v8339
      %v8341 = vmul.f32 %v7260, 1.442695
      %v8342 = vpow.pop %v8341
      %v8343 = vmul.f32 %v7261, 1.442695
      %v8344 = vpow.pop %v8343
      %v8345 = vmul.f32 %v7262, 1.442695
      %v8346 = vpow.pop %v8345
      %v8347 = vmul.f32 %v7263, 1.442695
      %v8348 = vpow.pop %v8347
      %v8349 = vmul.f32 %v7264, 1.442695
      %v8350 = vpow.pop %v8349
      %v8351 = vmul.f32 %v7265, 1.442695
      %v8352 = vpow.pop %v8351
      %v8353 = vmul.f32 %v7266, 1.442695
      %v8354 = vpow.pop %v8353
      %v8355 = vmul.f32 %v7267, 1.442695
      %v8356 = vpow.pop %v8355
      %v8357 = vmul.f32 %v7268, 1.442695
      %v8358 = vpow.pop %v8357
      %v8359 = vmul.f32 %v7269, 1.442695
      %v8360 = vpow.pop %v8359
      %v8361 = vmul.f32 %v7270, 1.442695
      %v8362 = vpow.pop %v8361
      %v8363 = vmul.f32 %v7271, 1.442695
      %v8364 = vpow.pop %v8363
      %v8365 = vmul.f32 %v7272, 1.442695
      %v8366 = vpow.pop %v8365
      %v8367 = vmul.f32 %v7273, 1.442695
      %v8368 = vpow.pop %v8367
      %v8369 = vmul.f32 %v7274, 1.442695
      %v8370 = vpow.pop %v8369
      %v8371 = vmul.f32 %v7275, 1.442695
      %v8372 = vpow.pop %v8371
      %v8373 = vmul.f32 %v7276, 1.442695
      %v8374 = vpow.pop %v8373
      %v8375 = vmul.f32 %v7277, 1.442695
      %v8376 = vpow.pop %v8375
      %v8377 = vmul.f32 %v7278, 1.442695
      %v8378 = vpow.pop %v8377
      %v8379 = vmul.f32 %v7279, 1.442695
      %v8380 = vpow.pop %v8379
      %v8381 = vmul.f32 %v7280, 1.442695
      %v8382 = vpow.pop %v8381
      %v8383 = vmul.f32 %v7281, 1.442695
      %v8384 = vpow.pop %v8383
      %v8385 = vmul.f32 %v7282, 1.442695
      %v8386 = vpow.pop %v8385
      %v8387 = vmul.f32 %v7283, 1.442695
      %v8388 = vpow.pop %v8387
      %v8389 = vmul.f32 %v7284, 1.442695
      %v8390 = vpow.pop %v8389
      %v8391 = vmul.f32 %v7285, 1.442695
      %v8392 = vpow.pop %v8391
      %v8393 = vmul.f32 %v7286, 1.442695
      %v8394 = vpow.pop %v8393
      %v8395 = vmul.f32 %v7287, 1.442695
      %v8396 = vpow.pop %v8395
      %v8397 = vmul.f32 %v7288, 1.442695
      %v8398 = vpow.pop %v8397
      %v8399 = vmul.f32 %v7289, 1.442695
      %v8400 = vpow.pop %v8399
      %v8401 = vmul.f32 %v7290, 1.442695
      %v8402 = vpow.pop %v8401
      %v8403 = vmul.f32 %v7291, 1.442695
      %v8404 = vpow.pop %v8403
      %v8405 = vmul.f32 %v7292, 1.442695
      %v8406 = vpow.pop %v8405
      %v8407 = vmul.f32 %v7293, 1.442695
      %v8408 = vpow.pop %v8407
      %v8409 = vmul.f32 %v7294, 1.442695
      %v8410 = vpow.pop %v8409
      %v8411 = vmul.f32 %v7295, 1.442695
      %v8412 = vpow.pop %v8411
      %v8413 = vmul.f32 %v7296, 1.442695
      %v8414 = vpow.pop %v8413
      %v8415 = vmul.f32 %v7297, 1.442695
      %v8416 = vpow.pop %v8415
      %v8417 = vmul.f32 %v7298, 1.442695
      %v8418 = vpow.pop %v8417
      %v8419 = vmul.f32 %v7299, 1.442695
      %v8420 = vpow.pop %v8419
      %v8421 = vmul.f32 %v7300, 1.442695
      %v8422 = vpow.pop %v8421
      %v8423 = vmul.f32 %v7301, 1.442695
      %v8424 = vpow.pop %v8423
      %v8425 = vmul.f32 %v7302, 1.442695
      %v8426 = vpow.pop %v8425
      %v8427 = vmul.f32 %v7303, 1.442695
      %v8428 = vpow.pop %v8427
      %v8429 = vmul.f32 %v7304, 1.442695
      %v8430 = vpow.pop %v8429
      %v8431 = vmul.f32 %v7305, 1.442695
      %v8432 = vpow.pop %v8431
      %v8433 = vmul.f32 %v7306, 1.442695
      %v8434 = vpow.pop %v8433
      %v8435 = vmul.f32 %v7307, 1.442695
      %v8436 = vpow.pop %v8435
      %v8437 = vmul.f32 %v7308, 1.442695
      %v8438 = vpow.pop %v8437
      %v8439 = vmul.f32 %v7309, 1.442695
      %v8440 = vpow.pop %v8439
      %v8441 = vmul.f32 %v7310, 1.442695
      %v8442 = vpow.pop %v8441
      %v8443 = vmul.f32 %v7311, 1.442695
      %v8444 = vpow.pop %v8443
      %v8445 = vmul.f32 %v7312, 1.442695
      %v8446 = vpow.pop %v8445
      %v8447 = vmul.f32 %v7313, 1.442695
      %v8448 = vpow.pop %v8447
      %v8449 = vmul.f32 %v7314, 1.442695
      %v8450 = vpow.pop %v8449
      %v8451 = vmul.f32 %v7315, 1.442695
      %v8452 = vpow.pop %v8451
      %v8453 = vmul.f32 %v7316, 1.442695
      %v8454 = vpow.pop %v8453
      %v8455 = vmul.f32 %v7317, 1.442695
      %v8456 = vpow.pop %v8455
      %v8457 = vmul.f32 %v7318, 1.442695
      %v8458 = vpow.pop %v8457
      %v8459 = vmul.f32 %v7319, 1.442695
      %v8460 = vpow.pop %v8459
      %v8461 = vmul.f32 %v7320, 1.442695
      %v8462 = vpow.pop %v8461
      %v8463 = vmul.f32 %v7321, 1.442695
      %v8464 = vpow.pop %v8463
      %v8465 = vmul.f32 %v7322, 1.442695
      %v8466 = vpow.pop %v8465
      %v8467 = vmul.f32 %v7323, 1.442695
      %v8468 = vpow.pop %v8467
      %v8469 = vmul.f32 %v7324, 1.442695
      %v8470 = vpow.pop %v8469
      %v8471 = vmul.f32 %v7325, 1.442695
      %v8472 = vpow.pop %v8471
      %v8473 = vmul.f32 %v7326, 1.442695
      %v8474 = vpow.pop %v8473
      %v8475 = vmul.f32 %v7327, 1.442695
      %v8476 = vpow.pop %v8475
      %v8477 = vmul.f32 %v7328, 1.442695
      %v8478 = vpow.pop %v8477
      %v8479 = vmul.f32 %v7329, 1.442695
      %v8480 = vpow.pop %v8479
      %v8481 = vmul.f32 %v7330, 1.442695
      %v8482 = vpow.pop %v8481
      %v8483 = vmul.f32 %v7331, 1.442695
      %v8484 = vpow.pop %v8483
      %v8485 = vmul.f32 %v7332, 1.442695
      %v8486 = vpow.pop %v8485
      %v8487 = vmul.f32 %v7333, 1.442695
      %v8488 = vpow.pop %v8487
      %v8489 = vmul.f32 %v7334, 1.442695
      %v8490 = vpow.pop %v8489
      %v8491 = vmul.f32 %v7335, 1.442695
      %v8492 = vpow.pop %v8491
      %v8493 = vmul.f32 %v7336, 1.442695
      %v8494 = vpow.pop %v8493
      %v8495 = vmul.f32 %v7337, 1.442695
      %v8496 = vpow.pop %v8495
      %v8497 = vmul.f32 %v7338, 1.442695
      %v8498 = vpow.pop %v8497
      %v8499 = vmul.f32 %v7339, 1.442695
      %v8500 = vpow.pop %v8499
      %v8501 = vmul.f32 %v7340, 1.442695
      %v8502 = vpow.pop %v8501
      %v8503 = vmul.f32 %v7341, 1.442695
      %v8504 = vpow.pop %v8503
      %v8505 = vmul.f32 %v7342, 1.442695
      %v8506 = vpow.pop %v8505
      %v8507 = vmul.f32 %v7343, 1.442695
      %v8508 = vpow.pop %v8507
      %v8509 = vmul.f32 %v7344, 1.442695
      %v8510 = vpow.pop %v8509
      %v8511 = vmul.f32 %v7345, 1.442695
      %v8512 = vpow.pop %v8511
      %v8513 = vmul.f32 %v7346, 1.442695
      %v8514 = vpow.pop %v8513
      %v8515 = vmul.f32 %v7347, 1.442695
      %v8516 = vpow.pop %v8515
      %v8517 = vmul.f32 %v7348, 1.442695
      %v8518 = vpow.pop %v8517
      %v8519 = vmul.f32 %v7349, 1.442695
      %v8520 = vpow.pop %v8519
      %v8521 = vmul.f32 %v7350, 1.442695
      %v8522 = vpow.pop %v8521
      %v8523 = vmul.f32 %v7351, 1.442695
      %v8524 = vpow.pop %v8523
      %v8525 = vmul.f32 %v7352, 1.442695
      %v8526 = vpow.pop %v8525
      %v8527 = vmul.f32 %v7353, 1.442695
      %v8528 = vpow.pop %v8527
      %v8529 = vmul.f32 %v7354, 1.442695
      %v8530 = vpow.pop %v8529
      %v8531 = vmul.f32 %v7355, 1.442695
      %v8532 = vpow.pop %v8531
      %v8533 = vmul.f32 %v7356, 1.442695
      %v8534 = vpow.pop %v8533
      %v8535 = vmul.f32 %v7357, 1.442695
      %v8536 = vpow.pop %v8535
      %v8537 = vmul.f32 %v7358, 1.442695
      %v8538 = vpow.pop %v8537
      %v8539 = vmul.f32 %v7359, 1.442695
      %v8540 = vpow.pop %v8539
      %v8541 = vmul.f32 %v7360, 1.442695
      %v8542 = vpow.pop %v8541
      %v8543 = vmul.f32 %v7361, 1.442695
      %v8544 = vpow.pop %v8543
      %v8545 = vmul.f32 %v7362, 1.442695
      %v8546 = vpow.pop %v8545
      %v8547 = vmul.f32 %v7363, 1.442695
      %v8548 = vpow.pop %v8547
      %v8549 = vmul.f32 %v7364, 1.442695
      %v8550 = vpow.pop %v8549
      %v8551 = vmul.f32 %v7365, 1.442695
      %v8552 = vpow.pop %v8551
      %v8553 = vmul.f32 %v7366, 1.442695
      %v8554 = vpow.pop %v8553
      %v8555 = vmul.f32 %v7367, 1.442695
      %v8556 = vpow.pop %v8555
      %v8557 = vmul.f32 %v7368, 1.442695
      %v8558 = vpow.pop %v8557
      %v8559 = vmul.f32 %v7369, 1.442695
      %v8560 = vpow.pop %v8559
      %v8561 = vmul.f32 %v7370, 1.442695
      %v8562 = vpow.pop %v8561
      %v8563 = vmul.f32 %v7371, 1.442695
      %v8564 = vpow.pop %v8563
      %v8565 = vmul.f32 %v7372, 1.442695
      %v8566 = vpow.pop %v8565
      %v8567 = vmul.f32 %v7373, 1.442695
      %v8568 = vpow.pop %v8567
      %v8569 = vmul.f32 %v7374, 1.442695
      %v8570 = vpow.pop %v8569
      %v8571 = vmul.f32 %v7375, 1.442695
      %v8572 = vpow.pop %v8571
      %v8573 = vmul.f32 %v7376, 1.442695
      %v8574 = vpow.pop %v8573
      %v8575 = vmul.f32 %v7377, 1.442695
      %v8576 = vpow.pop %v8575
      %v8577 = vmul.f32 %v7378, 1.442695
      %v8578 = vpow.pop %v8577
      %v8579 = vmul.f32 %v7379, 1.442695
      %v8580 = vpow.pop %v8579
      %v8581 = vmul.f32 %v7380, 1.442695
      %v8582 = vpow.pop %v8581
      %v8583 = vmul.f32 %v7381, 1.442695
      %v8584 = vpow.pop %v8583
      %v8585 = vmul.f32 %v7382, 1.442695
      %v8586 = vpow.pop %v8585
      %v8587 = vmul.f32 %v7383, 1.442695
      %v8588 = vpow.pop %v8587
      %v8589 = vmul.f32 %v7384, 1.442695
      %v8590 = vpow.pop %v8589
      %v8591 = vmul.f32 %v7385, 1.442695
      %v8592 = vpow.pop %v8591
      %v8593 = vmul.f32 %v7386, 1.442695
      %v8594 = vpow.pop %v8593
      %v8595 = vmul.f32 %v7387, 1.442695
      %v8596 = vpow.pop %v8595
      %v8597 = vmul.f32 %v7388, 1.442695
      %v8598 = vpow.pop %v8597
      %v8599 = vmul.f32 %v7389, 1.442695
      %v8600 = vpow.pop %v8599
      %v8601 = vmul.f32 %v7390, 1.442695
      %v8602 = vpow.pop %v8601
      %v8603 = vmul.f32 %v7391, 1.442695
      %v8604 = vpow.pop %v8603
      %v8605 = vmul.f32 %v7392, 1.442695
      %v8606 = vpow.pop %v8605
      %v8607 = vmul.f32 %v7393, 1.442695
      %v8608 = vpow.pop %v8607
      %v8609 = vmul.f32 %v7394, 1.442695
      %v8610 = vpow.pop %v8609
      %v8611 = vmul.f32 %v7395, 1.442695
      %v8612 = vpow.pop %v8611
      %v8613 = vmul.f32 %v7396, 1.442695
      %v8614 = vpow.pop %v8613
      %v8615 = vmul.f32 %v7397, 1.442695
      %v8616 = vpow.pop %v8615
      %v8617 = vmul.f32 %v7398, 1.442695
      %v8618 = vpow.pop %v8617
      %v8619 = vmul.f32 %v7399, 1.442695
      %v8620 = vpow.pop %v8619
      %v8621 = vmul.f32 %v7400, 1.442695
      %v8622 = vpow.pop %v8621
      %v8623 = vmul.f32 %v7401, 1.442695
      %v8624 = vpow.pop %v8623
      %v8625 = vmul.f32 %v7402, 1.442695
      %v8626 = vpow.pop %v8625
      %v8627 = vmul.f32 %v7403, 1.442695
      %v8628 = vpow.pop %v8627
      %v8629 = vmul.f32 %v7404, 1.442695
      %v8630 = vpow.pop %v8629
      %v8631 = vmul.f32 %v7405, 1.442695
      %v8632 = vpow.pop %v8631
      %v8633 = vmul.f32 %v7406, 1.442695
      %v8634 = vpow.pop %v8633
      %v8635 = vmul.f32 %v7407, 1.442695
      %v8636 = vpow.pop %v8635
      %v8637 = vmul.f32 %v7408, 1.442695
      %v8638 = vpow.pop %v8637
      %v8639 = vmul.f32 %v7409, 1.442695
      %v8640 = vpow.pop %v8639
      %v8641 = vmul.f32 %v7410, 1.442695
      %v8642 = vpow.pop %v8641
      %v8643 = vmul.f32 %v7411, 1.442695
      %v8644 = vpow.pop %v8643
      %v8645 = vmul.f32 %v7412, 1.442695
      %v8646 = vpow.pop %v8645
      %v8647 = vmul.f32 %v7413, 1.442695
      %v8648 = vpow.pop %v8647
      %v8649 = vmul.f32 %v7414, 1.442695
      %v8650 = vpow.pop %v8649
      %v8651 = vmul.f32 %v7415, 1.442695
      %v8652 = vpow.pop %v8651
      %v8653 = vmul.f32 %v7416, 1.442695
      %v8654 = vpow.pop %v8653
      %v8655 = vmul.f32 %v7417, 1.442695
      %v8656 = vpow.pop %v8655
      %v8657 = vmul.f32 %v7418, 1.442695
      %v8658 = vpow.pop %v8657
      %v8659 = vmul.f32 %v7419, 1.442695
      %v8660 = vpow.pop %v8659
      %v8661 = vmul.f32 %v7420, 1.442695
      %v8662 = vpow.pop %v8661
      %v8663 = vmul.f32 %v7421, 1.442695
      %v8664 = vpow.pop %v8663
      %v8665 = vmul.f32 %v7422, 1.442695
      %v8666 = vpow.pop %v8665
      %v8667 = vmul.f32 %v7423, 1.442695
      %v8668 = vpow.pop %v8667
      %v8669 = vmul.f32 %v7424, 1.442695
      %v8670 = vpow.pop %v8669
      %v8671 = vmul.f32 %v7425, 1.442695
      %v8672 = vpow.pop %v8671
      %v8673 = vmul.f32 %v7426, 1.442695
      %v8674 = vpow.pop %v8673
      %v8675 = vmul.f32 %v7427, 1.442695
      %v8676 = vpow.pop %v8675
      %v8677 = vmul.f32 %v7428, 1.442695
      %v8678 = vpow.pop %v8677
      %v8679 = vmul.f32 %v7429, 1.442695
      %v8680 = vpow.pop %v8679
      %v8681 = vmul.f32 %v7430, 1.442695
      %v8682 = vpow.pop %v8681
      %v8683 = vmul.f32 %v7431, 1.442695
      %v8684 = vpow.pop %v8683
      %v8685 = vmul.f32 %v7432, 1.442695
      %v8686 = vpow.pop %v8685
      %v8687 = vmul.f32 %v7433, 1.442695
      %v8688 = vpow.pop %v8687
      %v8689 = vmul.f32 %v7434, 1.442695
      %v8690 = vpow.pop %v8689
      %v8691 = vmul.f32 %v7435, 1.442695
      %v8692 = vpow.pop %v8691
      %v8693 = vmul.f32 %v7436, 1.442695
      %v8694 = vpow.pop %v8693
      %v8695 = vmul.f32 %v7437, 1.442695
      %v8696 = vpow.pop %v8695
      %v8697 = vmul.f32 %v7438, 1.442695
      %v8698 = vpow.pop %v8697
      %v8699 = vmul.f32 %v7439, 1.442695
      %v8700 = vpow.pop %v8699
      %v8701 = vmul.f32 %v7440, 1.442695
      %v8702 = vpow.pop %v8701
      %v8703 = vmul.f32 %v7441, 1.442695
      %v8704 = vpow.pop %v8703
      %v8705 = vmul.f32 %v7442, 1.442695
      %v8706 = vpow.pop %v8705
      %v8707 = vmul.f32 %v7443, 1.442695
      %v8708 = vpow.pop %v8707
      %v8709 = vmul.f32 %v7444, 1.442695
      %v8710 = vpow.pop %v8709
      %v8711 = vmul.f32 %v7445, 1.442695
      %v8712 = vpow.pop %v8711
      %v8713 = vmul.f32 %v7446, 1.442695
      %v8714 = vpow.pop %v8713
      %v8715 = vmul.f32 %v7447, 1.442695
      %v8716 = vpow.pop %v8715
      %v8717 = vmul.f32 %v7448, 1.442695
      %v8718 = vpow.pop %v8717
      %v8719 = vmul.f32 %v7449, 1.442695
      %v8720 = vpow.pop %v8719
      %v8721 = vmul.f32 %v7450, 1.442695
      %v8722 = vpow.pop %v8721
      %v8723 = vmul.f32 %v7451, 1.442695
      %v8724 = vpow.pop %v8723
      %v8725 = vmul.f32 %v7452, 1.442695
      %v8726 = vpow.pop %v8725
      %v8727 = vmul.f32 %v7453, 1.442695
      %v8728 = vpow.pop %v8727
      %v8729 = vmul.f32 %v7454, 1.442695
      %v8730 = vpow.pop %v8729
      %v8731 = vmul.f32 %v7455, 1.442695
      %v8732 = vpow.pop %v8731
      %v8733 = vmul.f32 %v7456, 1.442695
      %v8734 = vpow.pop %v8733
      %v8735 = vmul.f32 %v7457, 1.442695
      %v8736 = vpow.pop %v8735
      %v8737 = vmul.f32 %v7458, 1.442695
      %v8738 = vpow.pop %v8737
      %v8739 = vmul.f32 %v7459, 1.442695
      %v8740 = vpow.pop %v8739
      %v8741 = vmul.f32 %v7460, 1.442695
      %v8742 = vpow.pop %v8741
      %v8743 = vmul.f32 %v7461, 1.442695
      %v8744 = vpow.pop %v8743
      %v8745 = vmul.f32 %v7462, 1.442695
      %v8746 = vpow.pop %v8745
      %v8747 = vmul.f32 %v7463, 1.442695
      %v8748 = vpow.pop %v8747
      %v8749 = vmul.f32 %v7464, 1.442695
      %v8750 = vpow.pop %v8749
      %v8751 = vmul.f32 %v7465, 1.442695
      %v8752 = vpow.pop %v8751
      %v8753 = vmul.f32 %v7466, 1.442695
      %v8754 = vpow.pop %v8753
      %v8755 = vmul.f32 %v7467, 1.442695
      %v8756 = vpow.pop %v8755
      %v8757 = vmul.f32 %v7468, 1.442695
      %v8758 = vpow.pop %v8757
      %v8759 = vmul.f32 %v7469, 1.442695
      %v8760 = vpow.pop %v8759
      %v8761 = vmul.f32 %v7470, 1.442695
      %v8762 = vpow.pop %v8761
      %v8763 = vmul.f32 %v7471, 1.442695
      %v8764 = vpow.pop %v8763
      %v8765 = vmul.f32 %v7472, 1.442695
      %v8766 = vpow.pop %v8765
      %v8767 = vmul.f32 %v7473, 1.442695
      %v8768 = vpow.pop %v8767
      %v8769 = vmul.f32 %v7474, 1.442695
      %v8770 = vpow.pop %v8769
      %v8771 = vmul.f32 %v7475, 1.442695
      %v8772 = vpow.pop %v8771
      %v8773 = vmul.f32 %v7476, 1.442695
      %v8774 = vpow.pop %v8773
      %v8775 = vmul.f32 %v7477, 1.442695
      %v8776 = vpow.pop %v8775
      %v8777 = vmul.f32 %v7478, 1.442695
      %v8778 = vpow.pop %v8777
      %v8779 = vmul.f32 %v7479, 1.442695
      %v8780 = vpow.pop %v8779
      %v8781 = vmul.f32 %v7480, 1.442695
      %v8782 = vpow.pop %v8781
      %v8783 = vmul.f32 %v7481, 1.442695
      %v8784 = vpow.pop %v8783
      %v8785 = vmul.f32 %v7482, 1.442695
      %v8786 = vpow.pop %v8785
      %v8787 = vmul.f32 %v7483, 1.442695
      %v8788 = vpow.pop %v8787
      %v8789 = vmul.f32 %v7484, 1.442695
      %v8790 = vpow.pop %v8789
      %v8791 = vmul.f32 %v7485, 1.442695
      %v8792 = vpow.pop %v8791
      %v8793 = vmul.f32 %v7486, 1.442695
      %v8794 = vpow.pop %v8793
      %v8795 = vmul.f32 %v7487, 1.442695
      %v8796 = vpow.pop %v8795
      %v8797 = vmul.f32 %v7488, 1.442695
      %v8798 = vpow.pop %v8797
      %v8799 = vmul.f32 %v7489, 1.442695
      %v8800 = vpow.pop %v8799
      %v8801 = vmul.f32 %v7490, 1.442695
      %v8802 = vpow.pop %v8801
      %v8803 = vmul.f32 %v7491, 1.442695
      %v8804 = vpow.pop %v8803
      %v8805 = vmul.f32 %v7492, 1.442695
      %v8806 = vpow.pop %v8805
      %v8807 = vmul.f32 %v7493, 1.442695
      %v8808 = vpow.pop %v8807
      %v8809 = vmul.f32 %v7494, 1.442695
      %v8810 = vpow.pop %v8809
      %v8811 = vmul.f32 %v7495, 1.442695
      %v8812 = vpow.pop %v8811
      %v8813 = vmul.f32 %v7496, 1.442695
      %v8814 = vpow.pop %v8813
      %v8815 = vmul.f32 %v7497, 1.442695
      %v8816 = vpow.pop %v8815
      %v8817 = vmul.f32 %v7498, 1.442695
      %v8818 = vpow.pop %v8817
      %v8819 = vmul.f32 %v7499, 1.442695
      %v8820 = vpow.pop %v8819
      %v8821 = vmul.f32 %v7500, 1.442695
      %v8822 = vpow.pop %v8821
      %v8823 = vmul.f32 %v7501, 1.442695
      %v8824 = vpow.pop %v8823
      %v8825 = vmul.f32 %v7502, 1.442695
      %v8826 = vpow.pop %v8825
      %v8827 = vmul.f32 %v7503, 1.442695
      %v8828 = vpow.pop %v8827
      %v8829 = vmul.f32 %v7504, 1.442695
      %v8830 = vpow.pop %v8829
      %v8831 = vmul.f32 %v7505, 1.442695
      %v8832 = vpow.pop %v8831
      %v8833 = vmul.f32 %v7506, 1.442695
      %v8834 = vpow.pop %v8833
      %v8835 = vmul.f32 %v7507, 1.442695
      %v8836 = vpow.pop %v8835
      %v8837 = vmul.f32 %v7508, 1.442695
      %v8838 = vpow.pop %v8837
      %v8839 = vmul.f32 %v7509, 1.442695
      %v8840 = vpow.pop %v8839
      %v8841 = vmul.f32 %v7510, 1.442695
      %v8842 = vpow.pop %v8841
      %v8843 = vmul.f32 %v7511, 1.442695
      %v8844 = vpow.pop %v8843
      %v8845 = vmul.f32 %v7512, 1.442695
      %v8846 = vpow.pop %v8845
      %v8847 = vmul.f32 %v7513, 1.442695
      %v8848 = vpow.pop %v8847
      %v8849 = vmul.f32 %v7514, 1.442695
      %v8850 = vpow.pop %v8849
      %v8851 = vmul.f32 %v7515, 1.442695
      %v8852 = vpow.pop %v8851
      %v8853 = vmul.f32 %v7516, 1.442695
      %v8854 = vpow.pop %v8853
      %v8855 = vmul.f32 %v7517, 1.442695
      %v8856 = vpow.pop %v8855
      %v8857 = vmul.f32 %v7518, 1.442695
      %v8858 = vpow.pop %v8857
      %v8859 = vmul.f32 %v7519, 1.442695
      %v8860 = vpow.pop %v8859
      %v8861 = vmul.f32 %v7520, 1.442695
      %v8862 = vpow.pop %v8861
      %v8863 = vmul.f32 %v7521, 1.442695
      %v8864 = vpow.pop %v8863
      %v8865 = vmul.f32 %v7522, 1.442695
      %v8866 = vpow.pop %v8865
      %v8867 = vmul.f32 %v7523, 1.442695
      %v8868 = vpow.pop %v8867
      %v8869 = vmul.f32 %v7524, 1.442695
      %v8870 = vpow.pop %v8869
      %v8871 = vmul.f32 %v7525, 1.442695
      %v8872 = vpow.pop %v8871
      %v8873 = vmul.f32 %v7526, 1.442695
      %v8874 = vpow.pop %v8873
      %v8875 = vmul.f32 %v7527, 1.442695
      %v8876 = vpow.pop %v8875
      %v8877 = vmul.f32 %v7528, 1.442695
      %v8878 = vpow.pop %v8877
      %v8879 = vmul.f32 %v7529, 1.442695
      %v8880 = vpow.pop %v8879
      %v8881 = vmul.f32 %v7530, 1.442695
      %v8882 = vpow.pop %v8881
      %v8883 = vmul.f32 %v7531, 1.442695
      %v8884 = vpow.pop %v8883
      %v8885 = vmul.f32 %v7532, 1.442695
      %v8886 = vpow.pop %v8885
      %v8887 = vmul.f32 %v7533, 1.442695
      %v8888 = vpow.pop %v8887
      %v8889 = vmul.f32 %v7534, 1.442695
      %v8890 = vpow.pop %v8889
      %v8891 = vmul.f32 %v7535, 1.442695
      %v8892 = vpow.pop %v8891
      %v8893 = vmul.f32 %v7536, 1.442695
      %v8894 = vpow.pop %v8893
      %v8895 = vmul.f32 %v7537, 1.442695
      %v8896 = vpow.pop %v8895
      %v8897 = vmul.f32 %v7538, 1.442695
      %v8898 = vpow.pop %v8897
      %v8899 = vmul.f32 %v7539, 1.442695
      %v8900 = vpow.pop %v8899
      %v8901 = vmul.f32 %v7540, 1.442695
      %v8902 = vpow.pop %v8901
      %v8903 = vmul.f32 %v7541, 1.442695
      %v8904 = vpow.pop %v8903
      %v8905 = vmul.f32 %v7542, 1.442695
      %v8906 = vpow.pop %v8905
      %v8907 = vmul.f32 %v7543, 1.442695
      %v8908 = vpow.pop %v8907
      %v8909 = vmul.f32 %v7544, 1.442695
      %v8910 = vpow.pop %v8909
      %v8911 = vmul.f32 %v7545, 1.442695
      %v8912 = vpow.pop %v8911
      %v8913 = vmul.f32 %v7546, 1.442695
      %v8914 = vpow.pop %v8913
      %v8915 = vmul.f32 %v7547, 1.442695
      %v8916 = vpow.pop %v8915
      %v8917 = vmul.f32 %v7548, 1.442695
      %v8918 = vpow.pop %v8917
      %v8919 = vmul.f32 %v7549, 1.442695
      %v8920 = vpow.pop %v8919
      %v8921 = vmul.f32 %v7550, 1.442695
      %v8922 = vpow.pop %v8921
      %v8923 = vmul.f32 %v7551, 1.442695
      %v8924 = vpow.pop %v8923
      %v8925 = vmul.f32 %v7552, 1.442695
      %v8926 = vpow.pop %v8925
      %v8927 = vmul.f32 %v7553, 1.442695
      %v8928 = vpow.pop %v8927
      %v8929 = vmul.f32 %v7554, 1.442695
      %v8930 = vpow.pop %v8929
      %v8931 = vmul.f32 %v7555, 1.442695
      %v8932 = vpow.pop %v8931
      %v8933 = vmul.f32 %v7556, 1.442695
      %v8934 = vpow.pop %v8933
      %v8935 = vmul.f32 %v7557, 1.442695
      %v8936 = vpow.pop %v8935
      %v8937 = vmul.f32 %v7558, 1.442695
      %v8938 = vpow.pop %v8937
      %v8939 = vmul.f32 %v7559, 1.442695
      %v8940 = vpow.pop %v8939
      %v8941 = vmul.f32 %v7560, 1.442695
      %v8942 = vpow.pop %v8941
      %v8943 = vmul.f32 %v7561, 1.442695
      %v8944 = vpow.pop %v8943
      %v8945 = vmul.f32 %v7562, 1.442695
      %v8946 = vpow.pop %v8945
      %v8947 = vmul.f32 %v7563, 1.442695
      %v8948 = vpow.pop %v8947
      %v8949 = vmul.f32 %v7564, 1.442695
      %v8950 = vpow.pop %v8949
      %v8951 = vmul.f32 %v7565, 1.442695
      %v8952 = vpow.pop %v8951
      %v8953 = vmul.f32 %v7566, 1.442695
      %v8954 = vpow.pop %v8953
      %v8955 = vmul.f32 %v7567, 1.442695
      %v8956 = vpow.pop %v8955
      %v8957 = vmul.f32 %v7568, 1.442695
      %v8958 = vpow.pop %v8957
      %v8959 = vmul.f32 %v7569, 1.442695
      %v8960 = vpow.pop %v8959
      %v8961 = vmul.f32 %v7570, 1.442695
      %v8962 = vpow.pop %v8961
      %v8963 = vmul.f32 %v7571, 1.442695
      %v8964 = vpow.pop %v8963
      %v8965 = vmul.f32 %v7572, 1.442695
      %v8966 = vpow.pop %v8965
      %v8967 = vmul.f32 %v7573, 1.442695
      %v8968 = vpow.pop %v8967
      %v8969 = vmul.f32 %v7574, 1.442695
      %v8970 = vpow.pop %v8969
      %v8971 = vmul.f32 %v7575, 1.442695
      %v8972 = vpow.pop %v8971
      %v8973 = vmul.f32 %v7576, 1.442695
      %v8974 = vpow.pop %v8973
      %v8975 = vmul.f32 %v7577, 1.442695
      %v8976 = vpow.pop %v8975
      %v8977 = vmul.f32 %v7578, 1.442695
      %v8978 = vpow.pop %v8977
      %v8979 = vmul.f32 %v7579, 1.442695
      %v8980 = vpow.pop %v8979
      %v8981 = vmul.f32 %v7580, 1.442695
      %v8982 = vpow.pop %v8981
      %v8983 = vmul.f32 %v7581, 1.442695
      %v8984 = vpow.pop %v8983
      %v8985 = vmul.f32 %v7582, 1.442695
      %v8986 = vpow.pop %v8985
      %v8987 = vmul.f32 %v7583, 1.442695
      %v8988 = vpow.pop %v8987
      %v8989 = vmul.f32 %v7584, 1.442695
      %v8990 = vpow.pop %v8989
      %v8991 = vmul.f32 %v7585, 1.442695
      %v8992 = vpow.pop %v8991
      %v8993 = vmul.f32 %v7586, 1.442695
      %v8994 = vpow.pop %v8993
      %v8995 = vmul.f32 %v7587, 1.442695
      %v8996 = vpow.pop %v8995
      %v8997 = vmul.f32 %v7588, 1.442695
      %v8998 = vpow.pop %v8997
      %v8999 = vmul.f32 %v7589, 1.442695
      %v9000 = vpow.pop %v8999
      %v9001 = vmul.f32 %v7590, 1.442695
      %v9002 = vpow.pop %v9001
      %v9003 = vmul.f32 %v7591, 1.442695
      %v9004 = vpow.pop %v9003
      %v9005 = vmul.f32 %v7592, 1.442695
      %v9006 = vpow.pop %v9005
      %v9007 = vmul.f32 %v7593, 1.442695
      %v9008 = vpow.pop %v9007
      %v9009 = vmul.f32 %v7594, 1.442695
      %v9010 = vpow.pop %v9009
      %v9011 = vmul.f32 %v7595, 1.442695
      %v9012 = vpow.pop %v9011
      %v9013 = vmul.f32 %v7596, 1.442695
      %v9014 = vpow.pop %v9013
      %v9015 = vmul.f32 %v7597, 1.442695
      %v9016 = vpow.pop %v9015
      %v9017 = vmul.f32 %v7598, 1.442695
      %v9018 = vpow.pop %v9017
      %v9019 = vmul.f32 %v7599, 1.442695
      %v9020 = vpow.pop %v9019
      %v9021 = vmul.f32 %v7600, 1.442695
      %v9022 = vpow.pop %v9021
      %v9023 = vmul.f32 %v7601, 1.442695
      %v9024 = vpow.pop %v9023
      %v9025 = vmul.f32 %v7602, 1.442695
      %v9026 = vpow.pop %v9025
      %v9027 = vmul.f32 %v7603, 1.442695
      %v9028 = vpow.pop %v9027
      %v9029 = vmul.f32 %v7604, 1.442695
      %v9030 = vpow.pop %v9029
      %v9031 = vmul.f32 %v7605, 1.442695
      %v9032 = vpow.pop %v9031
      %v9033 = vmul.f32 %v7606, 1.442695
      %v9034 = vpow.pop %v9033
      %v9035 = vmul.f32 %v7607, 1.442695
      %v9036 = vpow.pop %v9035
      %v9037 = vmul.f32 %v7608, 1.442695
      %v9038 = vpow.pop %v9037
      %v9039 = vmul.f32 %v7609, 1.442695
      %v9040 = vpow.pop %v9039
      %v9041 = vmul.f32 %v7610, 1.442695
      %v9042 = vpow.pop %v9041
      %v9043 = vmul.f32 %v7611, 1.442695
      %v9044 = vpow.pop %v9043
      %v9045 = vmul.f32 %v7612, 1.442695
      %v9046 = vpow.pop %v9045
      %v9047 = vmul.f32 %v7613, 1.442695
      %v9048 = vpow.pop %v9047
      %v9049 = vmul.f32 %v7614, 1.442695
      %v9050 = vpow.pop %v9049
      %v9051 = vmul.f32 %v7615, 1.442695
      %v9052 = vpow.pop %v9051
      %v9053 = vmul.f32 %v7616, 1.442695
      %v9054 = vpow.pop %v9053
      %v9055 = vmul.f32 %v7617, 1.442695
      %v9056 = vpow.pop %v9055
      %v9057 = vmul.f32 %v7618, 1.442695
      %v9058 = vpow.pop %v9057
      %v9059 = vmul.f32 %v7619, 1.442695
      %v9060 = vpow.pop %v9059
      %v9061 = vmul.f32 %v7620, 1.442695
      %v9062 = vpow.pop %v9061
      %v9063 = vmul.f32 %v7621, 1.442695
      %v9064 = vpow.pop %v9063
      %v9065 = vmul.f32 %v7622, 1.442695
      %v9066 = vpow.pop %v9065
      %v9067 = vmul.f32 %v7623, 1.442695
      %v9068 = vpow.pop %v9067
      %v9069 = vmul.f32 %v7624, 1.442695
      %v9070 = vpow.pop %v9069
      %v9071 = vmul.f32 %v7625, 1.442695
      %v9072 = vpow.pop %v9071
      %v9073 = vmul.f32 %v7626, 1.442695
      %v9074 = vpow.pop %v9073
      %v9075 = vmul.f32 %v7627, 1.442695
      %v9076 = vpow.pop %v9075
      %v9077 = vmul.f32 %v7628, 1.442695
      %v9078 = vpow.pop %v9077
      %v9079 = vmul.f32 %v7629, 1.442695
      %v9080 = vpow.pop %v9079
      %v9081 = vmul.f32 %v7630, 1.442695
      %v9082 = vpow.pop %v9081
      %v9083 = vmul.f32 %v7631, 1.442695
      %v9084 = vpow.pop %v9083
      %v9085 = vmul.f32 %v7632, 1.442695
      %v9086 = vpow.pop %v9085
      %v9087 = vmul.f32 %v7633, 1.442695
      %v9088 = vpow.pop %v9087
      %v9089 = vmul.f32 %v7634, 1.442695
      %v9090 = vpow.pop %v9089
      %v9091 = vmul.f32 %v7635, 1.442695
      %v9092 = vpow.pop %v9091
      %v9093 = vmul.f32 %v7636, 1.442695
      %v9094 = vpow.pop %v9093
      %v9095 = vmul.f32 %v7637, 1.442695
      %v9096 = vpow.pop %v9095
      %v9097 = vmul.f32 %v7638, 1.442695
      %v9098 = vpow.pop %v9097
      %v9099 = vmul.f32 %v7639, 1.442695
      %v9100 = vpow.pop %v9099
      %v9101 = vmul.f32 %v7640, 1.442695
      %v9102 = vpow.pop %v9101
      %v9103 = vmul.f32 %v7641, 1.442695
      %v9104 = vpow.pop %v9103
      %v9105 = vmul.f32 %v7642, 1.442695
      %v9106 = vpow.pop %v9105
      %v9107 = vmul.f32 %v7643, 1.442695
      %v9108 = vpow.pop %v9107
      %v9109 = vmul.f32 %v7644, 1.442695
      %v9110 = vpow.pop %v9109
      %v9111 = vmul.f32 %v7645, 1.442695
      %v9112 = vpow.pop %v9111
      %v9113 = vmul.f32 %v7646, 1.442695
      %v9114 = vpow.pop %v9113
      %v9115 = vmul.f32 %v7647, 1.442695
      %v9116 = vpow.pop %v9115
      %v9117 = vmul.f32 %v7648, 1.442695
      %v9118 = vpow.pop %v9117
      %v9119 = vmul.f32 %v7649, 1.442695
      %v9120 = vpow.pop %v9119
      %v9121 = vmul.f32 %v7650, 1.442695
      %v9122 = vpow.pop %v9121
      %v9123 = vmul.f32 %v7651, 1.442695
      %v9124 = vpow.pop %v9123
      %v9125 = vmul.f32 %v7652, 1.442695
      %v9126 = vpow.pop %v9125
      %v9127 = vmul.f32 %v7653, 1.442695
      %v9128 = vpow.pop %v9127
      %v9129 = vmul.f32 %v7654, 1.442695
      %v9130 = vpow.pop %v9129
      %v9131 = vmul.f32 %v7655, 1.442695
      %v9132 = vpow.pop %v9131
      %v9133 = vmul.f32 %v7656, 1.442695
      %v9134 = vpow.pop %v9133
      %v9135 = vmul.f32 %v7657, 1.442695
      %v9136 = vpow.pop %v9135
      %v9137 = vmul.f32 %v7658, 1.442695
      %v9138 = vpow.pop %v9137
      %v9139 = vmul.f32 %v7659, 1.442695
      %v9140 = vpow.pop %v9139
      %v9141 = vmul.f32 %v7660, 1.442695
      %v9142 = vpow.pop %v9141
      %v9143 = vmul.f32 %v7661, 1.442695
      %v9144 = vpow.pop %v9143
      %v9145 = vmul.f32 %v7662, 1.442695
      %v9146 = vpow.pop %v9145
      %v9147 = vmul.f32 %v7663, 1.442695
      %v9148 = vpow.pop %v9147
      %v9149 = vmul.f32 %v7664, 1.442695
      %v9150 = vpow.pop %v9149
      %v9151 = vmul.f32 %v7665, 1.442695
      %v9152 = vpow.pop %v9151
      %v9153 = vmul.f32 %v7666, 1.442695
      %v9154 = vpow.pop %v9153
      %v9155 = vmul.f32 %v7667, 1.442695
      %v9156 = vpow.pop %v9155
      %v9157 = vmul.f32 %v7668, 1.442695
      %v9158 = vpow.pop %v9157
      %v9159 = vmul.f32 %v7669, 1.442695
      %v9160 = vpow.pop %v9159
      %v9161 = vmul.f32 %v7670, 1.442695
      %v9162 = vpow.pop %v9161
      %v9163 = vmul.f32 %v7671, 1.442695
      %v9164 = vpow.pop %v9163
      %v9165 = vmul.f32 %v7672, 1.442695
      %v9166 = vpow.pop %v9165
      %v9167 = vmul.f32 %v7673, 1.442695
      %v9168 = vpow.pop %v9167
      %v9169 = vmul.f32 %v7674, 1.442695
      %v9170 = vpow.pop %v9169
      %v9171 = vmul.f32 %v7675, 1.442695
      %v9172 = vpow.pop %v9171
      %v9173 = vmul.f32 %v7676, 1.442695
      %v9174 = vpow.pop %v9173
      %v9175 = vmul.f32 %v7677, 1.442695
      %v9176 = vpow.pop %v9175
      %v9177 = vmul.f32 %v7678, 1.442695
      %v9178 = vpow.pop %v9177
      %v9179 = vmul.f32 %v7679, 1.442695
      %v9180 = vpow.pop %v9179
      %v9181 = vmul.f32 %v7680, 1.442695
      %v9182 = vpow.pop %v9181
      %v9183 = vmul.f32 %v7681, 1.442695
      %v9184 = vpow.pop %v9183
      %v9185 = vmul.f32 %v7682, 1.442695
      %v9186 = vpow.pop %v9185
      %v9187 = vmul.f32 %v7683, 1.442695
      %v9188 = vpow.pop %v9187
      %v9189 = vmul.f32 %v7684, 1.442695
      %v9190 = vpow.pop %v9189
      %v9191 = vmul.f32 %v7685, 1.442695
      %v9192 = vpow.pop %v9191
      %v9193 = vmul.f32 %v7686, 1.442695
      %v9194 = vpow.pop %v9193
      %v9195 = vmul.f32 %v7687, 1.442695
      %v9196 = vpow.pop %v9195
      %v9197 = vmul.f32 %v7688, 1.442695
      %v9198 = vpow.pop %v9197
      %v9199 = vmul.f32 %v7689, 1.442695
      %v9200 = vpow.pop %v9199
      %v9201 = vmul.f32 %v7690, 1.442695
      %v9202 = vpow.pop %v9201
      %v9203 = vmul.f32 %v7691, 1.442695
      %v9204 = vpow.pop %v9203
      %v9205 = vmul.f32 %v7692, 1.442695
      %v9206 = vpow.pop %v9205
      %v9207 = vmul.f32 %v7693, 1.442695
      %v9208 = vpow.pop %v9207
      %v9209 = vmul.f32 %v7694, 1.442695
      %v9210 = vpow.pop %v9209
      %v9211 = vmul.f32 %v7695, 1.442695
      %v9212 = vpow.pop %v9211
      %v9213 = vmul.f32 %v7696, 1.442695
      %v9214 = vpow.pop %v9213
      %v9215 = vmul.f32 %v7697, 1.442695
      %v9216 = vpow.pop %v9215
      %v9217 = vmul.f32 %v7698, 1.442695
      %v9218 = vpow.pop %v9217
      %v9219 = vmul.f32 %v7699, 1.442695
      %v9220 = vpow.pop %v9219
      %v9221 = vmul.f32 %v7700, 1.442695
      %v9222 = vpow.pop %v9221
      %v9223 = vmul.f32 %v7701, 1.442695
      %v9224 = vpow.pop %v9223
      %v9225 = vmul.f32 %v7702, 1.442695
      %v9226 = vpow.pop %v9225
      %v9227 = vmul.f32 %v7703, 1.442695
      %v9228 = vpow.pop %v9227
      %v9229 = vmul.f32 %v7704, 1.442695
      %v9230 = vpow.pop %v9229
      %v9231 = vmul.f32 %v7705, 1.442695
      %v9232 = vpow.pop %v9231
      %v9233 = vmul.f32 %v7706, 1.442695
      %v9234 = vpow.pop %v9233
      %v9235 = vmul.f32 %v7707, 1.442695
      %v9236 = vpow.pop %v9235
      %v9237 = vmul.f32 %v7708, 1.442695
      %v9238 = vpow.pop %v9237
      %v9239 = vmul.f32 %v7709, 1.442695
      %v9240 = vpow.pop %v9239
      %v9241 = vmul.f32 %v7710, 1.442695
      %v9242 = vpow.pop %v9241
      %v9243 = vmul.f32 %v7711, 1.442695
      %v9244 = vpow.pop %v9243
      %v9245 = vmul.f32 %v7712, 1.442695
      %v9246 = vpow.pop %v9245
      %v9247 = vmul.f32 %v7713, 1.442695
      %v9248 = vpow.pop %v9247
      %v9249 = vmul.f32 %v7714, 1.442695
      %v9250 = vpow.pop %v9249
      %v9251 = vsel %vm6019, %v7716, 0.0
      %v9252 = vsel %vm6020, %v7718, 0.0
      %v9253 = vsel %vm6021, %v7720, 0.0
      %v9254 = vsel %vm6022, %v7722, 0.0
      %v9255 = vsel %vm6023, %v7724, 0.0
      %v9256 = vsel %vm6024, %v7726, 0.0
      %v9257 = vsel %vm6025, %v7728, 0.0
      %v9258 = vsel %vm6026, %v7730, 0.0
      %v9259 = vsel %vm6027, %v7732, 0.0
      %v9260 = vsel %vm6028, %v7734, 0.0
      %v9261 = vsel %vm6029, %v7736, 0.0
      %v9262 = vsel %vm6030, %v7738, 0.0
      %v9263 = vsel %vm6031, %v7740, 0.0
      %v9264 = vsel %vm6032, %v7742, 0.0
      %v9265 = vsel %vm6033, %v7744, 0.0
      %v9266 = vsel %vm6034, %v7746, 0.0
      %v9267 = vsel %vm6035, %v7748, 0.0
      %v9268 = vsel %vm6036, %v7750, 0.0
      %v9269 = vsel %vm6037, %v7752, 0.0
      %v9270 = vsel %vm6038, %v7754, 0.0
      %v9271 = vsel %vm6039, %v7756, 0.0
      %v9272 = vsel %vm6040, %v7758, 0.0
      %v9273 = vsel %vm6041, %v7760, 0.0
      %v9274 = vsel %vm6042, %v7762, 0.0
      %v9275 = vsel %vm6043, %v7764, 0.0
      %v9276 = vsel %vm6044, %v7766, 0.0
      %v9277 = vsel %vm6045, %v7768, 0.0
      %v9278 = vsel %vm6046, %v7770, 0.0
      %v9279 = vsel %vm6047, %v7772, 0.0
      %v9280 = vsel %vm6048, %v7774, 0.0
      %v9281 = vsel %vm6049, %v7776, 0.0
      %v9282 = vsel %vm6050, %v7778, 0.0
      %v9283 = vsel %vm6051, %v7780, 0.0
      %v9284 = vsel %vm6052, %v7782, 0.0
      %v9285 = vsel %vm6053, %v7784, 0.0
      %v9286 = vsel %vm6054, %v7786, 0.0
      %v9287 = vsel %vm6055, %v7788, 0.0
      %v9288 = vsel %vm6056, %v7790, 0.0
      %v9289 = vsel %vm6057, %v7792, 0.0
      %v9290 = vsel %vm6058, %v7794, 0.0
      %v9291 = vsel %vm6059, %v7796, 0.0
      %v9292 = vsel %vm6060, %v7798, 0.0
      %v9293 = vsel %vm6061, %v7800, 0.0
      %v9294 = vsel %vm6062, %v7802, 0.0
      %v9295 = vsel %vm6063, %v7804, 0.0
      %v9296 = vsel %vm6064, %v7806, 0.0
      %v9297 = vsel %vm6065, %v7808, 0.0
      %v9298 = vsel %vm6066, %v7810, 0.0
      %v9299 = vsel %vm6067, %v7812, 0.0
      %v9300 = vsel %vm6068, %v7814, 0.0
      %v9301 = vsel %vm6069, %v7816, 0.0
      %v9302 = vsel %vm6070, %v7818, 0.0
      %v9303 = vsel %vm6071, %v7820, 0.0
      %v9304 = vsel %vm6072, %v7822, 0.0
      %v9305 = vsel %vm6073, %v7824, 0.0
      %v9306 = vsel %vm6074, %v7826, 0.0
      %v9307 = vsel %vm6075, %v7828, 0.0
      %v9308 = vsel %vm6076, %v7830, 0.0
      %v9309 = vsel %vm6077, %v7832, 0.0
      %v9310 = vsel %vm6078, %v7834, 0.0
      %v9311 = vsel %vm6079, %v7836, 0.0
      %v9312 = vsel %vm6080, %v7838, 0.0
      %v9313 = vsel %vm6081, %v7840, 0.0
      %v9314 = vsel %vm6082, %v7842, 0.0
      %v9315 = vsel %vm6083, %v7844, 0.0
      %v9316 = vsel %vm6084, %v7846, 0.0
      %v9317 = vsel %vm6085, %v7848, 0.0
      %v9318 = vsel %vm6086, %v7850, 0.0
      %v9319 = vsel %vm6087, %v7852, 0.0
      %v9320 = vsel %vm6088, %v7854, 0.0
      %v9321 = vsel %vm6089, %v7856, 0.0
      %v9322 = vsel %vm6090, %v7858, 0.0
      %v9323 = vsel %vm6091, %v7860, 0.0
      %v9324 = vsel %vm6092, %v7862, 0.0
      %v9325 = vsel %vm6093, %v7864, 0.0
      %v9326 = vsel %vm6094, %v7866, 0.0
      %v9327 = vsel %vm6095, %v7868, 0.0
      %v9328 = vsel %vm6096, %v7870, 0.0
      %v9329 = vsel %vm6097, %v7872, 0.0
      %v9330 = vsel %vm6098, %v7874, 0.0
      %v9331 = vsel %vm6099, %v7876, 0.0
      %v9332 = vsel %vm6100, %v7878, 0.0
      %v9333 = vsel %vm6101, %v7880, 0.0
      %v9334 = vsel %vm6102, %v7882, 0.0
      %v9335 = vsel %vm6103, %v7884, 0.0
      %v9336 = vsel %vm6104, %v7886, 0.0
      %v9337 = vsel %vm6105, %v7888, 0.0
      %v9338 = vsel %vm6106, %v7890, 0.0
      %v9339 = vsel %vm6107, %v7892, 0.0
      %v9340 = vsel %vm6108, %v7894, 0.0
      %v9341 = vsel %vm6109, %v7896, 0.0
      %v9342 = vsel %vm6110, %v7898, 0.0
      %v9343 = vsel %vm6111, %v7900, 0.0
      %v9344 = vsel %vm6112, %v7902, 0.0
      %v9345 = vsel %vm6113, %v7904, 0.0
      %v9346 = vsel %vm6114, %v7906, 0.0
      %v9347 = vsel %vm6115, %v7908, 0.0
      %v9348 = vsel %vm6116, %v7910, 0.0
      %v9349 = vsel %vm6117, %v7912, 0.0
      %v9350 = vsel %vm6118, %v7914, 0.0
      %v9351 = vsel %vm6119, %v7916, 0.0
      %v9352 = vsel %vm6120, %v7918, 0.0
      %v9353 = vsel %vm6121, %v7920, 0.0
      %v9354 = vsel %vm6122, %v7922, 0.0
      %v9355 = vsel %vm6123, %v7924, 0.0
      %v9356 = vsel %vm6124, %v7926, 0.0
      %v9357 = vsel %vm6125, %v7928, 0.0
      %v9358 = vsel %vm6126, %v7930, 0.0
      %v9359 = vsel %vm6127, %v7932, 0.0
      %v9360 = vsel %vm6128, %v7934, 0.0
      %v9361 = vsel %vm6129, %v7936, 0.0
      %v9362 = vsel %vm6130, %v7938, 0.0
      %v9363 = vsel %vm6131, %v7940, 0.0
      %v9364 = vsel %vm6132, %v7942, 0.0
      %v9365 = vsel %vm6133, %v7944, 0.0
      %v9366 = vsel %vm6134, %v7946, 0.0
      %v9367 = vsel %vm6135, %v7948, 0.0
      %v9368 = vsel %vm6136, %v7950, 0.0
      %v9369 = vsel %vm6137, %v7952, 0.0
      %v9370 = vsel %vm6138, %v7954, 0.0
      %v9371 = vsel %vm6139, %v7956, 0.0
      %v9372 = vsel %vm6140, %v7958, 0.0
      %v9373 = vsel %vm6141, %v7960, 0.0
      %v9374 = vsel %vm6142, %v7962, 0.0
      %v9375 = vsel %vm6143, %v7964, 0.0
      %v9376 = vsel %vm6144, %v7966, 0.0
      %v9377 = vsel %vm6145, %v7968, 0.0
      %v9378 = vsel %vm6146, %v7970, 0.0
      %v9379 = vsel %vm6147, %v7972, 0.0
      %v9380 = vsel %vm6148, %v7974, 0.0
      %v9381 = vsel %vm6149, %v7976, 0.0
      %v9382 = vsel %vm6150, %v7978, 0.0
      %v9383 = vsel %vm6151, %v7980, 0.0
      %v9384 = vsel %vm6152, %v7982, 0.0
      %v9385 = vsel %vm6153, %v7984, 0.0
      %v9386 = vsel %vm6154, %v7986, 0.0
      %v9387 = vsel %vm6155, %v7988, 0.0
      %v9388 = vsel %vm6156, %v7990, 0.0
      %v9389 = vsel %vm6157, %v7992, 0.0
      %v9390 = vsel %vm6158, %v7994, 0.0
      %v9391 = vsel %vm6159, %v7996, 0.0
      %v9392 = vsel %vm6160, %v7998, 0.0
      %v9393 = vsel %vm6161, %v8000, 0.0
      %v9394 = vsel %vm6162, %v8002, 0.0
      %v9395 = vsel %vm6163, %v8004, 0.0
      %v9396 = vsel %vm6164, %v8006, 0.0
      %v9397 = vsel %vm6165, %v8008, 0.0
      %v9398 = vsel %vm6166, %v8010, 0.0
      %v9399 = vsel %vm6167, %v8012, 0.0
      %v9400 = vsel %vm6168, %v8014, 0.0
      %v9401 = vsel %vm6169, %v8016, 0.0
      %v9402 = vsel %vm6170, %v8018, 0.0
      %v9403 = vsel %vm6171, %v8020, 0.0
      %v9404 = vsel %vm6172, %v8022, 0.0
      %v9405 = vsel %vm6173, %v8024, 0.0
      %v9406 = vsel %vm6174, %v8026, 0.0
      %v9407 = vsel %vm6175, %v8028, 0.0
      %v9408 = vsel %vm6176, %v8030, 0.0
      %v9409 = vsel %vm6177, %v8032, 0.0
      %v9410 = vsel %vm6178, %v8034, 0.0
      %v9411 = vsel %vm6179, %v8036, 0.0
      %v9412 = vsel %vm6180, %v8038, 0.0
      %v9413 = vsel %vm6181, %v8040, 0.0
      %v9414 = vsel %vm6182, %v8042, 0.0
      %v9415 = vsel %vm6183, %v8044, 0.0
      %v9416 = vsel %vm6184, %v8046, 0.0
      %v9417 = vsel %vm6185, %v8048, 0.0
      %v9418 = vsel %vm6186, %v8050, 0.0
      %v9419 = vsel %vm6187, %v8052, 0.0
      %v9420 = vsel %vm6188, %v8054, 0.0
      %v9421 = vsel %vm6189, %v8056, 0.0
      %v9422 = vsel %vm6190, %v8058, 0.0
      %v9423 = vsel %vm6191, %v8060, 0.0
      %v9424 = vsel %vm6192, %v8062, 0.0
      %v9425 = vsel %vm6193, %v8064, 0.0
      %v9426 = vsel %vm6194, %v8066, 0.0
      %v9427 = vsel %vm6195, %v8068, 0.0
      %v9428 = vsel %vm6196, %v8070, 0.0
      %v9429 = vsel %vm6197, %v8072, 0.0
      %v9430 = vsel %vm6198, %v8074, 0.0
      %v9431 = vsel %vm6199, %v8076, 0.0
      %v9432 = vsel %vm6200, %v8078, 0.0
      %v9433 = vsel %vm6201, %v8080, 0.0
      %v9434 = vsel %vm6202, %v8082, 0.0
      %v9435 = vsel %vm6203, %v8084, 0.0
      %v9436 = vsel %vm6204, %v8086, 0.0
      %v9437 = vsel %vm6205, %v8088, 0.0
      %v9438 = vsel %vm6206, %v8090, 0.0
      %v9439 = vsel %vm6207, %v8092, 0.0
      %v9440 = vsel %vm6208, %v8094, 0.0
      %v9441 = vsel %vm6209, %v8096, 0.0
      %v9442 = vsel %vm6210, %v8098, 0.0
      %v9443 = vsel %vm6211, %v8100, 0.0
      %v9444 = vsel %vm6212, %v8102, 0.0
      %v9445 = vsel %vm6213, %v8104, 0.0
      %v9446 = vsel %vm6214, %v8106, 0.0
      %v9447 = vsel %vm6215, %v8108, 0.0
      %v9448 = vsel %vm6216, %v8110, 0.0
      %v9449 = vsel %vm6217, %v8112, 0.0
      %v9450 = vsel %vm6218, %v8114, 0.0
      %v9451 = vsel %vm6219, %v8116, 0.0
      %v9452 = vsel %vm6220, %v8118, 0.0
      %v9453 = vsel %vm6221, %v8120, 0.0
      %v9454 = vsel %vm6222, %v8122, 0.0
      %v9455 = vsel %vm6223, %v8124, 0.0
      %v9456 = vsel %vm6224, %v8126, 0.0
      %v9457 = vsel %vm6225, %v8128, 0.0
      %v9458 = vsel %vm6226, %v8130, 0.0
      %v9459 = vsel %vm6227, %v8132, 0.0
      %v9460 = vsel %vm6228, %v8134, 0.0
      %v9461 = vsel %vm6229, %v8136, 0.0
      %v9462 = vsel %vm6230, %v8138, 0.0
      %v9463 = vsel %vm6231, %v8140, 0.0
      %v9464 = vsel %vm6232, %v8142, 0.0
      %v9465 = vsel %vm6233, %v8144, 0.0
      %v9466 = vsel %vm6234, %v8146, 0.0
      %v9467 = vsel %vm6235, %v8148, 0.0
      %v9468 = vsel %vm6236, %v8150, 0.0
      %v9469 = vsel %vm6237, %v8152, 0.0
      %v9470 = vsel %vm6238, %v8154, 0.0
      %v9471 = vsel %vm6239, %v8156, 0.0
      %v9472 = vsel %vm6240, %v8158, 0.0
      %v9473 = vsel %vm6241, %v8160, 0.0
      %v9474 = vsel %vm6242, %v8162, 0.0
      %v9475 = vsel %vm6243, %v8164, 0.0
      %v9476 = vsel %vm6244, %v8166, 0.0
      %v9477 = vsel %vm6245, %v8168, 0.0
      %v9478 = vsel %vm6246, %v8170, 0.0
      %v9479 = vsel %vm6247, %v8172, 0.0
      %v9480 = vsel %vm6248, %v8174, 0.0
      %v9481 = vsel %vm6249, %v8176, 0.0
      %v9482 = vsel %vm6250, %v8178, 0.0
      %v9483 = vsel %vm6251, %v8180, 0.0
      %v9484 = vsel %vm6252, %v8182, 0.0
      %v9485 = vsel %vm6253, %v8184, 0.0
      %v9486 = vsel %vm6254, %v8186, 0.0
      %v9487 = vsel %vm6255, %v8188, 0.0
      %v9488 = vsel %vm6256, %v8190, 0.0
      %v9489 = vsel %vm6257, %v8192, 0.0
      %v9490 = vsel %vm6258, %v8194, 0.0
      %v9491 = vsel %vm6259, %v8196, 0.0
      %v9492 = vsel %vm6260, %v8198, 0.0
      %v9493 = vsel %vm6261, %v8200, 0.0
      %v9494 = vsel %vm6262, %v8202, 0.0
      %v9495 = vsel %vm6263, %v8204, 0.0
      %v9496 = vsel %vm6264, %v8206, 0.0
      %v9497 = vsel %vm6265, %v8208, 0.0
      %v9498 = vsel %vm6266, %v8210, 0.0
      %v9499 = vsel %vm6267, %v8212, 0.0
      %v9500 = vsel %vm6268, %v8214, 0.0
      %v9501 = vsel %vm6269, %v8216, 0.0
      %v9502 = vsel %vm6270, %v8218, 0.0
      %v9503 = vsel %vm6271, %v8220, 0.0
      %v9504 = vsel %vm6272, %v8222, 0.0
      %v9505 = vsel %vm6273, %v8224, 0.0
      %v9506 = vsel %vm6274, %v8226, 0.0
      %v9507 = vsel %vm6275, %v8228, 0.0
      %v9508 = vsel %vm6276, %v8230, 0.0
      %v9509 = vsel %vm6277, %v8232, 0.0
      %v9510 = vsel %vm6278, %v8234, 0.0
      %v9511 = vsel %vm6279, %v8236, 0.0
      %v9512 = vsel %vm6280, %v8238, 0.0
      %v9513 = vsel %vm6281, %v8240, 0.0
      %v9514 = vsel %vm6282, %v8242, 0.0
      %v9515 = vsel %vm6283, %v8244, 0.0
      %v9516 = vsel %vm6284, %v8246, 0.0
      %v9517 = vsel %vm6285, %v8248, 0.0
      %v9518 = vsel %vm6286, %v8250, 0.0
      %v9519 = vsel %vm6287, %v8252, 0.0
      %v9520 = vsel %vm6288, %v8254, 0.0
      %v9521 = vsel %vm6289, %v8256, 0.0
      %v9522 = vsel %vm6290, %v8258, 0.0
      %v9523 = vsel %vm6291, %v8260, 0.0
      %v9524 = vsel %vm6292, %v8262, 0.0
      %v9525 = vsel %vm6293, %v8264, 0.0
      %v9526 = vsel %vm6294, %v8266, 0.0
      %v9527 = vsel %vm6295, %v8268, 0.0
      %v9528 = vsel %vm6296, %v8270, 0.0
      %v9529 = vsel %vm6297, %v8272, 0.0
      %v9530 = vsel %vm6298, %v8274, 0.0
      %v9531 = vsel %vm6299, %v8276, 0.0
      %v9532 = vsel %vm6300, %v8278, 0.0
      %v9533 = vsel %vm6301, %v8280, 0.0
      %v9534 = vsel %vm6302, %v8282, 0.0
      %v9535 = vsel %vm6303, %v8284, 0.0
      %v9536 = vsel %vm6304, %v8286, 0.0
      %v9537 = vsel %vm6305, %v8288, 0.0
      %v9538 = vsel %vm6306, %v8290, 0.0
      %v9539 = vsel %vm6307, %v8292, 0.0
      %v9540 = vsel %vm6308, %v8294, 0.0
      %v9541 = vsel %vm6309, %v8296, 0.0
      %v9542 = vsel %vm6310, %v8298, 0.0
      %v9543 = vsel %vm6311, %v8300, 0.0
      %v9544 = vsel %vm6312, %v8302, 0.0
      %v9545 = vsel %vm6313, %v8304, 0.0
      %v9546 = vsel %vm6314, %v8306, 0.0
      %v9547 = vsel %vm6315, %v8308, 0.0
      %v9548 = vsel %vm6316, %v8310, 0.0
      %v9549 = vsel %vm6317, %v8312, 0.0
      %v9550 = vsel %vm6318, %v8314, 0.0
      %v9551 = vsel %vm6319, %v8316, 0.0
      %v9552 = vsel %vm6320, %v8318, 0.0
      %v9553 = vsel %vm6321, %v8320, 0.0
      %v9554 = vsel %vm6322, %v8322, 0.0
      %v9555 = vsel %vm6323, %v8324, 0.0
      %v9556 = vsel %vm6324, %v8326, 0.0
      %v9557 = vsel %vm6325, %v8328, 0.0
      %v9558 = vsel %vm6326, %v8330, 0.0
      %v9559 = vsel %vm6327, %v8332, 0.0
      %v9560 = vsel %vm6328, %v8334, 0.0
      %v9561 = vsel %vm6329, %v8336, 0.0
      %v9562 = vsel %vm6330, %v8338, 0.0
      %v9563 = vsel %vm6331, %v8340, 0.0
      %v9564 = vsel %vm6332, %v8342, 0.0
      %v9565 = vsel %vm6333, %v8344, 0.0
      %v9566 = vsel %vm6334, %v8346, 0.0
      %v9567 = vsel %vm6335, %v8348, 0.0
      %v9568 = vsel %vm6336, %v8350, 0.0
      %v9569 = vsel %vm6337, %v8352, 0.0
      %v9570 = vsel %vm6338, %v8354, 0.0
      %v9571 = vsel %vm6339, %v8356, 0.0
      %v9572 = vsel %vm6340, %v8358, 0.0
      %v9573 = vsel %vm6341, %v8360, 0.0
      %v9574 = vsel %vm6342, %v8362, 0.0
      %v9575 = vsel %vm6343, %v8364, 0.0
      %v9576 = vsel %vm6344, %v8366, 0.0
      %v9577 = vsel %vm6345, %v8368, 0.0
      %v9578 = vsel %vm6346, %v8370, 0.0
      %v9579 = vsel %vm6347, %v8372, 0.0
      %v9580 = vsel %vm6348, %v8374, 0.0
      %v9581 = vsel %vm6349, %v8376, 0.0
      %v9582 = vsel %vm6350, %v8378, 0.0
      %v9583 = vsel %vm6351, %v8380, 0.0
      %v9584 = vsel %vm6352, %v8382, 0.0
      %v9585 = vsel %vm6353, %v8384, 0.0
      %v9586 = vsel %vm6354, %v8386, 0.0
      %v9587 = vsel %vm6355, %v8388, 0.0
      %v9588 = vsel %vm6356, %v8390, 0.0
      %v9589 = vsel %vm6357, %v8392, 0.0
      %v9590 = vsel %vm6358, %v8394, 0.0
      %v9591 = vsel %vm6359, %v8396, 0.0
      %v9592 = vsel %vm6360, %v8398, 0.0
      %v9593 = vsel %vm6361, %v8400, 0.0
      %v9594 = vsel %vm6362, %v8402, 0.0
      %v9595 = vsel %vm6363, %v8404, 0.0
      %v9596 = vsel %vm6364, %v8406, 0.0
      %v9597 = vsel %vm6365, %v8408, 0.0
      %v9598 = vsel %vm6366, %v8410, 0.0
      %v9599 = vsel %vm6367, %v8412, 0.0
      %v9600 = vsel %vm6368, %v8414, 0.0
      %v9601 = vsel %vm6369, %v8416, 0.0
      %v9602 = vsel %vm6370, %v8418, 0.0
      %v9603 = vsel %vm6371, %v8420, 0.0
      %v9604 = vsel %vm6372, %v8422, 0.0
      %v9605 = vsel %vm6373, %v8424, 0.0
      %v9606 = vsel %vm6374, %v8426, 0.0
      %v9607 = vsel %vm6375, %v8428, 0.0
      %v9608 = vsel %vm6376, %v8430, 0.0
      %v9609 = vsel %vm6377, %v8432, 0.0
      %v9610 = vsel %vm6378, %v8434, 0.0
      %v9611 = vsel %vm6379, %v8436, 0.0
      %v9612 = vsel %vm6380, %v8438, 0.0
      %v9613 = vsel %vm6381, %v8440, 0.0
      %v9614 = vsel %vm6382, %v8442, 0.0
      %v9615 = vsel %vm6383, %v8444, 0.0
      %v9616 = vsel %vm6384, %v8446, 0.0
      %v9617 = vsel %vm6385, %v8448, 0.0
      %v9618 = vsel %vm6386, %v8450, 0.0
      %v9619 = vsel %vm6387, %v8452, 0.0
      %v9620 = vsel %vm6388, %v8454, 0.0
      %v9621 = vsel %vm6389, %v8456, 0.0
      %v9622 = vsel %vm6390, %v8458, 0.0
      %v9623 = vsel %vm6391, %v8460, 0.0
      %v9624 = vsel %vm6392, %v8462, 0.0
      %v9625 = vsel %vm6393, %v8464, 0.0
      %v9626 = vsel %vm6394, %v8466, 0.0
      %v9627 = vsel %vm6395, %v8468, 0.0
      %v9628 = vsel %vm6396, %v8470, 0.0
      %v9629 = vsel %vm6397, %v8472, 0.0
      %v9630 = vsel %vm6398, %v8474, 0.0
      %v9631 = vsel %vm6399, %v8476, 0.0
      %v9632 = vsel %vm6400, %v8478, 0.0
      %v9633 = vsel %vm6401, %v8480, 0.0
      %v9634 = vsel %vm6402, %v8482, 0.0
      %v9635 = vsel %vm6403, %v8484, 0.0
      %v9636 = vsel %vm6404, %v8486, 0.0
      %v9637 = vsel %vm6405, %v8488, 0.0
      %v9638 = vsel %vm6406, %v8490, 0.0
      %v9639 = vsel %vm6407, %v8492, 0.0
      %v9640 = vsel %vm6408, %v8494, 0.0
      %v9641 = vsel %vm6409, %v8496, 0.0
      %v9642 = vsel %vm6410, %v8498, 0.0
      %v9643 = vsel %vm6411, %v8500, 0.0
      %v9644 = vsel %vm6412, %v8502, 0.0
      %v9645 = vsel %vm6413, %v8504, 0.0
      %v9646 = vsel %vm6414, %v8506, 0.0
      %v9647 = vsel %vm6415, %v8508, 0.0
      %v9648 = vsel %vm6416, %v8510, 0.0
      %v9649 = vsel %vm6417, %v8512, 0.0
      %v9650 = vsel %vm6418, %v8514, 0.0
      %v9651 = vsel %vm6419, %v8516, 0.0
      %v9652 = vsel %vm6420, %v8518, 0.0
      %v9653 = vsel %vm6421, %v8520, 0.0
      %v9654 = vsel %vm6422, %v8522, 0.0
      %v9655 = vsel %vm6423, %v8524, 0.0
      %v9656 = vsel %vm6424, %v8526, 0.0
      %v9657 = vsel %vm6425, %v8528, 0.0
      %v9658 = vsel %vm6426, %v8530, 0.0
      %v9659 = vsel %vm6427, %v8532, 0.0
      %v9660 = vsel %vm6428, %v8534, 0.0
      %v9661 = vsel %vm6429, %v8536, 0.0
      %v9662 = vsel %vm6430, %v8538, 0.0
      %v9663 = vsel %vm6431, %v8540, 0.0
      %v9664 = vsel %vm6432, %v8542, 0.0
      %v9665 = vsel %vm6433, %v8544, 0.0
      %v9666 = vsel %vm6434, %v8546, 0.0
      %v9667 = vsel %vm6435, %v8548, 0.0
      %v9668 = vsel %vm6436, %v8550, 0.0
      %v9669 = vsel %vm6437, %v8552, 0.0
      %v9670 = vsel %vm6438, %v8554, 0.0
      %v9671 = vsel %vm6439, %v8556, 0.0
      %v9672 = vsel %vm6440, %v8558, 0.0
      %v9673 = vsel %vm6441, %v8560, 0.0
      %v9674 = vsel %vm6442, %v8562, 0.0
      %v9675 = vsel %vm6443, %v8564, 0.0
      %v9676 = vsel %vm6444, %v8566, 0.0
      %v9677 = vsel %vm6445, %v8568, 0.0
      %v9678 = vsel %vm6446, %v8570, 0.0
      %v9679 = vsel %vm6447, %v8572, 0.0
      %v9680 = vsel %vm6448, %v8574, 0.0
      %v9681 = vsel %vm6449, %v8576, 0.0
      %v9682 = vsel %vm6450, %v8578, 0.0
      %v9683 = vsel %vm6451, %v8580, 0.0
      %v9684 = vsel %vm6452, %v8582, 0.0
      %v9685 = vsel %vm6453, %v8584, 0.0
      %v9686 = vsel %vm6454, %v8586, 0.0
      %v9687 = vsel %vm6455, %v8588, 0.0
      %v9688 = vsel %vm6456, %v8590, 0.0
      %v9689 = vsel %vm6457, %v8592, 0.0
      %v9690 = vsel %vm6458, %v8594, 0.0
      %v9691 = vsel %vm6459, %v8596, 0.0
      %v9692 = vsel %vm6460, %v8598, 0.0
      %v9693 = vsel %vm6461, %v8600, 0.0
      %v9694 = vsel %vm6462, %v8602, 0.0
      %v9695 = vsel %vm6463, %v8604, 0.0
      %v9696 = vsel %vm6464, %v8606, 0.0
      %v9697 = vsel %vm6465, %v8608, 0.0
      %v9698 = vsel %vm6466, %v8610, 0.0
      %v9699 = vsel %vm6467, %v8612, 0.0
      %v9700 = vsel %vm6468, %v8614, 0.0
      %v9701 = vsel %vm6469, %v8616, 0.0
      %v9702 = vsel %vm6470, %v8618, 0.0
      %v9703 = vsel %vm6471, %v8620, 0.0
      %v9704 = vsel %vm6472, %v8622, 0.0
      %v9705 = vsel %vm6473, %v8624, 0.0
      %v9706 = vsel %vm6474, %v8626, 0.0
      %v9707 = vsel %vm6475, %v8628, 0.0
      %v9708 = vsel %vm6476, %v8630, 0.0
      %v9709 = vsel %vm6477, %v8632, 0.0
      %v9710 = vsel %vm6478, %v8634, 0.0
      %v9711 = vsel %vm6479, %v8636, 0.0
      %v9712 = vsel %vm6480, %v8638, 0.0
      %v9713 = vsel %vm6481, %v8640, 0.0
      %v9714 = vsel %vm6482, %v8642, 0.0
      %v9715 = vsel %vm6483, %v8644, 0.0
      %v9716 = vsel %vm6484, %v8646, 0.0
      %v9717 = vsel %vm6485, %v8648, 0.0
      %v9718 = vsel %vm6486, %v8650, 0.0
      %v9719 = vsel %vm6487, %v8652, 0.0
      %v9720 = vsel %vm6488, %v8654, 0.0
      %v9721 = vsel %vm6489, %v8656, 0.0
      %v9722 = vsel %vm6490, %v8658, 0.0
      %v9723 = vsel %vm6491, %v8660, 0.0
      %v9724 = vsel %vm6492, %v8662, 0.0
      %v9725 = vsel %vm6493, %v8664, 0.0
      %v9726 = vsel %vm6494, %v8666, 0.0
      %v9727 = vsel %vm6495, %v8668, 0.0
      %v9728 = vsel %vm6496, %v8670, 0.0
      %v9729 = vsel %vm6497, %v8672, 0.0
      %v9730 = vsel %vm6498, %v8674, 0.0
      %v9731 = vsel %vm6499, %v8676, 0.0
      %v9732 = vsel %vm6500, %v8678, 0.0
      %v9733 = vsel %vm6501, %v8680, 0.0
      %v9734 = vsel %vm6502, %v8682, 0.0
      %v9735 = vsel %vm6503, %v8684, 0.0
      %v9736 = vsel %vm6504, %v8686, 0.0
      %v9737 = vsel %vm6505, %v8688, 0.0
      %v9738 = vsel %vm6506, %v8690, 0.0
      %v9739 = vsel %vm6507, %v8692, 0.0
      %v9740 = vsel %vm6508, %v8694, 0.0
      %v9741 = vsel %vm6509, %v8696, 0.0
      %v9742 = vsel %vm6510, %v8698, 0.0
      %v9743 = vsel %vm6511, %v8700, 0.0
      %v9744 = vsel %vm6512, %v8702, 0.0
      %v9745 = vsel %vm6513, %v8704, 0.0
      %v9746 = vsel %vm6514, %v8706, 0.0
      %v9747 = vsel %vm6515, %v8708, 0.0
      %v9748 = vsel %vm6516, %v8710, 0.0
      %v9749 = vsel %vm6517, %v8712, 0.0
      %v9750 = vsel %vm6518, %v8714, 0.0
      %v9751 = vsel %vm6519, %v8716, 0.0
      %v9752 = vsel %vm6520, %v8718, 0.0
      %v9753 = vsel %vm6521, %v8720, 0.0
      %v9754 = vsel %vm6522, %v8722, 0.0
      %v9755 = vsel %vm6523, %v8724, 0.0
      %v9756 = vsel %vm6524, %v8726, 0.0
      %v9757 = vsel %vm6525, %v8728, 0.0
      %v9758 = vsel %vm6526, %v8730, 0.0
      %v9759 = vsel %vm6527, %v8732, 0.0
      %v9760 = vsel %vm6528, %v8734, 0.0
      %v9761 = vsel %vm6529, %v8736, 0.0
      %v9762 = vsel %vm6530, %v8738, 0.0
      %v9763 = vsel %vm6531, %v8740, 0.0
      %v9764 = vsel %vm6532, %v8742, 0.0
      %v9765 = vsel %vm6533, %v8744, 0.0
      %v9766 = vsel %vm6534, %v8746, 0.0
      %v9767 = vsel %vm6535, %v8748, 0.0
      %v9768 = vsel %vm6536, %v8750, 0.0
      %v9769 = vsel %vm6537, %v8752, 0.0
      %v9770 = vsel %vm6538, %v8754, 0.0
      %v9771 = vsel %vm6539, %v8756, 0.0
      %v9772 = vsel %vm6540, %v8758, 0.0
      %v9773 = vsel %vm6541, %v8760, 0.0
      %v9774 = vsel %vm6542, %v8762, 0.0
      %v9775 = vsel %vm6543, %v8764, 0.0
      %v9776 = vsel %vm6544, %v8766, 0.0
      %v9777 = vsel %vm6545, %v8768, 0.0
      %v9778 = vsel %vm6546, %v8770, 0.0
      %v9779 = vsel %vm6547, %v8772, 0.0
      %v9780 = vsel %vm6548, %v8774, 0.0
      %v9781 = vsel %vm6549, %v8776, 0.0
      %v9782 = vsel %vm6550, %v8778, 0.0
      %v9783 = vsel %vm6551, %v8780, 0.0
      %v9784 = vsel %vm6552, %v8782, 0.0
      %v9785 = vsel %vm6553, %v8784, 0.0
      %v9786 = vsel %vm6554, %v8786, 0.0
      %v9787 = vsel %vm6555, %v8788, 0.0
      %v9788 = vsel %vm6556, %v8790, 0.0
      %v9789 = vsel %vm6557, %v8792, 0.0
      %v9790 = vsel %vm6558, %v8794, 0.0
      %v9791 = vsel %vm6559, %v8796, 0.0
      %v9792 = vsel %vm6560, %v8798, 0.0
      %v9793 = vsel %vm6561, %v8800, 0.0
      %v9794 = vsel %vm6562, %v8802, 0.0
      %v9795 = vsel %vm6563, %v8804, 0.0
      %v9796 = vsel %vm6564, %v8806, 0.0
      %v9797 = vsel %vm6565, %v8808, 0.0
      %v9798 = vsel %vm6566, %v8810, 0.0
      %v9799 = vsel %vm6567, %v8812, 0.0
      %v9800 = vsel %vm6568, %v8814, 0.0
      %v9801 = vsel %vm6569, %v8816, 0.0
      %v9802 = vsel %vm6570, %v8818, 0.0
      %v9803 = vsel %vm6571, %v8820, 0.0
      %v9804 = vsel %vm6572, %v8822, 0.0
      %v9805 = vsel %vm6573, %v8824, 0.0
      %v9806 = vsel %vm6574, %v8826, 0.0
      %v9807 = vsel %vm6575, %v8828, 0.0
      %v9808 = vsel %vm6576, %v8830, 0.0
      %v9809 = vsel %vm6577, %v8832, 0.0
      %v9810 = vsel %vm6578, %v8834, 0.0
      %v9811 = vsel %vm6579, %v8836, 0.0
      %v9812 = vsel %vm6580, %v8838, 0.0
      %v9813 = vsel %vm6581, %v8840, 0.0
      %v9814 = vsel %vm6582, %v8842, 0.0
      %v9815 = vsel %vm6583, %v8844, 0.0
      %v9816 = vsel %vm6584, %v8846, 0.0
      %v9817 = vsel %vm6585, %v8848, 0.0
      %v9818 = vsel %vm6586, %v8850, 0.0
      %v9819 = vsel %vm6587, %v8852, 0.0
      %v9820 = vsel %vm6588, %v8854, 0.0
      %v9821 = vsel %vm6589, %v8856, 0.0
      %v9822 = vsel %vm6590, %v8858, 0.0
      %v9823 = vsel %vm6591, %v8860, 0.0
      %v9824 = vsel %vm6592, %v8862, 0.0
      %v9825 = vsel %vm6593, %v8864, 0.0
      %v9826 = vsel %vm6594, %v8866, 0.0
      %v9827 = vsel %vm6595, %v8868, 0.0
      %v9828 = vsel %vm6596, %v8870, 0.0
      %v9829 = vsel %vm6597, %v8872, 0.0
      %v9830 = vsel %vm6598, %v8874, 0.0
      %v9831 = vsel %vm6599, %v8876, 0.0
      %v9832 = vsel %vm6600, %v8878, 0.0
      %v9833 = vsel %vm6601, %v8880, 0.0
      %v9834 = vsel %vm6602, %v8882, 0.0
      %v9835 = vsel %vm6603, %v8884, 0.0
      %v9836 = vsel %vm6604, %v8886, 0.0
      %v9837 = vsel %vm6605, %v8888, 0.0
      %v9838 = vsel %vm6606, %v8890, 0.0
      %v9839 = vsel %vm6607, %v8892, 0.0
      %v9840 = vsel %vm6608, %v8894, 0.0
      %v9841 = vsel %vm6609, %v8896, 0.0
      %v9842 = vsel %vm6610, %v8898, 0.0
      %v9843 = vsel %vm6611, %v8900, 0.0
      %v9844 = vsel %vm6612, %v8902, 0.0
      %v9845 = vsel %vm6613, %v8904, 0.0
      %v9846 = vsel %vm6614, %v8906, 0.0
      %v9847 = vsel %vm6615, %v8908, 0.0
      %v9848 = vsel %vm6616, %v8910, 0.0
      %v9849 = vsel %vm6617, %v8912, 0.0
      %v9850 = vsel %vm6618, %v8914, 0.0
      %v9851 = vsel %vm6619, %v8916, 0.0
      %v9852 = vsel %vm6620, %v8918, 0.0
      %v9853 = vsel %vm6621, %v8920, 0.0
      %v9854 = vsel %vm6622, %v8922, 0.0
      %v9855 = vsel %vm6623, %v8924, 0.0
      %v9856 = vsel %vm6624, %v8926, 0.0
      %v9857 = vsel %vm6625, %v8928, 0.0
      %v9858 = vsel %vm6626, %v8930, 0.0
      %v9859 = vsel %vm6627, %v8932, 0.0
      %v9860 = vsel %vm6628, %v8934, 0.0
      %v9861 = vsel %vm6629, %v8936, 0.0
      %v9862 = vsel %vm6630, %v8938, 0.0
      %v9863 = vsel %vm6631, %v8940, 0.0
      %v9864 = vsel %vm6632, %v8942, 0.0
      %v9865 = vsel %vm6633, %v8944, 0.0
      %v9866 = vsel %vm6634, %v8946, 0.0
      %v9867 = vsel %vm6635, %v8948, 0.0
      %v9868 = vsel %vm6636, %v8950, 0.0
      %v9869 = vsel %vm6637, %v8952, 0.0
      %v9870 = vsel %vm6638, %v8954, 0.0
      %v9871 = vsel %vm6639, %v8956, 0.0
      %v9872 = vsel %vm6640, %v8958, 0.0
      %v9873 = vsel %vm6641, %v8960, 0.0
      %v9874 = vsel %vm6642, %v8962, 0.0
      %v9875 = vsel %vm6643, %v8964, 0.0
      %v9876 = vsel %vm6644, %v8966, 0.0
      %v9877 = vsel %vm6645, %v8968, 0.0
      %v9878 = vsel %vm6646, %v8970, 0.0
      %v9879 = vsel %vm6647, %v8972, 0.0
      %v9880 = vsel %vm6648, %v8974, 0.0
      %v9881 = vsel %vm6649, %v8976, 0.0
      %v9882 = vsel %vm6650, %v8978, 0.0
      %v9883 = vsel %vm6651, %v8980, 0.0
      %v9884 = vsel %vm6652, %v8982, 0.0
      %v9885 = vsel %vm6653, %v8984, 0.0
      %v9886 = vsel %vm6654, %v8986, 0.0
      %v9887 = vsel %vm6655, %v8988, 0.0
      %v9888 = vsel %vm6656, %v8990, 0.0
      %v9889 = vsel %vm6657, %v8992, 0.0
      %v9890 = vsel %vm6658, %v8994, 0.0
      %v9891 = vsel %vm6659, %v8996, 0.0
      %v9892 = vsel %vm6660, %v8998, 0.0
      %v9893 = vsel %vm6661, %v9000, 0.0
      %v9894 = vsel %vm6662, %v9002, 0.0
      %v9895 = vsel %vm6663, %v9004, 0.0
      %v9896 = vsel %vm6664, %v9006, 0.0
      %v9897 = vsel %vm6665, %v9008, 0.0
      %v9898 = vsel %vm6666, %v9010, 0.0
      %v9899 = vsel %vm6667, %v9012, 0.0
      %v9900 = vsel %vm6668, %v9014, 0.0
      %v9901 = vsel %vm6669, %v9016, 0.0
      %v9902 = vsel %vm6670, %v9018, 0.0
      %v9903 = vsel %vm6671, %v9020, 0.0
      %v9904 = vsel %vm6672, %v9022, 0.0
      %v9905 = vsel %vm6673, %v9024, 0.0
      %v9906 = vsel %vm6674, %v9026, 0.0
      %v9907 = vsel %vm6675, %v9028, 0.0
      %v9908 = vsel %vm6676, %v9030, 0.0
      %v9909 = vsel %vm6677, %v9032, 0.0
      %v9910 = vsel %vm6678, %v9034, 0.0
      %v9911 = vsel %vm6679, %v9036, 0.0
      %v9912 = vsel %vm6680, %v9038, 0.0
      %v9913 = vsel %vm6681, %v9040, 0.0
      %v9914 = vsel %vm6682, %v9042, 0.0
      %v9915 = vsel %vm6683, %v9044, 0.0
      %v9916 = vsel %vm6684, %v9046, 0.0
      %v9917 = vsel %vm6685, %v9048, 0.0
      %v9918 = vsel %vm6686, %v9050, 0.0
      %v9919 = vsel %vm6687, %v9052, 0.0
      %v9920 = vsel %vm6688, %v9054, 0.0
      %v9921 = vsel %vm6689, %v9056, 0.0
      %v9922 = vsel %vm6690, %v9058, 0.0
      %v9923 = vsel %vm6691, %v9060, 0.0
      %v9924 = vsel %vm6692, %v9062, 0.0
      %v9925 = vsel %vm6693, %v9064, 0.0
      %v9926 = vsel %vm6694, %v9066, 0.0
      %v9927 = vsel %vm6695, %v9068, 0.0
      %v9928 = vsel %vm6696, %v9070, 0.0
      %v9929 = vsel %vm6697, %v9072, 0.0
      %v9930 = vsel %vm6698, %v9074, 0.0
      %v9931 = vsel %vm6699, %v9076, 0.0
      %v9932 = vsel %vm6700, %v9078, 0.0
      %v9933 = vsel %vm6701, %v9080, 0.0
      %v9934 = vsel %vm6702, %v9082, 0.0
      %v9935 = vsel %vm6703, %v9084, 0.0
      %v9936 = vsel %vm6704, %v9086, 0.0
      %v9937 = vsel %vm6705, %v9088, 0.0
      %v9938 = vsel %vm6706, %v9090, 0.0
      %v9939 = vsel %vm6707, %v9092, 0.0
      %v9940 = vsel %vm6708, %v9094, 0.0
      %v9941 = vsel %vm6709, %v9096, 0.0
      %v9942 = vsel %vm6710, %v9098, 0.0
      %v9943 = vsel %vm6711, %v9100, 0.0
      %v9944 = vsel %vm6712, %v9102, 0.0
      %v9945 = vsel %vm6713, %v9104, 0.0
      %v9946 = vsel %vm6714, %v9106, 0.0
      %v9947 = vsel %vm6715, %v9108, 0.0
      %v9948 = vsel %vm6716, %v9110, 0.0
      %v9949 = vsel %vm6717, %v9112, 0.0
      %v9950 = vsel %vm6718, %v9114, 0.0
      %v9951 = vsel %vm6719, %v9116, 0.0
      %v9952 = vsel %vm6720, %v9118, 0.0
      %v9953 = vsel %vm6721, %v9120, 0.0
      %v9954 = vsel %vm6722, %v9122, 0.0
      %v9955 = vsel %vm6723, %v9124, 0.0
      %v9956 = vsel %vm6724, %v9126, 0.0
      %v9957 = vsel %vm6725, %v9128, 0.0
      %v9958 = vsel %vm6726, %v9130, 0.0
      %v9959 = vsel %vm6727, %v9132, 0.0
      %v9960 = vsel %vm6728, %v9134, 0.0
      %v9961 = vsel %vm6729, %v9136, 0.0
      %v9962 = vsel %vm6730, %v9138, 0.0
      %v9963 = vsel %vm6731, %v9140, 0.0
      %v9964 = vsel %vm6732, %v9142, 0.0
      %v9965 = vsel %vm6733, %v9144, 0.0
      %v9966 = vsel %vm6734, %v9146, 0.0
      %v9967 = vsel %vm6735, %v9148, 0.0
      %v9968 = vsel %vm6736, %v9150, 0.0
      %v9969 = vsel %vm6737, %v9152, 0.0
      %v9970 = vsel %vm6738, %v9154, 0.0
      %v9971 = vsel %vm6739, %v9156, 0.0
      %v9972 = vsel %vm6740, %v9158, 0.0
      %v9973 = vsel %vm6741, %v9160, 0.0
      %v9974 = vsel %vm6742, %v9162, 0.0
      %v9975 = vsel %vm6743, %v9164, 0.0
      %v9976 = vsel %vm6744, %v9166, 0.0
      %v9977 = vsel %vm6745, %v9168, 0.0
      %v9978 = vsel %vm6746, %v9170, 0.0
      %v9979 = vsel %vm6747, %v9172, 0.0
      %v9980 = vsel %vm6748, %v9174, 0.0
      %v9981 = vsel %vm6749, %v9176, 0.0
      %v9982 = vsel %vm6750, %v9178, 0.0
      %v9983 = vsel %vm6751, %v9180, 0.0
      %v9984 = vsel %vm6752, %v9182, 0.0
      %v9985 = vsel %vm6753, %v9184, 0.0
      %v9986 = vsel %vm6754, %v9186, 0.0
      %v9987 = vsel %vm6755, %v9188, 0.0
      %v9988 = vsel %vm6756, %v9190, 0.0
      %v9989 = vsel %vm6757, %v9192, 0.0
      %v9990 = vsel %vm6758, %v9194, 0.0
      %v9991 = vsel %vm6759, %v9196, 0.0
      %v9992 = vsel %vm6760, %v9198, 0.0
      %v9993 = vsel %vm6761, %v9200, 0.0
      %v9994 = vsel %vm6762, %v9202, 0.0
      %v9995 = vsel %vm6763, %v9204, 0.0
      %v9996 = vsel %vm6764, %v9206, 0.0
      %v9997 = vsel %vm6765, %v9208, 0.0
      %v9998 = vsel %vm6766, %v9210, 0.0
      %v9999 = vsel %vm6767, %v9212, 0.0
      %v10000 = vsel %vm6768, %v9214, 0.0
      %v10001 = vsel %vm6769, %v9216, 0.0
      %v10002 = vsel %vm6770, %v9218, 0.0
      %v10003 = vsel %vm6771, %v9220, 0.0
      %v10004 = vsel %vm6772, %v9222, 0.0
      %v10005 = vsel %vm6773, %v9224, 0.0
      %v10006 = vsel %vm6774, %v9226, 0.0
      %v10007 = vsel %vm6775, %v9228, 0.0
      %v10008 = vsel %vm6776, %v9230, 0.0
      %v10009 = vsel %vm6777, %v9232, 0.0
      %v10010 = vsel %vm6778, %v9234, 0.0
      %v10011 = vsel %vm6779, %v9236, 0.0
      %v10012 = vsel %vm6780, %v9238, 0.0
      %v10013 = vsel %vm6781, %v9240, 0.0
      %v10014 = vsel %vm6782, %v9242, 0.0
      %v10015 = vsel %vm6783, %v9244, 0.0
      %v10016 = vsel %vm6784, %v9246, 0.0
      %v10017 = vsel %vm6785, %v9248, 0.0
      %v10018 = vsel %vm6786, %v9250, 0.0
      %v10019 = vld [vmem:[#allocation3] sm:$0xff]
      %v10020 = vld [vmem:[#allocation3 + $0x8] sm:$0xff]
      %v10021 = vld [vmem:[#allocation3 + $0x10] sm:$0xff]
      %v10022 = vld [vmem:[#allocation3 + $0x18] sm:$0xff]
      %v10023 = vld [vmem:[#allocation3 + $0x20] sm:$0xff]
      %v10024 = vld [vmem:[#allocation3 + $0x28] sm:$0xff]
      %v10025 = vld [vmem:[#allocation3 + $0x30] sm:$0xff]
      %v10026 = vld [vmem:[#allocation3 + $0x38] sm:$0xff]
      %v10027 = vld [vmem:[#allocation3 + $0x40] sm:$0xff]
      %v10028 = vld [vmem:[#allocation3 + $0x48] sm:$0xff]
      %v10029 = vld [vmem:[#allocation3 + $0x50] sm:$0xff]
      %v10030 = vld [vmem:[#allocation3 + $0x58] sm:$0xff]
      %v10031 = vld [vmem:[#allocation3 + $0x60] sm:$0xff]
      %v10032 = vld [vmem:[#allocation3 + $0x68] sm:$0xff]
      %v10033 = vld [vmem:[#allocation3 + $0x70] sm:$0xff]
      %v10034 = vld [vmem:[#allocation3 + $0x78] sm:$0xff]
      %v10035 = vld [vmem:[#allocation3 + $0x80] sm:$0xff]
      %v10036 = vld [vmem:[#allocation3 + $0x88] sm:$0xff]
      %v10037 = vld [vmem:[#allocation3 + $0x90] sm:$0xff]
      %v10038 = vld [vmem:[#allocation3 + $0x98] sm:$0xff]
      %v10039 = vld [vmem:[#allocation3 + $0xa0] sm:$0xff]
      %v10040 = vld [vmem:[#allocation3 + $0xa8] sm:$0xff]
      %v10041 = vld [vmem:[#allocation3 + $0xb0] sm:$0xff]
      %v10042 = vld [vmem:[#allocation3 + $0xb8] sm:$0xff]
      %v10043 = vld [vmem:[#allocation3 + $0xc0] sm:$0xff]
      %v10044 = vld [vmem:[#allocation3 + $0xc8] sm:$0xff]
      %v10045 = vld [vmem:[#allocation3 + $0xd0] sm:$0xff]
      %v10046 = vld [vmem:[#allocation3 + $0xd8] sm:$0xff]
      %v10047 = vld [vmem:[#allocation3 + $0xe0] sm:$0xff]
      %v10048 = vld [vmem:[#allocation3 + $0xe8] sm:$0xff]
      %v10049 = vld [vmem:[#allocation3 + $0xf0] sm:$0xff]
      %v10050 = vld [vmem:[#allocation3 + $0xf8] sm:$0xff]
      %v10051 = vsub.f32 %v4840, %v5672
      %v10052 = vsub.f32 %v4841, %v5673
      %v10053 = vsub.f32 %v4842, %v5674
      %v10054 = vsub.f32 %v4843, %v5675
      %v10055 = vsub.f32 %v4844, %v5676
      %v10056 = vsub.f32 %v4845, %v5677
      %v10057 = vsub.f32 %v4846, %v5678
      %v10058 = vsub.f32 %v4847, %v5679
      %v10059 = vsub.f32 %v4848, %v5680
      %v10060 = vsub.f32 %v4849, %v5681
      %v10061 = vsub.f32 %v4850, %v5682
      %v10062 = vsub.f32 %v4851, %v5683
      %v10063 = vsub.f32 %v4852, %v5684
      %v10064 = vsub.f32 %v4853, %v5685
      %v10065 = vsub.f32 %v4854, %v5686
      %v10066 = vsub.f32 %v4855, %v5687
      %v10067 = vsub.f32 %v4856, %v5688
      %v10068 = vsub.f32 %v4857, %v5689
      %v10069 = vsub.f32 %v4858, %v5690
      %v10070 = vsub.f32 %v4859, %v5691
      %v10071 = vsub.f32 %v4860, %v5692
      %v10072 = vsub.f32 %v4861, %v5693
      %v10073 = vsub.f32 %v4862, %v5694
      %v10074 = vsub.f32 %v4863, %v5695
      %v10075 = vsub.f32 %v4864, %v5696
      %v10076 = vsub.f32 %v4865, %v5697
      %v10077 = vsub.f32 %v4866, %v5698
      %v10078 = vsub.f32 %v4867, %v5699
      %v10079 = vsub.f32 %v4868, %v5700
      %v10080 = vsub.f32 %v4869, %v5701
      %v10081 = vsub.f32 %v4870, %v5702
      %v10082 = vsub.f32 %v4871, %v5703
      %v10083 = vmul.f32 %v10051, 1.442695
      %v10084 = vpow.pop %v10083
      %v10085 = vmul.f32 %v10052, 1.442695
      %v10086 = vpow.pop %v10085
      %v10087 = vmul.f32 %v10053, 1.442695
      %v10088 = vpow.pop %v10087
      %v10089 = vmul.f32 %v10054, 1.442695
      %v10090 = vpow.pop %v10089
      %v10091 = vmul.f32 %v10055, 1.442695
      %v10092 = vpow.pop %v10091
      %v10093 = vmul.f32 %v10056, 1.442695
      %v10094 = vpow.pop %v10093
      %v10095 = vmul.f32 %v10057, 1.442695
      %v10096 = vpow.pop %v10095
      %v10097 = vmul.f32 %v10058, 1.442695
      %v10098 = vpow.pop %v10097
      %v10099 = vmul.f32 %v10059, 1.442695
      %v10100 = vpow.pop %v10099
      %v10101 = vmul.f32 %v10060, 1.442695
      %v10102 = vpow.pop %v10101
      %v10103 = vmul.f32 %v10061, 1.442695
      %v10104 = vpow.pop %v10103
      %v10105 = vmul.f32 %v10062, 1.442695
      %v10106 = vpow.pop %v10105
      %v10107 = vmul.f32 %v10063, 1.442695
      %v10108 = vpow.pop %v10107
      %v10109 = vmul.f32 %v10064, 1.442695
      %v10110 = vpow.pop %v10109
      %v10111 = vmul.f32 %v10065, 1.442695
      %v10112 = vpow.pop %v10111
      %v10113 = vmul.f32 %v10066, 1.442695
      %v10114 = vpow.pop %v10113
      %v10115 = vmul.f32 %v10067, 1.442695
      %v10116 = vpow.pop %v10115
      %v10117 = vmul.f32 %v10068, 1.442695
      %v10118 = vpow.pop %v10117
      %v10119 = vmul.f32 %v10069, 1.442695
      %v10120 = vpow.pop %v10119
      %v10121 = vmul.f32 %v10070, 1.442695
      %v10122 = vpow.pop %v10121
      %v10123 = vmul.f32 %v10071, 1.442695
      %v10124 = vpow.pop %v10123
      %v10125 = vmul.f32 %v10072, 1.442695
      %v10126 = vpow.pop %v10125
      %v10127 = vmul.f32 %v10073, 1.442695
      %v10128 = vpow.pop %v10127
      %v10129 = vmul.f32 %v10074, 1.442695
      %v10130 = vpow.pop %v10129
      %v10131 = vmul.f32 %v10075, 1.442695
      %v10132 = vpow.pop %v10131
      %v10133 = vmul.f32 %v10076, 1.442695
      %v10134 = vpow.pop %v10133
      %v10135 = vmul.f32 %v10077, 1.442695
      %v10136 = vpow.pop %v10135
      %v10137 = vmul.f32 %v10078, 1.442695
      %v10138 = vpow.pop %v10137
      %v10139 = vmul.f32 %v10079, 1.442695
      %v10140 = vpow.pop %v10139
      %v10141 = vmul.f32 %v10080, 1.442695
      %v10142 = vpow.pop %v10141
      %v10143 = vmul.f32 %v10081, 1.442695
      %v10144 = vpow.pop %v10143
      %v10145 = vmul.f32 %v10082, 1.442695
      %v10146 = vpow.pop %v10145
      %v10147 = vmul.f32 %v10019, %v10084
      %v10148 = vmul.f32 %v10020, %v10086
      %v10149 = vmul.f32 %v10021, %v10088
      %v10150 = vmul.f32 %v10022, %v10090
      %v10151 = vmul.f32 %v10023, %v10092
      %v10152 = vmul.f32 %v10024, %v10094
      %v10153 = vmul.f32 %v10025, %v10096
      %v10154 = vmul.f32 %v10026, %v10098
      %v10155 = vmul.f32 %v10027, %v10100
      %v10156 = vmul.f32 %v10028, %v10102
      %v10157 = vmul.f32 %v10029, %v10104
      %v10158 = vmul.f32 %v10030, %v10106
      %v10159 = vmul.f32 %v10031, %v10108
      %v10160 = vmul.f32 %v10032, %v10110
      %v10161 = vmul.f32 %v10033, %v10112
      %v10162 = vmul.f32 %v10034, %v10114
      %v10163 = vmul.f32 %v10035, %v10116
      %v10164 = vmul.f32 %v10036, %v10118
      %v10165 = vmul.f32 %v10037, %v10120
      %v10166 = vmul.f32 %v10038, %v10122
      %v10167 = vmul.f32 %v10039, %v10124
      %v10168 = vmul.f32 %v10040, %v10126
      %v10169 = vmul.f32 %v10041, %v10128
      %v10170 = vmul.f32 %v10042, %v10130
      %v10171 = vmul.f32 %v10043, %v10132
      %v10172 = vmul.f32 %v10044, %v10134
      %v10173 = vmul.f32 %v10045, %v10136
      %v10174 = vmul.f32 %v10046, %v10138
      %v10175 = vmul.f32 %v10047, %v10140
      %v10176 = vmul.f32 %v10048, %v10142
      %v10177 = vmul.f32 %v10049, %v10144
      %v10178 = vmul.f32 %v10050, %v10146
      %v10179 = vadd.f32 %v9251, %v9252
      %v10180 = vadd.f32 %v10179, %v9253
      %v10181 = vadd.f32 %v10180, %v9254
      %v10182 = vadd.f32 %v10181, %v9255
      %v10183 = vadd.f32 %v10182, %v9256
      %v10184 = vadd.f32 %v10183, %v9257
      %v10185 = vadd.f32 %v10184, %v9258
      %v10186 = vadd.f32 %v10185, %v9259
      %v10187 = vadd.f32 %v10186, %v9260
      %v10188 = vadd.f32 %v10187, %v9261
      %v10189 = vadd.f32 %v10188, %v9262
      %v10190 = vadd.f32 %v10189, %v9263
      %v10191 = vadd.f32 %v10190, %v9264
      %v10192 = vadd.f32 %v10191, %v9265
      %v10193 = vadd.f32 %v10192, %v9266
      %v10194 = vadd.f32 %v10193, %v9267
      %v10195 = vadd.f32 %v10194, %v9268
      %v10196 = vadd.f32 %v10195, %v9269
      %v10197 = vadd.f32 %v10196, %v9270
      %v10198 = vadd.f32 %v10197, %v9271
      %v10199 = vadd.f32 %v10198, %v9272
      %v10200 = vadd.f32 %v10199, %v9273
      %v10201 = vadd.f32 %v10200, %v9274
      %10202 = vadd.xlane.f32.xlu0 %v10201
      %v10203 = vpop.xlane.xlu0 %10202
      %v10204 = vadd.f32 %v9275, %v9276
      %v10205 = vadd.f32 %v10204, %v9277
      %v10206 = vadd.f32 %v10205, %v9278
      %v10207 = vadd.f32 %v10206, %v9279
      %v10208 = vadd.f32 %v10207, %v9280
      %v10209 = vadd.f32 %v10208, %v9281
      %v10210 = vadd.f32 %v10209, %v9282
      %v10211 = vadd.f32 %v10210, %v9283
      %v10212 = vadd.f32 %v10211, %v9284
      %v10213 = vadd.f32 %v10212, %v9285
      %v10214 = vadd.f32 %v10213, %v9286
      %v10215 = vadd.f32 %v10214, %v9287
      %v10216 = vadd.f32 %v10215, %v9288
      %v10217 = vadd.f32 %v10216, %v9289
      %v10218 = vadd.f32 %v10217, %v9290
      %v10219 = vadd.f32 %v10218, %v9291
      %v10220 = vadd.f32 %v10219, %v9292
      %v10221 = vadd.f32 %v10220, %v9293
      %v10222 = vadd.f32 %v10221, %v9294
      %v10223 = vadd.f32 %v10222, %v9295
      %v10224 = vadd.f32 %v10223, %v9296
      %v10225 = vadd.f32 %v10224, %v9297
      %v10226 = vadd.f32 %v10225, %v9298
      %10227 = vadd.xlane.f32.xlu0 %v10226
      %v10228 = vpop.xlane.xlu0 %10227
      %v10229 = vadd.f32 %v9299, %v9300
      %v10230 = vadd.f32 %v10229, %v9301
      %v10231 = vadd.f32 %v10230, %v9302
      %v10232 = vadd.f32 %v10231, %v9303
      %v10233 = vadd.f32 %v10232, %v9304
      %v10234 = vadd.f32 %v10233, %v9305
      %v10235 = vadd.f32 %v10234, %v9306
      %v10236 = vadd.f32 %v10235, %v9307
      %v10237 = vadd.f32 %v10236, %v9308
      %v10238 = vadd.f32 %v10237, %v9309
      %v10239 = vadd.f32 %v10238, %v9310
      %v10240 = vadd.f32 %v10239, %v9311
      %v10241 = vadd.f32 %v10240, %v9312
      %v10242 = vadd.f32 %v10241, %v9313
      %v10243 = vadd.f32 %v10242, %v9314
      %v10244 = vadd.f32 %v10243, %v9315
      %v10245 = vadd.f32 %v10244, %v9316
      %v10246 = vadd.f32 %v10245, %v9317
      %v10247 = vadd.f32 %v10246, %v9318
      %v10248 = vadd.f32 %v10247, %v9319
      %v10249 = vadd.f32 %v10248, %v9320
      %v10250 = vadd.f32 %v10249, %v9321
      %v10251 = vadd.f32 %v10250, %v9322
      %10252 = vadd.xlane.f32.xlu0 %v10251
      %v10253 = vpop.xlane.xlu0 %10252
      %v10254 = vadd.f32 %v9323, %v9324
      %v10255 = vadd.f32 %v10254, %v9325
      %v10256 = vadd.f32 %v10255, %v9326
      %v10257 = vadd.f32 %v10256, %v9327
      %v10258 = vadd.f32 %v10257, %v9328
      %v10259 = vadd.f32 %v10258, %v9329
      %v10260 = vadd.f32 %v10259, %v9330
      %v10261 = vadd.f32 %v10260, %v9331
      %v10262 = vadd.f32 %v10261, %v9332
      %v10263 = vadd.f32 %v10262, %v9333
      %v10264 = vadd.f32 %v10263, %v9334
      %v10265 = vadd.f32 %v10264, %v9335
      %v10266 = vadd.f32 %v10265, %v9336
      %v10267 = vadd.f32 %v10266, %v9337
      %v10268 = vadd.f32 %v10267, %v9338
      %v10269 = vadd.f32 %v10268, %v9339
      %v10270 = vadd.f32 %v10269, %v9340
      %v10271 = vadd.f32 %v10270, %v9341
      %v10272 = vadd.f32 %v10271, %v9342
      %v10273 = vadd.f32 %v10272, %v9343
      %v10274 = vadd.f32 %v10273, %v9344
      %v10275 = vadd.f32 %v10274, %v9345
      %v10276 = vadd.f32 %v10275, %v9346
      %10277 = vadd.xlane.f32.xlu0 %v10276
      %v10278 = vpop.xlane.xlu0 %10277
      %v10279 = vadd.f32 %v9347, %v9348
      %v10280 = vadd.f32 %v10279, %v9349
      %v10281 = vadd.f32 %v10280, %v9350
      %v10282 = vadd.f32 %v10281, %v9351
      %v10283 = vadd.f32 %v10282, %v9352
      %v10284 = vadd.f32 %v10283, %v9353
      %v10285 = vadd.f32 %v10284, %v9354
      %v10286 = vadd.f32 %v10285, %v9355
      %v10287 = vadd.f32 %v10286, %v9356
      %v10288 = vadd.f32 %v10287, %v9357
      %v10289 = vadd.f32 %v10288, %v9358
      %v10290 = vadd.f32 %v10289, %v9359
      %v10291 = vadd.f32 %v10290, %v9360
      %v10292 = vadd.f32 %v10291, %v9361
      %v10293 = vadd.f32 %v10292, %v9362
      %v10294 = vadd.f32 %v10293, %v9363
      %v10295 = vadd.f32 %v10294, %v9364
      %v10296 = vadd.f32 %v10295, %v9365
      %v10297 = vadd.f32 %v10296, %v9366
      %v10298 = vadd.f32 %v10297, %v9367
      %v10299 = vadd.f32 %v10298, %v9368
      %v10300 = vadd.f32 %v10299, %v9369
      %v10301 = vadd.f32 %v10300, %v9370
      %10302 = vadd.xlane.f32.xlu0 %v10301
      %v10303 = vpop.xlane.xlu0 %10302
      %v10304 = vadd.f32 %v9371, %v9372
      %v10305 = vadd.f32 %v10304, %v9373
      %v10306 = vadd.f32 %v10305, %v9374
      %v10307 = vadd.f32 %v10306, %v9375
      %v10308 = vadd.f32 %v10307, %v9376
      %v10309 = vadd.f32 %v10308, %v9377
      %v10310 = vadd.f32 %v10309, %v9378
      %v10311 = vadd.f32 %v10310, %v9379
      %v10312 = vadd.f32 %v10311, %v9380
      %v10313 = vadd.f32 %v10312, %v9381
      %v10314 = vadd.f32 %v10313, %v9382
      %v10315 = vadd.f32 %v10314, %v9383
      %v10316 = vadd.f32 %v10315, %v9384
      %v10317 = vadd.f32 %v10316, %v9385
      %v10318 = vadd.f32 %v10317, %v9386
      %v10319 = vadd.f32 %v10318, %v9387
      %v10320 = vadd.f32 %v10319, %v9388
      %v10321 = vadd.f32 %v10320, %v9389
      %v10322 = vadd.f32 %v10321, %v9390
      %v10323 = vadd.f32 %v10322, %v9391
      %v10324 = vadd.f32 %v10323, %v9392
      %v10325 = vadd.f32 %v10324, %v9393
      %v10326 = vadd.f32 %v10325, %v9394
      %10327 = vadd.xlane.f32.xlu0 %v10326
      %v10328 = vpop.xlane.xlu0 %10327
      %v10329 = vadd.f32 %v9395, %v9396
      %v10330 = vadd.f32 %v10329, %v9397
      %v10331 = vadd.f32 %v10330, %v9398
      %v10332 = vadd.f32 %v10331, %v9399
      %v10333 = vadd.f32 %v10332, %v9400
      %v10334 = vadd.f32 %v10333, %v9401
      %v10335 = vadd.f32 %v10334, %v9402
      %v10336 = vadd.f32 %v10335, %v9403
      %v10337 = vadd.f32 %v10336, %v9404
      %v10338 = vadd.f32 %v10337, %v9405
      %v10339 = vadd.f32 %v10338, %v9406
      %v10340 = vadd.f32 %v10339, %v9407
      %v10341 = vadd.f32 %v10340, %v9408
      %v10342 = vadd.f32 %v10341, %v9409
      %v10343 = vadd.f32 %v10342, %v9410
      %v10344 = vadd.f32 %v10343, %v9411
      %v10345 = vadd.f32 %v10344, %v9412
      %v10346 = vadd.f32 %v10345, %v9413
      %v10347 = vadd.f32 %v10346, %v9414
      %v10348 = vadd.f32 %v10347, %v9415
      %v10349 = vadd.f32 %v10348, %v9416
      %v10350 = vadd.f32 %v10349, %v9417
      %v10351 = vadd.f32 %v10350, %v9418
      %10352 = vadd.xlane.f32.xlu0 %v10351
      %v10353 = vpop.xlane.xlu0 %10352
      %v10354 = vadd.f32 %v9419, %v9420
      %v10355 = vadd.f32 %v10354, %v9421
      %v10356 = vadd.f32 %v10355, %v9422
      %v10357 = vadd.f32 %v10356, %v9423
      %v10358 = vadd.f32 %v10357, %v9424
      %v10359 = vadd.f32 %v10358, %v9425
      %v10360 = vadd.f32 %v10359, %v9426
      %v10361 = vadd.f32 %v10360, %v9427
      %v10362 = vadd.f32 %v10361, %v9428
      %v10363 = vadd.f32 %v10362, %v9429
      %v10364 = vadd.f32 %v10363, %v9430
      %v10365 = vadd.f32 %v10364, %v9431
      %v10366 = vadd.f32 %v10365, %v9432
      %v10367 = vadd.f32 %v10366, %v9433
      %v10368 = vadd.f32 %v10367, %v9434
      %v10369 = vadd.f32 %v10368, %v9435
      %v10370 = vadd.f32 %v10369, %v9436
      %v10371 = vadd.f32 %v10370, %v9437
      %v10372 = vadd.f32 %v10371, %v9438
      %v10373 = vadd.f32 %v10372, %v9439
      %v10374 = vadd.f32 %v10373, %v9440
      %v10375 = vadd.f32 %v10374, %v9441
      %v10376 = vadd.f32 %v10375, %v9442
      %10377 = vadd.xlane.f32.xlu0 %v10376
      %v10378 = vpop.xlane.xlu0 %10377
      %v10379 = vadd.f32 %v9443, %v9444
      %v10380 = vadd.f32 %v10379, %v9445
      %v10381 = vadd.f32 %v10380, %v9446
      %v10382 = vadd.f32 %v10381, %v9447
      %v10383 = vadd.f32 %v10382, %v9448
      %v10384 = vadd.f32 %v10383, %v9449
      %v10385 = vadd.f32 %v10384, %v9450
      %v10386 = vadd.f32 %v10385, %v9451
      %v10387 = vadd.f32 %v10386, %v9452
      %v10388 = vadd.f32 %v10387, %v9453
      %v10389 = vadd.f32 %v10388, %v9454
      %v10390 = vadd.f32 %v10389, %v9455
      %v10391 = vadd.f32 %v10390, %v9456
      %v10392 = vadd.f32 %v10391, %v9457
      %v10393 = vadd.f32 %v10392, %v9458
      %v10394 = vadd.f32 %v10393, %v9459
      %v10395 = vadd.f32 %v10394, %v9460
      %v10396 = vadd.f32 %v10395, %v9461
      %v10397 = vadd.f32 %v10396, %v9462
      %v10398 = vadd.f32 %v10397, %v9463
      %v10399 = vadd.f32 %v10398, %v9464
      %v10400 = vadd.f32 %v10399, %v9465
      %v10401 = vadd.f32 %v10400, %v9466
      %10402 = vadd.xlane.f32.xlu0 %v10401
      %v10403 = vpop.xlane.xlu0 %10402
      %v10404 = vadd.f32 %v9467, %v9468
      %v10405 = vadd.f32 %v10404, %v9469
      %v10406 = vadd.f32 %v10405, %v9470
      %v10407 = vadd.f32 %v10406, %v9471
      %v10408 = vadd.f32 %v10407, %v9472
      %v10409 = vadd.f32 %v10408, %v9473
      %v10410 = vadd.f32 %v10409, %v9474
      %v10411 = vadd.f32 %v10410, %v9475
      %v10412 = vadd.f32 %v10411, %v9476
      %v10413 = vadd.f32 %v10412, %v9477
      %v10414 = vadd.f32 %v10413, %v9478
      %v10415 = vadd.f32 %v10414, %v9479
      %v10416 = vadd.f32 %v10415, %v9480
      %v10417 = vadd.f32 %v10416, %v9481
      %v10418 = vadd.f32 %v10417, %v9482
      %v10419 = vadd.f32 %v10418, %v9483
      %v10420 = vadd.f32 %v10419, %v9484
      %v10421 = vadd.f32 %v10420, %v9485
      %v10422 = vadd.f32 %v10421, %v9486
      %v10423 = vadd.f32 %v10422, %v9487
      %v10424 = vadd.f32 %v10423, %v9488
      %v10425 = vadd.f32 %v10424, %v9489
      %v10426 = vadd.f32 %v10425, %v9490
      %10427 = vadd.xlane.f32.xlu0 %v10426
      %v10428 = vpop.xlane.xlu0 %10427
      %v10429 = vadd.f32 %v9491, %v9492
      %v10430 = vadd.f32 %v10429, %v9493
      %v10431 = vadd.f32 %v10430, %v9494
      %v10432 = vadd.f32 %v10431, %v9495
      %v10433 = vadd.f32 %v10432, %v9496
      %v10434 = vadd.f32 %v10433, %v9497
      %v10435 = vadd.f32 %v10434, %v9498
      %v10436 = vadd.f32 %v10435, %v9499
      %v10437 = vadd.f32 %v10436, %v9500
      %v10438 = vadd.f32 %v10437, %v9501
      %v10439 = vadd.f32 %v10438, %v9502
      %v10440 = vadd.f32 %v10439, %v9503
      %v10441 = vadd.f32 %v10440, %v9504
      %v10442 = vadd.f32 %v10441, %v9505
      %v10443 = vadd.f32 %v10442, %v9506
      %v10444 = vadd.f32 %v10443, %v9507
      %v10445 = vadd.f32 %v10444, %v9508
      %v10446 = vadd.f32 %v10445, %v9509
      %v10447 = vadd.f32 %v10446, %v9510
      %v10448 = vadd.f32 %v10447, %v9511
      %v10449 = vadd.f32 %v10448, %v9512
      %v10450 = vadd.f32 %v10449, %v9513
      %v10451 = vadd.f32 %v10450, %v9514
      %10452 = vadd.xlane.f32.xlu0 %v10451
      %v10453 = vpop.xlane.xlu0 %10452
      %v10454 = vadd.f32 %v9515, %v9516
      %v10455 = vadd.f32 %v10454, %v9517
      %v10456 = vadd.f32 %v10455, %v9518
      %v10457 = vadd.f32 %v10456, %v9519
      %v10458 = vadd.f32 %v10457, %v9520
      %v10459 = vadd.f32 %v10458, %v9521
      %v10460 = vadd.f32 %v10459, %v9522
      %v10461 = vadd.f32 %v10460, %v9523
      %v10462 = vadd.f32 %v10461, %v9524
      %v10463 = vadd.f32 %v10462, %v9525
      %v10464 = vadd.f32 %v10463, %v9526
      %v10465 = vadd.f32 %v10464, %v9527
      %v10466 = vadd.f32 %v10465, %v9528
      %v10467 = vadd.f32 %v10466, %v9529
      %v10468 = vadd.f32 %v10467, %v9530
      %v10469 = vadd.f32 %v10468, %v9531
      %v10470 = vadd.f32 %v10469, %v9532
      %v10471 = vadd.f32 %v10470, %v9533
      %v10472 = vadd.f32 %v10471, %v9534
      %v10473 = vadd.f32 %v10472, %v9535
      %v10474 = vadd.f32 %v10473, %v9536
      %v10475 = vadd.f32 %v10474, %v9537
      %v10476 = vadd.f32 %v10475, %v9538
      %10477 = vadd.xlane.f32.xlu0 %v10476
      %v10478 = vpop.xlane.xlu0 %10477
      %v10479 = vadd.f32 %v9539, %v9540
      %v10480 = vadd.f32 %v10479, %v9541
      %v10481 = vadd.f32 %v10480, %v9542
      %v10482 = vadd.f32 %v10481, %v9543
      %v10483 = vadd.f32 %v10482, %v9544
      %v10484 = vadd.f32 %v10483, %v9545
      %v10485 = vadd.f32 %v10484, %v9546
      %v10486 = vadd.f32 %v10485, %v9547
      %v10487 = vadd.f32 %v10486, %v9548
      %v10488 = vadd.f32 %v10487, %v9549
      %v10489 = vadd.f32 %v10488, %v9550
      %v10490 = vadd.f32 %v10489, %v9551
      %v10491 = vadd.f32 %v10490, %v9552
      %v10492 = vadd.f32 %v10491, %v9553
      %v10493 = vadd.f32 %v10492, %v9554
      %v10494 = vadd.f32 %v10493, %v9555
      %v10495 = vadd.f32 %v10494, %v9556
      %v10496 = vadd.f32 %v10495, %v9557
      %v10497 = vadd.f32 %v10496, %v9558
      %v10498 = vadd.f32 %v10497, %v9559
      %v10499 = vadd.f32 %v10498, %v9560
      %v10500 = vadd.f32 %v10499, %v9561
      %v10501 = vadd.f32 %v10500, %v9562
      %10502 = vadd.xlane.f32.xlu0 %v10501
      %v10503 = vpop.xlane.xlu0 %10502
      %v10504 = vadd.f32 %v9563, %v9564
      %v10505 = vadd.f32 %v10504, %v9565
      %v10506 = vadd.f32 %v10505, %v9566
      %v10507 = vadd.f32 %v10506, %v9567
      %v10508 = vadd.f32 %v10507, %v9568
      %v10509 = vadd.f32 %v10508, %v9569
      %v10510 = vadd.f32 %v10509, %v9570
      %v10511 = vadd.f32 %v10510, %v9571
      %v10512 = vadd.f32 %v10511, %v9572
      %v10513 = vadd.f32 %v10512, %v9573
      %v10514 = vadd.f32 %v10513, %v9574
      %v10515 = vadd.f32 %v10514, %v9575
      %v10516 = vadd.f32 %v10515, %v9576
      %v10517 = vadd.f32 %v10516, %v9577
      %v10518 = vadd.f32 %v10517, %v9578
      %v10519 = vadd.f32 %v10518, %v9579
      %v10520 = vadd.f32 %v10519, %v9580
      %v10521 = vadd.f32 %v10520, %v9581
      %v10522 = vadd.f32 %v10521, %v9582
      %v10523 = vadd.f32 %v10522, %v9583
      %v10524 = vadd.f32 %v10523, %v9584
      %v10525 = vadd.f32 %v10524, %v9585
      %v10526 = vadd.f32 %v10525, %v9586
      %10527 = vadd.xlane.f32.xlu0 %v10526
      %v10528 = vpop.xlane.xlu0 %10527
      %v10529 = vadd.f32 %v9587, %v9588
      %v10530 = vadd.f32 %v10529, %v9589
      %v10531 = vadd.f32 %v10530, %v9590
      %v10532 = vadd.f32 %v10531, %v9591
      %v10533 = vadd.f32 %v10532, %v9592
      %v10534 = vadd.f32 %v10533, %v9593
      %v10535 = vadd.f32 %v10534, %v9594
      %v10536 = vadd.f32 %v10535, %v9595
      %v10537 = vadd.f32 %v10536, %v9596
      %v10538 = vadd.f32 %v10537, %v9597
      %v10539 = vadd.f32 %v10538, %v9598
      %v10540 = vadd.f32 %v10539, %v9599
      %v10541 = vadd.f32 %v10540, %v9600
      %v10542 = vadd.f32 %v10541, %v9601
      %v10543 = vadd.f32 %v10542, %v9602
      %v10544 = vadd.f32 %v10543, %v9603
      %v10545 = vadd.f32 %v10544, %v9604
      %v10546 = vadd.f32 %v10545, %v9605
      %v10547 = vadd.f32 %v10546, %v9606
      %v10548 = vadd.f32 %v10547, %v9607
      %v10549 = vadd.f32 %v10548, %v9608
      %v10550 = vadd.f32 %v10549, %v9609
      %v10551 = vadd.f32 %v10550, %v9610
      %10552 = vadd.xlane.f32.xlu0 %v10551
      %v10553 = vpop.xlane.xlu0 %10552
      %v10554 = vadd.f32 %v9611, %v9612
      %v10555 = vadd.f32 %v10554, %v9613
      %v10556 = vadd.f32 %v10555, %v9614
      %v10557 = vadd.f32 %v10556, %v9615
      %v10558 = vadd.f32 %v10557, %v9616
      %v10559 = vadd.f32 %v10558, %v9617
      %v10560 = vadd.f32 %v10559, %v9618
      %v10561 = vadd.f32 %v10560, %v9619
      %v10562 = vadd.f32 %v10561, %v9620
      %v10563 = vadd.f32 %v10562, %v9621
      %v10564 = vadd.f32 %v10563, %v9622
      %v10565 = vadd.f32 %v10564, %v9623
      %v10566 = vadd.f32 %v10565, %v9624
      %v10567 = vadd.f32 %v10566, %v9625
      %v10568 = vadd.f32 %v10567, %v9626
      %v10569 = vadd.f32 %v10568, %v9627
      %v10570 = vadd.f32 %v10569, %v9628
      %v10571 = vadd.f32 %v10570, %v9629
      %v10572 = vadd.f32 %v10571, %v9630
      %v10573 = vadd.f32 %v10572, %v9631
      %v10574 = vadd.f32 %v10573, %v9632
      %v10575 = vadd.f32 %v10574, %v9633
      %v10576 = vadd.f32 %v10575, %v9634
      %10577 = vadd.xlane.f32.xlu0 %v10576
      %v10578 = vpop.xlane.xlu0 %10577
      %v10579 = vadd.f32 %v9635, %v9636
      %v10580 = vadd.f32 %v10579, %v9637
      %v10581 = vadd.f32 %v10580, %v9638
      %v10582 = vadd.f32 %v10581, %v9639
      %v10583 = vadd.f32 %v10582, %v9640
      %v10584 = vadd.f32 %v10583, %v9641
      %v10585 = vadd.f32 %v10584, %v9642
      %v10586 = vadd.f32 %v10585, %v9643
      %v10587 = vadd.f32 %v10586, %v9644
      %v10588 = vadd.f32 %v10587, %v9645
      %v10589 = vadd.f32 %v10588, %v9646
      %v10590 = vadd.f32 %v10589, %v9647
      %v10591 = vadd.f32 %v10590, %v9648
      %v10592 = vadd.f32 %v10591, %v9649
      %v10593 = vadd.f32 %v10592, %v9650
      %v10594 = vadd.f32 %v10593, %v9651
      %v10595 = vadd.f32 %v10594, %v9652
      %v10596 = vadd.f32 %v10595, %v9653
      %v10597 = vadd.f32 %v10596, %v9654
      %v10598 = vadd.f32 %v10597, %v9655
      %v10599 = vadd.f32 %v10598, %v9656
      %v10600 = vadd.f32 %v10599, %v9657
      %v10601 = vadd.f32 %v10600, %v9658
      %10602 = vadd.xlane.f32.xlu0 %v10601
      %v10603 = vpop.xlane.xlu0 %10602
      %v10604 = vadd.f32 %v9659, %v9660
      %v10605 = vadd.f32 %v10604, %v9661
      %v10606 = vadd.f32 %v10605, %v9662
      %v10607 = vadd.f32 %v10606, %v9663
      %v10608 = vadd.f32 %v10607, %v9664
      %v10609 = vadd.f32 %v10608, %v9665
      %v10610 = vadd.f32 %v10609, %v9666
      %v10611 = vadd.f32 %v10610, %v9667
      %v10612 = vadd.f32 %v10611, %v9668
      %v10613 = vadd.f32 %v10612, %v9669
      %v10614 = vadd.f32 %v10613, %v9670
      %v10615 = vadd.f32 %v10614, %v9671
      %v10616 = vadd.f32 %v10615, %v9672
      %v10617 = vadd.f32 %v10616, %v9673
      %v10618 = vadd.f32 %v10617, %v9674
      %v10619 = vadd.f32 %v10618, %v9675
      %v10620 = vadd.f32 %v10619, %v9676
      %v10621 = vadd.f32 %v10620, %v9677
      %v10622 = vadd.f32 %v10621, %v9678
      %v10623 = vadd.f32 %v10622, %v9679
      %v10624 = vadd.f32 %v10623, %v9680
      %v10625 = vadd.f32 %v10624, %v9681
      %v10626 = vadd.f32 %v10625, %v9682
      %10627 = vadd.xlane.f32.xlu0 %v10626
      %v10628 = vpop.xlane.xlu0 %10627
      %v10629 = vadd.f32 %v9683, %v9684
      %v10630 = vadd.f32 %v10629, %v9685
      %v10631 = vadd.f32 %v10630, %v9686
      %v10632 = vadd.f32 %v10631, %v9687
      %v10633 = vadd.f32 %v10632, %v9688
      %v10634 = vadd.f32 %v10633, %v9689
      %v10635 = vadd.f32 %v10634, %v9690
      %v10636 = vadd.f32 %v10635, %v9691
      %v10637 = vadd.f32 %v10636, %v9692
      %v10638 = vadd.f32 %v10637, %v9693
      %v10639 = vadd.f32 %v10638, %v9694
      %v10640 = vadd.f32 %v10639, %v9695
      %v10641 = vadd.f32 %v10640, %v9696
      %v10642 = vadd.f32 %v10641, %v9697
      %v10643 = vadd.f32 %v10642, %v9698
      %v10644 = vadd.f32 %v10643, %v9699
      %v10645 = vadd.f32 %v10644, %v9700
      %v10646 = vadd.f32 %v10645, %v9701
      %v10647 = vadd.f32 %v10646, %v9702
      %v10648 = vadd.f32 %v10647, %v9703
      %v10649 = vadd.f32 %v10648, %v9704
      %v10650 = vadd.f32 %v10649, %v9705
      %v10651 = vadd.f32 %v10650, %v9706
      %10652 = vadd.xlane.f32.xlu0 %v10651
      %v10653 = vpop.xlane.xlu0 %10652
      %v10654 = vadd.f32 %v9707, %v9708
      %v10655 = vadd.f32 %v10654, %v9709
      %v10656 = vadd.f32 %v10655, %v9710
      %v10657 = vadd.f32 %v10656, %v9711
      %v10658 = vadd.f32 %v10657, %v9712
      %v10659 = vadd.f32 %v10658, %v9713
      %v10660 = vadd.f32 %v10659, %v9714
      %v10661 = vadd.f32 %v10660, %v9715
      %v10662 = vadd.f32 %v10661, %v9716
      %v10663 = vadd.f32 %v10662, %v9717
      %v10664 = vadd.f32 %v10663, %v9718
      %v10665 = vadd.f32 %v10664, %v9719
      %v10666 = vadd.f32 %v10665, %v9720
      %v10667 = vadd.f32 %v10666, %v9721
      %v10668 = vadd.f32 %v10667, %v9722
      %v10669 = vadd.f32 %v10668, %v9723
      %v10670 = vadd.f32 %v10669, %v9724
      %v10671 = vadd.f32 %v10670, %v9725
      %v10672 = vadd.f32 %v10671, %v9726
      %v10673 = vadd.f32 %v10672, %v9727
      %v10674 = vadd.f32 %v10673, %v9728
      %v10675 = vadd.f32 %v10674, %v9729
      %v10676 = vadd.f32 %v10675, %v9730
      %10677 = vadd.xlane.f32.xlu0 %v10676
      %v10678 = vpop.xlane.xlu0 %10677
      %v10679 = vadd.f32 %v9731, %v9732
      %v10680 = vadd.f32 %v10679, %v9733
      %v10681 = vadd.f32 %v10680, %v9734
      %v10682 = vadd.f32 %v10681, %v9735
      %v10683 = vadd.f32 %v10682, %v9736
      %v10684 = vadd.f32 %v10683, %v9737
      %v10685 = vadd.f32 %v10684, %v9738
      %v10686 = vadd.f32 %v10685, %v9739
      %v10687 = vadd.f32 %v10686, %v9740
      %v10688 = vadd.f32 %v10687, %v9741
      %v10689 = vadd.f32 %v10688, %v9742
      %v10690 = vadd.f32 %v10689, %v9743
      %v10691 = vadd.f32 %v10690, %v9744
      %v10692 = vadd.f32 %v10691, %v9745
      %v10693 = vadd.f32 %v10692, %v9746
      %v10694 = vadd.f32 %v10693, %v9747
      %v10695 = vadd.f32 %v10694, %v9748
      %v10696 = vadd.f32 %v10695, %v9749
      %v10697 = vadd.f32 %v10696, %v9750
      %v10698 = vadd.f32 %v10697, %v9751
      %v10699 = vadd.f32 %v10698, %v9752
      %v10700 = vadd.f32 %v10699, %v9753
      %v10701 = vadd.f32 %v10700, %v9754
      %10702 = vadd.xlane.f32.xlu0 %v10701
      %v10703 = vpop.xlane.xlu0 %10702
      %v10704 = vadd.f32 %v9755, %v9756
      %v10705 = vadd.f32 %v10704, %v9757
      %v10706 = vadd.f32 %v10705, %v9758
      %v10707 = vadd.f32 %v10706, %v9759
      %v10708 = vadd.f32 %v10707, %v9760
      %v10709 = vadd.f32 %v10708, %v9761
      %v10710 = vadd.f32 %v10709, %v9762
      %v10711 = vadd.f32 %v10710, %v9763
      %v10712 = vadd.f32 %v10711, %v9764
      %v10713 = vadd.f32 %v10712, %v9765
      %v10714 = vadd.f32 %v10713, %v9766
      %v10715 = vadd.f32 %v10714, %v9767
      %v10716 = vadd.f32 %v10715, %v9768
      %v10717 = vadd.f32 %v10716, %v9769
      %v10718 = vadd.f32 %v10717, %v9770
      %v10719 = vadd.f32 %v10718, %v9771
      %v10720 = vadd.f32 %v10719, %v9772
      %v10721 = vadd.f32 %v10720, %v9773
      %v10722 = vadd.f32 %v10721, %v9774
      %v10723 = vadd.f32 %v10722, %v9775
      %v10724 = vadd.f32 %v10723, %v9776
      %v10725 = vadd.f32 %v10724, %v9777
      %v10726 = vadd.f32 %v10725, %v9778
      %10727 = vadd.xlane.f32.xlu0 %v10726
      %v10728 = vpop.xlane.xlu0 %10727
      %v10729 = vadd.f32 %v9779, %v9780
      %v10730 = vadd.f32 %v10729, %v9781
      %v10731 = vadd.f32 %v10730, %v9782
      %v10732 = vadd.f32 %v10731, %v9783
      %v10733 = vadd.f32 %v10732, %v9784
      %v10734 = vadd.f32 %v10733, %v9785
      %v10735 = vadd.f32 %v10734, %v9786
      %v10736 = vadd.f32 %v10735, %v9787
      %v10737 = vadd.f32 %v10736, %v9788
      %v10738 = vadd.f32 %v10737, %v9789
      %v10739 = vadd.f32 %v10738, %v9790
      %v10740 = vadd.f32 %v10739, %v9791
      %v10741 = vadd.f32 %v10740, %v9792
      %v10742 = vadd.f32 %v10741, %v9793
      %v10743 = vadd.f32 %v10742, %v9794
      %v10744 = vadd.f32 %v10743, %v9795
      %v10745 = vadd.f32 %v10744, %v9796
      %v10746 = vadd.f32 %v10745, %v9797
      %v10747 = vadd.f32 %v10746, %v9798
      %v10748 = vadd.f32 %v10747, %v9799
      %v10749 = vadd.f32 %v10748, %v9800
      %v10750 = vadd.f32 %v10749, %v9801
      %v10751 = vadd.f32 %v10750, %v9802
      %10752 = vadd.xlane.f32.xlu0 %v10751
      %v10753 = vpop.xlane.xlu0 %10752
      %v10754 = vadd.f32 %v9803, %v9804
      %v10755 = vadd.f32 %v10754, %v9805
      %v10756 = vadd.f32 %v10755, %v9806
      %v10757 = vadd.f32 %v10756, %v9807
      %v10758 = vadd.f32 %v10757, %v9808
      %v10759 = vadd.f32 %v10758, %v9809
      %v10760 = vadd.f32 %v10759, %v9810
      %v10761 = vadd.f32 %v10760, %v9811
      %v10762 = vadd.f32 %v10761, %v9812
      %v10763 = vadd.f32 %v10762, %v9813
      %v10764 = vadd.f32 %v10763, %v9814
      %v10765 = vadd.f32 %v10764, %v9815
      %v10766 = vadd.f32 %v10765, %v9816
      %v10767 = vadd.f32 %v10766, %v9817
      %v10768 = vadd.f32 %v10767, %v9818
      %v10769 = vadd.f32 %v10768, %v9819
      %v10770 = vadd.f32 %v10769, %v9820
      %v10771 = vadd.f32 %v10770, %v9821
      %v10772 = vadd.f32 %v10771, %v9822
      %v10773 = vadd.f32 %v10772, %v9823
      %v10774 = vadd.f32 %v10773, %v9824
      %v10775 = vadd.f32 %v10774, %v9825
      %v10776 = vadd.f32 %v10775, %v9826
      %10777 = vadd.xlane.f32.xlu0 %v10776
      %v10778 = vpop.xlane.xlu0 %10777
      %v10779 = vadd.f32 %v9827, %v9828
      %v10780 = vadd.f32 %v10779, %v9829
      %v10781 = vadd.f32 %v10780, %v9830
      %v10782 = vadd.f32 %v10781, %v9831
      %v10783 = vadd.f32 %v10782, %v9832
      %v10784 = vadd.f32 %v10783, %v9833
      %v10785 = vadd.f32 %v10784, %v9834
      %v10786 = vadd.f32 %v10785, %v9835
      %v10787 = vadd.f32 %v10786, %v9836
      %v10788 = vadd.f32 %v10787, %v9837
      %v10789 = vadd.f32 %v10788, %v9838
      %v10790 = vadd.f32 %v10789, %v9839
      %v10791 = vadd.f32 %v10790, %v9840
      %v10792 = vadd.f32 %v10791, %v9841
      %v10793 = vadd.f32 %v10792, %v9842
      %v10794 = vadd.f32 %v10793, %v9843
      %v10795 = vadd.f32 %v10794, %v9844
      %v10796 = vadd.f32 %v10795, %v9845
      %v10797 = vadd.f32 %v10796, %v9846
      %v10798 = vadd.f32 %v10797, %v9847
      %v10799 = vadd.f32 %v10798, %v9848
      %v10800 = vadd.f32 %v10799, %v9849
      %v10801 = vadd.f32 %v10800, %v9850
      %10802 = vadd.xlane.f32.xlu0 %v10801
      %v10803 = vpop.xlane.xlu0 %10802
      %v10804 = vadd.f32 %v9851, %v9852
      %v10805 = vadd.f32 %v10804, %v9853
      %v10806 = vadd.f32 %v10805, %v9854
      %v10807 = vadd.f32 %v10806, %v9855
      %v10808 = vadd.f32 %v10807, %v9856
      %v10809 = vadd.f32 %v10808, %v9857
      %v10810 = vadd.f32 %v10809, %v9858
      %v10811 = vadd.f32 %v10810, %v9859
      %v10812 = vadd.f32 %v10811, %v9860
      %v10813 = vadd.f32 %v10812, %v9861
      %v10814 = vadd.f32 %v10813, %v9862
      %v10815 = vadd.f32 %v10814, %v9863
      %v10816 = vadd.f32 %v10815, %v9864
      %v10817 = vadd.f32 %v10816, %v9865
      %v10818 = vadd.f32 %v10817, %v9866
      %v10819 = vadd.f32 %v10818, %v9867
      %v10820 = vadd.f32 %v10819, %v9868
      %v10821 = vadd.f32 %v10820, %v9869
      %v10822 = vadd.f32 %v10821, %v9870
      %v10823 = vadd.f32 %v10822, %v9871
      %v10824 = vadd.f32 %v10823, %v9872
      %v10825 = vadd.f32 %v10824, %v9873
      %v10826 = vadd.f32 %v10825, %v9874
      %10827 = vadd.xlane.f32.xlu0 %v10826
      %v10828 = vpop.xlane.xlu0 %10827
      %v10829 = vadd.f32 %v9875, %v9876
      %v10830 = vadd.f32 %v10829, %v9877
      %v10831 = vadd.f32 %v10830, %v9878
      %v10832 = vadd.f32 %v10831, %v9879
      %v10833 = vadd.f32 %v10832, %v9880
      %v10834 = vadd.f32 %v10833, %v9881
      %v10835 = vadd.f32 %v10834, %v9882
      %v10836 = vadd.f32 %v10835, %v9883
      %v10837 = vadd.f32 %v10836, %v9884
      %v10838 = vadd.f32 %v10837, %v9885
      %v10839 = vadd.f32 %v10838, %v9886
      %v10840 = vadd.f32 %v10839, %v9887
      %v10841 = vadd.f32 %v10840, %v9888
      %v10842 = vadd.f32 %v10841, %v9889
      %v10843 = vadd.f32 %v10842, %v9890
      %v10844 = vadd.f32 %v10843, %v9891
      %v10845 = vadd.f32 %v10844, %v9892
      %v10846 = vadd.f32 %v10845, %v9893
      %v10847 = vadd.f32 %v10846, %v9894
      %v10848 = vadd.f32 %v10847, %v9895
      %v10849 = vadd.f32 %v10848, %v9896
      %v10850 = vadd.f32 %v10849, %v9897
      %v10851 = vadd.f32 %v10850, %v9898
      %10852 = vadd.xlane.f32.xlu0 %v10851
      %v10853 = vpop.xlane.xlu0 %10852
      %v10854 = vadd.f32 %v9899, %v9900
      %v10855 = vadd.f32 %v10854, %v9901
      %v10856 = vadd.f32 %v10855, %v9902
      %v10857 = vadd.f32 %v10856, %v9903
      %v10858 = vadd.f32 %v10857, %v9904
      %v10859 = vadd.f32 %v10858, %v9905
      %v10860 = vadd.f32 %v10859, %v9906
      %v10861 = vadd.f32 %v10860, %v9907
      %v10862 = vadd.f32 %v10861, %v9908
      %v10863 = vadd.f32 %v10862, %v9909
      %v10864 = vadd.f32 %v10863, %v9910
      %v10865 = vadd.f32 %v10864, %v9911
      %v10866 = vadd.f32 %v10865, %v9912
      %v10867 = vadd.f32 %v10866, %v9913
      %v10868 = vadd.f32 %v10867, %v9914
      %v10869 = vadd.f32 %v10868, %v9915
      %v10870 = vadd.f32 %v10869, %v9916
      %v10871 = vadd.f32 %v10870, %v9917
      %v10872 = vadd.f32 %v10871, %v9918
      %v10873 = vadd.f32 %v10872, %v9919
      %v10874 = vadd.f32 %v10873, %v9920
      %v10875 = vadd.f32 %v10874, %v9921
      %v10876 = vadd.f32 %v10875, %v9922
      %10877 = vadd.xlane.f32.xlu0 %v10876
      %v10878 = vpop.xlane.xlu0 %10877
      %v10879 = vadd.f32 %v9923, %v9924
      %v10880 = vadd.f32 %v10879, %v9925
      %v10881 = vadd.f32 %v10880, %v9926
      %v10882 = vadd.f32 %v10881, %v9927
      %v10883 = vadd.f32 %v10882, %v9928
      %v10884 = vadd.f32 %v10883, %v9929
      %v10885 = vadd.f32 %v10884, %v9930
      %v10886 = vadd.f32 %v10885, %v9931
      %v10887 = vadd.f32 %v10886, %v9932
      %v10888 = vadd.f32 %v10887, %v9933
      %v10889 = vadd.f32 %v10888, %v9934
      %v10890 = vadd.f32 %v10889, %v9935
      %v10891 = vadd.f32 %v10890, %v9936
      %v10892 = vadd.f32 %v10891, %v9937
      %v10893 = vadd.f32 %v10892, %v9938
      %v10894 = vadd.f32 %v10893, %v9939
      %v10895 = vadd.f32 %v10894, %v9940
      %v10896 = vadd.f32 %v10895, %v9941
      %v10897 = vadd.f32 %v10896, %v9942
      %v10898 = vadd.f32 %v10897, %v9943
      %v10899 = vadd.f32 %v10898, %v9944
      %v10900 = vadd.f32 %v10899, %v9945
      %v10901 = vadd.f32 %v10900, %v9946
      %10902 = vadd.xlane.f32.xlu0 %v10901
      %v10903 = vpop.xlane.xlu0 %10902
      %v10904 = vadd.f32 %v9947, %v9948
      %v10905 = vadd.f32 %v10904, %v9949
      %v10906 = vadd.f32 %v10905, %v9950
      %v10907 = vadd.f32 %v10906, %v9951
      %v10908 = vadd.f32 %v10907, %v9952
      %v10909 = vadd.f32 %v10908, %v9953
      %v10910 = vadd.f32 %v10909, %v9954
      %v10911 = vadd.f32 %v10910, %v9955
      %v10912 = vadd.f32 %v10911, %v9956
      %v10913 = vadd.f32 %v10912, %v9957
      %v10914 = vadd.f32 %v10913, %v9958
      %v10915 = vadd.f32 %v10914, %v9959
      %v10916 = vadd.f32 %v10915, %v9960
      %v10917 = vadd.f32 %v10916, %v9961
      %v10918 = vadd.f32 %v10917, %v9962
      %v10919 = vadd.f32 %v10918, %v9963
      %v10920 = vadd.f32 %v10919, %v9964
      %v10921 = vadd.f32 %v10920, %v9965
      %v10922 = vadd.f32 %v10921, %v9966
      %v10923 = vadd.f32 %v10922, %v9967
      %v10924 = vadd.f32 %v10923, %v9968
      %v10925 = vadd.f32 %v10924, %v9969
      %v10926 = vadd.f32 %v10925, %v9970
      %10927 = vadd.xlane.f32.xlu0 %v10926
      %v10928 = vpop.xlane.xlu0 %10927
      %v10929 = vadd.f32 %v9971, %v9972
      %v10930 = vadd.f32 %v10929, %v9973
      %v10931 = vadd.f32 %v10930, %v9974
      %v10932 = vadd.f32 %v10931, %v9975
      %v10933 = vadd.f32 %v10932, %v9976
      %v10934 = vadd.f32 %v10933, %v9977
      %v10935 = vadd.f32 %v10934, %v9978
      %v10936 = vadd.f32 %v10935, %v9979
      %v10937 = vadd.f32 %v10936, %v9980
      %v10938 = vadd.f32 %v10937, %v9981
      %v10939 = vadd.f32 %v10938, %v9982
      %v10940 = vadd.f32 %v10939, %v9983
      %v10941 = vadd.f32 %v10940, %v9984
      %v10942 = vadd.f32 %v10941, %v9985
      %v10943 = vadd.f32 %v10942, %v9986
      %v10944 = vadd.f32 %v10943, %v9987
      %v10945 = vadd.f32 %v10944, %v9988
      %v10946 = vadd.f32 %v10945, %v9989
      %v10947 = vadd.f32 %v10946, %v9990
      %v10948 = vadd.f32 %v10947, %v9991
      %v10949 = vadd.f32 %v10948, %v9992
      %v10950 = vadd.f32 %v10949, %v9993
      %v10951 = vadd.f32 %v10950, %v9994
      %10952 = vadd.xlane.f32.xlu0 %v10951
      %v10953 = vpop.xlane.xlu0 %10952
      %v10954 = vadd.f32 %v9995, %v9996
      %v10955 = vadd.f32 %v10954, %v9997
      %v10956 = vadd.f32 %v10955, %v9998
      %v10957 = vadd.f32 %v10956, %v9999
      %v10958 = vadd.f32 %v10957, %v10000
      %v10959 = vadd.f32 %v10958, %v10001
      %v10960 = vadd.f32 %v10959, %v10002
      %v10961 = vadd.f32 %v10960, %v10003
      %v10962 = vadd.f32 %v10961, %v10004
      %v10963 = vadd.f32 %v10962, %v10005
      %v10964 = vadd.f32 %v10963, %v10006
      %v10965 = vadd.f32 %v10964, %v10007
      %v10966 = vadd.f32 %v10965, %v10008
      %v10967 = vadd.f32 %v10966, %v10009
      %v10968 = vadd.f32 %v10967, %v10010
      %v10969 = vadd.f32 %v10968, %v10011
      %v10970 = vadd.f32 %v10969, %v10012
      %v10971 = vadd.f32 %v10970, %v10013
      %v10972 = vadd.f32 %v10971, %v10014
      %v10973 = vadd.f32 %v10972, %v10015
      %v10974 = vadd.f32 %v10973, %v10016
      %v10975 = vadd.f32 %v10974, %v10017
      %v10976 = vadd.f32 %v10975, %v10018
      %10977 = vadd.xlane.f32.xlu0 %v10976
      %v10978 = vpop.xlane.xlu0 %10977
      %v10979 = vadd.f32 %v10147, %v10203
      %v10980 = vadd.f32 %v10148, %v10228
      %v10981 = vadd.f32 %v10149, %v10253
      %v10982 = vadd.f32 %v10150, %v10278
      %v10983 = vadd.f32 %v10151, %v10303
      %v10984 = vadd.f32 %v10152, %v10328
      %v10985 = vadd.f32 %v10153, %v10353
      %v10986 = vadd.f32 %v10154, %v10378
      %v10987 = vadd.f32 %v10155, %v10403
      %v10988 = vadd.f32 %v10156, %v10428
      %v10989 = vadd.f32 %v10157, %v10453
      %v10990 = vadd.f32 %v10158, %v10478
      %v10991 = vadd.f32 %v10159, %v10503
      %v10992 = vadd.f32 %v10160, %v10528
      %v10993 = vadd.f32 %v10161, %v10553
      %v10994 = vadd.f32 %v10162, %v10578
      %v10995 = vadd.f32 %v10163, %v10603
      %v10996 = vadd.f32 %v10164, %v10628
      %v10997 = vadd.f32 %v10165, %v10653
      %v10998 = vadd.f32 %v10166, %v10678
      %v10999 = vadd.f32 %v10167, %v10703
      %v11000 = vadd.f32 %v10168, %v10728
      %v11001 = vadd.f32 %v10169, %v10753
      %v11002 = vadd.f32 %v10170, %v10778
      %v11003 = vadd.f32 %v10171, %v10803
      %v11004 = vadd.f32 %v10172, %v10828
      %v11005 = vadd.f32 %v10173, %v10853
      %v11006 = vadd.f32 %v10174, %v10878
      %v11007 = vadd.f32 %v10175, %v10903
      %v11008 = vadd.f32 %v10176, %v10928
      %v11009 = vadd.f32 %v10177, %v10953
      %v11010 = vadd.f32 %v10178, %v10978
      %vm11011 = vcmask 7168
      %11012 = vst.msk [vmem:[#allocation3] sm:$0xff] %vm11011, %v10979
      %11013 = vst.msk [vmem:[#allocation3 + $0x8] sm:$0xff] %vm11011, %v10980
      %11014 = vst.msk [vmem:[#allocation3 + $0x10] sm:$0xff] %vm11011, %v10981
      %11015 = vst.msk [vmem:[#allocation3 + $0x18] sm:$0xff] %vm11011, %v10982
      %11016 = vst.msk [vmem:[#allocation3 + $0x20] sm:$0xff] %vm11011, %v10983
      %11017 = vst.msk [vmem:[#allocation3 + $0x28] sm:$0xff] %vm11011, %v10984
      %11018 = vst.msk [vmem:[#allocation3 + $0x30] sm:$0xff] %vm11011, %v10985
      %11019 = vst.msk [vmem:[#allocation3 + $0x38] sm:$0xff] %vm11011, %v10986
      %11020 = vst.msk [vmem:[#allocation3 + $0x40] sm:$0xff] %vm11011, %v10987
      %11021 = vst.msk [vmem:[#allocation3 + $0x48] sm:$0xff] %vm11011, %v10988
      %11022 = vst.msk [vmem:[#allocation3 + $0x50] sm:$0xff] %vm11011, %v10989
      %11023 = vst.msk [vmem:[#allocation3 + $0x58] sm:$0xff] %vm11011, %v10990
      %11024 = vst.msk [vmem:[#allocation3 + $0x60] sm:$0xff] %vm11011, %v10991
      %11025 = vst.msk [vmem:[#allocation3 + $0x68] sm:$0xff] %vm11011, %v10992
      %11026 = vst.msk [vmem:[#allocation3 + $0x70] sm:$0xff] %vm11011, %v10993
      %11027 = vst.msk [vmem:[#allocation3 + $0x78] sm:$0xff] %vm11011, %v10994
      %11028 = vst.msk [vmem:[#allocation3 + $0x80] sm:$0xff] %vm11011, %v10995
      %11029 = vst.msk [vmem:[#allocation3 + $0x88] sm:$0xff] %vm11011, %v10996
      %11030 = vst.msk [vmem:[#allocation3 + $0x90] sm:$0xff] %vm11011, %v10997
      %11031 = vst.msk [vmem:[#allocation3 + $0x98] sm:$0xff] %vm11011, %v10998
      %11032 = vst.msk [vmem:[#allocation3 + $0xa0] sm:$0xff] %vm11011, %v10999
      %11033 = vst.msk [vmem:[#allocation3 + $0xa8] sm:$0xff] %vm11011, %v11000
      %11034 = vst.msk [vmem:[#allocation3 + $0xb0] sm:$0xff] %vm11011, %v11001
      %11035 = vst.msk [vmem:[#allocation3 + $0xb8] sm:$0xff] %vm11011, %v11002
      %11036 = vst.msk [vmem:[#allocation3 + $0xc0] sm:$0xff] %vm11011, %v11003
      %11037 = vst.msk [vmem:[#allocation3 + $0xc8] sm:$0xff] %vm11011, %v11004
      %11038 = vst.msk [vmem:[#allocation3 + $0xd0] sm:$0xff] %vm11011, %v11005
      %11039 = vst.msk [vmem:[#allocation3 + $0xd8] sm:$0xff] %vm11011, %v11006
      %11040 = vst.msk [vmem:[#allocation3 + $0xe0] sm:$0xff] %vm11011, %v11007
      %11041 = vst.msk [vmem:[#allocation3 + $0xe8] sm:$0xff] %vm11011, %v11008
      %11042 = vst.msk [vmem:[#allocation3 + $0xf0] sm:$0xff] %vm11011, %v11009
      %11043 = vst.msk [vmem:[#allocation3 + $0xf8] sm:$0xff] %vm11011, %v11010
      %11044 = vst.msk [vmem:[#allocation2] sm:$0xff] %vm11011, %v5672
      %11045 = vst.msk [vmem:[#allocation2 + $0x8] sm:$0xff] %vm11011, %v5673
      %11046 = vst.msk [vmem:[#allocation2 + $0x10] sm:$0xff] %vm11011, %v5674
      %11047 = vst.msk [vmem:[#allocation2 + $0x18] sm:$0xff] %vm11011, %v5675
      %11048 = vst.msk [vmem:[#allocation2 + $0x20] sm:$0xff] %vm11011, %v5676
      %11049 = vst.msk [vmem:[#allocation2 + $0x28] sm:$0xff] %vm11011, %v5677
      %11050 = vst.msk [vmem:[#allocation2 + $0x30] sm:$0xff] %vm11011, %v5678
      %11051 = vst.msk [vmem:[#allocation2 + $0x38] sm:$0xff] %vm11011, %v5679
      %11052 = vst.msk [vmem:[#allocation2 + $0x40] sm:$0xff] %vm11011, %v5680
      %11053 = vst.msk [vmem:[#allocation2 + $0x48] sm:$0xff] %vm11011, %v5681
      %11054 = vst.msk [vmem:[#allocation2 + $0x50] sm:$0xff] %vm11011, %v5682
      %11055 = vst.msk [vmem:[#allocation2 + $0x58] sm:$0xff] %vm11011, %v5683
      %11056 = vst.msk [vmem:[#allocation2 + $0x60] sm:$0xff] %vm11011, %v5684
      %11057 = vst.msk [vmem:[#allocation2 + $0x68] sm:$0xff] %vm11011, %v5685
      %11058 = vst.msk [vmem:[#allocation2 + $0x70] sm:$0xff] %vm11011, %v5686
      %11059 = vst.msk [vmem:[#allocation2 + $0x78] sm:$0xff] %vm11011, %v5687
      %11060 = vst.msk [vmem:[#allocation2 + $0x80] sm:$0xff] %vm11011, %v5688
      %11061 = vst.msk [vmem:[#allocation2 + $0x88] sm:$0xff] %vm11011, %v5689
      %11062 = vst.msk [vmem:[#allocation2 + $0x90] sm:$0xff] %vm11011, %v5690
      %11063 = vst.msk [vmem:[#allocation2 + $0x98] sm:$0xff] %vm11011, %v5691
      %11064 = vst.msk [vmem:[#allocation2 + $0xa0] sm:$0xff] %vm11011, %v5692
      %11065 = vst.msk [vmem:[#allocation2 + $0xa8] sm:$0xff] %vm11011, %v5693
      %11066 = vst.msk [vmem:[#allocation2 + $0xb0] sm:$0xff] %vm11011, %v5694
      %11067 = vst.msk [vmem:[#allocation2 + $0xb8] sm:$0xff] %vm11011, %v5695
      %11068 = vst.msk [vmem:[#allocation2 + $0xc0] sm:$0xff] %vm11011, %v5696
      %11069 = vst.msk [vmem:[#allocation2 + $0xc8] sm:$0xff] %vm11011, %v5697
      %11070 = vst.msk [vmem:[#allocation2 + $0xd0] sm:$0xff] %vm11011, %v5698
      %11071 = vst.msk [vmem:[#allocation2 + $0xd8] sm:$0xff] %vm11011, %v5699
      %11072 = vst.msk [vmem:[#allocation2 + $0xe0] sm:$0xff] %vm11011, %v5700
      %11073 = vst.msk [vmem:[#allocation2 + $0xe8] sm:$0xff] %vm11011, %v5701
      %11074 = vst.msk [vmem:[#allocation2 + $0xf0] sm:$0xff] %vm11011, %v5702
      %11075 = vst.msk [vmem:[#allocation2 + $0xf8] sm:$0xff] %vm11011, %v5703
      %p11076 = scmp.eq.s32.totalorder %s20, 4
      // Predicated region
      $region41: #{tpu_custom_call.1} parent=35 // pred_check
        %p11077 = pneg %p11076
      $region42: #{tpu_custom_call.1} parent=35 // pred_check_branch
        %11079 = sbr.rel (%p11077) target = $region44
      $region43: #{tpu_custom_call.1} parent=35 // pred_region
        %v11080 = vld [vmem:[#allocation3] sm:$0xff]
        %v11081 = vld [vmem:[#allocation3 + $0x8] sm:$0xff]
        %v11082 = vld [vmem:[#allocation3 + $0x10] sm:$0xff]
        %v11083 = vld [vmem:[#allocation3 + $0x18] sm:$0xff]
        %v11084 = vld [vmem:[#allocation3 + $0x20] sm:$0xff]
        %v11085 = vld [vmem:[#allocation3 + $0x28] sm:$0xff]
        %v11086 = vld [vmem:[#allocation3 + $0x30] sm:$0xff]
        %v11087 = vld [vmem:[#allocation3 + $0x38] sm:$0xff]
        %v11088 = vld [vmem:[#allocation3 + $0x40] sm:$0xff]
        %v11089 = vld [vmem:[#allocation3 + $0x48] sm:$0xff]
        %v11090 = vld [vmem:[#allocation3 + $0x50] sm:$0xff]
        %v11091 = vld [vmem:[#allocation3 + $0x58] sm:$0xff]
        %v11092 = vld [vmem:[#allocation3 + $0x60] sm:$0xff]
        %v11093 = vld [vmem:[#allocation3 + $0x68] sm:$0xff]
        %v11094 = vld [vmem:[#allocation3 + $0x70] sm:$0xff]
        %v11095 = vld [vmem:[#allocation3 + $0x78] sm:$0xff]
        %v11096 = vld [vmem:[#allocation3 + $0x80] sm:$0xff]
        %v11097 = vld [vmem:[#allocation3 + $0x88] sm:$0xff]
        %v11098 = vld [vmem:[#allocation3 + $0x90] sm:$0xff]
        %v11099 = vld [vmem:[#allocation3 + $0x98] sm:$0xff]
        %v11100 = vld [vmem:[#allocation3 + $0xa0] sm:$0xff]
        %v11101 = vld [vmem:[#allocation3 + $0xa8] sm:$0xff]
        %v11102 = vld [vmem:[#allocation3 + $0xb0] sm:$0xff]
        %v11103 = vld [vmem:[#allocation3 + $0xb8] sm:$0xff]
        %v11104 = vld [vmem:[#allocation3 + $0xc0] sm:$0xff]
        %v11105 = vld [vmem:[#allocation3 + $0xc8] sm:$0xff]
        %v11106 = vld [vmem:[#allocation3 + $0xd0] sm:$0xff]
        %v11107 = vld [vmem:[#allocation3 + $0xd8] sm:$0xff]
        %v11108 = vld [vmem:[#allocation3 + $0xe0] sm:$0xff]
        %v11109 = vld [vmem:[#allocation3 + $0xe8] sm:$0xff]
        %v11110 = vld [vmem:[#allocation3 + $0xf0] sm:$0xff]
        %v11111 = vld [vmem:[#allocation3 + $0xf8] sm:$0xff]
        %11112 = vst.msk [vmem:[%s274] sm:$0xff] %vm11011, %v11080
        %11113 = vst.msk [vmem:[%s274 + $0x8] sm:$0xff] %vm11011, %v11081
        %11114 = vst.msk [vmem:[%s274 + $0x10] sm:$0xff] %vm11011, %v11082
        %11115 = vst.msk [vmem:[%s274 + $0x18] sm:$0xff] %vm11011, %v11083
        %11116 = vst.msk [vmem:[%s274 + $0x20] sm:$0xff] %vm11011, %v11084
        %11117 = vst.msk [vmem:[%s274 + $0x28] sm:$0xff] %vm11011, %v11085
        %11118 = vst.msk [vmem:[%s274 + $0x30] sm:$0xff] %vm11011, %v11086
        %11119 = vst.msk [vmem:[%s274 + $0x38] sm:$0xff] %vm11011, %v11087
        %11120 = vst.msk [vmem:[%s274 + $0x40] sm:$0xff] %vm11011, %v11088
        %11121 = vst.msk [vmem:[%s274 + $0x48] sm:$0xff] %vm11011, %v11089
        %11122 = vst.msk [vmem:[%s274 + $0x50] sm:$0xff] %vm11011, %v11090
        %11123 = vst.msk [vmem:[%s274 + $0x58] sm:$0xff] %vm11011, %v11091
        %11124 = vst.msk [vmem:[%s274 + $0x60] sm:$0xff] %vm11011, %v11092
        %11125 = vst.msk [vmem:[%s274 + $0x68] sm:$0xff] %vm11011, %v11093
        %11126 = vst.msk [vmem:[%s274 + $0x70] sm:$0xff] %vm11011, %v11094
        %11127 = vst.msk [vmem:[%s274 + $0x78] sm:$0xff] %vm11011, %v11095
        %11128 = vst.msk [vmem:[%s274 + $0x80] sm:$0xff] %vm11011, %v11096
        %11129 = vst.msk [vmem:[%s274 + $0x88] sm:$0xff] %vm11011, %v11097
        %11130 = vst.msk [vmem:[%s274 + $0x90] sm:$0xff] %vm11011, %v11098
        %11131 = vst.msk [vmem:[%s274 + $0x98] sm:$0xff] %vm11011, %v11099
        %11132 = vst.msk [vmem:[%s274 + $0xa0] sm:$0xff] %vm11011, %v11100
        %11133 = vst.msk [vmem:[%s274 + $0xa8] sm:$0xff] %vm11011, %v11101
        %11134 = vst.msk [vmem:[%s274 + $0xb0] sm:$0xff] %vm11011, %v11102
        %11135 = vst.msk [vmem:[%s274 + $0xb8] sm:$0xff] %vm11011, %v11103
        %11136 = vst.msk [vmem:[%s274 + $0xc0] sm:$0xff] %vm11011, %v11104
        %11137 = vst.msk [vmem:[%s274 + $0xc8] sm:$0xff] %vm11011, %v11105
        %11138 = vst.msk [vmem:[%s274 + $0xd0] sm:$0xff] %vm11011, %v11106
        %11139 = vst.msk [vmem:[%s274 + $0xd8] sm:$0xff] %vm11011, %v11107
        %11140 = vst.msk [vmem:[%s274 + $0xe0] sm:$0xff] %vm11011, %v11108
        %11141 = vst.msk [vmem:[%s274 + $0xe8] sm:$0xff] %vm11011, %v11109
        %11142 = vst.msk [vmem:[%s274 + $0xf0] sm:$0xff] %vm11011, %v11110
        %11143 = vst.msk [vmem:[%s274 + $0xf8] sm:$0xff] %vm11011, %v11111
      $region44: #{tpu_custom_call.1} parent=35 // pred_fallthru
        _
      %s11144 = smul.u32 32, %s19
      %p11145 = scmp.lt.s32.totalorder %s11144, 31
      %s11146 = scalar_select %p11145, %s11144, 31
      %s11147 = smul.addr %s11146, 8
      %s11148 = scalar_lea.vmem %s4, %s11147
      // Predicated region
      $region45: #{tpu_custom_call.1} parent=35 // pred_check
        %p11149 = pneg %p149
      $region46: #{tpu_custom_call.1} parent=35 // pred_check_branch
        %11151 = sbr.rel (%p11149) target = $region48
      $region47: #{tpu_custom_call.1} parent=35 // pred_region
        %s11152 = smul.u32 32, %s19
      $region48: #{tpu_custom_call.1} parent=35 // pred_fallthru
        _
      // Predicated region
      $region49: #{tpu_custom_call.1} parent=35 // pred_check
        %p11153 = pneg %p149
      $region50: #{tpu_custom_call.1} parent=35 // pred_check_branch
        %11155 = sbr.rel (%p11153) target = $region52
      $region51: #{tpu_custom_call.1} parent=35 // pred_region
        %s11156 = smul.u32 32, %s19
        %p11157 = scmp.lt.s32.totalorder %s11156, 31
        %s11158 = scalar_select %p11157, %s11156, 31
        %s11159 = smul.addr %s11158, 8
        %s11160 = scalar_lea.vmem %s4, %s11159
      $region52: #{tpu_custom_call.1} parent=35 // pred_fallthru
        _
    $region36: #{tpu_custom_call.1} parent=5 // pred_fallthru
      _
    %p11161 = scmp.le.s32.totalorder 2, %s10
    // Predicated region
    $region53: #{tpu_custom_call.1} parent=5 // pred_check
      %p11162 = pneg %p11161
    $region54: #{tpu_custom_call.1} parent=5 // pred_check_branch
      %11164 = sbr.rel (%p11162) target = $region56
    $region55: #{tpu_custom_call.1} parent=5 // pred_region
      %s11165 = ssub.s32 %s10, 2
    $region56: #{tpu_custom_call.1} parent=5 // pred_fallthru
      _
  $region6: #{tpu_custom_call.1} parent=0 // loop_footer
    %s14 = sadd.s32 1, %s10
  $region7: #{tpu_custom_call.1} parent=0 // loop_footer_branch
    %9 = sbr.rel target = $region3
  $region8: #{tpu_custom_call.1} parent=0 // loop_exit
    _

</llo_original>
